<compile_context>
chip_gen: v7x
topology: tpu7x:2x2x1
jax: 0.10.0
libtpu: 0.0.40
codegen_flags: <defaults>
</compile_context>

<pallas_src>
import jax
import jax.numpy as jnp
import numpy as np
from jax.experimental import pallas as pl
from jax.experimental.pallas import tpu as pltpu


# ----------------------------------------------------------------------------
# Combined (channel-masked) depthwise weights for the fused branch passes.
# ----------------------------------------------------------------------------
def _build_branch_weights(p, dim):
    c = dim // 4
    f32 = jnp.float32
    # pass 1 (3x3): identity (center delta) for channels [0,3c), 1/9 box for
    # [3c,4c)  (== F.avg_pool2d(3, stride=1, pad=1, count_include_pad=True)).
    delta3 = jnp.zeros((9,), f32).at[4].set(1.0)                  # center (1,1)
    w_pool = jnp.concatenate(
        [jnp.broadcast_to(delta3[:, None], (9, 3 * c)),
         jnp.full((9, c), 1.0 / 9.0, f32)], axis=1)               # (9, dim)

    # pass 2a (7x7, dilation 1): delta / embedded 3x3 / 7x7 / zeros
    delta7 = jnp.zeros((49,), f32).at[24].set(1.0)                # center (3,3)
    w1_emb = jnp.zeros((7, 7, c), f32).at[2:5, 2:5, :].set(p["w_dw1"])
    w_a = jnp.concatenate(
        [jnp.broadcast_to(delta7[:, None], (49, c)),
         w1_emb.reshape(49, c),
         p["w_dw2"].reshape(49, c),
         jnp.zeros((49, c), f32)], axis=1)                        # (49, dim)

    # pass 2b (7x7, dilation 3): only branch 3
    w_b = jnp.concatenate(
        [jnp.zeros((49, 3 * c), f32), p["w_dw3"].reshape(49, c)], axis=1)

    bias = jnp.concatenate(
        [jnp.zeros((c,), f32), p["b_dw1"], p["b_dw2"], p["b_dw3"]])
    return w_pool, w_a, w_b, bias.reshape(1, dim)


# ----------------------------------------------------------------------------
# Fused Block kernel: branches + LayerNorm + fc1 + gate + fc2 + residual.
# ----------------------------------------------------------------------------
def fused_block_pallas(x, w_pool, w_a, w_b, bias_c, ln_g, ln_b,
                       w1a, w1b, b1a, b1b, w2, b2, rs):
    """x: [B,H,W,dim] f32 NHWC -> [B,H,W,dim] Block output (NHWC)."""
    B, H, W, dim = x.shape
    ffdim = w2.shape[0]
    assert dim % 4 == 0
    # TODO(synk): masked tail tiles instead of this restriction.
    assert H % 8 == 0 and W % 8 == 0, "demo path needs H, W multiples of 8"

    TH = 8                       # row tile (sublane tile height)
    nT = H // TH
    # scratch geometry: all *stores* start at 8-aligned W offsets, the halo
    # bands are 8/16 columns wide so the zero fills are unmasked as well.
    CO1 = 8                      # left pad cols of s1 (input padded by 1)
    W1 = CO1 + W + 8
    PR2, CO2 = 9, 16             # top / left pad of s2 (t1 padded by 9)
    H2 = H + 2 * PR2
    W2 = CO2 + W + 16

    def kernel(x_ref, wp_ref, wa_ref, wb_ref, bc_ref, g_ref, be_ref,
               w1a_ref, w1b_ref, b1a_ref, b1b_ref, w2_ref, b2_ref, rs_ref,
               o_ref, s1, s2):
        f32 = jnp.float32
        # ---- zero ONLY the padding halo (not the whole scratch); done every
        #      grid step (each TensorCore has its own scratch copy).
        s1[0:1, :, :] = jnp.zeros((1, W1, dim), f32)
        s1[H + 1:H + 2, :, :] = jnp.zeros((1, W1, dim), f32)
        s1[1:H + 1, 0:CO1, :] = jnp.zeros((H, CO1, dim), f32)
        s1[1:H + 1, CO1 + W:W1, :] = jnp.zeros((H, W1 - CO1 - W, dim), f32)
        s2[0:PR2, :, :] = jnp.zeros((PR2, W2, dim), f32)
        s2[PR2 + H:H2, :, :] = jnp.zeros((H2 - PR2 - H, W2, dim), f32)
        s2[PR2:PR2 + H, 0:CO2, :] = jnp.zeros((H, CO2, dim), f32)
        s2[PR2:PR2 + H, CO2 + W:W2, :] = jnp.zeros((H, W2 - CO2 - W, dim), f32)
        # interior of s1 = the input image (zero-padded by 1 in H and W)
        s1[1:H + 1, CO1:CO1 + W, :] = x_ref[0]

        # ---- pass 1 (3x3): identity (branches 0-2) / 1-9 box (branch 3),
        #      row-tiled, one misaligned W strip per kx.
        def pass1_tile(i, carry):
            r0 = pl.multiple_of(i * TH, TH)
            acc = jnp.zeros((TH, W, dim), f32)
            for kx in range(3):
                strip = s1[pl.ds(r0, TH + 2),
                           CO1 - 1 + kx:CO1 - 1 + kx + W, :]
                for ky in range(3):
                    acc = acc + strip[ky:ky + TH] * wp_ref[3 * ky + kx, :]
            s2[pl.ds(r0 + PR2, TH), CO2:CO2 + W, :] = acc
            return carry

        jax.lax.fori_loop(0, nT, pass1_tile, 0)

        # loop-invariant broadcasts hoisted (JAX does not CSE broadcast_in_dim)
        bias2d = jnp.broadcast_to(bc_ref[...], (W, dim))
        gamma, beta = g_ref[0, :], be_ref[0, :]
        b1a_v, b1b_v = b1a_ref[0, :], b1b_ref[0, :]
        b2_v, rs_v = b2_ref[0, :], rs_ref[0, :]

        # ---- pass 2 (7x7 dil-1 + dil-3) + LN/MLP/residual epilogue per tile
        def tile_body(i, carry):
            r0 = pl.multiple_of(i * TH, TH)
            acc = jnp.zeros((TH, W, dim), f32)
            # dil-1 taps (identity / embedded-3x3 / 7x7 / zero): one misaligned
            # W strip per kx, ky indexed on the free leading dim.
            for kx in range(7):
                strip = s2[pl.ds(r0 + PR2 - 3, TH + 6),
                           CO2 - 3 + kx:CO2 - 3 + kx + W, :]
                for ky in range(7):
                    acc = acc + strip[ky:ky + TH] * wa_ref[7 * ky + kx, :]
            # dil-3 taps (branch 3 only); ky grouped so the hoisted strip stays
            # <= TH+6 rows and the live vreg set stays bounded.
            for kx in range(7):
                for ky0, nky in ((0, 3), (3, 3), (6, 1)):
                    strip = s2[pl.ds(r0 + 3 * ky0, TH + 3 * (nky - 1)),
                               CO2 - 9 + 3 * kx:CO2 - 9 + 3 * kx + W, :]
                    for j in range(nky):
                        acc = acc + (strip[3 * j:3 * j + TH] *
                                     wb_ref[7 * (ky0 + j) + kx, :])
            xb = (acc + bias2d).reshape(TH * W, dim)

            # LayerNorm over channels (torch semantics: biased var, eps=1e-5)
            mu = jnp.mean(xb, axis=-1, keepdims=True)
            xc = xb - mu
            var = jnp.mean(xc * xc, axis=-1, keepdims=True)
            xn = (xc * jax.lax.rsqrt(var + 1e-5) * gamma + beta
                  ).astype(jnp.bfloat16)
            # fc1 as TWO lane-dense matmuls (no ffdim-boundary slice of h),
            # bf16 operands / f32 accumulation (MXU-native).
            a = jnp.dot(xn, w1a_ref[...], preferred_element_type=f32) + b1a_v
            g = jnp.dot(xn, w1b_ref[...], preferred_element_type=f32) + b1b_v
            gated = (jnp.tanh(jnp.exp(a)) * a * g).astype(jnp.bfloat16)
            y = jnp.dot(gated, w2_ref[...], preferred_element_type=f32) + b2_v
            # residual: y + xx * rs
            xin = x_ref[0, pl.ds(r0, TH), :, :].reshape(TH * W, dim)
            out = y + xin * rs_v
            o_ref[0, pl.ds(r0, TH), :, :] = (
                out.reshape(TH, W, dim).astype(o_ref.dtype))
            return carry

        jax.lax.fori_loop(0, nT, tile_body, 0)

    rows4 = lambda b: (b, 0, 0, 0)
    const2 = lambda b: (0, 0)
    return pl.pallas_call(
        kernel,
        out_shape=jax.ShapeDtypeStruct((B, H, W, dim), x.dtype),
        grid=(B,),
        in_specs=[
            pl.BlockSpec((1, H, W, dim), rows4),     # x
            pl.BlockSpec((9, dim), const2),          # w_pool
            pl.BlockSpec((49, dim), const2),         # w_a (dil-1)
            pl.BlockSpec((49, dim), const2),         # w_b (dil-3)
            pl.BlockSpec((1, dim), const2),          # conv bias
            pl.BlockSpec((1, dim), const2),          # ln gamma
            pl.BlockSpec((1, dim), const2),          # ln beta
            pl.BlockSpec((dim, ffdim), const2),      # w1 (a half, bf16)
            pl.BlockSpec((dim, ffdim), const2),      # w1 (g half, bf16)
            pl.BlockSpec((1, ffdim), const2),        # b1 (a half)
            pl.BlockSpec((1, ffdim), const2),        # b1 (g half)
            pl.BlockSpec((ffdim, dim), const2),      # w2 (bf16)
            pl.BlockSpec((1, dim), const2),          # b2
            pl.BlockSpec((1, dim), const2),          # rs
        ],
        out_specs=pl.BlockSpec((1, H, W, dim), rows4),
        scratch_shapes=[
            pltpu.VMEM((H + 2, W1, dim), jnp.float32),   # padded input
            pltpu.VMEM((H2, W2, dim), jnp.float32),      # padded pass-1 output
        ],
        compiler_params=pltpu.CompilerParams(
            dimension_semantics=("parallel",)),
        # ~2 MiB VMEM at demo scale; default scoped limit is plenty.
    )(x, w_pool, w_a, w_b, bias_c, ln_g, ln_b, w1a, w1b, b1a, b1b, w2, b2, rs)


# ----------------------------------------------------------------------------
# Block forward (Pallas) — matches PyTorch Block.forward on NCHW input.
# ----------------------------------------------------------------------------
def block_forward_pallas(xx_nchw, p):
    xx = jnp.transpose(xx_nchw, (0, 2, 3, 1))        # NCHW -> NHWC (interface)
    B, H, W, dim = xx.shape
    ffdim = p["w2"].shape[0]
    w_pool, w_a, w_b, bias_c = _build_branch_weights(p, dim)
    out = fused_block_pallas(
        xx, w_pool, w_a, w_b, bias_c,
        p["ln_g"].reshape(1, dim), p["ln_b"].reshape(1, dim),
        p["w1"][:, :ffdim].astype(jnp.bfloat16),
        p["w1"][:, ffdim:].astype(jnp.bfloat16),
        p["b1"][:ffdim].reshape(1, ffdim), p["b1"][ffdim:].reshape(1, ffdim),
        p["w2"].astype(jnp.bfloat16), p["b2"].reshape(1, dim),
        p["rs"].reshape(1, dim))
    return jnp.transpose(out, (0, 3, 1, 2))          # NHWC -> NCHW


# ----------------------------------------------------------------------------
# Pure-JAX reference (PyTorch semantics, f32 throughout) for correctness.
# ----------------------------------------------------------------------------
def _dw_conv_ref(x, w, b, dilation):
    C = x.shape[-1]
    out = jax.lax.conv_general_dilated(
        x, w[:, :, None, :], window_strides=(1, 1), padding="SAME",
        rhs_dilation=(dilation, dilation),
        dimension_numbers=("NHWC", "HWIO", "NHWC"), feature_group_count=C)
    return out + b


def block_forward_ref(xx_nchw, p):
    xx = jnp.transpose(xx_nchw, (0, 2, 3, 1))
    B, H, W, dim = xx.shape
    c = dim // 4
    xc = [xx[..., i * c:(i + 1) * c] for i in range(4)]
    x1 = _dw_conv_ref(xc[1], p["w_dw1"], p["b_dw1"], 1)
    x2 = _dw_conv_ref(xc[2], p["w_dw2"], p["b_dw2"], 1)
    x3 = jax.lax.reduce_window(xc[3], 0.0, jax.lax.add, (1, 3, 3, 1),
                               (1, 1, 1, 1),
                               ((0, 0), (1, 1), (1, 1), (0, 0))) / 9.0
    x3 = _dw_conv_ref(x3, p["w_dw3"], p["b_dw3"], 3)
    x = jnp.concatenate([xc[0], x1, x2, x3], axis=-1)
    mu = jnp.mean(x, axis=-1, keepdims=True)
    var = jnp.mean((x - mu) ** 2, axis=-1, keepdims=True)
    xn = (x - mu) * jax.lax.rsqrt(var + 1e-5) * p["ln_g"] + p["ln_b"]
    h = jnp.einsum("bhwc,cf->bhwf", xn, p["w1"]) + p["b1"]
    ffdim = p["w2"].shape[0]
    a, g = h[..., :ffdim], h[..., ffdim:]
    gated = jnp.tanh(jnp.exp(a)) * a * g
    y = jnp.einsum("bhwf,fc->bhwc", gated, p["w2"]) + p["b2"]
    out = y + xx * p["rs"]
    return jnp.transpose(out, (0, 3, 1, 2))


# ----------------------------------------------------------------------------
def init_params(key, dim, ffdim):
    c = dim // 4
    ks = jax.random.split(key, 12)
    s = 0.05
    return {
        "w_dw1": s * jax.random.normal(ks[0], (3, 3, c), jnp.float32),
        "b_dw1": s * jax.random.normal(ks[1], (c,), jnp.float32),
        "w_dw2": s * jax.random.normal(ks[2], (7, 7, c), jnp.float32),
        "b_dw2": s * jax.random.normal(ks[3], (c,), jnp.float32),
        "w_dw3": s * jax.random.normal(ks[4], (7, 7, c), jnp.float32),
        "b_dw3": s * jax.random.normal(ks[5], (c,), jnp.float32),
        "ln_g": jnp.ones((dim,), jnp.float32),
        "ln_b": jnp.zeros((dim,), jnp.float32),
        "w1": s * jax.random.normal(ks[6], (dim, 2 * ffdim), jnp.float32),
        "b1": s * jax.random.normal(ks[7], (2 * ffdim,), jnp.float32),
        "w2": s * jax.random.normal(ks[8], (ffdim, dim), jnp.float32),
        "b2": s * jax.random.normal(ks[9], (dim,), jnp.float32),
        "rs": jnp.ones((dim,), jnp.float32),  # nn.Parameter(torch.ones(1,dim,1,1))
    }


if __name__ == "__main__":
    # dim / ffdim chosen as multiples of 128 so the kernel is lane-dense
    # (review item 1, option b) and the fc matmuls fill the MXU.
    B, dim, H, W = 2, 128, 16, 16
    ffdim = 128

    key = jax.random.PRNGKey(0)
    k_x, k_p = jax.random.split(key)
    xx = jax.random.normal(k_x, (B, dim, H, W), jnp.float32)  # NCHW like torch
    params = init_params(k_p, dim, ffdim)

    out = jax.block_until_ready(block_forward_pallas(xx, params))
    ref = jax.block_until_ready(block_forward_ref(xx, params))

    assert out.shape == (B, dim, H, W)
    # Tolerance covers the intentional bf16 matmul operands (f32 accumulation);
    # the conv/LN/gate/residual math stays in f32.
    np.testing.assert_allclose(np.asarray(out), np.asarray(ref),
                               atol=2e-2, rtol=2e-2)
    print("KERNEL_OK")
</pallas_src>

<mosaic_0001>
module attributes {stable_mosaic.version = 11 : i64} {
  func.func @kernel(%arg0: i32, %arg1: memref<1x16x16x128xf32, #tpu.memory_space<vmem>>, %arg2: memref<9x128xf32, #tpu.memory_space<vmem>>, %arg3: memref<49x128xf32, #tpu.memory_space<vmem>>, %arg4: memref<49x128xf32, #tpu.memory_space<vmem>>, %arg5: memref<1x128xf32, #tpu.memory_space<vmem>>, %arg6: memref<1x128xf32, #tpu.memory_space<vmem>>, %arg7: memref<1x128xf32, #tpu.memory_space<vmem>>, %arg8: memref<128x128xbf16, #tpu.memory_space<vmem>>, %arg9: memref<128x128xbf16, #tpu.memory_space<vmem>>, %arg10: memref<1x128xf32, #tpu.memory_space<vmem>>, %arg11: memref<1x128xf32, #tpu.memory_space<vmem>>, %arg12: memref<128x128xbf16, #tpu.memory_space<vmem>>, %arg13: memref<1x128xf32, #tpu.memory_space<vmem>>, %arg14: memref<1x128xf32, #tpu.memory_space<vmem>>, %arg15: memref<1x16x16x128xf32, #tpu.memory_space<vmem>>, %arg16: memref<18x32x128xf32, #tpu.memory_space<vmem>>, %arg17: memref<34x48x128xf32, #tpu.memory_space<vmem>>) attributes {dimension_semantics = [#tpu.dimension_semantics<parallel>], iteration_bounds = array<i64: 2>, scalar_prefetch = 0 : i64, scratch_operands = 2 : i64, tpu.core_type = #tpu.core_type<tc>, window_params = [{transform_indices = @transform_0, window_bounds = array<i64: 1, 16, 16, 128>}, {pipeline_mode = #tpu.pipeline_mode<synchronous>, transform_indices = @transform_1, window_bounds = array<i64: 9, 128>}, {pipeline_mode = #tpu.pipeline_mode<synchronous>, transform_indices = @transform_2, window_bounds = array<i64: 49, 128>}, {pipeline_mode = #tpu.pipeline_mode<synchronous>, transform_indices = @transform_3, window_bounds = array<i64: 49, 128>}, {pipeline_mode = #tpu.pipeline_mode<synchronous>, transform_indices = @transform_4, window_bounds = array<i64: 1, 128>}, {pipeline_mode = #tpu.pipeline_mode<synchronous>, transform_indices = @transform_5, window_bounds = array<i64: 1, 128>}, {pipeline_mode = #tpu.pipeline_mode<synchronous>, transform_indices = @transform_6, window_bounds = array<i64: 1, 128>}, {pipeline_mode = #tpu.pipeline_mode<synchronous>, transform_indices = @transform_7, window_bounds = array<i64: 128, 128>}, {pipeline_mode = #tpu.pipeline_mode<synchronous>, transform_indices = @transform_8, window_bounds = array<i64: 128, 128>}, {pipeline_mode = #tpu.pipeline_mode<synchronous>, transform_indices = @transform_9, window_bounds = array<i64: 1, 128>}, {pipeline_mode = #tpu.pipeline_mode<synchronous>, transform_indices = @transform_10, window_bounds = array<i64: 1, 128>}, {pipeline_mode = #tpu.pipeline_mode<synchronous>, transform_indices = @transform_11, window_bounds = array<i64: 128, 128>}, {pipeline_mode = #tpu.pipeline_mode<synchronous>, transform_indices = @transform_12, window_bounds = array<i64: 1, 128>}, {pipeline_mode = #tpu.pipeline_mode<synchronous>, transform_indices = @transform_13, window_bounds = array<i64: 1, 128>}, {transform_indices = @transform_14, window_bounds = array<i64: 1, 16, 16, 128>}]} {
    %cst = arith.constant 0.000000e+00 : f32
    %0 = vector.broadcast %cst : f32 to vector<1x32x128xf32>
    %c0 = arith.constant 0 : index
    %c0_0 = arith.constant 0 : index
    %c0_1 = arith.constant 0 : index
    %1 = vector.load %arg16[%c0, %c0_0, %c0_1] : memref<18x32x128xf32, #tpu.memory_space<vmem>>, vector<1x32x128xf32>
    tpu.vector_store %arg16[%c0, %c0_0, %c0_1], %0 {strides = array<i32>} : memref<18x32x128xf32, #tpu.memory_space<vmem>>, vector<1x32x128xf32>,
    %cst_2 = arith.constant 0.000000e+00 : f32
    %2 = vector.broadcast %cst_2 : f32 to vector<1x32x128xf32>
    %c17 = arith.constant 17 : index
    %c0_3 = arith.constant 0 : index
    %c0_4 = arith.constant 0 : index
    %3 = vector.load %arg16[%c17, %c0_3, %c0_4] : memref<18x32x128xf32, #tpu.memory_space<vmem>>, vector<1x32x128xf32>
    tpu.vector_store %arg16[%c17, %c0_3, %c0_4], %2 {strides = array<i32>} : memref<18x32x128xf32, #tpu.memory_space<vmem>>, vector<1x32x128xf32>,
    %cst_5 = arith.constant 0.000000e+00 : f32
    %4 = vector.broadcast %cst_5 : f32 to vector<16x8x128xf32>
    %c1 = arith.constant 1 : index
    %c0_6 = arith.constant 0 : index
    %c0_7 = arith.constant 0 : index
    %5 = vector.load %arg16[%c1, %c0_6, %c0_7] : memref<18x32x128xf32, #tpu.memory_space<vmem>>, vector<16x8x128xf32>
    tpu.vector_store %arg16[%c1, %c0_6, %c0_7], %4 {strides = array<i32>} : memref<18x32x128xf32, #tpu.memory_space<vmem>>, vector<16x8x128xf32>,
    %cst_8 = arith.constant 0.000000e+00 : f32
    %6 = vector.broadcast %cst_8 : f32 to vector<16x8x128xf32>
    %c1_9 = arith.constant 1 : index
    %c24 = arith.constant 24 : index
    %c0_10 = arith.constant 0 : index
    %7 = vector.load %arg16[%c1_9, %c24, %c0_10] : memref<18x32x128xf32, #tpu.memory_space<vmem>>, vector<16x8x128xf32>
    tpu.vector_store %arg16[%c1_9, %c24, %c0_10], %6 {strides = array<i32>} : memref<18x32x128xf32, #tpu.memory_space<vmem>>, vector<16x8x128xf32>,
    %cst_11 = arith.constant 0.000000e+00 : f32
    %8 = vector.broadcast %cst_11 : f32 to vector<9x48x128xf32>
    %c0_12 = arith.constant 0 : index
    %c0_13 = arith.constant 0 : index
    %c0_14 = arith.constant 0 : index
    %9 = vector.load %arg17[%c0_12, %c0_13, %c0_14] : memref<34x48x128xf32, #tpu.memory_space<vmem>>, vector<9x48x128xf32>
    tpu.vector_store %arg17[%c0_12, %c0_13, %c0_14], %8 {strides = array<i32>} : memref<34x48x128xf32, #tpu.memory_space<vmem>>, vector<9x48x128xf32>,
    %cst_15 = arith.constant 0.000000e+00 : f32
    %10 = vector.broadcast %cst_15 : f32 to vector<9x48x128xf32>
    %c25 = arith.constant 25 : index
    %c0_16 = arith.constant 0 : index
    %c0_17 = arith.constant 0 : index
    %11 = vector.load %arg17[%c25, %c0_16, %c0_17] : memref<34x48x128xf32, #tpu.memory_space<vmem>>, vector<9x48x128xf32>
    tpu.vector_store %arg17[%c25, %c0_16, %c0_17], %10 {strides = array<i32>} : memref<34x48x128xf32, #tpu.memory_space<vmem>>, vector<9x48x128xf32>,
    %cst_18 = arith.constant 0.000000e+00 : f32
    %12 = vector.broadcast %cst_18 : f32 to vector<16x16x128xf32>
    %c9 = arith.constant 9 : index
    %c0_19 = arith.constant 0 : index
    %c0_20 = arith.constant 0 : index
    %13 = vector.load %arg17[%c9, %c0_19, %c0_20] : memref<34x48x128xf32, #tpu.memory_space<vmem>>, vector<16x16x128xf32>
    tpu.vector_store %arg17[%c9, %c0_19, %c0_20], %12 {strides = array<i32>} : memref<34x48x128xf32, #tpu.memory_space<vmem>>, vector<16x16x128xf32>,
    %cst_21 = arith.constant 0.000000e+00 : f32
    %14 = vector.broadcast %cst_21 : f32 to vector<16x16x128xf32>
    %c9_22 = arith.constant 9 : index
    %c32 = arith.constant 32 : index
    %c0_23 = arith.constant 0 : index
    %15 = vector.load %arg17[%c9_22, %c32, %c0_23] : memref<34x48x128xf32, #tpu.memory_space<vmem>>, vector<16x16x128xf32>
    tpu.vector_store %arg17[%c9_22, %c32, %c0_23], %14 {strides = array<i32>} : memref<34x48x128xf32, #tpu.memory_space<vmem>>, vector<16x16x128xf32>,
    %c0_24 = arith.constant 0 : index
    %c0_25 = arith.constant 0 : index
    %c0_26 = arith.constant 0 : index
    %c0_27 = arith.constant 0 : index
    %16 = vector.load %arg1[%c0_24, %c0_25, %c0_26, %c0_27] : memref<1x16x16x128xf32, #tpu.memory_space<vmem>>, vector<1x16x16x128xf32>
    %17 = vector.shape_cast %16 : vector<1x16x16x128xf32> to vector<16x16x128xf32>
    %c1_28 = arith.constant 1 : index
    %c8 = arith.constant 8 : index
    %c0_29 = arith.constant 0 : index
    %18 = vector.load %arg16[%c1_28, %c8, %c0_29] : memref<18x32x128xf32, #tpu.memory_space<vmem>>, vector<16x16x128xf32>
    tpu.vector_store %arg16[%c1_28, %c8, %c0_29], %17 {strides = array<i32>} : memref<18x32x128xf32, #tpu.memory_space<vmem>>, vector<16x16x128xf32>,
    %c0_i32 = arith.constant 0 : i32
    %c2_i32 = arith.constant 2 : i32
    %19 = arith.addi %c0_i32, %c2_i32 : i32
    %c1_i32 = arith.constant 1 : i32
    scf.for %arg18 = %c0_i32 to %19 step %c1_i32  : i32 {
      %c8_i32 = arith.constant 8 : i32
      %36 = arith.muli %arg18, %c8_i32 : i32
      %37 = tpu.assume_multiple %36, 8 : i32
      %cst_49 = arith.constant 0.000000e+00 : f32
      %38 = vector.broadcast %cst_49 : f32 to vector<8x16x128xf32>
      %39 = arith.index_cast %37 : i32 to index
      %c7 = arith.constant 7 : index
      %c0_50 = arith.constant 0 : index
      %40 = vector.load %arg16[%39, %c7, %c0_50] : memref<18x32x128xf32, #tpu.memory_space<vmem>>, vector<10x16x128xf32>
      %41 = vector.extract_strided_slice %40 {offsets = [0, 0, 0], sizes = [8, 16, 128], strides = [1, 1, 1]} : vector<10x16x128xf32> to vector<8x16x128xf32>
      %c0_51 = arith.constant 0 : index
      %c0_52 = arith.constant 0 : index
      %42 = vector.load %arg2[%c0_51, %c0_52] : memref<9x128xf32, #tpu.memory_space<vmem>>, vector<1x128xf32>
      %43 = vector.shape_cast %42 : vector<1x128xf32> to vector<128xf32>
      %44 = vector.shape_cast %43 : vector<128xf32> to vector<1x1x128xf32>
      %45 = vector.broadcast %44 : vector<1x1x128xf32> to vector<8x16x128xf32>
      %46 = arith.mulf %41, %45 : vector<8x16x128xf32>
      %47 = arith.addf %38, %46 : vector<8x16x128xf32>
      %48 = vector.extract_strided_slice %40 {offsets = [1, 0, 0], sizes = [8, 16, 128], strides = [1, 1, 1]} : vector<10x16x128xf32> to vector<8x16x128xf32>
      %c3 = arith.constant 3 : index
      %c0_53 = arith.constant 0 : index
      %49 = vector.load %arg2[%c3, %c0_53] : memref<9x128xf32, #tpu.memory_space<vmem>>, vector<1x128xf32>
      %50 = vector.shape_cast %49 : vector<1x128xf32> to vector<128xf32>
      %51 = vector.shape_cast %50 : vector<128xf32> to vector<1x1x128xf32>
      %52 = vector.broadcast %51 : vector<1x1x128xf32> to vector<8x16x128xf32>
      %53 = arith.mulf %48, %52 : vector<8x16x128xf32>
      %54 = arith.addf %47, %53 : vector<8x16x128xf32>
      %55 = vector.extract_strided_slice %40 {offsets = [2, 0, 0], sizes = [8, 16, 128], strides = [1, 1, 1]} : vector<10x16x128xf32> to vector<8x16x128xf32>
      %c6 = arith.constant 6 : index
      %c0_54 = arith.constant 0 : index
      %56 = vector.load %arg2[%c6, %c0_54] : memref<9x128xf32, #tpu.memory_space<vmem>>, vector<1x128xf32>
      %57 = vector.shape_cast %56 : vector<1x128xf32> to vector<128xf32>
      %58 = vector.shape_cast %57 : vector<128xf32> to vector<1x1x128xf32>
      %59 = vector.broadcast %58 : vector<1x1x128xf32> to vector<8x16x128xf32>
      %60 = arith.mulf %55, %59 : vector<8x16x128xf32>
      %61 = arith.addf %54, %60 : vector<8x16x128xf32>
      %62 = arith.index_cast %37 : i32 to index
      %c8_55 = arith.constant 8 : index
      %c0_56 = arith.constant 0 : index
      %63 = vector.load %arg16[%62, %c8_55, %c0_56] : memref<18x32x128xf32, #tpu.memory_space<vmem>>, vector<10x16x128xf32>
      %64 = vector.extract_strided_slice %63 {offsets = [0, 0, 0], sizes = [8, 16, 128], strides = [1, 1, 1]} : vector<10x16x128xf32> to vector<8x16x128xf32>
      %c1_57 = arith.constant 1 : index
      %c0_58 = arith.constant 0 : index
      %65 = vector.load %arg2[%c1_57, %c0_58] : memref<9x128xf32, #tpu.memory_space<vmem>>, vector<1x128xf32>
      %66 = vector.shape_cast %65 : vector<1x128xf32> to vector<128xf32>
      %67 = vector.shape_cast %66 : vector<128xf32> to vector<1x1x128xf32>
      %68 = vector.broadcast %67 : vector<1x1x128xf32> to vector<8x16x128xf32>
      %69 = arith.mulf %64, %68 : vector<8x16x128xf32>
      %70 = arith.addf %61, %69 : vector<8x16x128xf32>
      %71 = vector.extract_strided_slice %63 {offsets = [1, 0, 0], sizes = [8, 16, 128], strides = [1, 1, 1]} : vector<10x16x128xf32> to vector<8x16x128xf32>
      %c4 = arith.constant 4 : index
      %c0_59 = arith.constant 0 : index
      %72 = vector.load %arg2[%c4, %c0_59] : memref<9x128xf32, #tpu.memory_space<vmem>>, vector<1x128xf32>
      %73 = vector.shape_cast %72 : vector<1x128xf32> to vector<128xf32>
      %74 = vector.shape_cast %73 : vector<128xf32> to vector<1x1x128xf32>
      %75 = vector.broadcast %74 : vector<1x1x128xf32> to vector<8x16x128xf32>
      %76 = arith.mulf %71, %75 : vector<8x16x128xf32>
      %77 = arith.addf %70, %76 : vector<8x16x128xf32>
      %78 = vector.extract_strided_slice %63 {offsets = [2, 0, 0], sizes = [8, 16, 128], strides = [1, 1, 1]} : vector<10x16x128xf32> to vector<8x16x128xf32>
      %c7_60 = arith.constant 7 : index
      %c0_61 = arith.constant 0 : index
      %79 = vector.load %arg2[%c7_60, %c0_61] : memref<9x128xf32, #tpu.memory_space<vmem>>, vector<1x128xf32>
      %80 = vector.shape_cast %79 : vector<1x128xf32> to vector<128xf32>
      %81 = vector.shape_cast %80 : vector<128xf32> to vector<1x1x128xf32>
      %82 = vector.broadcast %81 : vector<1x1x128xf32> to vector<8x16x128xf32>
      %83 = arith.mulf %78, %82 : vector<8x16x128xf32>
      %84 = arith.addf %77, %83 : vector<8x16x128xf32>
      %85 = arith.index_cast %37 : i32 to index
      %c9_62 = arith.constant 9 : index
      %c0_63 = arith.constant 0 : index
      %86 = vector.load %arg16[%85, %c9_62, %c0_63] : memref<18x32x128xf32, #tpu.memory_space<vmem>>, vector<10x16x128xf32>
      %87 = vector.extract_strided_slice %86 {offsets = [0, 0, 0], sizes = [8, 16, 128], strides = [1, 1, 1]} : vector<10x16x128xf32> to vector<8x16x128xf32>
      %c2 = arith.constant 2 : index
      %c0_64 = arith.constant 0 : index
      %88 = vector.load %arg2[%c2, %c0_64] : memref<9x128xf32, #tpu.memory_space<vmem>>, vector<1x128xf32>
      %89 = vector.shape_cast %88 : vector<1x128xf32> to vector<128xf32>
      %90 = vector.shape_cast %89 : vector<128xf32> to vector<1x1x128xf32>
      %91 = vector.broadcast %90 : vector<1x1x128xf32> to vector<8x16x128xf32>
      %92 = arith.mulf %87, %91 : vector<8x16x128xf32>
      %93 = arith.addf %84, %92 : vector<8x16x128xf32>
      %94 = vector.extract_strided_slice %86 {offsets = [1, 0, 0], sizes = [8, 16, 128], strides = [1, 1, 1]} : vector<10x16x128xf32> to vector<8x16x128xf32>
      %c5 = arith.constant 5 : index
      %c0_65 = arith.constant 0 : index
      %95 = vector.load %arg2[%c5, %c0_65] : memref<9x128xf32, #tpu.memory_space<vmem>>, vector<1x128xf32>
      %96 = vector.shape_cast %95 : vector<1x128xf32> to vector<128xf32>
      %97 = vector.shape_cast %96 : vector<128xf32> to vector<1x1x128xf32>
      %98 = vector.broadcast %97 : vector<1x1x128xf32> to vector<8x16x128xf32>
      %99 = arith.mulf %94, %98 : vector<8x16x128xf32>
      %100 = arith.addf %93, %99 : vector<8x16x128xf32>
      %101 = vector.extract_strided_slice %86 {offsets = [2, 0, 0], sizes = [8, 16, 128], strides = [1, 1, 1]} : vector<10x16x128xf32> to vector<8x16x128xf32>
      %c8_66 = arith.constant 8 : index
      %c0_67 = arith.constant 0 : index
      %102 = vector.load %arg2[%c8_66, %c0_67] : memref<9x128xf32, #tpu.memory_space<vmem>>, vector<1x128xf32>
      %103 = vector.shape_cast %102 : vector<1x128xf32> to vector<128xf32>
      %104 = vector.shape_cast %103 : vector<128xf32> to vector<1x1x128xf32>
      %105 = vector.broadcast %104 : vector<1x1x128xf32> to vector<8x16x128xf32>
      %106 = arith.mulf %101, %105 : vector<8x16x128xf32>
      %107 = arith.addf %100, %106 : vector<8x16x128xf32>
      %c9_i32 = arith.constant 9 : i32
      %108 = arith.addi %37, %c9_i32 : i32
      %109 = arith.index_cast %108 : i32 to index
      %c16 = arith.constant 16 : index
      %c0_68 = arith.constant 0 : index
      %110 = vector.load %arg17[%109, %c16, %c0_68] : memref<34x48x128xf32, #tpu.memory_space<vmem>>, vector<8x16x128xf32>
      tpu.vector_store %arg17[%109, %c16, %c0_68], %107 {strides = array<i32>} : memref<34x48x128xf32, #tpu.memory_space<vmem>>, vector<8x16x128xf32>,
    }
    %c2_i32_30 = arith.constant 2 : i32
    %c0_31 = arith.constant 0 : index
    %c0_32 = arith.constant 0 : index
    %20 = vector.load %arg5[%c0_31, %c0_32] : memref<1x128xf32, #tpu.memory_space<vmem>>, vector<1x128xf32>
    %21 = vector.shape_cast %20 : vector<1x128xf32> to vector<1x128xf32>
    %22 = vector.broadcast %21 : vector<1x128xf32> to vector<16x128xf32>
    %c0_33 = arith.constant 0 : index
    %c0_34 = arith.constant 0 : index
    %23 = vector.load %arg6[%c0_33, %c0_34] : memref<1x128xf32, #tpu.memory_space<vmem>>, vector<1x128xf32>
    %24 = vector.shape_cast %23 : vector<1x128xf32> to vector<128xf32>
    %c0_35 = arith.constant 0 : index
    %c0_36 = arith.constant 0 : index
    %25 = vector.load %arg7[%c0_35, %c0_36] : memref<1x128xf32, #tpu.memory_space<vmem>>, vector<1x128xf32>
    %26 = vector.shape_cast %25 : vector<1x128xf32> to vector<128xf32>
    %c0_37 = arith.constant 0 : index
    %c0_38 = arith.constant 0 : index
    %27 = vector.load %arg10[%c0_37, %c0_38] : memref<1x128xf32, #tpu.memory_space<vmem>>, vector<1x128xf32>
    %28 = vector.shape_cast %27 : vector<1x128xf32> to vector<128xf32>
    %c0_39 = arith.constant 0 : index
    %c0_40 = arith.constant 0 : index
    %29 = vector.load %arg11[%c0_39, %c0_40] : memref<1x128xf32, #tpu.memory_space<vmem>>, vector<1x128xf32>
    %30 = vector.shape_cast %29 : vector<1x128xf32> to vector<128xf32>
    %c0_41 = arith.constant 0 : index
    %c0_42 = arith.constant 0 : index
    %31 = vector.load %arg13[%c0_41, %c0_42] : memref<1x128xf32, #tpu.memory_space<vmem>>, vector<1x128xf32>
    %32 = vector.shape_cast %31 : vector<1x128xf32> to vector<128xf32>
    %c0_43 = arith.constant 0 : index
    %c0_44 = arith.constant 0 : index
    %33 = vector.load %arg14[%c0_43, %c0_44] : memref<1x128xf32, #tpu.memory_space<vmem>>, vector<1x128xf32>
    %34 = vector.shape_cast %33 : vector<1x128xf32> to vector<128xf32>
    %c0_i32_45 = arith.constant 0 : i32
    %c2_i32_46 = arith.constant 2 : i32
    %35 = arith.addi %c0_i32_45, %c2_i32_46 : i32
    %c1_i32_47 = arith.constant 1 : i32
    scf.for %arg18 = %c0_i32_45 to %35 step %c1_i32_47  : i32 {
      %c8_i32 = arith.constant 8 : i32
      %36 = arith.muli %arg18, %c8_i32 : i32
      %37 = tpu.assume_multiple %36, 8 : i32
      %cst_49 = arith.constant 0.000000e+00 : f32
      %38 = vector.broadcast %cst_49 : f32 to vector<8x16x128xf32>
      %c9_i32 = arith.constant 9 : i32
      %39 = arith.addi %37, %c9_i32 : i32
      %c3_i32 = arith.constant 3 : i32
      %40 = arith.subi %39, %c3_i32 : i32
      %41 = arith.index_cast %40 : i32 to index
      %c13 = arith.constant 13 : index
      %c0_50 = arith.constant 0 : index
      %42 = vector.load %arg17[%41, %c13, %c0_50] : memref<34x48x128xf32, #tpu.memory_space<vmem>>, vector<14x16x128xf32>
      %43 = vector.extract_strided_slice %42 {offsets = [0, 0, 0], sizes = [8, 16, 128], strides = [1, 1, 1]} : vector<14x16x128xf32> to vector<8x16x128xf32>
      %c0_51 = arith.constant 0 : index
      %c0_52 = arith.constant 0 : index
      %44 = vector.load %arg3[%c0_51, %c0_52] : memref<49x128xf32, #tpu.memory_space<vmem>>, vector<1x128xf32>
      %45 = vector.shape_cast %44 : vector<1x128xf32> to vector<128xf32>
      %46 = vector.shape_cast %45 : vector<128xf32> to vector<1x1x128xf32>
      %47 = vector.broadcast %46 : vector<1x1x128xf32> to vector<8x16x128xf32>
      %48 = arith.mulf %43, %47 : vector<8x16x128xf32>
      %49 = arith.addf %38, %48 : vector<8x16x128xf32>
      %50 = vector.extract_strided_slice %42 {offsets = [1, 0, 0], sizes = [8, 16, 128], strides = [1, 1, 1]} : vector<14x16x128xf32> to vector<8x16x128xf32>
      %c7 = arith.constant 7 : index
      %c0_53 = arith.constant 0 : index
      %51 = vector.load %arg3[%c7, %c0_53] : memref<49x128xf32, #tpu.memory_space<vmem>>, vector<1x128xf32>
      %52 = vector.shape_cast %51 : vector<1x128xf32> to vector<128xf32>
      %53 = vector.shape_cast %52 : vector<128xf32> to vector<1x1x128xf32>
      %54 = vector.broadcast %53 : vector<1x1x128xf32> to vector<8x16x128xf32>
      %55 = arith.mulf %50, %54 : vector<8x16x128xf32>
      %56 = arith.addf %49, %55 : vector<8x16x128xf32>
      %57 = vector.extract_strided_slice %42 {offsets = [2, 0, 0], sizes = [8, 16, 128], strides = [1, 1, 1]} : vector<14x16x128xf32> to vector<8x16x128xf32>
      %c14 = arith.constant 14 : index
      %c0_54 = arith.constant 0 : index
      %58 = vector.load %arg3[%c14, %c0_54] : memref<49x128xf32, #tpu.memory_space<vmem>>, vector<1x128xf32>
      %59 = vector.shape_cast %58 : vector<1x128xf32> to vector<128xf32>
      %60 = vector.shape_cast %59 : vector<128xf32> to vector<1x1x128xf32>
      %61 = vector.broadcast %60 : vector<1x1x128xf32> to vector<8x16x128xf32>
      %62 = arith.mulf %57, %61 : vector<8x16x128xf32>
      %63 = arith.addf %56, %62 : vector<8x16x128xf32>
      %64 = vector.extract_strided_slice %42 {offsets = [3, 0, 0], sizes = [8, 16, 128], strides = [1, 1, 1]} : vector<14x16x128xf32> to vector<8x16x128xf32>
      %c21 = arith.constant 21 : index
      %c0_55 = arith.constant 0 : index
      %65 = vector.load %arg3[%c21, %c0_55] : memref<49x128xf32, #tpu.memory_space<vmem>>, vector<1x128xf32>
      %66 = vector.shape_cast %65 : vector<1x128xf32> to vector<128xf32>
      %67 = vector.shape_cast %66 : vector<128xf32> to vector<1x1x128xf32>
      %68 = vector.broadcast %67 : vector<1x1x128xf32> to vector<8x16x128xf32>
      %69 = arith.mulf %64, %68 : vector<8x16x128xf32>
      %70 = arith.addf %63, %69 : vector<8x16x128xf32>
      %71 = vector.extract_strided_slice %42 {offsets = [4, 0, 0], sizes = [8, 16, 128], strides = [1, 1, 1]} : vector<14x16x128xf32> to vector<8x16x128xf32>
      %c28 = arith.constant 28 : index
      %c0_56 = arith.constant 0 : index
      %72 = vector.load %arg3[%c28, %c0_56] : memref<49x128xf32, #tpu.memory_space<vmem>>, vector<1x128xf32>
      %73 = vector.shape_cast %72 : vector<1x128xf32> to vector<128xf32>
      %74 = vector.shape_cast %73 : vector<128xf32> to vector<1x1x128xf32>
      %75 = vector.broadcast %74 : vector<1x1x128xf32> to vector<8x16x128xf32>
      %76 = arith.mulf %71, %75 : vector<8x16x128xf32>
      %77 = arith.addf %70, %76 : vector<8x16x128xf32>
      %78 = vector.extract_strided_slice %42 {offsets = [5, 0, 0], sizes = [8, 16, 128], strides = [1, 1, 1]} : vector<14x16x128xf32> to vector<8x16x128xf32>
      %c35 = arith.constant 35 : index
      %c0_57 = arith.constant 0 : index
      %79 = vector.load %arg3[%c35, %c0_57] : memref<49x128xf32, #tpu.memory_space<vmem>>, vector<1x128xf32>
      %80 = vector.shape_cast %79 : vector<1x128xf32> to vector<128xf32>
      %81 = vector.shape_cast %80 : vector<128xf32> to vector<1x1x128xf32>
      %82 = vector.broadcast %81 : vector<1x1x128xf32> to vector<8x16x128xf32>
      %83 = arith.mulf %78, %82 : vector<8x16x128xf32>
      %84 = arith.addf %77, %83 : vector<8x16x128xf32>
      %85 = vector.extract_strided_slice %42 {offsets = [6, 0, 0], sizes = [8, 16, 128], strides = [1, 1, 1]} : vector<14x16x128xf32> to vector<8x16x128xf32>
      %c42 = arith.constant 42 : index
      %c0_58 = arith.constant 0 : index
      %86 = vector.load %arg3[%c42, %c0_58] : memref<49x128xf32, #tpu.memory_space<vmem>>, vector<1x128xf32>
      %87 = vector.shape_cast %86 : vector<1x128xf32> to vector<128xf32>
      %88 = vector.shape_cast %87 : vector<128xf32> to vector<1x1x128xf32>
      %89 = vector.broadcast %88 : vector<1x1x128xf32> to vector<8x16x128xf32>
      %90 = arith.mulf %85, %89 : vector<8x16x128xf32>
      %91 = arith.addf %84, %90 : vector<8x16x128xf32>
      %c9_i32_59 = arith.constant 9 : i32
      %92 = arith.addi %37, %c9_i32_59 : i32
      %c3_i32_60 = arith.constant 3 : i32
      %93 = arith.subi %92, %c3_i32_60 : i32
      %94 = arith.index_cast %93 : i32 to index
      %c14_61 = arith.constant 14 : index
      %c0_62 = arith.constant 0 : index
      %95 = vector.load %arg17[%94, %c14_61, %c0_62] : memref<34x48x128xf32, #tpu.memory_space<vmem>>, vector<14x16x128xf32>
      %96 = vector.extract_strided_slice %95 {offsets = [0, 0, 0], sizes = [8, 16, 128], strides = [1, 1, 1]} : vector<14x16x128xf32> to vector<8x16x128xf32>
      %c1_63 = arith.constant 1 : index
      %c0_64 = arith.constant 0 : index
      %97 = vector.load %arg3[%c1_63, %c0_64] : memref<49x128xf32, #tpu.memory_space<vmem>>, vector<1x128xf32>
      %98 = vector.shape_cast %97 : vector<1x128xf32> to vector<128xf32>
      %99 = vector.shape_cast %98 : vector<128xf32> to vector<1x1x128xf32>
      %100 = vector.broadcast %99 : vector<1x1x128xf32> to vector<8x16x128xf32>
      %101 = arith.mulf %96, %100 : vector<8x16x128xf32>
      %102 = arith.addf %91, %101 : vector<8x16x128xf32>
      %103 = vector.extract_strided_slice %95 {offsets = [1, 0, 0], sizes = [8, 16, 128], strides = [1, 1, 1]} : vector<14x16x128xf32> to vector<8x16x128xf32>
      %c8_65 = arith.constant 8 : index
      %c0_66 = arith.constant 0 : index
      %104 = vector.load %arg3[%c8_65, %c0_66] : memref<49x128xf32, #tpu.memory_space<vmem>>, vector<1x128xf32>
      %105 = vector.shape_cast %104 : vector<1x128xf32> to vector<128xf32>
      %106 = vector.shape_cast %105 : vector<128xf32> to vector<1x1x128xf32>
      %107 = vector.broadcast %106 : vector<1x1x128xf32> to vector<8x16x128xf32>
      %108 = arith.mulf %103, %107 : vector<8x16x128xf32>
      %109 = arith.addf %102, %108 : vector<8x16x128xf32>
      %110 = vector.extract_strided_slice %95 {offsets = [2, 0, 0], sizes = [8, 16, 128], strides = [1, 1, 1]} : vector<14x16x128xf32> to vector<8x16x128xf32>
      %c15 = arith.constant 15 : index
      %c0_67 = arith.constant 0 : index
      %111 = vector.load %arg3[%c15, %c0_67] : memref<49x128xf32, #tpu.memory_space<vmem>>, vector<1x128xf32>
      %112 = vector.shape_cast %111 : vector<1x128xf32> to vector<128xf32>
      %113 = vector.shape_cast %112 : vector<128xf32> to vector<1x1x128xf32>
      %114 = vector.broadcast %113 : vector<1x1x128xf32> to vector<8x16x128xf32>
      %115 = arith.mulf %110, %114 : vector<8x16x128xf32>
      %116 = arith.addf %109, %115 : vector<8x16x128xf32>
      %117 = vector.extract_strided_slice %95 {offsets = [3, 0, 0], sizes = [8, 16, 128], strides = [1, 1, 1]} : vector<14x16x128xf32> to vector<8x16x128xf32>
      %c22 = arith.constant 22 : index
      %c0_68 = arith.constant 0 : index
      %118 = vector.load %arg3[%c22, %c0_68] : memref<49x128xf32, #tpu.memory_space<vmem>>, vector<1x128xf32>
      %119 = vector.shape_cast %118 : vector<1x128xf32> to vector<128xf32>
      %120 = vector.shape_cast %119 : vector<128xf32> to vector<1x1x128xf32>
      %121 = vector.broadcast %120 : vector<1x1x128xf32> to vector<8x16x128xf32>
      %122 = arith.mulf %117, %121 : vector<8x16x128xf32>
      %123 = arith.addf %116, %122 : vector<8x16x128xf32>
      %124 = vector.extract_strided_slice %95 {offsets = [4, 0, 0], sizes = [8, 16, 128], strides = [1, 1, 1]} : vector<14x16x128xf32> to vector<8x16x128xf32>
      %c29 = arith.constant 29 : index
      %c0_69 = arith.constant 0 : index
      %125 = vector.load %arg3[%c29, %c0_69] : memref<49x128xf32, #tpu.memory_space<vmem>>, vector<1x128xf32>
      %126 = vector.shape_cast %125 : vector<1x128xf32> to vector<128xf32>
      %127 = vector.shape_cast %126 : vector<128xf32> to vector<1x1x128xf32>
      %128 = vector.broadcast %127 : vector<1x1x128xf32> to vector<8x16x128xf32>
      %129 = arith.mulf %124, %128 : vector<8x16x128xf32>
      %130 = arith.addf %123, %129 : vector<8x16x128xf32>
      %131 = vector.extract_strided_slice %95 {offsets = [5, 0, 0], sizes = [8, 16, 128], strides = [1, 1, 1]} : vector<14x16x128xf32> to vector<8x16x128xf32>
      %c36 = arith.constant 36 : index
      %c0_70 = arith.constant 0 : index
      %132 = vector.load %arg3[%c36, %c0_70] : memref<49x128xf32, #tpu.memory_space<vmem>>, vector<1x128xf32>
      %133 = vector.shape_cast %132 : vector<1x128xf32> to vector<128xf32>
      %134 = vector.shape_cast %133 : vector<128xf32> to vector<1x1x128xf32>
      %135 = vector.broadcast %134 : vector<1x1x128xf32> to vector<8x16x128xf32>
      %136 = arith.mulf %131, %135 : vector<8x16x128xf32>
      %137 = arith.addf %130, %136 : vector<8x16x128xf32>
      %138 = vector.extract_strided_slice %95 {offsets = [6, 0, 0], sizes = [8, 16, 128], strides = [1, 1, 1]} : vector<14x16x128xf32> to vector<8x16x128xf32>
      %c43 = arith.constant 43 : index
      %c0_71 = arith.constant 0 : index
      %139 = vector.load %arg3[%c43, %c0_71] : memref<49x128xf32, #tpu.memory_space<vmem>>, vector<1x128xf32>
      %140 = vector.shape_cast %139 : vector<1x128xf32> to vector<128xf32>
      %141 = vector.shape_cast %140 : vector<128xf32> to vector<1x1x128xf32>
      %142 = vector.broadcast %141 : vector<1x1x128xf32> to vector<8x16x128xf32>
      %143 = arith.mulf %138, %142 : vector<8x16x128xf32>
      %144 = arith.addf %137, %143 : vector<8x16x128xf32>
      %c9_i32_72 = arith.constant 9 : i32
      %145 = arith.addi %37, %c9_i32_72 : i32
      %c3_i32_73 = arith.constant 3 : i32
      %146 = arith.subi %145, %c3_i32_73 : i32
      %147 = arith.index_cast %146 : i32 to index
      %c15_74 = arith.constant 15 : index
      %c0_75 = arith.constant 0 : index
      %148 = vector.load %arg17[%147, %c15_74, %c0_75] : memref<34x48x128xf32, #tpu.memory_space<vmem>>, vector<14x16x128xf32>
      %149 = vector.extract_strided_slice %148 {offsets = [0, 0, 0], sizes = [8, 16, 128], strides = [1, 1, 1]} : vector<14x16x128xf32> to vector<8x16x128xf32>
      %c2 = arith.constant 2 : index
      %c0_76 = arith.constant 0 : index
      %150 = vector.load %arg3[%c2, %c0_76] : memref<49x128xf32, #tpu.memory_space<vmem>>, vector<1x128xf32>
      %151 = vector.shape_cast %150 : vector<1x128xf32> to vector<128xf32>
      %152 = vector.shape_cast %151 : vector<128xf32> to vector<1x1x128xf32>
      %153 = vector.broadcast %152 : vector<1x1x128xf32> to vector<8x16x128xf32>
      %154 = arith.mulf %149, %153 : vector<8x16x128xf32>
      %155 = arith.addf %144, %154 : vector<8x16x128xf32>
      %156 = vector.extract_strided_slice %148 {offsets = [1, 0, 0], sizes = [8, 16, 128], strides = [1, 1, 1]} : vector<14x16x128xf32> to vector<8x16x128xf32>
      %c9_77 = arith.constant 9 : index
      %c0_78 = arith.constant 0 : index
      %157 = vector.load %arg3[%c9_77, %c0_78] : memref<49x128xf32, #tpu.memory_space<vmem>>, vector<1x128xf32>
      %158 = vector.shape_cast %157 : vector<1x128xf32> to vector<128xf32>
      %159 = vector.shape_cast %158 : vector<128xf32> to vector<1x1x128xf32>
      %160 = vector.broadcast %159 : vector<1x1x128xf32> to vector<8x16x128xf32>
      %161 = arith.mulf %156, %160 : vector<8x16x128xf32>
      %162 = arith.addf %155, %161 : vector<8x16x128xf32>
      %163 = vector.extract_strided_slice %148 {offsets = [2, 0, 0], sizes = [8, 16, 128], strides = [1, 1, 1]} : vector<14x16x128xf32> to vector<8x16x128xf32>
      %c16 = arith.constant 16 : index
      %c0_79 = arith.constant 0 : index
      %164 = vector.load %arg3[%c16, %c0_79] : memref<49x128xf32, #tpu.memory_space<vmem>>, vector<1x128xf32>
      %165 = vector.shape_cast %164 : vector<1x128xf32> to vector<128xf32>
      %166 = vector.shape_cast %165 : vector<128xf32> to vector<1x1x128xf32>
      %167 = vector.broadcast %166 : vector<1x1x128xf32> to vector<8x16x128xf32>
      %168 = arith.mulf %163, %167 : vector<8x16x128xf32>
      %169 = arith.addf %162, %168 : vector<8x16x128xf32>
      %170 = vector.extract_strided_slice %148 {offsets = [3, 0, 0], sizes = [8, 16, 128], strides = [1, 1, 1]} : vector<14x16x128xf32> to vector<8x16x128xf32>
      %c23 = arith.constant 23 : index
      %c0_80 = arith.constant 0 : index
      %171 = vector.load %arg3[%c23, %c0_80] : memref<49x128xf32, #tpu.memory_space<vmem>>, vector<1x128xf32>
      %172 = vector.shape_cast %171 : vector<1x128xf32> to vector<128xf32>
      %173 = vector.shape_cast %172 : vector<128xf32> to vector<1x1x128xf32>
      %174 = vector.broadcast %173 : vector<1x1x128xf32> to vector<8x16x128xf32>
      %175 = arith.mulf %170, %174 : vector<8x16x128xf32>
      %176 = arith.addf %169, %175 : vector<8x16x128xf32>
      %177 = vector.extract_strided_slice %148 {offsets = [4, 0, 0], sizes = [8, 16, 128], strides = [1, 1, 1]} : vector<14x16x128xf32> to vector<8x16x128xf32>
      %c30 = arith.constant 30 : index
      %c0_81 = arith.constant 0 : index
      %178 = vector.load %arg3[%c30, %c0_81] : memref<49x128xf32, #tpu.memory_space<vmem>>, vector<1x128xf32>
      %179 = vector.shape_cast %178 : vector<1x128xf32> to vector<128xf32>
      %180 = vector.shape_cast %179 : vector<128xf32> to vector<1x1x128xf32>
      %181 = vector.broadcast %180 : vector<1x1x128xf32> to vector<8x16x128xf32>
      %182 = arith.mulf %177, %181 : vector<8x16x128xf32>
      %183 = arith.addf %176, %182 : vector<8x16x128xf32>
      %184 = vector.extract_strided_slice %148 {offsets = [5, 0, 0], sizes = [8, 16, 128], strides = [1, 1, 1]} : vector<14x16x128xf32> to vector<8x16x128xf32>
      %c37 = arith.constant 37 : index
      %c0_82 = arith.constant 0 : index
      %185 = vector.load %arg3[%c37, %c0_82] : memref<49x128xf32, #tpu.memory_space<vmem>>, vector<1x128xf32>
      %186 = vector.shape_cast %185 : vector<1x128xf32> to vector<128xf32>
      %187 = vector.shape_cast %186 : vector<128xf32> to vector<1x1x128xf32>
      %188 = vector.broadcast %187 : vector<1x1x128xf32> to vector<8x16x128xf32>
      %189 = arith.mulf %184, %188 : vector<8x16x128xf32>
      %190 = arith.addf %183, %189 : vector<8x16x128xf32>
      %191 = vector.extract_strided_slice %148 {offsets = [6, 0, 0], sizes = [8, 16, 128], strides = [1, 1, 1]} : vector<14x16x128xf32> to vector<8x16x128xf32>
      %c44 = arith.constant 44 : index
      %c0_83 = arith.constant 0 : index
      %192 = vector.load %arg3[%c44, %c0_83] : memref<49x128xf32, #tpu.memory_space<vmem>>, vector<1x128xf32>
      %193 = vector.shape_cast %192 : vector<1x128xf32> to vector<128xf32>
      %194 = vector.shape_cast %193 : vector<128xf32> to vector<1x1x128xf32>
      %195 = vector.broadcast %194 : vector<1x1x128xf32> to vector<8x16x128xf32>
      %196 = arith.mulf %191, %195 : vector<8x16x128xf32>
      %197 = arith.addf %190, %196 : vector<8x16x128xf32>
      %c9_i32_84 = arith.constant 9 : i32
      %198 = arith.addi %37, %c9_i32_84 : i32
      %c3_i32_85 = arith.constant 3 : i32
      %199 = arith.subi %198, %c3_i32_85 : i32
      %200 = arith.index_cast %199 : i32 to index
      %c16_86 = arith.constant 16 : index
      %c0_87 = arith.constant 0 : index
      %201 = vector.load %arg17[%200, %c16_86, %c0_87] : memref<34x48x128xf32, #tpu.memory_space<vmem>>, vector<14x16x128xf32>
      %202 = vector.extract_strided_slice %201 {offsets = [0, 0, 0], sizes = [8, 16, 128], strides = [1, 1, 1]} : vector<14x16x128xf32> to vector<8x16x128xf32>
      %c3 = arith.constant 3 : index
      %c0_88 = arith.constant 0 : index
      %203 = vector.load %arg3[%c3, %c0_88] : memref<49x128xf32, #tpu.memory_space<vmem>>, vector<1x128xf32>
      %204 = vector.shape_cast %203 : vector<1x128xf32> to vector<128xf32>
      %205 = vector.shape_cast %204 : vector<128xf32> to vector<1x1x128xf32>
      %206 = vector.broadcast %205 : vector<1x1x128xf32> to vector<8x16x128xf32>
      %207 = arith.mulf %202, %206 : vector<8x16x128xf32>
      %208 = arith.addf %197, %207 : vector<8x16x128xf32>
      %209 = vector.extract_strided_slice %201 {offsets = [1, 0, 0], sizes = [8, 16, 128], strides = [1, 1, 1]} : vector<14x16x128xf32> to vector<8x16x128xf32>
      %c10 = arith.constant 10 : index
      %c0_89 = arith.constant 0 : index
      %210 = vector.load %arg3[%c10, %c0_89] : memref<49x128xf32, #tpu.memory_space<vmem>>, vector<1x128xf32>
      %211 = vector.shape_cast %210 : vector<1x128xf32> to vector<128xf32>
      %212 = vector.shape_cast %211 : vector<128xf32> to vector<1x1x128xf32>
      %213 = vector.broadcast %212 : vector<1x1x128xf32> to vector<8x16x128xf32>
      %214 = arith.mulf %209, %213 : vector<8x16x128xf32>
      %215 = arith.addf %208, %214 : vector<8x16x128xf32>
      %216 = vector.extract_strided_slice %201 {offsets = [2, 0, 0], sizes = [8, 16, 128], strides = [1, 1, 1]} : vector<14x16x128xf32> to vector<8x16x128xf32>
      %c17_90 = arith.constant 17 : index
      %c0_91 = arith.constant 0 : index
      %217 = vector.load %arg3[%c17_90, %c0_91] : memref<49x128xf32, #tpu.memory_space<vmem>>, vector<1x128xf32>
      %218 = vector.shape_cast %217 : vector<1x128xf32> to vector<128xf32>
      %219 = vector.shape_cast %218 : vector<128xf32> to vector<1x1x128xf32>
      %220 = vector.broadcast %219 : vector<1x1x128xf32> to vector<8x16x128xf32>
      %221 = arith.mulf %216, %220 : vector<8x16x128xf32>
      %222 = arith.addf %215, %221 : vector<8x16x128xf32>
      %223 = vector.extract_strided_slice %201 {offsets = [3, 0, 0], sizes = [8, 16, 128], strides = [1, 1, 1]} : vector<14x16x128xf32> to vector<8x16x128xf32>
      %c24_92 = arith.constant 24 : index
      %c0_93 = arith.constant 0 : index
      %224 = vector.load %arg3[%c24_92, %c0_93] : memref<49x128xf32, #tpu.memory_space<vmem>>, vector<1x128xf32>
      %225 = vector.shape_cast %224 : vector<1x128xf32> to vector<128xf32>
      %226 = vector.shape_cast %225 : vector<128xf32> to vector<1x1x128xf32>
      %227 = vector.broadcast %226 : vector<1x1x128xf32> to vector<8x16x128xf32>
      %228 = arith.mulf %223, %227 : vector<8x16x128xf32>
      %229 = arith.addf %222, %228 : vector<8x16x128xf32>
      %230 = vector.extract_strided_slice %201 {offsets = [4, 0, 0], sizes = [8, 16, 128], strides = [1, 1, 1]} : vector<14x16x128xf32> to vector<8x16x128xf32>
      %c31 = arith.constant 31 : index
      %c0_94 = arith.constant 0 : index
      %231 = vector.load %arg3[%c31, %c0_94] : memref<49x128xf32, #tpu.memory_space<vmem>>, vector<1x128xf32>
      %232 = vector.shape_cast %231 : vector<1x128xf32> to vector<128xf32>
      %233 = vector.shape_cast %232 : vector<128xf32> to vector<1x1x128xf32>
      %234 = vector.broadcast %233 : vector<1x1x128xf32> to vector<8x16x128xf32>
      %235 = arith.mulf %230, %234 : vector<8x16x128xf32>
      %236 = arith.addf %229, %235 : vector<8x16x128xf32>
      %237 = vector.extract_strided_slice %201 {offsets = [5, 0, 0], sizes = [8, 16, 128], strides = [1, 1, 1]} : vector<14x16x128xf32> to vector<8x16x128xf32>
      %c38 = arith.constant 38 : index
      %c0_95 = arith.constant 0 : index
      %238 = vector.load %arg3[%c38, %c0_95] : memref<49x128xf32, #tpu.memory_space<vmem>>, vector<1x128xf32>
      %239 = vector.shape_cast %238 : vector<1x128xf32> to vector<128xf32>
      %240 = vector.shape_cast %239 : vector<128xf32> to vector<1x1x128xf32>
      %241 = vector.broadcast %240 : vector<1x1x128xf32> to vector<8x16x128xf32>
      %242 = arith.mulf %237, %241 : vector<8x16x128xf32>
      %243 = arith.addf %236, %242 : vector<8x16x128xf32>
      %244 = vector.extract_strided_slice %201 {offsets = [6, 0, 0], sizes = [8, 16, 128], strides = [1, 1, 1]} : vector<14x16x128xf32> to vector<8x16x128xf32>
      %c45 = arith.constant 45 : index
      %c0_96 = arith.constant 0 : index
      %245 = vector.load %arg3[%c45, %c0_96] : memref<49x128xf32, #tpu.memory_space<vmem>>, vector<1x128xf32>
      %246 = vector.shape_cast %245 : vector<1x128xf32> to vector<128xf32>
      %247 = vector.shape_cast %246 : vector<128xf32> to vector<1x1x128xf32>
      %248 = vector.broadcast %247 : vector<1x1x128xf32> to vector<8x16x128xf32>
      %249 = arith.mulf %244, %248 : vector<8x16x128xf32>
      %250 = arith.addf %243, %249 : vector<8x16x128xf32>
      %c9_i32_97 = arith.constant 9 : i32
      %251 = arith.addi %37, %c9_i32_97 : i32
      %c3_i32_98 = arith.constant 3 : i32
      %252 = arith.subi %251, %c3_i32_98 : i32
      %253 = arith.index_cast %252 : i32 to index
      %c17_99 = arith.constant 17 : index
      %c0_100 = arith.constant 0 : index
      %254 = vector.load %arg17[%253, %c17_99, %c0_100] : memref<34x48x128xf32, #tpu.memory_space<vmem>>, vector<14x16x128xf32>
      %255 = vector.extract_strided_slice %254 {offsets = [0, 0, 0], sizes = [8, 16, 128], strides = [1, 1, 1]} : vector<14x16x128xf32> to vector<8x16x128xf32>
      %c4 = arith.constant 4 : index
      %c0_101 = arith.constant 0 : index
      %256 = vector.load %arg3[%c4, %c0_101] : memref<49x128xf32, #tpu.memory_space<vmem>>, vector<1x128xf32>
      %257 = vector.shape_cast %256 : vector<1x128xf32> to vector<128xf32>
      %258 = vector.shape_cast %257 : vector<128xf32> to vector<1x1x128xf32>
      %259 = vector.broadcast %258 : vector<1x1x128xf32> to vector<8x16x128xf32>
      %260 = arith.mulf %255, %259 : vector<8x16x128xf32>
      %261 = arith.addf %250, %260 : vector<8x16x128xf32>
      %262 = vector.extract_strided_slice %254 {offsets = [1, 0, 0], sizes = [8, 16, 128], strides = [1, 1, 1]} : vector<14x16x128xf32> to vector<8x16x128xf32>
      %c11 = arith.constant 11 : index
      %c0_102 = arith.constant 0 : index
      %263 = vector.load %arg3[%c11, %c0_102] : memref<49x128xf32, #tpu.memory_space<vmem>>, vector<1x128xf32>
      %264 = vector.shape_cast %263 : vector<1x128xf32> to vector<128xf32>
      %265 = vector.shape_cast %264 : vector<128xf32> to vector<1x1x128xf32>
      %266 = vector.broadcast %265 : vector<1x1x128xf32> to vector<8x16x128xf32>
      %267 = arith.mulf %262, %266 : vector<8x16x128xf32>
      %268 = arith.addf %261, %267 : vector<8x16x128xf32>
      %269 = vector.extract_strided_slice %254 {offsets = [2, 0, 0], sizes = [8, 16, 128], strides = [1, 1, 1]} : vector<14x16x128xf32> to vector<8x16x128xf32>
      %c18 = arith.constant 18 : index
      %c0_103 = arith.constant 0 : index
      %270 = vector.load %arg3[%c18, %c0_103] : memref<49x128xf32, #tpu.memory_space<vmem>>, vector<1x128xf32>
      %271 = vector.shape_cast %270 : vector<1x128xf32> to vector<128xf32>
      %272 = vector.shape_cast %271 : vector<128xf32> to vector<1x1x128xf32>
      %273 = vector.broadcast %272 : vector<1x1x128xf32> to vector<8x16x128xf32>
      %274 = arith.mulf %269, %273 : vector<8x16x128xf32>
      %275 = arith.addf %268, %274 : vector<8x16x128xf32>
      %276 = vector.extract_strided_slice %254 {offsets = [3, 0, 0], sizes = [8, 16, 128], strides = [1, 1, 1]} : vector<14x16x128xf32> to vector<8x16x128xf32>
      %c25_104 = arith.constant 25 : index
      %c0_105 = arith.constant 0 : index
      %277 = vector.load %arg3[%c25_104, %c0_105] : memref<49x128xf32, #tpu.memory_space<vmem>>, vector<1x128xf32>
      %278 = vector.shape_cast %277 : vector<1x128xf32> to vector<128xf32>
      %279 = vector.shape_cast %278 : vector<128xf32> to vector<1x1x128xf32>
      %280 = vector.broadcast %279 : vector<1x1x128xf32> to vector<8x16x128xf32>
      %281 = arith.mulf %276, %280 : vector<8x16x128xf32>
      %282 = arith.addf %275, %281 : vector<8x16x128xf32>
      %283 = vector.extract_strided_slice %254 {offsets = [4, 0, 0], sizes = [8, 16, 128], strides = [1, 1, 1]} : vector<14x16x128xf32> to vector<8x16x128xf32>
      %c32_106 = arith.constant 32 : index
      %c0_107 = arith.constant 0 : index
      %284 = vector.load %arg3[%c32_106, %c0_107] : memref<49x128xf32, #tpu.memory_space<vmem>>, vector<1x128xf32>
      %285 = vector.shape_cast %284 : vector<1x128xf32> to vector<128xf32>
      %286 = vector.shape_cast %285 : vector<128xf32> to vector<1x1x128xf32>
      %287 = vector.broadcast %286 : vector<1x1x128xf32> to vector<8x16x128xf32>
      %288 = arith.mulf %283, %287 : vector<8x16x128xf32>
      %289 = arith.addf %282, %288 : vector<8x16x128xf32>
      %290 = vector.extract_strided_slice %254 {offsets = [5, 0, 0], sizes = [8, 16, 128], strides = [1, 1, 1]} : vector<14x16x128xf32> to vector<8x16x128xf32>
      %c39 = arith.constant 39 : index
      %c0_108 = arith.constant 0 : index
      %291 = vector.load %arg3[%c39, %c0_108] : memref<49x128xf32, #tpu.memory_space<vmem>>, vector<1x128xf32>
      %292 = vector.shape_cast %291 : vector<1x128xf32> to vector<128xf32>
      %293 = vector.shape_cast %292 : vector<128xf32> to vector<1x1x128xf32>
      %294 = vector.broadcast %293 : vector<1x1x128xf32> to vector<8x16x128xf32>
      %295 = arith.mulf %290, %294 : vector<8x16x128xf32>
      %296 = arith.addf %289, %295 : vector<8x16x128xf32>
      %297 = vector.extract_strided_slice %254 {offsets = [6, 0, 0], sizes = [8, 16, 128], strides = [1, 1, 1]} : vector<14x16x128xf32> to vector<8x16x128xf32>
      %c46 = arith.constant 46 : index
      %c0_109 = arith.constant 0 : index
      %298 = vector.load %arg3[%c46, %c0_109] : memref<49x128xf32, #tpu.memory_space<vmem>>, vector<1x128xf32>
      %299 = vector.shape_cast %298 : vector<1x128xf32> to vector<128xf32>
      %300 = vector.shape_cast %299 : vector<128xf32> to vector<1x1x128xf32>
      %301 = vector.broadcast %300 : vector<1x1x128xf32> to vector<8x16x128xf32>
      %302 = arith.mulf %297, %301 : vector<8x16x128xf32>
      %303 = arith.addf %296, %302 : vector<8x16x128xf32>
      %c9_i32_110 = arith.constant 9 : i32
      %304 = arith.addi %37, %c9_i32_110 : i32
      %c3_i32_111 = arith.constant 3 : i32
      %305 = arith.subi %304, %c3_i32_111 : i32
      %306 = arith.index_cast %305 : i32 to index
      %c18_112 = arith.constant 18 : index
      %c0_113 = arith.constant 0 : index
      %307 = vector.load %arg17[%306, %c18_112, %c0_113] : memref<34x48x128xf32, #tpu.memory_space<vmem>>, vector<14x16x128xf32>
      %308 = vector.extract_strided_slice %307 {offsets = [0, 0, 0], sizes = [8, 16, 128], strides = [1, 1, 1]} : vector<14x16x128xf32> to vector<8x16x128xf32>
      %c5 = arith.constant 5 : index
      %c0_114 = arith.constant 0 : index
      %309 = vector.load %arg3[%c5, %c0_114] : memref<49x128xf32, #tpu.memory_space<vmem>>, vector<1x128xf32>
      %310 = vector.shape_cast %309 : vector<1x128xf32> to vector<128xf32>
      %311 = vector.shape_cast %310 : vector<128xf32> to vector<1x1x128xf32>
      %312 = vector.broadcast %311 : vector<1x1x128xf32> to vector<8x16x128xf32>
      %313 = arith.mulf %308, %312 : vector<8x16x128xf32>
      %314 = arith.addf %303, %313 : vector<8x16x128xf32>
      %315 = vector.extract_strided_slice %307 {offsets = [1, 0, 0], sizes = [8, 16, 128], strides = [1, 1, 1]} : vector<14x16x128xf32> to vector<8x16x128xf32>
      %c12 = arith.constant 12 : index
      %c0_115 = arith.constant 0 : index
      %316 = vector.load %arg3[%c12, %c0_115] : memref<49x128xf32, #tpu.memory_space<vmem>>, vector<1x128xf32>
      %317 = vector.shape_cast %316 : vector<1x128xf32> to vector<128xf32>
      %318 = vector.shape_cast %317 : vector<128xf32> to vector<1x1x128xf32>
      %319 = vector.broadcast %318 : vector<1x1x128xf32> to vector<8x16x128xf32>
      %320 = arith.mulf %315, %319 : vector<8x16x128xf32>
      %321 = arith.addf %314, %320 : vector<8x16x128xf32>
      %322 = vector.extract_strided_slice %307 {offsets = [2, 0, 0], sizes = [8, 16, 128], strides = [1, 1, 1]} : vector<14x16x128xf32> to vector<8x16x128xf32>
      %c19 = arith.constant 19 : index
      %c0_116 = arith.constant 0 : index
      %323 = vector.load %arg3[%c19, %c0_116] : memref<49x128xf32, #tpu.memory_space<vmem>>, vector<1x128xf32>
      %324 = vector.shape_cast %323 : vector<1x128xf32> to vector<128xf32>
      %325 = vector.shape_cast %324 : vector<128xf32> to vector<1x1x128xf32>
      %326 = vector.broadcast %325 : vector<1x1x128xf32> to vector<8x16x128xf32>
      %327 = arith.mulf %322, %326 : vector<8x16x128xf32>
      %328 = arith.addf %321, %327 : vector<8x16x128xf32>
      %329 = vector.extract_strided_slice %307 {offsets = [3, 0, 0], sizes = [8, 16, 128], strides = [1, 1, 1]} : vector<14x16x128xf32> to vector<8x16x128xf32>
      %c26 = arith.constant 26 : index
      %c0_117 = arith.constant 0 : index
      %330 = vector.load %arg3[%c26, %c0_117] : memref<49x128xf32, #tpu.memory_space<vmem>>, vector<1x128xf32>
      %331 = vector.shape_cast %330 : vector<1x128xf32> to vector<128xf32>
      %332 = vector.shape_cast %331 : vector<128xf32> to vector<1x1x128xf32>
      %333 = vector.broadcast %332 : vector<1x1x128xf32> to vector<8x16x128xf32>
      %334 = arith.mulf %329, %333 : vector<8x16x128xf32>
      %335 = arith.addf %328, %334 : vector<8x16x128xf32>
      %336 = vector.extract_strided_slice %307 {offsets = [4, 0, 0], sizes = [8, 16, 128], strides = [1, 1, 1]} : vector<14x16x128xf32> to vector<8x16x128xf32>
      %c33 = arith.constant 33 : index
      %c0_118 = arith.constant 0 : index
      %337 = vector.load %arg3[%c33, %c0_118] : memref<49x128xf32, #tpu.memory_space<vmem>>, vector<1x128xf32>
      %338 = vector.shape_cast %337 : vector<1x128xf32> to vector<128xf32>
      %339 = vector.shape_cast %338 : vector<128xf32> to vector<1x1x128xf32>
      %340 = vector.broadcast %339 : vector<1x1x128xf32> to vector<8x16x128xf32>
      %341 = arith.mulf %336, %340 : vector<8x16x128xf32>
      %342 = arith.addf %335, %341 : vector<8x16x128xf32>
      %343 = vector.extract_strided_slice %307 {offsets = [5, 0, 0], sizes = [8, 16, 128], strides = [1, 1, 1]} : vector<14x16x128xf32> to vector<8x16x128xf32>
      %c40 = arith.constant 40 : index
      %c0_119 = arith.constant 0 : index
      %344 = vector.load %arg3[%c40, %c0_119] : memref<49x128xf32, #tpu.memory_space<vmem>>, vector<1x128xf32>
      %345 = vector.shape_cast %344 : vector<1x128xf32> to vector<128xf32>
      %346 = vector.shape_cast %345 : vector<128xf32> to vector<1x1x128xf32>
      %347 = vector.broadcast %346 : vector<1x1x128xf32> to vector<8x16x128xf32>
      %348 = arith.mulf %343, %347 : vector<8x16x128xf32>
      %349 = arith.addf %342, %348 : vector<8x16x128xf32>
      %350 = vector.extract_strided_slice %307 {offsets = [6, 0, 0], sizes = [8, 16, 128], strides = [1, 1, 1]} : vector<14x16x128xf32> to vector<8x16x128xf32>
      %c47 = arith.constant 47 : index
      %c0_120 = arith.constant 0 : index
      %351 = vector.load %arg3[%c47, %c0_120] : memref<49x128xf32, #tpu.memory_space<vmem>>, vector<1x128xf32>
      %352 = vector.shape_cast %351 : vector<1x128xf32> to vector<128xf32>
      %353 = vector.shape_cast %352 : vector<128xf32> to vector<1x1x128xf32>
      %354 = vector.broadcast %353 : vector<1x1x128xf32> to vector<8x16x128xf32>
      %355 = arith.mulf %350, %354 : vector<8x16x128xf32>
      %356 = arith.addf %349, %355 : vector<8x16x128xf32>
      %c9_i32_121 = arith.constant 9 : i32
      %357 = arith.addi %37, %c9_i32_121 : i32
      %c3_i32_122 = arith.constant 3 : i32
      %358 = arith.subi %357, %c3_i32_122 : i32
      %359 = arith.index_cast %358 : i32 to index
      %c19_123 = arith.constant 19 : index
      %c0_124 = arith.constant 0 : index
      %360 = vector.load %arg17[%359, %c19_123, %c0_124] : memref<34x48x128xf32, #tpu.memory_space<vmem>>, vector<14x16x128xf32>
      %361 = vector.extract_strided_slice %360 {offsets = [0, 0, 0], sizes = [8, 16, 128], strides = [1, 1, 1]} : vector<14x16x128xf32> to vector<8x16x128xf32>
      %c6 = arith.constant 6 : index
      %c0_125 = arith.constant 0 : index
      %362 = vector.load %arg3[%c6, %c0_125] : memref<49x128xf32, #tpu.memory_space<vmem>>, vector<1x128xf32>
      %363 = vector.shape_cast %362 : vector<1x128xf32> to vector<128xf32>
      %364 = vector.shape_cast %363 : vector<128xf32> to vector<1x1x128xf32>
      %365 = vector.broadcast %364 : vector<1x1x128xf32> to vector<8x16x128xf32>
      %366 = arith.mulf %361, %365 : vector<8x16x128xf32>
      %367 = arith.addf %356, %366 : vector<8x16x128xf32>
      %368 = vector.extract_strided_slice %360 {offsets = [1, 0, 0], sizes = [8, 16, 128], strides = [1, 1, 1]} : vector<14x16x128xf32> to vector<8x16x128xf32>
      %c13_126 = arith.constant 13 : index
      %c0_127 = arith.constant 0 : index
      %369 = vector.load %arg3[%c13_126, %c0_127] : memref<49x128xf32, #tpu.memory_space<vmem>>, vector<1x128xf32>
      %370 = vector.shape_cast %369 : vector<1x128xf32> to vector<128xf32>
      %371 = vector.shape_cast %370 : vector<128xf32> to vector<1x1x128xf32>
      %372 = vector.broadcast %371 : vector<1x1x128xf32> to vector<8x16x128xf32>
      %373 = arith.mulf %368, %372 : vector<8x16x128xf32>
      %374 = arith.addf %367, %373 : vector<8x16x128xf32>
      %375 = vector.extract_strided_slice %360 {offsets = [2, 0, 0], sizes = [8, 16, 128], strides = [1, 1, 1]} : vector<14x16x128xf32> to vector<8x16x128xf32>
      %c20 = arith.constant 20 : index
      %c0_128 = arith.constant 0 : index
      %376 = vector.load %arg3[%c20, %c0_128] : memref<49x128xf32, #tpu.memory_space<vmem>>, vector<1x128xf32>
      %377 = vector.shape_cast %376 : vector<1x128xf32> to vector<128xf32>
      %378 = vector.shape_cast %377 : vector<128xf32> to vector<1x1x128xf32>
      %379 = vector.broadcast %378 : vector<1x1x128xf32> to vector<8x16x128xf32>
      %380 = arith.mulf %375, %379 : vector<8x16x128xf32>
      %381 = arith.addf %374, %380 : vector<8x16x128xf32>
      %382 = vector.extract_strided_slice %360 {offsets = [3, 0, 0], sizes = [8, 16, 128], strides = [1, 1, 1]} : vector<14x16x128xf32> to vector<8x16x128xf32>
      %c27 = arith.constant 27 : index
      %c0_129 = arith.constant 0 : index
      %383 = vector.load %arg3[%c27, %c0_129] : memref<49x128xf32, #tpu.memory_space<vmem>>, vector<1x128xf32>
      %384 = vector.shape_cast %383 : vector<1x128xf32> to vector<128xf32>
      %385 = vector.shape_cast %384 : vector<128xf32> to vector<1x1x128xf32>
      %386 = vector.broadcast %385 : vector<1x1x128xf32> to vector<8x16x128xf32>
      %387 = arith.mulf %382, %386 : vector<8x16x128xf32>
      %388 = arith.addf %381, %387 : vector<8x16x128xf32>
      %389 = vector.extract_strided_slice %360 {offsets = [4, 0, 0], sizes = [8, 16, 128], strides = [1, 1, 1]} : vector<14x16x128xf32> to vector<8x16x128xf32>
      %c34 = arith.constant 34 : index
      %c0_130 = arith.constant 0 : index
      %390 = vector.load %arg3[%c34, %c0_130] : memref<49x128xf32, #tpu.memory_space<vmem>>, vector<1x128xf32>
      %391 = vector.shape_cast %390 : vector<1x128xf32> to vector<128xf32>
      %392 = vector.shape_cast %391 : vector<128xf32> to vector<1x1x128xf32>
      %393 = vector.broadcast %392 : vector<1x1x128xf32> to vector<8x16x128xf32>
      %394 = arith.mulf %389, %393 : vector<8x16x128xf32>
      %395 = arith.addf %388, %394 : vector<8x16x128xf32>
      %396 = vector.extract_strided_slice %360 {offsets = [5, 0, 0], sizes = [8, 16, 128], strides = [1, 1, 1]} : vector<14x16x128xf32> to vector<8x16x128xf32>
      %c41 = arith.constant 41 : index
      %c0_131 = arith.constant 0 : index
      %397 = vector.load %arg3[%c41, %c0_131] : memref<49x128xf32, #tpu.memory_space<vmem>>, vector<1x128xf32>
      %398 = vector.shape_cast %397 : vector<1x128xf32> to vector<128xf32>
      %399 = vector.shape_cast %398 : vector<128xf32> to vector<1x1x128xf32>
      %400 = vector.broadcast %399 : vector<1x1x128xf32> to vector<8x16x128xf32>
      %401 = arith.mulf %396, %400 : vector<8x16x128xf32>
      %402 = arith.addf %395, %401 : vector<8x16x128xf32>
      %403 = vector.extract_strided_slice %360 {offsets = [6, 0, 0], sizes = [8, 16, 128], strides = [1, 1, 1]} : vector<14x16x128xf32> to vector<8x16x128xf32>
      %c48 = arith.constant 48 : index
      %c0_132 = arith.constant 0 : index
      %404 = vector.load %arg3[%c48, %c0_132] : memref<49x128xf32, #tpu.memory_space<vmem>>, vector<1x128xf32>
      %405 = vector.shape_cast %404 : vector<1x128xf32> to vector<128xf32>
      %406 = vector.shape_cast %405 : vector<128xf32> to vector<1x1x128xf32>
      %407 = vector.broadcast %406 : vector<1x1x128xf32> to vector<8x16x128xf32>
      %408 = arith.mulf %403, %407 : vector<8x16x128xf32>
      %409 = arith.addf %402, %408 : vector<8x16x128xf32>
      %c0_i32_133 = arith.constant 0 : i32
      %410 = arith.addi %37, %c0_i32_133 : i32
      %411 = arith.index_cast %410 : i32 to index
      %c7_134 = arith.constant 7 : index
      %c0_135 = arith.constant 0 : index
      %412 = vector.load %arg17[%411, %c7_134, %c0_135] : memref<34x48x128xf32, #tpu.memory_space<vmem>>, vector<14x16x128xf32>
      %413 = vector.extract_strided_slice %412 {offsets = [0, 0, 0], sizes = [8, 16, 128], strides = [1, 1, 1]} : vector<14x16x128xf32> to vector<8x16x128xf32>
      %c0_136 = arith.constant 0 : index
      %c0_137 = arith.constant 0 : index
      %414 = vector.load %arg4[%c0_136, %c0_137] : memref<49x128xf32, #tpu.memory_space<vmem>>, vector<1x128xf32>
      %415 = vector.shape_cast %414 : vector<1x128xf32> to vector<128xf32>
      %416 = vector.shape_cast %415 : vector<128xf32> to vector<1x1x128xf32>
      %417 = vector.broadcast %416 : vector<1x1x128xf32> to vector<8x16x128xf32>
      %418 = arith.mulf %413, %417 : vector<8x16x128xf32>
      %419 = arith.addf %409, %418 : vector<8x16x128xf32>
      %420 = vector.extract_strided_slice %412 {offsets = [3, 0, 0], sizes = [8, 16, 128], strides = [1, 1, 1]} : vector<14x16x128xf32> to vector<8x16x128xf32>
      %c7_138 = arith.constant 7 : index
      %c0_139 = arith.constant 0 : index
      %421 = vector.load %arg4[%c7_138, %c0_139] : memref<49x128xf32, #tpu.memory_space<vmem>>, vector<1x128xf32>
      %422 = vector.shape_cast %421 : vector<1x128xf32> to vector<128xf32>
      %423 = vector.shape_cast %422 : vector<128xf32> to vector<1x1x128xf32>
      %424 = vector.broadcast %423 : vector<1x1x128xf32> to vector<8x16x128xf32>
      %425 = arith.mulf %420, %424 : vector<8x16x128xf32>
      %426 = arith.addf %419, %425 : vector<8x16x128xf32>
      %427 = vector.extract_strided_slice %412 {offsets = [6, 0, 0], sizes = [8, 16, 128], strides = [1, 1, 1]} : vector<14x16x128xf32> to vector<8x16x128xf32>
      %c14_140 = arith.constant 14 : index
      %c0_141 = arith.constant 0 : index
      %428 = vector.load %arg4[%c14_140, %c0_141] : memref<49x128xf32, #tpu.memory_space<vmem>>, vector<1x128xf32>
      %429 = vector.shape_cast %428 : vector<1x128xf32> to vector<128xf32>
      %430 = vector.shape_cast %429 : vector<128xf32> to vector<1x1x128xf32>
      %431 = vector.broadcast %430 : vector<1x1x128xf32> to vector<8x16x128xf32>
      %432 = arith.mulf %427, %431 : vector<8x16x128xf32>
      %433 = arith.addf %426, %432 : vector<8x16x128xf32>
      %c9_i32_142 = arith.constant 9 : i32
      %434 = arith.addi %37, %c9_i32_142 : i32
      %435 = arith.index_cast %434 : i32 to index
      %c7_143 = arith.constant 7 : index
      %c0_144 = arith.constant 0 : index
      %436 = vector.load %arg17[%435, %c7_143, %c0_144] : memref<34x48x128xf32, #tpu.memory_space<vmem>>, vector<14x16x128xf32>
      %437 = vector.extract_strided_slice %436 {offsets = [0, 0, 0], sizes = [8, 16, 128], strides = [1, 1, 1]} : vector<14x16x128xf32> to vector<8x16x128xf32>
      %c21_145 = arith.constant 21 : index
      %c0_146 = arith.constant 0 : index
      %438 = vector.load %arg4[%c21_145, %c0_146] : memref<49x128xf32, #tpu.memory_space<vmem>>, vector<1x128xf32>
      %439 = vector.shape_cast %438 : vector<1x128xf32> to vector<128xf32>
      %440 = vector.shape_cast %439 : vector<128xf32> to vector<1x1x128xf32>
      %441 = vector.broadcast %440 : vector<1x1x128xf32> to vector<8x16x128xf32>
      %442 = arith.mulf %437, %441 : vector<8x16x128xf32>
      %443 = arith.addf %433, %442 : vector<8x16x128xf32>
      %444 = vector.extract_strided_slice %436 {offsets = [3, 0, 0], sizes = [8, 16, 128], strides = [1, 1, 1]} : vector<14x16x128xf32> to vector<8x16x128xf32>
      %c28_147 = arith.constant 28 : index
      %c0_148 = arith.constant 0 : index
      %445 = vector.load %arg4[%c28_147, %c0_148] : memref<49x128xf32, #tpu.memory_space<vmem>>, vector<1x128xf32>
      %446 = vector.shape_cast %445 : vector<1x128xf32> to vector<128xf32>
      %447 = vector.shape_cast %446 : vector<128xf32> to vector<1x1x128xf32>
      %448 = vector.broadcast %447 : vector<1x1x128xf32> to vector<8x16x128xf32>
      %449 = arith.mulf %444, %448 : vector<8x16x128xf32>
      %450 = arith.addf %443, %449 : vector<8x16x128xf32>
      %451 = vector.extract_strided_slice %436 {offsets = [6, 0, 0], sizes = [8, 16, 128], strides = [1, 1, 1]} : vector<14x16x128xf32> to vector<8x16x128xf32>
      %c35_149 = arith.constant 35 : index
      %c0_150 = arith.constant 0 : index
      %452 = vector.load %arg4[%c35_149, %c0_150] : memref<49x128xf32, #tpu.memory_space<vmem>>, vector<1x128xf32>
      %453 = vector.shape_cast %452 : vector<1x128xf32> to vector<128xf32>
      %454 = vector.shape_cast %453 : vector<128xf32> to vector<1x1x128xf32>
      %455 = vector.broadcast %454 : vector<1x1x128xf32> to vector<8x16x128xf32>
      %456 = arith.mulf %451, %455 : vector<8x16x128xf32>
      %457 = arith.addf %450, %456 : vector<8x16x128xf32>
      %c18_i32 = arith.constant 18 : i32
      %458 = arith.addi %37, %c18_i32 : i32
      %459 = arith.index_cast %458 : i32 to index
      %c7_151 = arith.constant 7 : index
      %c0_152 = arith.constant 0 : index
      %460 = vector.load %arg17[%459, %c7_151, %c0_152] : memref<34x48x128xf32, #tpu.memory_space<vmem>>, vector<8x16x128xf32>
      %c42_153 = arith.constant 42 : index
      %c0_154 = arith.constant 0 : index
      %461 = vector.load %arg4[%c42_153, %c0_154] : memref<49x128xf32, #tpu.memory_space<vmem>>, vector<1x128xf32>
      %462 = vector.shape_cast %461 : vector<1x128xf32> to vector<128xf32>
      %463 = vector.shape_cast %462 : vector<128xf32> to vector<1x1x128xf32>
      %464 = vector.broadcast %463 : vector<1x1x128xf32> to vector<8x16x128xf32>
      %465 = arith.mulf %460, %464 : vector<8x16x128xf32>
      %466 = arith.addf %457, %465 : vector<8x16x128xf32>
      %c0_i32_155 = arith.constant 0 : i32
      %467 = arith.addi %37, %c0_i32_155 : i32
      %468 = arith.index_cast %467 : i32 to index
      %c10_156 = arith.constant 10 : index
      %c0_157 = arith.constant 0 : index
      %469 = vector.load %arg17[%468, %c10_156, %c0_157] : memref<34x48x128xf32, #tpu.memory_space<vmem>>, vector<14x16x128xf32>
      %470 = vector.extract_strided_slice %469 {offsets = [0, 0, 0], sizes = [8, 16, 128], strides = [1, 1, 1]} : vector<14x16x128xf32> to vector<8x16x128xf32>
      %c1_158 = arith.constant 1 : index
      %c0_159 = arith.constant 0 : index
      %471 = vector.load %arg4[%c1_158, %c0_159] : memref<49x128xf32, #tpu.memory_space<vmem>>, vector<1x128xf32>
      %472 = vector.shape_cast %471 : vector<1x128xf32> to vector<128xf32>
      %473 = vector.shape_cast %472 : vector<128xf32> to vector<1x1x128xf32>
      %474 = vector.broadcast %473 : vector<1x1x128xf32> to vector<8x16x128xf32>
      %475 = arith.mulf %470, %474 : vector<8x16x128xf32>
      %476 = arith.addf %466, %475 : vector<8x16x128xf32>
      %477 = vector.extract_strided_slice %469 {offsets = [3, 0, 0], sizes = [8, 16, 128], strides = [1, 1, 1]} : vector<14x16x128xf32> to vector<8x16x128xf32>
      %c8_160 = arith.constant 8 : index
      %c0_161 = arith.constant 0 : index
      %478 = vector.load %arg4[%c8_160, %c0_161] : memref<49x128xf32, #tpu.memory_space<vmem>>, vector<1x128xf32>
      %479 = vector.shape_cast %478 : vector<1x128xf32> to vector<128xf32>
      %480 = vector.shape_cast %479 : vector<128xf32> to vector<1x1x128xf32>
      %481 = vector.broadcast %480 : vector<1x1x128xf32> to vector<8x16x128xf32>
      %482 = arith.mulf %477, %481 : vector<8x16x128xf32>
      %483 = arith.addf %476, %482 : vector<8x16x128xf32>
      %484 = vector.extract_strided_slice %469 {offsets = [6, 0, 0], sizes = [8, 16, 128], strides = [1, 1, 1]} : vector<14x16x128xf32> to vector<8x16x128xf32>
      %c15_162 = arith.constant 15 : index
      %c0_163 = arith.constant 0 : index
      %485 = vector.load %arg4[%c15_162, %c0_163] : memref<49x128xf32, #tpu.memory_space<vmem>>, vector<1x128xf32>
      %486 = vector.shape_cast %485 : vector<1x128xf32> to vector<128xf32>
      %487 = vector.shape_cast %486 : vector<128xf32> to vector<1x1x128xf32>
      %488 = vector.broadcast %487 : vector<1x1x128xf32> to vector<8x16x128xf32>
      %489 = arith.mulf %484, %488 : vector<8x16x128xf32>
      %490 = arith.addf %483, %489 : vector<8x16x128xf32>
      %c9_i32_164 = arith.constant 9 : i32
      %491 = arith.addi %37, %c9_i32_164 : i32
      %492 = arith.index_cast %491 : i32 to index
      %c10_165 = arith.constant 10 : index
      %c0_166 = arith.constant 0 : index
      %493 = vector.load %arg17[%492, %c10_165, %c0_166] : memref<34x48x128xf32, #tpu.memory_space<vmem>>, vector<14x16x128xf32>
      %494 = vector.extract_strided_slice %493 {offsets = [0, 0, 0], sizes = [8, 16, 128], strides = [1, 1, 1]} : vector<14x16x128xf32> to vector<8x16x128xf32>
      %c22_167 = arith.constant 22 : index
      %c0_168 = arith.constant 0 : index
      %495 = vector.load %arg4[%c22_167, %c0_168] : memref<49x128xf32, #tpu.memory_space<vmem>>, vector<1x128xf32>
      %496 = vector.shape_cast %495 : vector<1x128xf32> to vector<128xf32>
      %497 = vector.shape_cast %496 : vector<128xf32> to vector<1x1x128xf32>
      %498 = vector.broadcast %497 : vector<1x1x128xf32> to vector<8x16x128xf32>
      %499 = arith.mulf %494, %498 : vector<8x16x128xf32>
      %500 = arith.addf %490, %499 : vector<8x16x128xf32>
      %501 = vector.extract_strided_slice %493 {offsets = [3, 0, 0], sizes = [8, 16, 128], strides = [1, 1, 1]} : vector<14x16x128xf32> to vector<8x16x128xf32>
      %c29_169 = arith.constant 29 : index
      %c0_170 = arith.constant 0 : index
      %502 = vector.load %arg4[%c29_169, %c0_170] : memref<49x128xf32, #tpu.memory_space<vmem>>, vector<1x128xf32>
      %503 = vector.shape_cast %502 : vector<1x128xf32> to vector<128xf32>
      %504 = vector.shape_cast %503 : vector<128xf32> to vector<1x1x128xf32>
      %505 = vector.broadcast %504 : vector<1x1x128xf32> to vector<8x16x128xf32>
      %506 = arith.mulf %501, %505 : vector<8x16x128xf32>
      %507 = arith.addf %500, %506 : vector<8x16x128xf32>
      %508 = vector.extract_strided_slice %493 {offsets = [6, 0, 0], sizes = [8, 16, 128], strides = [1, 1, 1]} : vector<14x16x128xf32> to vector<8x16x128xf32>
      %c36_171 = arith.constant 36 : index
      %c0_172 = arith.constant 0 : index
      %509 = vector.load %arg4[%c36_171, %c0_172] : memref<49x128xf32, #tpu.memory_space<vmem>>, vector<1x128xf32>
      %510 = vector.shape_cast %509 : vector<1x128xf32> to vector<128xf32>
      %511 = vector.shape_cast %510 : vector<128xf32> to vector<1x1x128xf32>
      %512 = vector.broadcast %511 : vector<1x1x128xf32> to vector<8x16x128xf32>
      %513 = arith.mulf %508, %512 : vector<8x16x128xf32>
      %514 = arith.addf %507, %513 : vector<8x16x128xf32>
      %c18_i32_173 = arith.constant 18 : i32
      %515 = arith.addi %37, %c18_i32_173 : i32
      %516 = arith.index_cast %515 : i32 to index
      %c10_174 = arith.constant 10 : index
      %c0_175 = arith.constant 0 : index
      %517 = vector.load %arg17[%516, %c10_174, %c0_175] : memref<34x48x128xf32, #tpu.memory_space<vmem>>, vector<8x16x128xf32>
      %c43_176 = arith.constant 43 : index
      %c0_177 = arith.constant 0 : index
      %518 = vector.load %arg4[%c43_176, %c0_177] : memref<49x128xf32, #tpu.memory_space<vmem>>, vector<1x128xf32>
      %519 = vector.shape_cast %518 : vector<1x128xf32> to vector<128xf32>
      %520 = vector.shape_cast %519 : vector<128xf32> to vector<1x1x128xf32>
      %521 = vector.broadcast %520 : vector<1x1x128xf32> to vector<8x16x128xf32>
      %522 = arith.mulf %517, %521 : vector<8x16x128xf32>
      %523 = arith.addf %514, %522 : vector<8x16x128xf32>
      %c0_i32_178 = arith.constant 0 : i32
      %524 = arith.addi %37, %c0_i32_178 : i32
      %525 = arith.index_cast %524 : i32 to index
      %c13_179 = arith.constant 13 : index
      %c0_180 = arith.constant 0 : index
      %526 = vector.load %arg17[%525, %c13_179, %c0_180] : memref<34x48x128xf32, #tpu.memory_space<vmem>>, vector<14x16x128xf32>
      %527 = vector.extract_strided_slice %526 {offsets = [0, 0, 0], sizes = [8, 16, 128], strides = [1, 1, 1]} : vector<14x16x128xf32> to vector<8x16x128xf32>
      %c2_181 = arith.constant 2 : index
      %c0_182 = arith.constant 0 : index
      %528 = vector.load %arg4[%c2_181, %c0_182] : memref<49x128xf32, #tpu.memory_space<vmem>>, vector<1x128xf32>
      %529 = vector.shape_cast %528 : vector<1x128xf32> to vector<128xf32>
      %530 = vector.shape_cast %529 : vector<128xf32> to vector<1x1x128xf32>
      %531 = vector.broadcast %530 : vector<1x1x128xf32> to vector<8x16x128xf32>
      %532 = arith.mulf %527, %531 : vector<8x16x128xf32>
      %533 = arith.addf %523, %532 : vector<8x16x128xf32>
      %534 = vector.extract_strided_slice %526 {offsets = [3, 0, 0], sizes = [8, 16, 128], strides = [1, 1, 1]} : vector<14x16x128xf32> to vector<8x16x128xf32>
      %c9_183 = arith.constant 9 : index
      %c0_184 = arith.constant 0 : index
      %535 = vector.load %arg4[%c9_183, %c0_184] : memref<49x128xf32, #tpu.memory_space<vmem>>, vector<1x128xf32>
      %536 = vector.shape_cast %535 : vector<1x128xf32> to vector<128xf32>
      %537 = vector.shape_cast %536 : vector<128xf32> to vector<1x1x128xf32>
      %538 = vector.broadcast %537 : vector<1x1x128xf32> to vector<8x16x128xf32>
      %539 = arith.mulf %534, %538 : vector<8x16x128xf32>
      %540 = arith.addf %533, %539 : vector<8x16x128xf32>
      %541 = vector.extract_strided_slice %526 {offsets = [6, 0, 0], sizes = [8, 16, 128], strides = [1, 1, 1]} : vector<14x16x128xf32> to vector<8x16x128xf32>
      %c16_185 = arith.constant 16 : index
      %c0_186 = arith.constant 0 : index
      %542 = vector.load %arg4[%c16_185, %c0_186] : memref<49x128xf32, #tpu.memory_space<vmem>>, vector<1x128xf32>
      %543 = vector.shape_cast %542 : vector<1x128xf32> to vector<128xf32>
      %544 = vector.shape_cast %543 : vector<128xf32> to vector<1x1x128xf32>
      %545 = vector.broadcast %544 : vector<1x1x128xf32> to vector<8x16x128xf32>
      %546 = arith.mulf %541, %545 : vector<8x16x128xf32>
      %547 = arith.addf %540, %546 : vector<8x16x128xf32>
      %c9_i32_187 = arith.constant 9 : i32
      %548 = arith.addi %37, %c9_i32_187 : i32
      %549 = arith.index_cast %548 : i32 to index
      %c13_188 = arith.constant 13 : index
      %c0_189 = arith.constant 0 : index
      %550 = vector.load %arg17[%549, %c13_188, %c0_189] : memref<34x48x128xf32, #tpu.memory_space<vmem>>, vector<14x16x128xf32>
      %551 = vector.extract_strided_slice %550 {offsets = [0, 0, 0], sizes = [8, 16, 128], strides = [1, 1, 1]} : vector<14x16x128xf32> to vector<8x16x128xf32>
      %c23_190 = arith.constant 23 : index
      %c0_191 = arith.constant 0 : index
      %552 = vector.load %arg4[%c23_190, %c0_191] : memref<49x128xf32, #tpu.memory_space<vmem>>, vector<1x128xf32>
      %553 = vector.shape_cast %552 : vector<1x128xf32> to vector<128xf32>
      %554 = vector.shape_cast %553 : vector<128xf32> to vector<1x1x128xf32>
      %555 = vector.broadcast %554 : vector<1x1x128xf32> to vector<8x16x128xf32>
      %556 = arith.mulf %551, %555 : vector<8x16x128xf32>
      %557 = arith.addf %547, %556 : vector<8x16x128xf32>
      %558 = vector.extract_strided_slice %550 {offsets = [3, 0, 0], sizes = [8, 16, 128], strides = [1, 1, 1]} : vector<14x16x128xf32> to vector<8x16x128xf32>
      %c30_192 = arith.constant 30 : index
      %c0_193 = arith.constant 0 : index
      %559 = vector.load %arg4[%c30_192, %c0_193] : memref<49x128xf32, #tpu.memory_space<vmem>>, vector<1x128xf32>
      %560 = vector.shape_cast %559 : vector<1x128xf32> to vector<128xf32>
      %561 = vector.shape_cast %560 : vector<128xf32> to vector<1x1x128xf32>
      %562 = vector.broadcast %561 : vector<1x1x128xf32> to vector<8x16x128xf32>
      %563 = arith.mulf %558, %562 : vector<8x16x128xf32>
      %564 = arith.addf %557, %563 : vector<8x16x128xf32>
      %565 = vector.extract_strided_slice %550 {offsets = [6, 0, 0], sizes = [8, 16, 128], strides = [1, 1, 1]} : vector<14x16x128xf32> to vector<8x16x128xf32>
      %c37_194 = arith.constant 37 : index
      %c0_195 = arith.constant 0 : index
      %566 = vector.load %arg4[%c37_194, %c0_195] : memref<49x128xf32, #tpu.memory_space<vmem>>, vector<1x128xf32>
      %567 = vector.shape_cast %566 : vector<1x128xf32> to vector<128xf32>
      %568 = vector.shape_cast %567 : vector<128xf32> to vector<1x1x128xf32>
      %569 = vector.broadcast %568 : vector<1x1x128xf32> to vector<8x16x128xf32>
      %570 = arith.mulf %565, %569 : vector<8x16x128xf32>
      %571 = arith.addf %564, %570 : vector<8x16x128xf32>
      %c18_i32_196 = arith.constant 18 : i32
      %572 = arith.addi %37, %c18_i32_196 : i32
      %573 = arith.index_cast %572 : i32 to index
      %c13_197 = arith.constant 13 : index
      %c0_198 = arith.constant 0 : index
      %574 = vector.load %arg17[%573, %c13_197, %c0_198] : memref<34x48x128xf32, #tpu.memory_space<vmem>>, vector<8x16x128xf32>
      %c44_199 = arith.constant 44 : index
      %c0_200 = arith.constant 0 : index
      %575 = vector.load %arg4[%c44_199, %c0_200] : memref<49x128xf32, #tpu.memory_space<vmem>>, vector<1x128xf32>
      %576 = vector.shape_cast %575 : vector<1x128xf32> to vector<128xf32>
      %577 = vector.shape_cast %576 : vector<128xf32> to vector<1x1x128xf32>
      %578 = vector.broadcast %577 : vector<1x1x128xf32> to vector<8x16x128xf32>
      %579 = arith.mulf %574, %578 : vector<8x16x128xf32>
      %580 = arith.addf %571, %579 : vector<8x16x128xf32>
      %c0_i32_201 = arith.constant 0 : i32
      %581 = arith.addi %37, %c0_i32_201 : i32
      %582 = arith.index_cast %581 : i32 to index
      %c16_202 = arith.constant 16 : index
      %c0_203 = arith.constant 0 : index
      %583 = vector.load %arg17[%582, %c16_202, %c0_203] : memref<34x48x128xf32, #tpu.memory_space<vmem>>, vector<14x16x128xf32>
      %584 = vector.extract_strided_slice %583 {offsets = [0, 0, 0], sizes = [8, 16, 128], strides = [1, 1, 1]} : vector<14x16x128xf32> to vector<8x16x128xf32>
      %c3_204 = arith.constant 3 : index
      %c0_205 = arith.constant 0 : index
      %585 = vector.load %arg4[%c3_204, %c0_205] : memref<49x128xf32, #tpu.memory_space<vmem>>, vector<1x128xf32>
      %586 = vector.shape_cast %585 : vector<1x128xf32> to vector<128xf32>
      %587 = vector.shape_cast %586 : vector<128xf32> to vector<1x1x128xf32>
      %588 = vector.broadcast %587 : vector<1x1x128xf32> to vector<8x16x128xf32>
      %589 = arith.mulf %584, %588 : vector<8x16x128xf32>
      %590 = arith.addf %580, %589 : vector<8x16x128xf32>
      %591 = vector.extract_strided_slice %583 {offsets = [3, 0, 0], sizes = [8, 16, 128], strides = [1, 1, 1]} : vector<14x16x128xf32> to vector<8x16x128xf32>
      %c10_206 = arith.constant 10 : index
      %c0_207 = arith.constant 0 : index
      %592 = vector.load %arg4[%c10_206, %c0_207] : memref<49x128xf32, #tpu.memory_space<vmem>>, vector<1x128xf32>
      %593 = vector.shape_cast %592 : vector<1x128xf32> to vector<128xf32>
      %594 = vector.shape_cast %593 : vector<128xf32> to vector<1x1x128xf32>
      %595 = vector.broadcast %594 : vector<1x1x128xf32> to vector<8x16x128xf32>
      %596 = arith.mulf %591, %595 : vector<8x16x128xf32>
      %597 = arith.addf %590, %596 : vector<8x16x128xf32>
      %598 = vector.extract_strided_slice %583 {offsets = [6, 0, 0], sizes = [8, 16, 128], strides = [1, 1, 1]} : vector<14x16x128xf32> to vector<8x16x128xf32>
      %c17_208 = arith.constant 17 : index
      %c0_209 = arith.constant 0 : index
      %599 = vector.load %arg4[%c17_208, %c0_209] : memref<49x128xf32, #tpu.memory_space<vmem>>, vector<1x128xf32>
      %600 = vector.shape_cast %599 : vector<1x128xf32> to vector<128xf32>
      %601 = vector.shape_cast %600 : vector<128xf32> to vector<1x1x128xf32>
      %602 = vector.broadcast %601 : vector<1x1x128xf32> to vector<8x16x128xf32>
      %603 = arith.mulf %598, %602 : vector<8x16x128xf32>
      %604 = arith.addf %597, %603 : vector<8x16x128xf32>
      %c9_i32_210 = arith.constant 9 : i32
      %605 = arith.addi %37, %c9_i32_210 : i32
      %606 = arith.index_cast %605 : i32 to index
      %c16_211 = arith.constant 16 : index
      %c0_212 = arith.constant 0 : index
      %607 = vector.load %arg17[%606, %c16_211, %c0_212] : memref<34x48x128xf32, #tpu.memory_space<vmem>>, vector<14x16x128xf32>
      %608 = vector.extract_strided_slice %607 {offsets = [0, 0, 0], sizes = [8, 16, 128], strides = [1, 1, 1]} : vector<14x16x128xf32> to vector<8x16x128xf32>
      %c24_213 = arith.constant 24 : index
      %c0_214 = arith.constant 0 : index
      %609 = vector.load %arg4[%c24_213, %c0_214] : memref<49x128xf32, #tpu.memory_space<vmem>>, vector<1x128xf32>
      %610 = vector.shape_cast %609 : vector<1x128xf32> to vector<128xf32>
      %611 = vector.shape_cast %610 : vector<128xf32> to vector<1x1x128xf32>
      %612 = vector.broadcast %611 : vector<1x1x128xf32> to vector<8x16x128xf32>
      %613 = arith.mulf %608, %612 : vector<8x16x128xf32>
      %614 = arith.addf %604, %613 : vector<8x16x128xf32>
      %615 = vector.extract_strided_slice %607 {offsets = [3, 0, 0], sizes = [8, 16, 128], strides = [1, 1, 1]} : vector<14x16x128xf32> to vector<8x16x128xf32>
      %c31_215 = arith.constant 31 : index
      %c0_216 = arith.constant 0 : index
      %616 = vector.load %arg4[%c31_215, %c0_216] : memref<49x128xf32, #tpu.memory_space<vmem>>, vector<1x128xf32>
      %617 = vector.shape_cast %616 : vector<1x128xf32> to vector<128xf32>
      %618 = vector.shape_cast %617 : vector<128xf32> to vector<1x1x128xf32>
      %619 = vector.broadcast %618 : vector<1x1x128xf32> to vector<8x16x128xf32>
      %620 = arith.mulf %615, %619 : vector<8x16x128xf32>
      %621 = arith.addf %614, %620 : vector<8x16x128xf32>
      %622 = vector.extract_strided_slice %607 {offsets = [6, 0, 0], sizes = [8, 16, 128], strides = [1, 1, 1]} : vector<14x16x128xf32> to vector<8x16x128xf32>
      %c38_217 = arith.constant 38 : index
      %c0_218 = arith.constant 0 : index
      %623 = vector.load %arg4[%c38_217, %c0_218] : memref<49x128xf32, #tpu.memory_space<vmem>>, vector<1x128xf32>
      %624 = vector.shape_cast %623 : vector<1x128xf32> to vector<128xf32>
      %625 = vector.shape_cast %624 : vector<128xf32> to vector<1x1x128xf32>
      %626 = vector.broadcast %625 : vector<1x1x128xf32> to vector<8x16x128xf32>
      %627 = arith.mulf %622, %626 : vector<8x16x128xf32>
      %628 = arith.addf %621, %627 : vector<8x16x128xf32>
      %c18_i32_219 = arith.constant 18 : i32
      %629 = arith.addi %37, %c18_i32_219 : i32
      %630 = arith.index_cast %629 : i32 to index
      %c16_220 = arith.constant 16 : index
      %c0_221 = arith.constant 0 : index
      %631 = vector.load %arg17[%630, %c16_220, %c0_221] : memref<34x48x128xf32, #tpu.memory_space<vmem>>, vector<8x16x128xf32>
      %c45_222 = arith.constant 45 : index
      %c0_223 = arith.constant 0 : index
      %632 = vector.load %arg4[%c45_222, %c0_223] : memref<49x128xf32, #tpu.memory_space<vmem>>, vector<1x128xf32>
      %633 = vector.shape_cast %632 : vector<1x128xf32> to vector<128xf32>
      %634 = vector.shape_cast %633 : vector<128xf32> to vector<1x1x128xf32>
      %635 = vector.broadcast %634 : vector<1x1x128xf32> to vector<8x16x128xf32>
      %636 = arith.mulf %631, %635 : vector<8x16x128xf32>
      %637 = arith.addf %628, %636 : vector<8x16x128xf32>
      %c0_i32_224 = arith.constant 0 : i32
      %638 = arith.addi %37, %c0_i32_224 : i32
      %639 = arith.index_cast %638 : i32 to index
      %c19_225 = arith.constant 19 : index
      %c0_226 = arith.constant 0 : index
      %640 = vector.load %arg17[%639, %c19_225, %c0_226] : memref<34x48x128xf32, #tpu.memory_space<vmem>>, vector<14x16x128xf32>
      %641 = vector.extract_strided_slice %640 {offsets = [0, 0, 0], sizes = [8, 16, 128], strides = [1, 1, 1]} : vector<14x16x128xf32> to vector<8x16x128xf32>
      %c4_227 = arith.constant 4 : index
      %c0_228 = arith.constant 0 : index
      %642 = vector.load %arg4[%c4_227, %c0_228] : memref<49x128xf32, #tpu.memory_space<vmem>>, vector<1x128xf32>
      %643 = vector.shape_cast %642 : vector<1x128xf32> to vector<128xf32>
      %644 = vector.shape_cast %643 : vector<128xf32> to vector<1x1x128xf32>
      %645 = vector.broadcast %644 : vector<1x1x128xf32> to vector<8x16x128xf32>
      %646 = arith.mulf %641, %645 : vector<8x16x128xf32>
      %647 = arith.addf %637, %646 : vector<8x16x128xf32>
      %648 = vector.extract_strided_slice %640 {offsets = [3, 0, 0], sizes = [8, 16, 128], strides = [1, 1, 1]} : vector<14x16x128xf32> to vector<8x16x128xf32>
      %c11_229 = arith.constant 11 : index
      %c0_230 = arith.constant 0 : index
      %649 = vector.load %arg4[%c11_229, %c0_230] : memref<49x128xf32, #tpu.memory_space<vmem>>, vector<1x128xf32>
      %650 = vector.shape_cast %649 : vector<1x128xf32> to vector<128xf32>
      %651 = vector.shape_cast %650 : vector<128xf32> to vector<1x1x128xf32>
      %652 = vector.broadcast %651 : vector<1x1x128xf32> to vector<8x16x128xf32>
      %653 = arith.mulf %648, %652 : vector<8x16x128xf32>
      %654 = arith.addf %647, %653 : vector<8x16x128xf32>
      %655 = vector.extract_strided_slice %640 {offsets = [6, 0, 0], sizes = [8, 16, 128], strides = [1, 1, 1]} : vector<14x16x128xf32> to vector<8x16x128xf32>
      %c18_231 = arith.constant 18 : index
      %c0_232 = arith.constant 0 : index
      %656 = vector.load %arg4[%c18_231, %c0_232] : memref<49x128xf32, #tpu.memory_space<vmem>>, vector<1x128xf32>
      %657 = vector.shape_cast %656 : vector<1x128xf32> to vector<128xf32>
      %658 = vector.shape_cast %657 : vector<128xf32> to vector<1x1x128xf32>
      %659 = vector.broadcast %658 : vector<1x1x128xf32> to vector<8x16x128xf32>
      %660 = arith.mulf %655, %659 : vector<8x16x128xf32>
      %661 = arith.addf %654, %660 : vector<8x16x128xf32>
      %c9_i32_233 = arith.constant 9 : i32
      %662 = arith.addi %37, %c9_i32_233 : i32
      %663 = arith.index_cast %662 : i32 to index
      %c19_234 = arith.constant 19 : index
      %c0_235 = arith.constant 0 : index
      %664 = vector.load %arg17[%663, %c19_234, %c0_235] : memref<34x48x128xf32, #tpu.memory_space<vmem>>, vector<14x16x128xf32>
      %665 = vector.extract_strided_slice %664 {offsets = [0, 0, 0], sizes = [8, 16, 128], strides = [1, 1, 1]} : vector<14x16x128xf32> to vector<8x16x128xf32>
      %c25_236 = arith.constant 25 : index
      %c0_237 = arith.constant 0 : index
      %666 = vector.load %arg4[%c25_236, %c0_237] : memref<49x128xf32, #tpu.memory_space<vmem>>, vector<1x128xf32>
      %667 = vector.shape_cast %666 : vector<1x128xf32> to vector<128xf32>
      %668 = vector.shape_cast %667 : vector<128xf32> to vector<1x1x128xf32>
      %669 = vector.broadcast %668 : vector<1x1x128xf32> to vector<8x16x128xf32>
      %670 = arith.mulf %665, %669 : vector<8x16x128xf32>
      %671 = arith.addf %661, %670 : vector<8x16x128xf32>
      %672 = vector.extract_strided_slice %664 {offsets = [3, 0, 0], sizes = [8, 16, 128], strides = [1, 1, 1]} : vector<14x16x128xf32> to vector<8x16x128xf32>
      %c32_238 = arith.constant 32 : index
      %c0_239 = arith.constant 0 : index
      %673 = vector.load %arg4[%c32_238, %c0_239] : memref<49x128xf32, #tpu.memory_space<vmem>>, vector<1x128xf32>
      %674 = vector.shape_cast %673 : vector<1x128xf32> to vector<128xf32>
      %675 = vector.shape_cast %674 : vector<128xf32> to vector<1x1x128xf32>
      %676 = vector.broadcast %675 : vector<1x1x128xf32> to vector<8x16x128xf32>
      %677 = arith.mulf %672, %676 : vector<8x16x128xf32>
      %678 = arith.addf %671, %677 : vector<8x16x128xf32>
      %679 = vector.extract_strided_slice %664 {offsets = [6, 0, 0], sizes = [8, 16, 128], strides = [1, 1, 1]} : vector<14x16x128xf32> to vector<8x16x128xf32>
      %c39_240 = arith.constant 39 : index
      %c0_241 = arith.constant 0 : index
      %680 = vector.load %arg4[%c39_240, %c0_241] : memref<49x128xf32, #tpu.memory_space<vmem>>, vector<1x128xf32>
      %681 = vector.shape_cast %680 : vector<1x128xf32> to vector<128xf32>
      %682 = vector.shape_cast %681 : vector<128xf32> to vector<1x1x128xf32>
      %683 = vector.broadcast %682 : vector<1x1x128xf32> to vector<8x16x128xf32>
      %684 = arith.mulf %679, %683 : vector<8x16x128xf32>
      %685 = arith.addf %678, %684 : vector<8x16x128xf32>
      %c18_i32_242 = arith.constant 18 : i32
      %686 = arith.addi %37, %c18_i32_242 : i32
      %687 = arith.index_cast %686 : i32 to index
      %c19_243 = arith.constant 19 : index
      %c0_244 = arith.constant 0 : index
      %688 = vector.load %arg17[%687, %c19_243, %c0_244] : memref<34x48x128xf32, #tpu.memory_space<vmem>>, vector<8x16x128xf32>
      %c46_245 = arith.constant 46 : index
      %c0_246 = arith.constant 0 : index
      %689 = vector.load %arg4[%c46_245, %c0_246] : memref<49x128xf32, #tpu.memory_space<vmem>>, vector<1x128xf32>
      %690 = vector.shape_cast %689 : vector<1x128xf32> to vector<128xf32>
      %691 = vector.shape_cast %690 : vector<128xf32> to vector<1x1x128xf32>
      %692 = vector.broadcast %691 : vector<1x1x128xf32> to vector<8x16x128xf32>
      %693 = arith.mulf %688, %692 : vector<8x16x128xf32>
      %694 = arith.addf %685, %693 : vector<8x16x128xf32>
      %c0_i32_247 = arith.constant 0 : i32
      %695 = arith.addi %37, %c0_i32_247 : i32
      %696 = arith.index_cast %695 : i32 to index
      %c22_248 = arith.constant 22 : index
      %c0_249 = arith.constant 0 : index
      %697 = vector.load %arg17[%696, %c22_248, %c0_249] : memref<34x48x128xf32, #tpu.memory_space<vmem>>, vector<14x16x128xf32>
      %698 = vector.extract_strided_slice %697 {offsets = [0, 0, 0], sizes = [8, 16, 128], strides = [1, 1, 1]} : vector<14x16x128xf32> to vector<8x16x128xf32>
      %c5_250 = arith.constant 5 : index
      %c0_251 = arith.constant 0 : index
      %699 = vector.load %arg4[%c5_250, %c0_251] : memref<49x128xf32, #tpu.memory_space<vmem>>, vector<1x128xf32>
      %700 = vector.shape_cast %699 : vector<1x128xf32> to vector<128xf32>
      %701 = vector.shape_cast %700 : vector<128xf32> to vector<1x1x128xf32>
      %702 = vector.broadcast %701 : vector<1x1x128xf32> to vector<8x16x128xf32>
      %703 = arith.mulf %698, %702 : vector<8x16x128xf32>
      %704 = arith.addf %694, %703 : vector<8x16x128xf32>
      %705 = vector.extract_strided_slice %697 {offsets = [3, 0, 0], sizes = [8, 16, 128], strides = [1, 1, 1]} : vector<14x16x128xf32> to vector<8x16x128xf32>
      %c12_252 = arith.constant 12 : index
      %c0_253 = arith.constant 0 : index
      %706 = vector.load %arg4[%c12_252, %c0_253] : memref<49x128xf32, #tpu.memory_space<vmem>>, vector<1x128xf32>
      %707 = vector.shape_cast %706 : vector<1x128xf32> to vector<128xf32>
      %708 = vector.shape_cast %707 : vector<128xf32> to vector<1x1x128xf32>
      %709 = vector.broadcast %708 : vector<1x1x128xf32> to vector<8x16x128xf32>
      %710 = arith.mulf %705, %709 : vector<8x16x128xf32>
      %711 = arith.addf %704, %710 : vector<8x16x128xf32>
      %712 = vector.extract_strided_slice %697 {offsets = [6, 0, 0], sizes = [8, 16, 128], strides = [1, 1, 1]} : vector<14x16x128xf32> to vector<8x16x128xf32>
      %c19_254 = arith.constant 19 : index
      %c0_255 = arith.constant 0 : index
      %713 = vector.load %arg4[%c19_254, %c0_255] : memref<49x128xf32, #tpu.memory_space<vmem>>, vector<1x128xf32>
      %714 = vector.shape_cast %713 : vector<1x128xf32> to vector<128xf32>
      %715 = vector.shape_cast %714 : vector<128xf32> to vector<1x1x128xf32>
      %716 = vector.broadcast %715 : vector<1x1x128xf32> to vector<8x16x128xf32>
      %717 = arith.mulf %712, %716 : vector<8x16x128xf32>
      %718 = arith.addf %711, %717 : vector<8x16x128xf32>
      %c9_i32_256 = arith.constant 9 : i32
      %719 = arith.addi %37, %c9_i32_256 : i32
      %720 = arith.index_cast %719 : i32 to index
      %c22_257 = arith.constant 22 : index
      %c0_258 = arith.constant 0 : index
      %721 = vector.load %arg17[%720, %c22_257, %c0_258] : memref<34x48x128xf32, #tpu.memory_space<vmem>>, vector<14x16x128xf32>
      %722 = vector.extract_strided_slice %721 {offsets = [0, 0, 0], sizes = [8, 16, 128], strides = [1, 1, 1]} : vector<14x16x128xf32> to vector<8x16x128xf32>
      %c26_259 = arith.constant 26 : index
      %c0_260 = arith.constant 0 : index
      %723 = vector.load %arg4[%c26_259, %c0_260] : memref<49x128xf32, #tpu.memory_space<vmem>>, vector<1x128xf32>
      %724 = vector.shape_cast %723 : vector<1x128xf32> to vector<128xf32>
      %725 = vector.shape_cast %724 : vector<128xf32> to vector<1x1x128xf32>
      %726 = vector.broadcast %725 : vector<1x1x128xf32> to vector<8x16x128xf32>
      %727 = arith.mulf %722, %726 : vector<8x16x128xf32>
      %728 = arith.addf %718, %727 : vector<8x16x128xf32>
      %729 = vector.extract_strided_slice %721 {offsets = [3, 0, 0], sizes = [8, 16, 128], strides = [1, 1, 1]} : vector<14x16x128xf32> to vector<8x16x128xf32>
      %c33_261 = arith.constant 33 : index
      %c0_262 = arith.constant 0 : index
      %730 = vector.load %arg4[%c33_261, %c0_262] : memref<49x128xf32, #tpu.memory_space<vmem>>, vector<1x128xf32>
      %731 = vector.shape_cast %730 : vector<1x128xf32> to vector<128xf32>
      %732 = vector.shape_cast %731 : vector<128xf32> to vector<1x1x128xf32>
      %733 = vector.broadcast %732 : vector<1x1x128xf32> to vector<8x16x128xf32>
      %734 = arith.mulf %729, %733 : vector<8x16x128xf32>
      %735 = arith.addf %728, %734 : vector<8x16x128xf32>
      %736 = vector.extract_strided_slice %721 {offsets = [6, 0, 0], sizes = [8, 16, 128], strides = [1, 1, 1]} : vector<14x16x128xf32> to vector<8x16x128xf32>
      %c40_263 = arith.constant 40 : index
      %c0_264 = arith.constant 0 : index
      %737 = vector.load %arg4[%c40_263, %c0_264] : memref<49x128xf32, #tpu.memory_space<vmem>>, vector<1x128xf32>
      %738 = vector.shape_cast %737 : vector<1x128xf32> to vector<128xf32>
      %739 = vector.shape_cast %738 : vector<128xf32> to vector<1x1x128xf32>
      %740 = vector.broadcast %739 : vector<1x1x128xf32> to vector<8x16x128xf32>
      %741 = arith.mulf %736, %740 : vector<8x16x128xf32>
      %742 = arith.addf %735, %741 : vector<8x16x128xf32>
      %c18_i32_265 = arith.constant 18 : i32
      %743 = arith.addi %37, %c18_i32_265 : i32
      %744 = arith.index_cast %743 : i32 to index
      %c22_266 = arith.constant 22 : index
      %c0_267 = arith.constant 0 : index
      %745 = vector.load %arg17[%744, %c22_266, %c0_267] : memref<34x48x128xf32, #tpu.memory_space<vmem>>, vector<8x16x128xf32>
      %c47_268 = arith.constant 47 : index
      %c0_269 = arith.constant 0 : index
      %746 = vector.load %arg4[%c47_268, %c0_269] : memref<49x128xf32, #tpu.memory_space<vmem>>, vector<1x128xf32>
      %747 = vector.shape_cast %746 : vector<1x128xf32> to vector<128xf32>
      %748 = vector.shape_cast %747 : vector<128xf32> to vector<1x1x128xf32>
      %749 = vector.broadcast %748 : vector<1x1x128xf32> to vector<8x16x128xf32>
      %750 = arith.mulf %745, %749 : vector<8x16x128xf32>
      %751 = arith.addf %742, %750 : vector<8x16x128xf32>
      %c0_i32_270 = arith.constant 0 : i32
      %752 = arith.addi %37, %c0_i32_270 : i32
      %753 = arith.index_cast %752 : i32 to index
      %c25_271 = arith.constant 25 : index
      %c0_272 = arith.constant 0 : index
      %754 = vector.load %arg17[%753, %c25_271, %c0_272] : memref<34x48x128xf32, #tpu.memory_space<vmem>>, vector<14x16x128xf32>
      %755 = vector.extract_strided_slice %754 {offsets = [0, 0, 0], sizes = [8, 16, 128], strides = [1, 1, 1]} : vector<14x16x128xf32> to vector<8x16x128xf32>
      %c6_273 = arith.constant 6 : index
      %c0_274 = arith.constant 0 : index
      %756 = vector.load %arg4[%c6_273, %c0_274] : memref<49x128xf32, #tpu.memory_space<vmem>>, vector<1x128xf32>
      %757 = vector.shape_cast %756 : vector<1x128xf32> to vector<128xf32>
      %758 = vector.shape_cast %757 : vector<128xf32> to vector<1x1x128xf32>
      %759 = vector.broadcast %758 : vector<1x1x128xf32> to vector<8x16x128xf32>
      %760 = arith.mulf %755, %759 : vector<8x16x128xf32>
      %761 = arith.addf %751, %760 : vector<8x16x128xf32>
      %762 = vector.extract_strided_slice %754 {offsets = [3, 0, 0], sizes = [8, 16, 128], strides = [1, 1, 1]} : vector<14x16x128xf32> to vector<8x16x128xf32>
      %c13_275 = arith.constant 13 : index
      %c0_276 = arith.constant 0 : index
      %763 = vector.load %arg4[%c13_275, %c0_276] : memref<49x128xf32, #tpu.memory_space<vmem>>, vector<1x128xf32>
      %764 = vector.shape_cast %763 : vector<1x128xf32> to vector<128xf32>
      %765 = vector.shape_cast %764 : vector<128xf32> to vector<1x1x128xf32>
      %766 = vector.broadcast %765 : vector<1x1x128xf32> to vector<8x16x128xf32>
      %767 = arith.mulf %762, %766 : vector<8x16x128xf32>
      %768 = arith.addf %761, %767 : vector<8x16x128xf32>
      %769 = vector.extract_strided_slice %754 {offsets = [6, 0, 0], sizes = [8, 16, 128], strides = [1, 1, 1]} : vector<14x16x128xf32> to vector<8x16x128xf32>
      %c20_277 = arith.constant 20 : index
      %c0_278 = arith.constant 0 : index
      %770 = vector.load %arg4[%c20_277, %c0_278] : memref<49x128xf32, #tpu.memory_space<vmem>>, vector<1x128xf32>
      %771 = vector.shape_cast %770 : vector<1x128xf32> to vector<128xf32>
      %772 = vector.shape_cast %771 : vector<128xf32> to vector<1x1x128xf32>
      %773 = vector.broadcast %772 : vector<1x1x128xf32> to vector<8x16x128xf32>
      %774 = arith.mulf %769, %773 : vector<8x16x128xf32>
      %775 = arith.addf %768, %774 : vector<8x16x128xf32>
      %c9_i32_279 = arith.constant 9 : i32
      %776 = arith.addi %37, %c9_i32_279 : i32
      %777 = arith.index_cast %776 : i32 to index
      %c25_280 = arith.constant 25 : index
      %c0_281 = arith.constant 0 : index
      %778 = vector.load %arg17[%777, %c25_280, %c0_281] : memref<34x48x128xf32, #tpu.memory_space<vmem>>, vector<14x16x128xf32>
      %779 = vector.extract_strided_slice %778 {offsets = [0, 0, 0], sizes = [8, 16, 128], strides = [1, 1, 1]} : vector<14x16x128xf32> to vector<8x16x128xf32>
      %c27_282 = arith.constant 27 : index
      %c0_283 = arith.constant 0 : index
      %780 = vector.load %arg4[%c27_282, %c0_283] : memref<49x128xf32, #tpu.memory_space<vmem>>, vector<1x128xf32>
      %781 = vector.shape_cast %780 : vector<1x128xf32> to vector<128xf32>
      %782 = vector.shape_cast %781 : vector<128xf32> to vector<1x1x128xf32>
      %783 = vector.broadcast %782 : vector<1x1x128xf32> to vector<8x16x128xf32>
      %784 = arith.mulf %779, %783 : vector<8x16x128xf32>
      %785 = arith.addf %775, %784 : vector<8x16x128xf32>
      %786 = vector.extract_strided_slice %778 {offsets = [3, 0, 0], sizes = [8, 16, 128], strides = [1, 1, 1]} : vector<14x16x128xf32> to vector<8x16x128xf32>
      %c34_284 = arith.constant 34 : index
      %c0_285 = arith.constant 0 : index
      %787 = vector.load %arg4[%c34_284, %c0_285] : memref<49x128xf32, #tpu.memory_space<vmem>>, vector<1x128xf32>
      %788 = vector.shape_cast %787 : vector<1x128xf32> to vector<128xf32>
      %789 = vector.shape_cast %788 : vector<128xf32> to vector<1x1x128xf32>
      %790 = vector.broadcast %789 : vector<1x1x128xf32> to vector<8x16x128xf32>
      %791 = arith.mulf %786, %790 : vector<8x16x128xf32>
      %792 = arith.addf %785, %791 : vector<8x16x128xf32>
      %793 = vector.extract_strided_slice %778 {offsets = [6, 0, 0], sizes = [8, 16, 128], strides = [1, 1, 1]} : vector<14x16x128xf32> to vector<8x16x128xf32>
      %c41_286 = arith.constant 41 : index
      %c0_287 = arith.constant 0 : index
      %794 = vector.load %arg4[%c41_286, %c0_287] : memref<49x128xf32, #tpu.memory_space<vmem>>, vector<1x128xf32>
      %795 = vector.shape_cast %794 : vector<1x128xf32> to vector<128xf32>
      %796 = vector.shape_cast %795 : vector<128xf32> to vector<1x1x128xf32>
      %797 = vector.broadcast %796 : vector<1x1x128xf32> to vector<8x16x128xf32>
      %798 = arith.mulf %793, %797 : vector<8x16x128xf32>
      %799 = arith.addf %792, %798 : vector<8x16x128xf32>
      %c18_i32_288 = arith.constant 18 : i32
      %800 = arith.addi %37, %c18_i32_288 : i32
      %801 = arith.index_cast %800 : i32 to index
      %c25_289 = arith.constant 25 : index
      %c0_290 = arith.constant 0 : index
      %802 = vector.load %arg17[%801, %c25_289, %c0_290] : memref<34x48x128xf32, #tpu.memory_space<vmem>>, vector<8x16x128xf32>
      %c48_291 = arith.constant 48 : index
      %c0_292 = arith.constant 0 : index
      %803 = vector.load %arg4[%c48_291, %c0_292] : memref<49x128xf32, #tpu.memory_space<vmem>>, vector<1x128xf32>
      %804 = vector.shape_cast %803 : vector<1x128xf32> to vector<128xf32>
      %805 = vector.shape_cast %804 : vector<128xf32> to vector<1x1x128xf32>
      %806 = vector.broadcast %805 : vector<1x1x128xf32> to vector<8x16x128xf32>
      %807 = arith.mulf %802, %806 : vector<8x16x128xf32>
      %808 = arith.addf %799, %807 : vector<8x16x128xf32>
      %809 = vector.shape_cast %22 : vector<16x128xf32> to vector<1x16x128xf32>
      %810 = vector.broadcast %809 : vector<1x16x128xf32> to vector<8x16x128xf32>
      %811 = arith.addf %808, %810 : vector<8x16x128xf32>
      %812 = vector.shape_cast %811 : vector<8x16x128xf32> to vector<128x128xf32>
      %cst_293 = arith.constant dense<0.000000e+00> : vector<128xf32>
      %813 = vector.multi_reduction <add>, %812, %cst_293 [1] : vector<128x128xf32> to vector<128xf32>
      %814 = vector.shape_cast %813 : vector<128xf32> to vector<128x1xf32>
      %cst_294 = arith.constant 1.280000e+02 : f32
      %815 = vector.broadcast %cst_294 : f32 to vector<128x1xf32>
      %816 = arith.divf %814, %815 : vector<128x1xf32>
      %817 = vector.broadcast %816 : vector<128x1xf32> to vector<128x128xf32>
      %818 = arith.subf %812, %817 : vector<128x128xf32>
      %819 = arith.mulf %818, %818 : vector<128x128xf32>
      %cst_295 = arith.constant dense<0.000000e+00> : vector<128xf32>
      %820 = vector.multi_reduction <add>, %819, %cst_295 [1] : vector<128x128xf32> to vector<128xf32>
      %821 = vector.shape_cast %820 : vector<128xf32> to vector<128x1xf32>
      %cst_296 = arith.constant 1.280000e+02 : f32
      %822 = vector.broadcast %cst_296 : f32 to vector<128x1xf32>
      %823 = arith.divf %821, %822 : vector<128x1xf32>
      %cst_297 = arith.constant 9.99999974E-6 : f32
      %824 = vector.broadcast %cst_297 : f32 to vector<128x1xf32>
      %825 = arith.addf %823, %824 : vector<128x1xf32>
      %826 = math.rsqrt %825 : vector<128x1xf32>
      %827 = vector.broadcast %826 : vector<128x1xf32> to vector<128x128xf32>
      %828 = arith.mulf %818, %827 : vector<128x128xf32>
      %829 = vector.shape_cast %24 : vector<128xf32> to vector<1x128xf32>
      %830 = vector.broadcast %829 : vector<1x128xf32> to vector<128x128xf32>
      %831 = arith.mulf %828, %830 : vector<128x128xf32>
      %832 = vector.shape_cast %26 : vector<128xf32> to vector<1x128xf32>
      %833 = vector.broadcast %832 : vector<1x128xf32> to vector<128x128xf32>
      %834 = arith.addf %831, %833 : vector<128x128xf32>
      %835 = arith.truncf %834 : vector<128x128xf32> to vector<128x128xbf16>
      %c0_298 = arith.constant 0 : index
      %c0_299 = arith.constant 0 : index
      %836 = vector.load %arg8[%c0_298, %c0_299] : memref<128x128xbf16, #tpu.memory_space<vmem>>, vector<128x128xbf16>
      %cst_300 = arith.constant dense<0.000000e+00> : vector<128x128xf32>
      %837 = tpu.matmul %835, %836, %cst_300 {dimension_numbers = #tpu.dot_dimension_numbers<[1], [0], [0], [1], [0, 0, 1, 1], [], []>} : vector<128x128xbf16>, vector<128x128xbf16>, vector<128x128xf32> -> vector<128x128xf32>
      %838 = vector.shape_cast %28 : vector<128xf32> to vector<1x128xf32>
      %839 = vector.broadcast %838 : vector<1x128xf32> to vector<128x128xf32>
      %840 = arith.addf %837, %839 : vector<128x128xf32>
      %c0_301 = arith.constant 0 : index
      %c0_302 = arith.constant 0 : index
      %841 = vector.load %arg9[%c0_301, %c0_302] : memref<128x128xbf16, #tpu.memory_space<vmem>>, vector<128x128xbf16>
      %cst_303 = arith.constant dense<0.000000e+00> : vector<128x128xf32>
      %842 = tpu.matmul %835, %841, %cst_303 {dimension_numbers = #tpu.dot_dimension_numbers<[1], [0], [0], [1], [0, 0, 1, 1], [], []>} : vector<128x128xbf16>, vector<128x128xbf16>, vector<128x128xf32> -> vector<128x128xf32>
      %843 = vector.shape_cast %30 : vector<128xf32> to vector<1x128xf32>
      %844 = vector.broadcast %843 : vector<1x128xf32> to vector<128x128xf32>
      %845 = arith.addf %842, %844 : vector<128x128xf32>
      %846 = math.exp %840 : vector<128x128xf32>
      %847 = math.tanh %846 : vector<128x128xf32>
      %848 = arith.mulf %847, %840 : vector<128x128xf32>
      %849 = arith.mulf %848, %845 : vector<128x128xf32>
      %850 = arith.truncf %849 : vector<128x128xf32> to vector<128x128xbf16>
      %c0_304 = arith.constant 0 : index
      %c0_305 = arith.constant 0 : index
      %851 = vector.load %arg12[%c0_304, %c0_305] : memref<128x128xbf16, #tpu.memory_space<vmem>>, vector<128x128xbf16>
      %cst_306 = arith.constant dense<0.000000e+00> : vector<128x128xf32>
      %852 = tpu.matmul %850, %851, %cst_306 {dimension_numbers = #tpu.dot_dimension_numbers<[1], [0], [0], [1], [0, 0, 1, 1], [], []>} : vector<128x128xbf16>, vector<128x128xbf16>, vector<128x128xf32> -> vector<128x128xf32>
      %853 = vector.shape_cast %32 : vector<128xf32> to vector<1x128xf32>
      %854 = vector.broadcast %853 : vector<1x128xf32> to vector<128x128xf32>
      %855 = arith.addf %852, %854 : vector<128x128xf32>
      %c0_307 = arith.constant 0 : index
      %856 = arith.index_cast %37 : i32 to index
      %c0_308 = arith.constant 0 : index
      %c0_309 = arith.constant 0 : index
      %857 = vector.load %arg1[%c0_307, %856, %c0_308, %c0_309] : memref<1x16x16x128xf32, #tpu.memory_space<vmem>>, vector<1x8x16x128xf32>
      %858 = vector.shape_cast %857 : vector<1x8x16x128xf32> to vector<8x16x128xf32>
      %859 = vector.shape_cast %858 : vector<8x16x128xf32> to vector<128x128xf32>
      %860 = vector.shape_cast %34 : vector<128xf32> to vector<1x128xf32>
      %861 = vector.broadcast %860 : vector<1x128xf32> to vector<128x128xf32>
      %862 = arith.mulf %859, %861 : vector<128x128xf32>
      %863 = arith.addf %855, %862 : vector<128x128xf32>
      %864 = vector.shape_cast %863 : vector<128x128xf32> to vector<8x16x128xf32>
      %c0_310 = arith.constant 0 : index
      %865 = arith.index_cast %37 : i32 to index
      %c0_311 = arith.constant 0 : index
      %c0_312 = arith.constant 0 : index
      %866 = vector.load %arg15[%c0_310, %865, %c0_311, %c0_312] : memref<1x16x16x128xf32, #tpu.memory_space<vmem>>, vector<1x8x16x128xf32>
      %867 = vector.shape_cast %866 : vector<1x8x16x128xf32> to vector<8x16x128xf32>
      %868 = vector.shape_cast %864 : vector<8x16x128xf32> to vector<1x8x16x128xf32>
      tpu.vector_store %arg15[%c0_310, %865, %c0_311, %c0_312], %868 {strides = array<i32>} : memref<1x16x16x128xf32, #tpu.memory_space<vmem>>, vector<1x8x16x128xf32>,
    }
    %c2_i32_48 = arith.constant 2 : i32
    return
  }
  func.func @transform_0(%arg0: i32) -> (i32, i32, i32, i32) {
    %c0_i32 = arith.constant 0 : i32
    %c0_i32_0 = arith.constant 0 : i32
    %c0_i32_1 = arith.constant 0 : i32
    %c0_i32_2 = arith.constant 0 : i32
    return %arg0, %c0_i32, %c0_i32_0, %c0_i32_1 : i32, i32, i32, i32
  }
  func.func @transform_1(%arg0: i32) -> (i32, i32) {
    %c0_i32 = arith.constant 0 : i32
    %c0_i32_0 = arith.constant 0 : i32
    %c0_i32_1 = arith.constant 0 : i32
    return %c0_i32, %c0_i32_0 : i32, i32
  }
  func.func @transform_2(%arg0: i32) -> (i32, i32) {
    %c0_i32 = arith.constant 0 : i32
    %c0_i32_0 = arith.constant 0 : i32
    %c0_i32_1 = arith.constant 0 : i32
    return %c0_i32, %c0_i32_0 : i32, i32
  }
  func.func @transform_3(%arg0: i32) -> (i32, i32) {
    %c0_i32 = arith.constant 0 : i32
    %c0_i32_0 = arith.constant 0 : i32
    %c0_i32_1 = arith.constant 0 : i32
    return %c0_i32, %c0_i32_0 : i32, i32
  }
  func.func @transform_4(%arg0: i32) -> (i32, i32) {
    %c0_i32 = arith.constant 0 : i32
    %c0_i32_0 = arith.constant 0 : i32
    %c0_i32_1 = arith.constant 0 : i32
    return %c0_i32, %c0_i32_0 : i32, i32
  }
  func.func @transform_5(%arg0: i32) -> (i32, i32) {
    %c0_i32 = arith.constant 0 : i32
    %c0_i32_0 = arith.constant 0 : i32
    %c0_i32_1 = arith.constant 0 : i32
    return %c0_i32, %c0_i32_0 : i32, i32
  }
  func.func @transform_6(%arg0: i32) -> (i32, i32) {
    %c0_i32 = arith.constant 0 : i32
    %c0_i32_0 = arith.constant 0 : i32
    %c0_i32_1 = arith.constant 0 : i32
    return %c0_i32, %c0_i32_0 : i32, i32
  }
  func.func @transform_7(%arg0: i32) -> (i32, i32) {
    %c0_i32 = arith.constant 0 : i32
    %c0_i32_0 = arith.constant 0 : i32
    %c0_i32_1 = arith.constant 0 : i32
    return %c0_i32, %c0_i32_0 : i32, i32
  }
  func.func @transform_8(%arg0: i32) -> (i32, i32) {
    %c0_i32 = arith.constant 0 : i32
    %c0_i32_0 = arith.constant 0 : i32
    %c0_i32_1 = arith.constant 0 : i32
    return %c0_i32, %c0_i32_0 : i32, i32
  }
  func.func @transform_9(%arg0: i32) -> (i32, i32) {
    %c0_i32 = arith.constant 0 : i32
    %c0_i32_0 = arith.constant 0 : i32
    %c0_i32_1 = arith.constant 0 : i32
    return %c0_i32, %c0_i32_0 : i32, i32
  }
  func.func @transform_10(%arg0: i32) -> (i32, i32) {
    %c0_i32 = arith.constant 0 : i32
    %c0_i32_0 = arith.constant 0 : i32
    %c0_i32_1 = arith.constant 0 : i32
    return %c0_i32, %c0_i32_0 : i32, i32
  }
  func.func @transform_11(%arg0: i32) -> (i32, i32) {
    %c0_i32 = arith.constant 0 : i32
    %c0_i32_0 = arith.constant 0 : i32
    %c0_i32_1 = arith.constant 0 : i32
    return %c0_i32, %c0_i32_0 : i32, i32
  }
  func.func @transform_12(%arg0: i32) -> (i32, i32) {
    %c0_i32 = arith.constant 0 : i32
    %c0_i32_0 = arith.constant 0 : i32
    %c0_i32_1 = arith.constant 0 : i32
    return %c0_i32, %c0_i32_0 : i32, i32
  }
  func.func @transform_13(%arg0: i32) -> (i32, i32) {
    %c0_i32 = arith.constant 0 : i32
    %c0_i32_0 = arith.constant 0 : i32
    %c0_i32_1 = arith.constant 0 : i32
    return %c0_i32, %c0_i32_0 : i32, i32
  }
  func.func @transform_14(%arg0: i32) -> (i32, i32, i32, i32) {
    %c0_i32 = arith.constant 0 : i32
    %c0_i32_0 = arith.constant 0 : i32
    %c0_i32_1 = arith.constant 0 : i32
    %c0_i32_2 = arith.constant 0 : i32
    return %arg0, %c0_i32, %c0_i32_0, %c0_i32_1 : i32, i32, i32, i32
  }
}

</mosaic_0001>

<llo_original>
// kernel: tpu_custom_call.1
$region0: #{tpu_custom_call.1}
  #allocation0 [shape = 'u32[]', space=smem, size = 0x4, offset = 0x4, fixed_abs, tag = 'smem constant byte address 0x4 - core index']
  #allocation1 [shape = 'u32[144,128]{1,0:T(1,128)}', space=vmem, size = 0x12000, scoped, tag = 'internal scratch']
  #allocation2 [shape = 'f32[18,32,128]{2,1,0:T(8,128)}', space=vmem, size = 0x48000, scoped, tag = 'scratch operand']
  #allocation3 [shape = 'f32[34,48,128]{2,1,0:T(8,128)}', space=vmem, size = 0xcc000, scoped, tag = 'scratch operand']
  %s0 = inlined_call_operand.hbm [shape: f32[2,16,16,128], index: 0, kind: input, shape index: {}]
  %s1 = inlined_call_operand.hbm [shape: f32[9,128], index: 1, kind: input, shape index: {}]
  %s2 = inlined_call_operand.hbm [shape: f32[49,128], index: 2, kind: input, shape index: {}]
  %s3 = inlined_call_operand.hbm [shape: f32[49,128], index: 3, kind: input, shape index: {}]
  %s4 = inlined_call_operand.vmem [shape: f32[1,128], index: 4, kind: input, shape index: {}]
  %s5 = inlined_call_operand.vmem [shape: f32[1,128], index: 5, kind: input, shape index: {}]
  %s6 = inlined_call_operand.vmem [shape: f32[1,128], index: 6, kind: input, shape index: {}]
  %s7 = inlined_call_operand.hbm [shape: bf16[128,128], index: 7, kind: input, shape index: {}]
  %s8 = inlined_call_operand.hbm [shape: bf16[128,128], index: 8, kind: input, shape index: {}]
  %s9 = inlined_call_operand.vmem [shape: f32[1,128], index: 9, kind: input, shape index: {}]
  %s10 = inlined_call_operand.vmem [shape: f32[1,128], index: 10, kind: input, shape index: {}]
  %s11 = inlined_call_operand.hbm [shape: bf16[128,128], index: 11, kind: input, shape index: {}]
  %s12 = inlined_call_operand.vmem [shape: f32[1,128], index: 12, kind: input, shape index: {}]
  %s13 = inlined_call_operand.vmem [shape: f32[1,128], index: 13, kind: input, shape index: {}]
  %s14 = inlined_call_operand.hbm [shape: f32[2,16,16,128], index: 14, kind: output, shape index: {}]
  %s15 = sld [smem:[#allocation0]]
  $region131: #{tpu_custom_call.1} parent=0
    _
  %s17 = ssub.s32 1, %s15
  %s18 = scalar_select 0, %s17, %s15
  $region1: #{tpu_custom_call.1} parent=0
    #allocation4 [shape = 'u8[262144]{0}', space=vmem, size = 0x40000, scoped, tag = 'input window, operand 0']
    #allocation5 [shape = 's32[2]{0}', space=sflag, size = 0x8, scoped, tag = 'scoped memory for tpu_custom_call.1']
    #allocation6 [shape = 's32[2]{0}', space=sflag, size = 0x8, scoped, tag = 'scoped memory for tpu_custom_call.1']
    #allocation7 [shape = 'u8[8192]{0}', space=vmem, size = 0x2000, scoped, tag = 'input window, operand 1, single buffered']
    #allocation8 [shape = 's32[1]{0}', space=sflag, size = 0x4, scoped, tag = 'scoped memory for tpu_custom_call.1']
    #allocation9 [shape = 'u8[28672]{0}', space=vmem, size = 0x7000, scoped, tag = 'input window, operand 2, single buffered']
    #allocation10 [shape = 'u8[28672]{0}', space=vmem, size = 0x7000, scoped, tag = 'input window, operand 3, single buffered']
    #allocation11 [shape = 's32[1]{0}', space=sflag, size = 0x4, scoped, tag = 'scoped memory for tpu_custom_call.1']
    #allocation12 [shape = 'u8[32768]{0}', space=vmem, size = 0x8000, scoped, tag = 'input window, operand 7, single buffered']
    #allocation13 [shape = 'u8[32768]{0}', space=vmem, size = 0x8000, scoped, tag = 'input window, operand 8, single buffered']
    #allocation14 [shape = 's32[1]{0}', space=sflag, size = 0x4, scoped, tag = 'scoped memory for tpu_custom_call.1']
    #allocation15 [shape = 'u8[32768]{0}', space=vmem, size = 0x8000, scoped, tag = 'input window, operand 11, single buffered']
    #allocation16 [shape = 'u8[262144]{0}', space=vmem, size = 0x40000, scoped, tag = 'output window, operand 0']
    %19 = vsyncpa [#allocation5], 0
    %s20 = scalar_lea.sflag [#allocation5], 1
    %21 = vsyncpa %s20, 0
    %22 = vsyncpa [#allocation8], 0
    %23 = vsyncpa [#allocation11], 0
    %24 = vsyncpa [#allocation14], 0
    %25 = vsyncpa [#allocation6], 0
    %s26 = scalar_lea.sflag [#allocation6], 1
    %27 = vsyncpa %s26, 0
    loop: start=0, step=1, limit=4
    $region2: #{tpu_custom_call.1} parent=1 // loop_pre_header
      _
    $region3: #{tpu_custom_call.1} parent=1 // loop_header
      %s29 = sphi 0, %s33
      %p30 = scmp.ge.s32.totalorder %s29, 4
      %s39 = sphi 0, %s41
      %s42 = sphi 0, %s39
      %s43 = sphi 0, %s42
      %s59 = sphi 0, %s43
      %s63 = sphi 0, %s63
      %s65 = sphi 0, %s63
      %s66 = sphi 0, %s65
      %s80 = sphi 0, %s66
      %s84 = sphi 0, %s84
      %s86 = sphi 0, %s84
      %s87 = sphi 0, %s86
      %s101 = sphi 0, %s87
      %s105 = sphi 0, %s105
      %s107 = sphi 0, %s105
      %s108 = sphi 0, %s107
      %s122 = sphi 0, %s108
      %s126 = sphi 0, %s126
      %s128 = sphi 0, %s126
      %s129 = sphi 0, %s128
      %s143 = sphi 0, %s129
      %s147 = sphi 0, %s147
      %s149 = sphi 0, %s147
      %s150 = sphi 0, %s149
      %s164 = sphi 0, %s150
      %s168 = sphi 0, %s168
      %s170 = sphi 0, %s168
      %s171 = sphi 0, %s170
      %s185 = sphi 0, %s171
      %s189 = sphi 0, %s189
      %s191 = sphi 0, %s189
      %s192 = sphi 0, %s191
      %s206 = sphi 0, %s192
      %s210 = sphi 0, %s210
      %s212 = sphi 0, %s210
      %s213 = sphi 0, %s212
      %s227 = sphi 0, %s213
      %s231 = sphi 0, %s231
      %s233 = sphi 0, %s231
      %s234 = sphi 0, %s233
      %s248 = sphi 0, %s234
      %s252 = sphi 0, %s252
      %s254 = sphi 0, %s252
      %s255 = sphi 0, %s254
      %s269 = sphi 0, %s255
      %s273 = sphi 0, %s273
      %s275 = sphi 0, %s273
      %s276 = sphi 0, %s275
      %s290 = sphi 0, %s276
      %s294 = sphi 0, %s294
      %s296 = sphi 0, %s294
      %s297 = sphi 0, %s296
      %s311 = sphi 0, %s297
      %s315 = sphi 0, %s315
      %s317 = sphi 0, %s315
      %s318 = sphi 0, %s317
      %s332 = sphi 0, %s318
      %s338 = sphi 0, %s340
      %s341 = sphi 0, %s338
      %s342 = sphi 0, %s341
      %s358 = sphi 0, %s342
    $region4: #{tpu_custom_call.1} parent=1 // loop_header_branch
      %32 = sbr.rel (%p30) target = $region8
    $region5: #{tpu_custom_call.1} parent=1 // loop_body
      %s34 = ssub.s32 %s29, 1
      %s35 = ssub.s32 %s29, 2
      %s36 = sadd.s32 %s29, 1
      %s37 = ssub.s32 %s29, %s36
      %p38 = scmp.eq.s32.totalorder %s37, 0
      %s40 = sadd.s32 %s39, 1
      %s41 = scalar_select %p38, %s39, %s40
      %p44 = pneg %p38
      %p45 = scmp.eq.s32.totalorder %s29, 1
      %p46 = por %p44, %p45
      %p47 = scmp.ne.s32.totalorder %s39, %s42
      %p48 = scmp.eq.s32.totalorder %s29, 0
      %p49 = por %p47, %p48
      %p50 = scmp.ne.s32.totalorder %s39, %s42
      %p51 = scmp.eq.s32.totalorder %s34, 1
      %p52 = por %p50, %p51
      %p53 = scmp.ne.s32.totalorder %s42, %s43
      %p54 = scmp.eq.s32.totalorder %s34, 0
      %p55 = por %p53, %p54
      %p56 = scmp.ne.s32.totalorder %s42, %s43
      %p57 = scmp.eq.s32.totalorder %s35, 1
      %p58 = por %p56, %p57
      %p60 = scmp.ne.s32.totalorder %s43, %s59
      %p61 = scmp.eq.s32.totalorder %s35, 0
      %p62 = por %p60, %p61
      %s64 = sadd.s32 %s63, 1
      %p67 = scmp.eq.s32.totalorder %s29, 1
      %p68 = scmp.ne.s32.totalorder %s63, %s65
      %p69 = scmp.eq.s32.totalorder %s29, 0
      %p70 = por %p68, %p69
      %p71 = scmp.ne.s32.totalorder %s63, %s65
      %p72 = scmp.eq.s32.totalorder %s34, 1
      %p73 = por %p71, %p72
      %p74 = scmp.ne.s32.totalorder %s65, %s66
      %p75 = scmp.eq.s32.totalorder %s34, 0
      %p76 = por %p74, %p75
      %p77 = scmp.ne.s32.totalorder %s65, %s66
      %p78 = scmp.eq.s32.totalorder %s35, 1
      %p79 = por %p77, %p78
      %p81 = scmp.ne.s32.totalorder %s66, %s80
      %p82 = scmp.eq.s32.totalorder %s35, 0
      %p83 = por %p81, %p82
      %s85 = sadd.s32 %s84, 1
      %p88 = scmp.eq.s32.totalorder %s29, 1
      %p89 = scmp.ne.s32.totalorder %s84, %s86
      %p90 = scmp.eq.s32.totalorder %s29, 0
      %p91 = por %p89, %p90
      %p92 = scmp.ne.s32.totalorder %s84, %s86
      %p93 = scmp.eq.s32.totalorder %s34, 1
      %p94 = por %p92, %p93
      %p95 = scmp.ne.s32.totalorder %s86, %s87
      %p96 = scmp.eq.s32.totalorder %s34, 0
      %p97 = por %p95, %p96
      %p98 = scmp.ne.s32.totalorder %s86, %s87
      %p99 = scmp.eq.s32.totalorder %s35, 1
      %p100 = por %p98, %p99
      %p102 = scmp.ne.s32.totalorder %s87, %s101
      %p103 = scmp.eq.s32.totalorder %s35, 0
      %p104 = por %p102, %p103
      %s106 = sadd.s32 %s105, 1
      %p109 = scmp.eq.s32.totalorder %s29, 1
      %p110 = scmp.ne.s32.totalorder %s105, %s107
      %p111 = scmp.eq.s32.totalorder %s29, 0
      %p112 = por %p110, %p111
      %p113 = scmp.ne.s32.totalorder %s105, %s107
      %p114 = scmp.eq.s32.totalorder %s34, 1
      %p115 = por %p113, %p114
      %p116 = scmp.ne.s32.totalorder %s107, %s108
      %p117 = scmp.eq.s32.totalorder %s34, 0
      %p118 = por %p116, %p117
      %p119 = scmp.ne.s32.totalorder %s107, %s108
      %p120 = scmp.eq.s32.totalorder %s35, 1
      %p121 = por %p119, %p120
      %p123 = scmp.ne.s32.totalorder %s108, %s122
      %p124 = scmp.eq.s32.totalorder %s35, 0
      %p125 = por %p123, %p124
      %s127 = sadd.s32 %s126, 1
      %p130 = scmp.eq.s32.totalorder %s29, 1
      %p131 = scmp.ne.s32.totalorder %s126, %s128
      %p132 = scmp.eq.s32.totalorder %s29, 0
      %p133 = por %p131, %p132
      %p134 = scmp.ne.s32.totalorder %s126, %s128
      %p135 = scmp.eq.s32.totalorder %s34, 1
      %p136 = por %p134, %p135
      %p137 = scmp.ne.s32.totalorder %s128, %s129
      %p138 = scmp.eq.s32.totalorder %s34, 0
      %p139 = por %p137, %p138
      %p140 = scmp.ne.s32.totalorder %s128, %s129
      %p141 = scmp.eq.s32.totalorder %s35, 1
      %p142 = por %p140, %p141
      %p144 = scmp.ne.s32.totalorder %s129, %s143
      %p145 = scmp.eq.s32.totalorder %s35, 0
      %p146 = por %p144, %p145
      %s148 = sadd.s32 %s147, 1
      %p151 = scmp.eq.s32.totalorder %s29, 1
      %p152 = scmp.ne.s32.totalorder %s147, %s149
      %p153 = scmp.eq.s32.totalorder %s29, 0
      %p154 = por %p152, %p153
      %p155 = scmp.ne.s32.totalorder %s147, %s149
      %p156 = scmp.eq.s32.totalorder %s34, 1
      %p157 = por %p155, %p156
      %p158 = scmp.ne.s32.totalorder %s149, %s150
      %p159 = scmp.eq.s32.totalorder %s34, 0
      %p160 = por %p158, %p159
      %p161 = scmp.ne.s32.totalorder %s149, %s150
      %p162 = scmp.eq.s32.totalorder %s35, 1
      %p163 = por %p161, %p162
      %p165 = scmp.ne.s32.totalorder %s150, %s164
      %p166 = scmp.eq.s32.totalorder %s35, 0
      %p167 = por %p165, %p166
      %s169 = sadd.s32 %s168, 1
      %p172 = scmp.eq.s32.totalorder %s29, 1
      %p173 = scmp.ne.s32.totalorder %s168, %s170
      %p174 = scmp.eq.s32.totalorder %s29, 0
      %p175 = por %p173, %p174
      %p176 = scmp.ne.s32.totalorder %s168, %s170
      %p177 = scmp.eq.s32.totalorder %s34, 1
      %p178 = por %p176, %p177
      %p179 = scmp.ne.s32.totalorder %s170, %s171
      %p180 = scmp.eq.s32.totalorder %s34, 0
      %p181 = por %p179, %p180
      %p182 = scmp.ne.s32.totalorder %s170, %s171
      %p183 = scmp.eq.s32.totalorder %s35, 1
      %p184 = por %p182, %p183
      %p186 = scmp.ne.s32.totalorder %s171, %s185
      %p187 = scmp.eq.s32.totalorder %s35, 0
      %p188 = por %p186, %p187
      %s190 = sadd.s32 %s189, 1
      %p193 = scmp.eq.s32.totalorder %s29, 1
      %p194 = scmp.ne.s32.totalorder %s189, %s191
      %p195 = scmp.eq.s32.totalorder %s29, 0
      %p196 = por %p194, %p195
      %p197 = scmp.ne.s32.totalorder %s189, %s191
      %p198 = scmp.eq.s32.totalorder %s34, 1
      %p199 = por %p197, %p198
      %p200 = scmp.ne.s32.totalorder %s191, %s192
      %p201 = scmp.eq.s32.totalorder %s34, 0
      %p202 = por %p200, %p201
      %p203 = scmp.ne.s32.totalorder %s191, %s192
      %p204 = scmp.eq.s32.totalorder %s35, 1
      %p205 = por %p203, %p204
      %p207 = scmp.ne.s32.totalorder %s192, %s206
      %p208 = scmp.eq.s32.totalorder %s35, 0
      %p209 = por %p207, %p208
      %s211 = sadd.s32 %s210, 1
      %p214 = scmp.eq.s32.totalorder %s29, 1
      %p215 = scmp.ne.s32.totalorder %s210, %s212
      %p216 = scmp.eq.s32.totalorder %s29, 0
      %p217 = por %p215, %p216
      %p218 = scmp.ne.s32.totalorder %s210, %s212
      %p219 = scmp.eq.s32.totalorder %s34, 1
      %p220 = por %p218, %p219
      %p221 = scmp.ne.s32.totalorder %s212, %s213
      %p222 = scmp.eq.s32.totalorder %s34, 0
      %p223 = por %p221, %p222
      %p224 = scmp.ne.s32.totalorder %s212, %s213
      %p225 = scmp.eq.s32.totalorder %s35, 1
      %p226 = por %p224, %p225
      %p228 = scmp.ne.s32.totalorder %s213, %s227
      %p229 = scmp.eq.s32.totalorder %s35, 0
      %p230 = por %p228, %p229
      %s232 = sadd.s32 %s231, 1
      %p235 = scmp.eq.s32.totalorder %s29, 1
      %p236 = scmp.ne.s32.totalorder %s231, %s233
      %p237 = scmp.eq.s32.totalorder %s29, 0
      %p238 = por %p236, %p237
      %p239 = scmp.ne.s32.totalorder %s231, %s233
      %p240 = scmp.eq.s32.totalorder %s34, 1
      %p241 = por %p239, %p240
      %p242 = scmp.ne.s32.totalorder %s233, %s234
      %p243 = scmp.eq.s32.totalorder %s34, 0
      %p244 = por %p242, %p243
      %p245 = scmp.ne.s32.totalorder %s233, %s234
      %p246 = scmp.eq.s32.totalorder %s35, 1
      %p247 = por %p245, %p246
      %p249 = scmp.ne.s32.totalorder %s234, %s248
      %p250 = scmp.eq.s32.totalorder %s35, 0
      %p251 = por %p249, %p250
      %s253 = sadd.s32 %s252, 1
      %p256 = scmp.eq.s32.totalorder %s29, 1
      %p257 = scmp.ne.s32.totalorder %s252, %s254
      %p258 = scmp.eq.s32.totalorder %s29, 0
      %p259 = por %p257, %p258
      %p260 = scmp.ne.s32.totalorder %s252, %s254
      %p261 = scmp.eq.s32.totalorder %s34, 1
      %p262 = por %p260, %p261
      %p263 = scmp.ne.s32.totalorder %s254, %s255
      %p264 = scmp.eq.s32.totalorder %s34, 0
      %p265 = por %p263, %p264
      %p266 = scmp.ne.s32.totalorder %s254, %s255
      %p267 = scmp.eq.s32.totalorder %s35, 1
      %p268 = por %p266, %p267
      %p270 = scmp.ne.s32.totalorder %s255, %s269
      %p271 = scmp.eq.s32.totalorder %s35, 0
      %p272 = por %p270, %p271
      %s274 = sadd.s32 %s273, 1
      %p277 = scmp.eq.s32.totalorder %s29, 1
      %p278 = scmp.ne.s32.totalorder %s273, %s275
      %p279 = scmp.eq.s32.totalorder %s29, 0
      %p280 = por %p278, %p279
      %p281 = scmp.ne.s32.totalorder %s273, %s275
      %p282 = scmp.eq.s32.totalorder %s34, 1
      %p283 = por %p281, %p282
      %p284 = scmp.ne.s32.totalorder %s275, %s276
      %p285 = scmp.eq.s32.totalorder %s34, 0
      %p286 = por %p284, %p285
      %p287 = scmp.ne.s32.totalorder %s275, %s276
      %p288 = scmp.eq.s32.totalorder %s35, 1
      %p289 = por %p287, %p288
      %p291 = scmp.ne.s32.totalorder %s276, %s290
      %p292 = scmp.eq.s32.totalorder %s35, 0
      %p293 = por %p291, %p292
      %s295 = sadd.s32 %s294, 1
      %p298 = scmp.eq.s32.totalorder %s29, 1
      %p299 = scmp.ne.s32.totalorder %s294, %s296
      %p300 = scmp.eq.s32.totalorder %s29, 0
      %p301 = por %p299, %p300
      %p302 = scmp.ne.s32.totalorder %s294, %s296
      %p303 = scmp.eq.s32.totalorder %s34, 1
      %p304 = por %p302, %p303
      %p305 = scmp.ne.s32.totalorder %s296, %s297
      %p306 = scmp.eq.s32.totalorder %s34, 0
      %p307 = por %p305, %p306
      %p308 = scmp.ne.s32.totalorder %s296, %s297
      %p309 = scmp.eq.s32.totalorder %s35, 1
      %p310 = por %p308, %p309
      %p312 = scmp.ne.s32.totalorder %s297, %s311
      %p313 = scmp.eq.s32.totalorder %s35, 0
      %p314 = por %p312, %p313
      %s316 = sadd.s32 %s315, 1
      %p319 = scmp.eq.s32.totalorder %s29, 1
      %p320 = scmp.ne.s32.totalorder %s315, %s317
      %p321 = scmp.eq.s32.totalorder %s29, 0
      %p322 = por %p320, %p321
      %p323 = scmp.ne.s32.totalorder %s315, %s317
      %p324 = scmp.eq.s32.totalorder %s34, 1
      %p325 = por %p323, %p324
      %p326 = scmp.ne.s32.totalorder %s317, %s318
      %p327 = scmp.eq.s32.totalorder %s34, 0
      %p328 = por %p326, %p327
      %p329 = scmp.ne.s32.totalorder %s317, %s318
      %p330 = scmp.eq.s32.totalorder %s35, 1
      %p331 = por %p329, %p330
      %p333 = scmp.ne.s32.totalorder %s318, %s332
      %p334 = scmp.eq.s32.totalorder %s35, 0
      %p335 = por %p333, %p334
      %s336 = ssub.s32 %s29, %s36
      %p337 = scmp.eq.s32.totalorder %s336, 0
      %s339 = sadd.s32 %s338, 1
      %s340 = scalar_select %p337, %s338, %s339
      %p343 = pneg %p337
      %p344 = scmp.eq.s32.totalorder %s29, 1
      %p345 = por %p343, %p344
      %p346 = scmp.ne.s32.totalorder %s338, %s341
      %p347 = scmp.eq.s32.totalorder %s29, 0
      %p348 = por %p346, %p347
      %p349 = scmp.ne.s32.totalorder %s338, %s341
      %p350 = scmp.eq.s32.totalorder %s34, 1
      %p351 = por %p349, %p350
      %p352 = scmp.ne.s32.totalorder %s341, %s342
      %p353 = scmp.eq.s32.totalorder %s34, 0
      %p354 = por %p352, %p353
      %p355 = scmp.ne.s32.totalorder %s341, %s342
      %p356 = scmp.eq.s32.totalorder %s35, 1
      %p357 = por %p355, %p356
      %p359 = scmp.ne.s32.totalorder %s342, %s358
      %p360 = scmp.eq.s32.totalorder %s35, 0
      %p361 = por %p359, %p360
      %p362 = scmp.le.s32.totalorder 1, %s29
      %p363 = scmp.lt.s32.totalorder %s29, 3
      %p364 = pnand %p362, %p363
      %p365 = pneg %p364
      // Predicated region
      $region9: #{tpu_custom_call.1} parent=5 // pred_check
        _
      $region10: #{tpu_custom_call.1} parent=5 // pred_check_branch
        %367 = sbr.rel (%p364) target = $region12
      $region11: #{tpu_custom_call.1} parent=5 // pred_region
        %s368 = ssub.s32 %s29, 1
        // Predicated region
        $region13: #{tpu_custom_call.1} parent=11 // pred_check
          %p369 = pneg %p76
        $region14: #{tpu_custom_call.1} parent=11 // pred_check_branch
          %371 = sbr.rel (%p369) target = $region16
        $region15: #{tpu_custom_call.1} parent=11 // pred_region
          %s373 = ssub.s32 256, 256
          %374 = vsyncadd [#allocation8], %s373
          %s375 = sshll.u32 [#allocation7], 4
          %s376 = int_to_ptr.vmem [resolvable:$true] %s375
          %381 = dma.hbm_to_vmem [thread:$0]  %s1, 256, %s376, [#allocation8], 128, 128, 8
        $region16: #{tpu_custom_call.1} parent=11 // pred_fallthru
          _
        // Predicated region
        $region17: #{tpu_custom_call.1} parent=11 // pred_check
          %p382 = pneg %p97
        $region18: #{tpu_custom_call.1} parent=11 // pred_check_branch
          %384 = sbr.rel (%p382) target = $region20
        $region19: #{tpu_custom_call.1} parent=11 // pred_region
          %s386 = ssub.s32 896, 896
          %387 = vsyncadd [#allocation8], %s386
          %s388 = sshll.u32 [#allocation9], 4
          %s389 = int_to_ptr.vmem [resolvable:$true] %s388
          %394 = dma.hbm_to_vmem [thread:$0]  %s2, 896, %s389, [#allocation8], 128, 128, 8
        $region20: #{tpu_custom_call.1} parent=11 // pred_fallthru
          _
        // Predicated region
        $region21: #{tpu_custom_call.1} parent=11 // pred_check
          %p395 = pneg %p118
        $region22: #{tpu_custom_call.1} parent=11 // pred_check_branch
          %397 = sbr.rel (%p395) target = $region24
        $region23: #{tpu_custom_call.1} parent=11 // pred_region
          %s399 = ssub.s32 896, 896
          %400 = vsyncadd [#allocation11], %s399
          %s401 = sshll.u32 [#allocation10], 4
          %s402 = int_to_ptr.vmem [resolvable:$true] %s401
          %407 = dma.hbm_to_vmem [thread:$0]  %s3, 896, %s402, [#allocation11], 128, 128, 8
        $region24: #{tpu_custom_call.1} parent=11 // pred_fallthru
          _
        // Predicated region
        $region25: #{tpu_custom_call.1} parent=11 // pred_check
          %p408 = pneg %p139
        $region26: #{tpu_custom_call.1} parent=11 // pred_check_branch
          %410 = sbr.rel (%p408) target = $region28
        $region27: #{tpu_custom_call.1} parent=11 // pred_region
          _
        $region28: #{tpu_custom_call.1} parent=11 // pred_fallthru
          _
        // Predicated region
        $region29: #{tpu_custom_call.1} parent=11 // pred_check
          %p411 = pneg %p160
        $region30: #{tpu_custom_call.1} parent=11 // pred_check_branch
          %413 = sbr.rel (%p411) target = $region32
        $region31: #{tpu_custom_call.1} parent=11 // pred_region
          _
        $region32: #{tpu_custom_call.1} parent=11 // pred_fallthru
          _
        // Predicated region
        $region33: #{tpu_custom_call.1} parent=11 // pred_check
          %p414 = pneg %p181
        $region34: #{tpu_custom_call.1} parent=11 // pred_check_branch
          %416 = sbr.rel (%p414) target = $region36
        $region35: #{tpu_custom_call.1} parent=11 // pred_region
          _
        $region36: #{tpu_custom_call.1} parent=11 // pred_fallthru
          _
        // Predicated region
        $region37: #{tpu_custom_call.1} parent=11 // pred_check
          %p417 = pneg %p202
        $region38: #{tpu_custom_call.1} parent=11 // pred_check_branch
          %419 = sbr.rel (%p417) target = $region40
        $region39: #{tpu_custom_call.1} parent=11 // pred_region
          %s421 = ssub.s32 1024, 1024
          %422 = vsyncadd [#allocation11], %s421
          %s423 = sshll.u32 [#allocation12], 4
          %s424 = int_to_ptr.vmem [resolvable:$true] %s423
          %429 = dma.hbm_to_vmem [thread:$0]  %s7, 1024, %s424, [#allocation11], 64, 64, 4
        $region40: #{tpu_custom_call.1} parent=11 // pred_fallthru
          _
        // Predicated region
        $region41: #{tpu_custom_call.1} parent=11 // pred_check
          %p430 = pneg %p223
        $region42: #{tpu_custom_call.1} parent=11 // pred_check_branch
          %432 = sbr.rel (%p430) target = $region44
        $region43: #{tpu_custom_call.1} parent=11 // pred_region
          %s434 = ssub.s32 1024, 1024
          %435 = vsyncadd [#allocation14], %s434
          %s436 = sshll.u32 [#allocation13], 4
          %s437 = int_to_ptr.vmem [resolvable:$true] %s436
          %442 = dma.hbm_to_vmem [thread:$0]  %s8, 1024, %s437, [#allocation14], 64, 64, 4
        $region44: #{tpu_custom_call.1} parent=11 // pred_fallthru
          _
        // Predicated region
        $region45: #{tpu_custom_call.1} parent=11 // pred_check
          %p443 = pneg %p244
        $region46: #{tpu_custom_call.1} parent=11 // pred_check_branch
          %445 = sbr.rel (%p443) target = $region48
        $region47: #{tpu_custom_call.1} parent=11 // pred_region
          _
        $region48: #{tpu_custom_call.1} parent=11 // pred_fallthru
          _
        // Predicated region
        $region49: #{tpu_custom_call.1} parent=11 // pred_check
          %p446 = pneg %p265
        $region50: #{tpu_custom_call.1} parent=11 // pred_check_branch
          %448 = sbr.rel (%p446) target = $region52
        $region51: #{tpu_custom_call.1} parent=11 // pred_region
          _
        $region52: #{tpu_custom_call.1} parent=11 // pred_fallthru
          _
        // Predicated region
        $region53: #{tpu_custom_call.1} parent=11 // pred_check
          %p449 = pneg %p286
        $region54: #{tpu_custom_call.1} parent=11 // pred_check_branch
          %451 = sbr.rel (%p449) target = $region56
        $region55: #{tpu_custom_call.1} parent=11 // pred_region
          %s453 = ssub.s32 1024, 1024
          %454 = vsyncadd [#allocation14], %s453
          %s455 = sshll.u32 [#allocation15], 4
          %s456 = int_to_ptr.vmem [resolvable:$true] %s455
          %461 = dma.hbm_to_vmem [thread:$0]  %s11, 1024, %s456, [#allocation14], 64, 64, 4
        $region56: #{tpu_custom_call.1} parent=11 // pred_fallthru
          _
        // Predicated region
        $region57: #{tpu_custom_call.1} parent=11 // pred_check
          %p462 = pneg %p307
        $region58: #{tpu_custom_call.1} parent=11 // pred_check_branch
          %464 = sbr.rel (%p462) target = $region60
        $region59: #{tpu_custom_call.1} parent=11 // pred_region
          _
        $region60: #{tpu_custom_call.1} parent=11 // pred_fallthru
          _
        // Predicated region
        $region61: #{tpu_custom_call.1} parent=11 // pred_check
          %p465 = pneg %p328
        $region62: #{tpu_custom_call.1} parent=11 // pred_check_branch
          %467 = sbr.rel (%p465) target = $region64
        $region63: #{tpu_custom_call.1} parent=11 // pred_region
          _
        $region64: #{tpu_custom_call.1} parent=11 // pred_fallthru
          _
      $region12: #{tpu_custom_call.1} parent=5 // pred_fallthru
        _
      %p468 = scmp.lt.s32.totalorder %s29, 2
      // Predicated region
      $region65: #{tpu_custom_call.1} parent=5 // pred_check
        %p469 = pneg %p468
      $region66: #{tpu_custom_call.1} parent=5 // pred_check_branch
        %471 = sbr.rel (%p469) target = $region68
      $region67: #{tpu_custom_call.1} parent=5 // pred_region
        // Predicated region
        $region69: #{tpu_custom_call.1} parent=67 // pred_check
          %p472 = pneg %p49
        $region70: #{tpu_custom_call.1} parent=67 // pred_check_branch
          %474 = sbr.rel (%p472) target = $region72
        $region71: #{tpu_custom_call.1} parent=67 // pred_region
          %s475 = sand.u32 %s39, 1
          %s476 = scalar_lea.sflag [#allocation5], %s475
          %s477 = sand.u32 %s39, 1
          %s478 = smul.addr %s477, 256
          %s479 = scalar_lea.vmem [#allocation4], %s478
          %s481 = ssub.s32 4096, 4096
          %482 = vsyncadd %s476, %s481
          %s483 = smul.addr %s29, 32
          %s484 = smul.addr %s483, 128
          %s485 = scalar_lea.hbm %s0, %s484
          %s486 = sshll.u32 %s479, 4
          %s487 = int_to_ptr.vmem [resolvable:$true] %s486
          %492 = dma.hbm_to_vmem [thread:$0]  %s485, 4096, %s487, %s476, 128, 128, 8
        $region72: #{tpu_custom_call.1} parent=67 // pred_fallthru
          _
      $region68: #{tpu_custom_call.1} parent=5 // pred_fallthru
        _
      %p493 = scmp.le.s32.totalorder 1, %s29
      %p494 = scmp.lt.s32.totalorder %s29, 3
      %p495 = pnand %p493, %p494
      %p496 = pneg %p495
      // Predicated region
      $region73: #{tpu_custom_call.1} parent=5 // pred_check
        _
      $region74: #{tpu_custom_call.1} parent=5 // pred_check_branch
        %498 = sbr.rel (%p495) target = $region76
      $region75: #{tpu_custom_call.1} parent=5 // pred_region
        %s499 = ssub.s32 %s29, 1
        %s500 = sand.u32 %s42, 1
        %s501 = scalar_lea.sflag [#allocation5], %s500
        %s502 = sand.u32 %s42, 1
        %s503 = smul.addr %s502, 256
        %s504 = scalar_lea.vmem [#allocation4], %s503
        // Predicated region
        $region77: #{tpu_custom_call.1} parent=75 // pred_check
          %p505 = pneg %p55
        $region78: #{tpu_custom_call.1} parent=75 // pred_check_branch
          %507 = sbr.rel (%p505) target = $region80
        $region79: #{tpu_custom_call.1} parent=75 // pred_region
          %508 = dma.done %s501, 4096
        $region80: #{tpu_custom_call.1} parent=75 // pred_fallthru
          _
        // Predicated region
        $region81: #{tpu_custom_call.1} parent=75 // pred_check
          %p509 = pneg %p76
        $region82: #{tpu_custom_call.1} parent=75 // pred_check_branch
          %511 = sbr.rel (%p509) target = $region84
        $region83: #{tpu_custom_call.1} parent=75 // pred_region
          %512 = dma.done [#allocation8], 256
        $region84: #{tpu_custom_call.1} parent=75 // pred_fallthru
          _
        // Predicated region
        $region85: #{tpu_custom_call.1} parent=75 // pred_check
          %p513 = pneg %p97
        $region86: #{tpu_custom_call.1} parent=75 // pred_check_branch
          %515 = sbr.rel (%p513) target = $region88
        $region87: #{tpu_custom_call.1} parent=75 // pred_region
          %516 = dma.done [#allocation8], 896
        $region88: #{tpu_custom_call.1} parent=75 // pred_fallthru
          _
        // Predicated region
        $region89: #{tpu_custom_call.1} parent=75 // pred_check
          %p517 = pneg %p118
        $region90: #{tpu_custom_call.1} parent=75 // pred_check_branch
          %519 = sbr.rel (%p517) target = $region92
        $region91: #{tpu_custom_call.1} parent=75 // pred_region
          %520 = dma.done [#allocation11], 896
        $region92: #{tpu_custom_call.1} parent=75 // pred_fallthru
          _
        // Predicated region
        $region93: #{tpu_custom_call.1} parent=75 // pred_check
          %p521 = pneg %p202
        $region94: #{tpu_custom_call.1} parent=75 // pred_check_branch
          %523 = sbr.rel (%p521) target = $region96
        $region95: #{tpu_custom_call.1} parent=75 // pred_region
          %524 = dma.done [#allocation11], 1024
        $region96: #{tpu_custom_call.1} parent=75 // pred_fallthru
          _
        // Predicated region
        $region97: #{tpu_custom_call.1} parent=75 // pred_check
          %p525 = pneg %p223
        $region98: #{tpu_custom_call.1} parent=75 // pred_check_branch
          %527 = sbr.rel (%p525) target = $region100
        $region99: #{tpu_custom_call.1} parent=75 // pred_region
          %528 = dma.done [#allocation14], 1024
        $region100: #{tpu_custom_call.1} parent=75 // pred_fallthru
          _
        // Predicated region
        $region101: #{tpu_custom_call.1} parent=75 // pred_check
          %p529 = pneg %p286
        $region102: #{tpu_custom_call.1} parent=75 // pred_check_branch
          %531 = sbr.rel (%p529) target = $region104
        $region103: #{tpu_custom_call.1} parent=75 // pred_region
          %532 = dma.done [#allocation14], 1024
        $region104: #{tpu_custom_call.1} parent=75 // pred_fallthru
          _
        %s533 = sand.u32 %s42, 1
        %s534 = scalar_lea.sflag [#allocation5], %s533
        %s535 = sand.u32 %s42, 1
        %s536 = smul.addr %s535, 256
        %s537 = scalar_lea.vmem [#allocation4], %s536
        %p538 = pneg %p55
        %p539 = pneg %p52
        %p540 = pneg %p76
        %p541 = pneg %p73
        %p542 = pneg %p97
        %p543 = pneg %p94
        %p544 = pneg %p118
        %p545 = pneg %p115
        %p546 = pneg %p139
        %p547 = pneg %p136
        %p548 = pneg %p160
        %p549 = pneg %p157
        %p550 = pneg %p181
        %p551 = pneg %p178
        %p552 = pneg %p202
        %p553 = pneg %p199
        %p554 = pneg %p223
        %p555 = pneg %p220
        %p556 = pneg %p244
        %p557 = pneg %p241
        %p558 = pneg %p265
        %p559 = pneg %p262
        %p560 = pneg %p286
        %p561 = pneg %p283
        %p562 = pneg %p307
        %p563 = pneg %p304
        %p564 = pneg %p328
        %p565 = pneg %p325
        %p566 = pneg %p354
        %p567 = pneg %p351
        %s568 = sand.u32 %s341, 1
        %s569 = scalar_lea.sflag [#allocation6], %s568
        %s570 = sand.u32 %s341, 1
        %s571 = smul.addr %s570, 256
        %s572 = scalar_lea.vmem [#allocation16], %s571
        %574 = vst [vmem:[#allocation2] sm:$0xff] 0.0
        %575 = vst [vmem:[#allocation2 + $0x8] sm:$0xff] 0.0
        %576 = vst [vmem:[#allocation2 + $0x10] sm:$0xff] 0.0
        %577 = vst [vmem:[#allocation2 + $0x18] sm:$0xff] 0.0
        %s578 = scalar_lea.vmem [#allocation2], 544
        %579 = vst [vmem:[%s578] sm:$0xff] 0.0
        %580 = vst [vmem:[%s578 + $0x8] sm:$0xff] 0.0
        %581 = vst [vmem:[%s578 + $0x10] sm:$0xff] 0.0
        %582 = vst [vmem:[%s578 + $0x18] sm:$0xff] 0.0
        %s583 = scalar_lea.vmem [#allocation2], 32
        %584 = vst [vmem:[%s583] sm:$0xff] 0.0
        %585 = vst [vmem:[%s583 + $0x20] sm:$0xff] 0.0
        %586 = vst [vmem:[%s583 + $0x40] sm:$0xff] 0.0
        %587 = vst [vmem:[%s583 + $0x60] sm:$0xff] 0.0
        %588 = vst [vmem:[%s583 + $0x80] sm:$0xff] 0.0
        %589 = vst [vmem:[%s583 + $0xa0] sm:$0xff] 0.0
        %590 = vst [vmem:[%s583 + $0xc0] sm:$0xff] 0.0
        %591 = vst [vmem:[%s583 + $0xe0] sm:$0xff] 0.0
        %592 = vst [vmem:[%s583 + $0x100] sm:$0xff] 0.0
        %593 = vst [vmem:[%s583 + $0x120] sm:$0xff] 0.0
        %594 = vst [vmem:[%s583 + $0x140] sm:$0xff] 0.0
        %595 = vst [vmem:[%s583 + $0x160] sm:$0xff] 0.0
        %596 = vst [vmem:[%s583 + $0x180] sm:$0xff] 0.0
        %597 = vst [vmem:[%s583 + $0x1a0] sm:$0xff] 0.0
        %598 = vst [vmem:[%s583 + $0x1c0] sm:$0xff] 0.0
        %599 = vst [vmem:[%s583 + $0x1e0] sm:$0xff] 0.0
        %600 = vst [vmem:[%s583 + $0x18] sm:$0xff] 0.0
        %601 = vst [vmem:[%s583 + $0x38] sm:$0xff] 0.0
        %602 = vst [vmem:[%s583 + $0x58] sm:$0xff] 0.0
        %603 = vst [vmem:[%s583 + $0x78] sm:$0xff] 0.0
        %604 = vst [vmem:[%s583 + $0x98] sm:$0xff] 0.0
        %605 = vst [vmem:[%s583 + $0xb8] sm:$0xff] 0.0
        %606 = vst [vmem:[%s583 + $0xd8] sm:$0xff] 0.0
        %607 = vst [vmem:[%s583 + $0xf8] sm:$0xff] 0.0
        %608 = vst [vmem:[%s583 + $0x118] sm:$0xff] 0.0
        %609 = vst [vmem:[%s583 + $0x138] sm:$0xff] 0.0
        %610 = vst [vmem:[%s583 + $0x158] sm:$0xff] 0.0
        %611 = vst [vmem:[%s583 + $0x178] sm:$0xff] 0.0
        %612 = vst [vmem:[%s583 + $0x198] sm:$0xff] 0.0
        %613 = vst [vmem:[%s583 + $0x1b8] sm:$0xff] 0.0
        %614 = vst [vmem:[%s583 + $0x1d8] sm:$0xff] 0.0
        %615 = vst [vmem:[%s583 + $0x1f8] sm:$0xff] 0.0
        %616 = vst [vmem:[#allocation3] sm:$0xff] 0.0
        %617 = vst [vmem:[#allocation3 + $0x8] sm:$0xff] 0.0
        %618 = vst [vmem:[#allocation3 + $0x10] sm:$0xff] 0.0
        %619 = vst [vmem:[#allocation3 + $0x18] sm:$0xff] 0.0
        %620 = vst [vmem:[#allocation3 + $0x20] sm:$0xff] 0.0
        %621 = vst [vmem:[#allocation3 + $0x28] sm:$0xff] 0.0
        %622 = vst [vmem:[#allocation3 + $0x30] sm:$0xff] 0.0
        %623 = vst [vmem:[#allocation3 + $0x38] sm:$0xff] 0.0
        %624 = vst [vmem:[#allocation3 + $0x40] sm:$0xff] 0.0
        %625 = vst [vmem:[#allocation3 + $0x48] sm:$0xff] 0.0
        %626 = vst [vmem:[#allocation3 + $0x50] sm:$0xff] 0.0
        %627 = vst [vmem:[#allocation3 + $0x58] sm:$0xff] 0.0
        %628 = vst [vmem:[#allocation3 + $0x60] sm:$0xff] 0.0
        %629 = vst [vmem:[#allocation3 + $0x68] sm:$0xff] 0.0
        %630 = vst [vmem:[#allocation3 + $0x70] sm:$0xff] 0.0
        %631 = vst [vmem:[#allocation3 + $0x78] sm:$0xff] 0.0
        %632 = vst [vmem:[#allocation3 + $0x80] sm:$0xff] 0.0
        %633 = vst [vmem:[#allocation3 + $0x88] sm:$0xff] 0.0
        %634 = vst [vmem:[#allocation3 + $0x90] sm:$0xff] 0.0
        %635 = vst [vmem:[#allocation3 + $0x98] sm:$0xff] 0.0
        %636 = vst [vmem:[#allocation3 + $0xa0] sm:$0xff] 0.0
        %637 = vst [vmem:[#allocation3 + $0xa8] sm:$0xff] 0.0
        %638 = vst [vmem:[#allocation3 + $0xb0] sm:$0xff] 0.0
        %639 = vst [vmem:[#allocation3 + $0xb8] sm:$0xff] 0.0
        %640 = vst [vmem:[#allocation3 + $0xc0] sm:$0xff] 0.0
        %641 = vst [vmem:[#allocation3 + $0xc8] sm:$0xff] 0.0
        %642 = vst [vmem:[#allocation3 + $0xd0] sm:$0xff] 0.0
        %643 = vst [vmem:[#allocation3 + $0xd8] sm:$0xff] 0.0
        %644 = vst [vmem:[#allocation3 + $0xe0] sm:$0xff] 0.0
        %645 = vst [vmem:[#allocation3 + $0xe8] sm:$0xff] 0.0
        %646 = vst [vmem:[#allocation3 + $0xf0] sm:$0xff] 0.0
        %647 = vst [vmem:[#allocation3 + $0xf8] sm:$0xff] 0.0
        %648 = vst [vmem:[#allocation3 + $0x100] sm:$0xff] 0.0
        %649 = vst [vmem:[#allocation3 + $0x108] sm:$0xff] 0.0
        %650 = vst [vmem:[#allocation3 + $0x110] sm:$0xff] 0.0
        %651 = vst [vmem:[#allocation3 + $0x118] sm:$0xff] 0.0
        %652 = vst [vmem:[#allocation3 + $0x120] sm:$0xff] 0.0
        %653 = vst [vmem:[#allocation3 + $0x128] sm:$0xff] 0.0
        %654 = vst [vmem:[#allocation3 + $0x130] sm:$0xff] 0.0
        %655 = vst [vmem:[#allocation3 + $0x138] sm:$0xff] 0.0
        %656 = vst [vmem:[#allocation3 + $0x140] sm:$0xff] 0.0
        %657 = vst [vmem:[#allocation3 + $0x148] sm:$0xff] 0.0
        %658 = vst [vmem:[#allocation3 + $0x150] sm:$0xff] 0.0
        %659 = vst [vmem:[#allocation3 + $0x158] sm:$0xff] 0.0
        %660 = vst [vmem:[#allocation3 + $0x160] sm:$0xff] 0.0
        %661 = vst [vmem:[#allocation3 + $0x168] sm:$0xff] 0.0
        %662 = vst [vmem:[#allocation3 + $0x170] sm:$0xff] 0.0
        %663 = vst [vmem:[#allocation3 + $0x178] sm:$0xff] 0.0
        %664 = vst [vmem:[#allocation3 + $0x180] sm:$0xff] 0.0
        %665 = vst [vmem:[#allocation3 + $0x188] sm:$0xff] 0.0
        %666 = vst [vmem:[#allocation3 + $0x190] sm:$0xff] 0.0
        %667 = vst [vmem:[#allocation3 + $0x198] sm:$0xff] 0.0
        %668 = vst [vmem:[#allocation3 + $0x1a0] sm:$0xff] 0.0
        %669 = vst [vmem:[#allocation3 + $0x1a8] sm:$0xff] 0.0
        %s670 = scalar_lea.vmem [#allocation3], 1200
        %671 = vst [vmem:[%s670] sm:$0xff] 0.0
        %672 = vst [vmem:[%s670 + $0x8] sm:$0xff] 0.0
        %673 = vst [vmem:[%s670 + $0x10] sm:$0xff] 0.0
        %674 = vst [vmem:[%s670 + $0x18] sm:$0xff] 0.0
        %675 = vst [vmem:[%s670 + $0x20] sm:$0xff] 0.0
        %676 = vst [vmem:[%s670 + $0x28] sm:$0xff] 0.0
        %677 = vst [vmem:[%s670 + $0x30] sm:$0xff] 0.0
        %678 = vst [vmem:[%s670 + $0x38] sm:$0xff] 0.0
        %679 = vst [vmem:[%s670 + $0x40] sm:$0xff] 0.0
        %680 = vst [vmem:[%s670 + $0x48] sm:$0xff] 0.0
        %681 = vst [vmem:[%s670 + $0x50] sm:$0xff] 0.0
        %682 = vst [vmem:[%s670 + $0x58] sm:$0xff] 0.0
        %683 = vst [vmem:[%s670 + $0x60] sm:$0xff] 0.0
        %684 = vst [vmem:[%s670 + $0x68] sm:$0xff] 0.0
        %685 = vst [vmem:[%s670 + $0x70] sm:$0xff] 0.0
        %686 = vst [vmem:[%s670 + $0x78] sm:$0xff] 0.0
        %687 = vst [vmem:[%s670 + $0x80] sm:$0xff] 0.0
        %688 = vst [vmem:[%s670 + $0x88] sm:$0xff] 0.0
        %689 = vst [vmem:[%s670 + $0x90] sm:$0xff] 0.0
        %690 = vst [vmem:[%s670 + $0x98] sm:$0xff] 0.0
        %691 = vst [vmem:[%s670 + $0xa0] sm:$0xff] 0.0
        %692 = vst [vmem:[%s670 + $0xa8] sm:$0xff] 0.0
        %693 = vst [vmem:[%s670 + $0xb0] sm:$0xff] 0.0
        %694 = vst [vmem:[%s670 + $0xb8] sm:$0xff] 0.0
        %695 = vst [vmem:[%s670 + $0xc0] sm:$0xff] 0.0
        %696 = vst [vmem:[%s670 + $0xc8] sm:$0xff] 0.0
        %697 = vst [vmem:[%s670 + $0xd0] sm:$0xff] 0.0
        %698 = vst [vmem:[%s670 + $0xd8] sm:$0xff] 0.0
        %699 = vst [vmem:[%s670 + $0xe0] sm:$0xff] 0.0
        %700 = vst [vmem:[%s670 + $0xe8] sm:$0xff] 0.0
        %701 = vst [vmem:[%s670 + $0xf0] sm:$0xff] 0.0
        %702 = vst [vmem:[%s670 + $0xf8] sm:$0xff] 0.0
        %703 = vst [vmem:[%s670 + $0x100] sm:$0xff] 0.0
        %704 = vst [vmem:[%s670 + $0x108] sm:$0xff] 0.0
        %705 = vst [vmem:[%s670 + $0x110] sm:$0xff] 0.0
        %706 = vst [vmem:[%s670 + $0x118] sm:$0xff] 0.0
        %707 = vst [vmem:[%s670 + $0x120] sm:$0xff] 0.0
        %708 = vst [vmem:[%s670 + $0x128] sm:$0xff] 0.0
        %709 = vst [vmem:[%s670 + $0x130] sm:$0xff] 0.0
        %710 = vst [vmem:[%s670 + $0x138] sm:$0xff] 0.0
        %711 = vst [vmem:[%s670 + $0x140] sm:$0xff] 0.0
        %712 = vst [vmem:[%s670 + $0x148] sm:$0xff] 0.0
        %713 = vst [vmem:[%s670 + $0x150] sm:$0xff] 0.0
        %714 = vst [vmem:[%s670 + $0x158] sm:$0xff] 0.0
        %715 = vst [vmem:[%s670 + $0x160] sm:$0xff] 0.0
        %716 = vst [vmem:[%s670 + $0x168] sm:$0xff] 0.0
        %717 = vst [vmem:[%s670 + $0x170] sm:$0xff] 0.0
        %718 = vst [vmem:[%s670 + $0x178] sm:$0xff] 0.0
        %719 = vst [vmem:[%s670 + $0x180] sm:$0xff] 0.0
        %720 = vst [vmem:[%s670 + $0x188] sm:$0xff] 0.0
        %721 = vst [vmem:[%s670 + $0x190] sm:$0xff] 0.0
        %722 = vst [vmem:[%s670 + $0x198] sm:$0xff] 0.0
        %723 = vst [vmem:[%s670 + $0x1a0] sm:$0xff] 0.0
        %724 = vst [vmem:[%s670 + $0x1a8] sm:$0xff] 0.0
        %s725 = scalar_lea.vmem [#allocation3], 432
        %726 = vst [vmem:[%s725] sm:$0xff] 0.0
        %727 = vst [vmem:[%s725 + $0x8] sm:$0xff] 0.0
        %728 = vst [vmem:[%s725 + $0x30] sm:$0xff] 0.0
        %729 = vst [vmem:[%s725 + $0x38] sm:$0xff] 0.0
        %730 = vst [vmem:[%s725 + $0x60] sm:$0xff] 0.0
        %731 = vst [vmem:[%s725 + $0x68] sm:$0xff] 0.0
        %732 = vst [vmem:[%s725 + $0x90] sm:$0xff] 0.0
        %733 = vst [vmem:[%s725 + $0x98] sm:$0xff] 0.0
        %734 = vst [vmem:[%s725 + $0xc0] sm:$0xff] 0.0
        %735 = vst [vmem:[%s725 + $0xc8] sm:$0xff] 0.0
        %736 = vst [vmem:[%s725 + $0xf0] sm:$0xff] 0.0
        %737 = vst [vmem:[%s725 + $0xf8] sm:$0xff] 0.0
        %738 = vst [vmem:[%s725 + $0x120] sm:$0xff] 0.0
        %739 = vst [vmem:[%s725 + $0x128] sm:$0xff] 0.0
        %740 = vst [vmem:[%s725 + $0x150] sm:$0xff] 0.0
        %741 = vst [vmem:[%s725 + $0x158] sm:$0xff] 0.0
        %742 = vst [vmem:[%s725 + $0x180] sm:$0xff] 0.0
        %743 = vst [vmem:[%s725 + $0x188] sm:$0xff] 0.0
        %744 = vst [vmem:[%s725 + $0x1b0] sm:$0xff] 0.0
        %745 = vst [vmem:[%s725 + $0x1b8] sm:$0xff] 0.0
        %746 = vst [vmem:[%s725 + $0x1e0] sm:$0xff] 0.0
        %747 = vst [vmem:[%s725 + $0x1e8] sm:$0xff] 0.0
        %748 = vst [vmem:[%s725 + $0x210] sm:$0xff] 0.0
        %749 = vst [vmem:[%s725 + $0x218] sm:$0xff] 0.0
        %750 = vst [vmem:[%s725 + $0x240] sm:$0xff] 0.0
        %751 = vst [vmem:[%s725 + $0x248] sm:$0xff] 0.0
        %752 = vst [vmem:[%s725 + $0x270] sm:$0xff] 0.0
        %753 = vst [vmem:[%s725 + $0x278] sm:$0xff] 0.0
        %754 = vst [vmem:[%s725 + $0x2a0] sm:$0xff] 0.0
        %755 = vst [vmem:[%s725 + $0x2a8] sm:$0xff] 0.0
        %756 = vst [vmem:[%s725 + $0x2d0] sm:$0xff] 0.0
        %757 = vst [vmem:[%s725 + $0x2d8] sm:$0xff] 0.0
        %758 = vst [vmem:[%s725 + $0x20] sm:$0xff] 0.0
        %759 = vst [vmem:[%s725 + $0x28] sm:$0xff] 0.0
        %760 = vst [vmem:[%s725 + $0x50] sm:$0xff] 0.0
        %761 = vst [vmem:[%s725 + $0x58] sm:$0xff] 0.0
        %762 = vst [vmem:[%s725 + $0x80] sm:$0xff] 0.0
        %763 = vst [vmem:[%s725 + $0x88] sm:$0xff] 0.0
        %764 = vst [vmem:[%s725 + $0xb0] sm:$0xff] 0.0
        %765 = vst [vmem:[%s725 + $0xb8] sm:$0xff] 0.0
        %766 = vst [vmem:[%s725 + $0xe0] sm:$0xff] 0.0
        %767 = vst [vmem:[%s725 + $0xe8] sm:$0xff] 0.0
        %768 = vst [vmem:[%s725 + $0x110] sm:$0xff] 0.0
        %769 = vst [vmem:[%s725 + $0x118] sm:$0xff] 0.0
        %770 = vst [vmem:[%s725 + $0x140] sm:$0xff] 0.0
        %771 = vst [vmem:[%s725 + $0x148] sm:$0xff] 0.0
        %772 = vst [vmem:[%s725 + $0x170] sm:$0xff] 0.0
        %773 = vst [vmem:[%s725 + $0x178] sm:$0xff] 0.0
        %774 = vst [vmem:[%s725 + $0x1a0] sm:$0xff] 0.0
        %775 = vst [vmem:[%s725 + $0x1a8] sm:$0xff] 0.0
        %776 = vst [vmem:[%s725 + $0x1d0] sm:$0xff] 0.0
        %777 = vst [vmem:[%s725 + $0x1d8] sm:$0xff] 0.0
        %778 = vst [vmem:[%s725 + $0x200] sm:$0xff] 0.0
        %779 = vst [vmem:[%s725 + $0x208] sm:$0xff] 0.0
        %780 = vst [vmem:[%s725 + $0x230] sm:$0xff] 0.0
        %781 = vst [vmem:[%s725 + $0x238] sm:$0xff] 0.0
        %782 = vst [vmem:[%s725 + $0x260] sm:$0xff] 0.0
        %783 = vst [vmem:[%s725 + $0x268] sm:$0xff] 0.0
        %784 = vst [vmem:[%s725 + $0x290] sm:$0xff] 0.0
        %785 = vst [vmem:[%s725 + $0x298] sm:$0xff] 0.0
        %786 = vst [vmem:[%s725 + $0x2c0] sm:$0xff] 0.0
        %787 = vst [vmem:[%s725 + $0x2c8] sm:$0xff] 0.0
        %788 = vst [vmem:[%s725 + $0x2f0] sm:$0xff] 0.0
        %789 = vst [vmem:[%s725 + $0x2f8] sm:$0xff] 0.0
        %v790 = vld [vmem:[%s504] sm:$0xff]
        %v791 = vld [vmem:[%s504 + $0x8] sm:$0xff]
        %v792 = vld [vmem:[%s504 + $0x10] sm:$0xff]
        %v793 = vld [vmem:[%s504 + $0x18] sm:$0xff]
        %v794 = vld [vmem:[%s504 + $0x20] sm:$0xff]
        %v795 = vld [vmem:[%s504 + $0x28] sm:$0xff]
        %v796 = vld [vmem:[%s504 + $0x30] sm:$0xff]
        %v797 = vld [vmem:[%s504 + $0x38] sm:$0xff]
        %v798 = vld [vmem:[%s504 + $0x40] sm:$0xff]
        %v799 = vld [vmem:[%s504 + $0x48] sm:$0xff]
        %v800 = vld [vmem:[%s504 + $0x50] sm:$0xff]
        %v801 = vld [vmem:[%s504 + $0x58] sm:$0xff]
        %v802 = vld [vmem:[%s504 + $0x60] sm:$0xff]
        %v803 = vld [vmem:[%s504 + $0x68] sm:$0xff]
        %v804 = vld [vmem:[%s504 + $0x70] sm:$0xff]
        %v805 = vld [vmem:[%s504 + $0x78] sm:$0xff]
        %v806 = vld [vmem:[%s504 + $0x80] sm:$0xff]
        %v807 = vld [vmem:[%s504 + $0x88] sm:$0xff]
        %v808 = vld [vmem:[%s504 + $0x90] sm:$0xff]
        %v809 = vld [vmem:[%s504 + $0x98] sm:$0xff]
        %v810 = vld [vmem:[%s504 + $0xa0] sm:$0xff]
        %v811 = vld [vmem:[%s504 + $0xa8] sm:$0xff]
        %v812 = vld [vmem:[%s504 + $0xb0] sm:$0xff]
        %v813 = vld [vmem:[%s504 + $0xb8] sm:$0xff]
        %v814 = vld [vmem:[%s504 + $0xc0] sm:$0xff]
        %v815 = vld [vmem:[%s504 + $0xc8] sm:$0xff]
        %v816 = vld [vmem:[%s504 + $0xd0] sm:$0xff]
        %v817 = vld [vmem:[%s504 + $0xd8] sm:$0xff]
        %v818 = vld [vmem:[%s504 + $0xe0] sm:$0xff]
        %v819 = vld [vmem:[%s504 + $0xe8] sm:$0xff]
        %v820 = vld [vmem:[%s504 + $0xf0] sm:$0xff]
        %v821 = vld [vmem:[%s504 + $0xf8] sm:$0xff]
        %822 = vst [vmem:[%s583 + $0x8] sm:$0xff] %v790
        %823 = vst [vmem:[%s583 + $0x10] sm:$0xff] %v791
        %824 = vst [vmem:[%s583 + $0x28] sm:$0xff] %v792
        %825 = vst [vmem:[%s583 + $0x30] sm:$0xff] %v793
        %826 = vst [vmem:[%s583 + $0x48] sm:$0xff] %v794
        %827 = vst [vmem:[%s583 + $0x50] sm:$0xff] %v795
        %828 = vst [vmem:[%s583 + $0x68] sm:$0xff] %v796
        %829 = vst [vmem:[%s583 + $0x70] sm:$0xff] %v797
        %830 = vst [vmem:[%s583 + $0x88] sm:$0xff] %v798
        %831 = vst [vmem:[%s583 + $0x90] sm:$0xff] %v799
        %832 = vst [vmem:[%s583 + $0xa8] sm:$0xff] %v800
        %833 = vst [vmem:[%s583 + $0xb0] sm:$0xff] %v801
        %834 = vst [vmem:[%s583 + $0xc8] sm:$0xff] %v802
        %835 = vst [vmem:[%s583 + $0xd0] sm:$0xff] %v803
        %836 = vst [vmem:[%s583 + $0xe8] sm:$0xff] %v804
        %837 = vst [vmem:[%s583 + $0xf0] sm:$0xff] %v805
        %838 = vst [vmem:[%s583 + $0x108] sm:$0xff] %v806
        %839 = vst [vmem:[%s583 + $0x110] sm:$0xff] %v807
        %840 = vst [vmem:[%s583 + $0x128] sm:$0xff] %v808
        %841 = vst [vmem:[%s583 + $0x130] sm:$0xff] %v809
        %842 = vst [vmem:[%s583 + $0x148] sm:$0xff] %v810
        %843 = vst [vmem:[%s583 + $0x150] sm:$0xff] %v811
        %844 = vst [vmem:[%s583 + $0x168] sm:$0xff] %v812
        %845 = vst [vmem:[%s583 + $0x170] sm:$0xff] %v813
        %846 = vst [vmem:[%s583 + $0x188] sm:$0xff] %v814
        %847 = vst [vmem:[%s583 + $0x190] sm:$0xff] %v815
        %848 = vst [vmem:[%s583 + $0x1a8] sm:$0xff] %v816
        %849 = vst [vmem:[%s583 + $0x1b0] sm:$0xff] %v817
        %850 = vst [vmem:[%s583 + $0x1c8] sm:$0xff] %v818
        %851 = vst [vmem:[%s583 + $0x1d0] sm:$0xff] %v819
        %852 = vst [vmem:[%s583 + $0x1e8] sm:$0xff] %v820
        %853 = vst [vmem:[%s583 + $0x1f0] sm:$0xff] %v821
        loop: start=0, step=1, limit=2
        $region105: #{tpu_custom_call.1} parent=75 // loop_pre_header
          _
        $region106: #{tpu_custom_call.1} parent=75 // loop_header
          %s855 = sphi 0, %s859
          %p856 = scmp.ge.s32.totalorder %s855, 2
        $region107: #{tpu_custom_call.1} parent=75 // loop_header_branch
          %858 = sbr.rel (%p856) target = $region111
        $region108: #{tpu_custom_call.1} parent=75 // loop_body
          %s860 = smul.u32 %s855, 8
          %s861 = smul.u32 %s860, 32
          %s862 = scalar_lea.vmem [#allocation2], %s861
          %v863 = vld [vmem:[%s862 + $0x7] sm:$0xff]
          %v864 = vld [vmem:[%s862 + $0xf] sm:$0xff]
          %v865 = vld [vmem:[%s862 + $0x27] sm:$0xff]
          %v866 = vld [vmem:[%s862 + $0x2f] sm:$0xff]
          %v867 = vld [vmem:[%s862 + $0x47] sm:$0xff]
          %v868 = vld [vmem:[%s862 + $0x4f] sm:$0xff]
          %v869 = vld [vmem:[%s862 + $0x67] sm:$0xff]
          %v870 = vld [vmem:[%s862 + $0x6f] sm:$0xff]
          %v871 = vld [vmem:[%s862 + $0x87] sm:$0xff]
          %v872 = vld [vmem:[%s862 + $0x8f] sm:$0xff]
          %v873 = vld [vmem:[%s862 + $0xa7] sm:$0xff]
          %v874 = vld [vmem:[%s862 + $0xaf] sm:$0xff]
          %v875 = vld [vmem:[%s862 + $0xc7] sm:$0xff]
          %v876 = vld [vmem:[%s862 + $0xcf] sm:$0xff]
          %v877 = vld [vmem:[%s862 + $0xe7] sm:$0xff]
          %v878 = vld [vmem:[%s862 + $0xef] sm:$0xff]
          %v879 = vld [vmem:[%s862 + $0x107] sm:$0xff]
          %v880 = vld [vmem:[%s862 + $0x10f] sm:$0xff]
          %v881 = vld [vmem:[%s862 + $0x127] sm:$0xff]
          %v882 = vld [vmem:[%s862 + $0x12f] sm:$0xff]
          %v883 = vld [vmem:[#allocation7] sm:$0x1]
          %v884 = vlaneseq
          %v885 = vshrl.u32 %v884, 7
          %v886 = vsub.s32 0, %v885
          %v887 = vrot.slane %v883, %v886
          %v888 = vmul.f32 %v863, %v887
          %v889 = vmul.f32 %v864, %v887
          %v890 = vmul.f32 %v865, %v887
          %v891 = vmul.f32 %v866, %v887
          %v892 = vmul.f32 %v867, %v887
          %v893 = vmul.f32 %v868, %v887
          %v894 = vmul.f32 %v869, %v887
          %v895 = vmul.f32 %v870, %v887
          %v896 = vmul.f32 %v871, %v887
          %v897 = vmul.f32 %v872, %v887
          %v898 = vmul.f32 %v873, %v887
          %v899 = vmul.f32 %v874, %v887
          %v900 = vmul.f32 %v875, %v887
          %v901 = vmul.f32 %v876, %v887
          %v902 = vmul.f32 %v877, %v887
          %v903 = vmul.f32 %v878, %v887
          %v904 = vadd.f32 %v888, 0.0
          %v905 = vadd.f32 %v889, 0.0
          %v906 = vadd.f32 %v890, 0.0
          %v907 = vadd.f32 %v891, 0.0
          %v908 = vadd.f32 %v892, 0.0
          %v909 = vadd.f32 %v893, 0.0
          %v910 = vadd.f32 %v894, 0.0
          %v911 = vadd.f32 %v895, 0.0
          %v912 = vadd.f32 %v896, 0.0
          %v913 = vadd.f32 %v897, 0.0
          %v914 = vadd.f32 %v898, 0.0
          %v915 = vadd.f32 %v899, 0.0
          %v916 = vadd.f32 %v900, 0.0
          %v917 = vadd.f32 %v901, 0.0
          %v918 = vadd.f32 %v902, 0.0
          %v919 = vadd.f32 %v903, 0.0
          %v920 = vld [vmem:[#allocation7 + $0x3] sm:$0x1]
          %v921 = vlaneseq
          %v922 = vshrl.u32 %v921, 7
          %v923 = vsub.s32 0, %v922
          %v924 = vrot.slane %v920, %v923
          %v925 = vmul.f32 %v865, %v924
          %v926 = vmul.f32 %v866, %v924
          %v927 = vmul.f32 %v867, %v924
          %v928 = vmul.f32 %v868, %v924
          %v929 = vmul.f32 %v869, %v924
          %v930 = vmul.f32 %v870, %v924
          %v931 = vmul.f32 %v871, %v924
          %v932 = vmul.f32 %v872, %v924
          %v933 = vmul.f32 %v873, %v924
          %v934 = vmul.f32 %v874, %v924
          %v935 = vmul.f32 %v875, %v924
          %v936 = vmul.f32 %v876, %v924
          %v937 = vmul.f32 %v877, %v924
          %v938 = vmul.f32 %v878, %v924
          %v939 = vmul.f32 %v879, %v924
          %v940 = vmul.f32 %v880, %v924
          %v941 = vadd.f32 %v904, %v925
          %v942 = vadd.f32 %v905, %v926
          %v943 = vadd.f32 %v906, %v927
          %v944 = vadd.f32 %v907, %v928
          %v945 = vadd.f32 %v908, %v929
          %v946 = vadd.f32 %v909, %v930
          %v947 = vadd.f32 %v910, %v931
          %v948 = vadd.f32 %v911, %v932
          %v949 = vadd.f32 %v912, %v933
          %v950 = vadd.f32 %v913, %v934
          %v951 = vadd.f32 %v914, %v935
          %v952 = vadd.f32 %v915, %v936
          %v953 = vadd.f32 %v916, %v937
          %v954 = vadd.f32 %v917, %v938
          %v955 = vadd.f32 %v918, %v939
          %v956 = vadd.f32 %v919, %v940
          %v957 = vld [vmem:[#allocation7 + $0x6] sm:$0x1]
          %v958 = vlaneseq
          %v959 = vshrl.u32 %v958, 7
          %v960 = vsub.s32 0, %v959
          %v961 = vrot.slane %v957, %v960
          %v962 = vmul.f32 %v867, %v961
          %v963 = vmul.f32 %v868, %v961
          %v964 = vmul.f32 %v869, %v961
          %v965 = vmul.f32 %v870, %v961
          %v966 = vmul.f32 %v871, %v961
          %v967 = vmul.f32 %v872, %v961
          %v968 = vmul.f32 %v873, %v961
          %v969 = vmul.f32 %v874, %v961
          %v970 = vmul.f32 %v875, %v961
          %v971 = vmul.f32 %v876, %v961
          %v972 = vmul.f32 %v877, %v961
          %v973 = vmul.f32 %v878, %v961
          %v974 = vmul.f32 %v879, %v961
          %v975 = vmul.f32 %v880, %v961
          %v976 = vmul.f32 %v881, %v961
          %v977 = vmul.f32 %v882, %v961
          %v978 = vadd.f32 %v941, %v962
          %v979 = vadd.f32 %v942, %v963
          %v980 = vadd.f32 %v943, %v964
          %v981 = vadd.f32 %v944, %v965
          %v982 = vadd.f32 %v945, %v966
          %v983 = vadd.f32 %v946, %v967
          %v984 = vadd.f32 %v947, %v968
          %v985 = vadd.f32 %v948, %v969
          %v986 = vadd.f32 %v949, %v970
          %v987 = vadd.f32 %v950, %v971
          %v988 = vadd.f32 %v951, %v972
          %v989 = vadd.f32 %v952, %v973
          %v990 = vadd.f32 %v953, %v974
          %v991 = vadd.f32 %v954, %v975
          %v992 = vadd.f32 %v955, %v976
          %v993 = vadd.f32 %v956, %v977
          %v994 = vld [vmem:[%s862 + $0x8] sm:$0xff]
          %v995 = vld [vmem:[%s862 + $0x10] sm:$0xff]
          %v996 = vld [vmem:[%s862 + $0x28] sm:$0xff]
          %v997 = vld [vmem:[%s862 + $0x30] sm:$0xff]
          %v998 = vld [vmem:[%s862 + $0x48] sm:$0xff]
          %v999 = vld [vmem:[%s862 + $0x50] sm:$0xff]
          %v1000 = vld [vmem:[%s862 + $0x68] sm:$0xff]
          %v1001 = vld [vmem:[%s862 + $0x70] sm:$0xff]
          %v1002 = vld [vmem:[%s862 + $0x88] sm:$0xff]
          %v1003 = vld [vmem:[%s862 + $0x90] sm:$0xff]
          %v1004 = vld [vmem:[%s862 + $0xa8] sm:$0xff]
          %v1005 = vld [vmem:[%s862 + $0xb0] sm:$0xff]
          %v1006 = vld [vmem:[%s862 + $0xc8] sm:$0xff]
          %v1007 = vld [vmem:[%s862 + $0xd0] sm:$0xff]
          %v1008 = vld [vmem:[%s862 + $0xe8] sm:$0xff]
          %v1009 = vld [vmem:[%s862 + $0xf0] sm:$0xff]
          %v1010 = vld [vmem:[%s862 + $0x108] sm:$0xff]
          %v1011 = vld [vmem:[%s862 + $0x110] sm:$0xff]
          %v1012 = vld [vmem:[%s862 + $0x128] sm:$0xff]
          %v1013 = vld [vmem:[%s862 + $0x130] sm:$0xff]
          %v1014 = vld [vmem:[#allocation7 + $0x1] sm:$0x1]
          %v1015 = vlaneseq
          %v1016 = vshrl.u32 %v1015, 7
          %v1017 = vsub.s32 0, %v1016
          %v1018 = vrot.slane %v1014, %v1017
          %v1019 = vmul.f32 %v994, %v1018
          %v1020 = vmul.f32 %v995, %v1018
          %v1021 = vmul.f32 %v996, %v1018
          %v1022 = vmul.f32 %v997, %v1018
          %v1023 = vmul.f32 %v998, %v1018
          %v1024 = vmul.f32 %v999, %v1018
          %v1025 = vmul.f32 %v1000, %v1018
          %v1026 = vmul.f32 %v1001, %v1018
          %v1027 = vmul.f32 %v1002, %v1018
          %v1028 = vmul.f32 %v1003, %v1018
          %v1029 = vmul.f32 %v1004, %v1018
          %v1030 = vmul.f32 %v1005, %v1018
          %v1031 = vmul.f32 %v1006, %v1018
          %v1032 = vmul.f32 %v1007, %v1018
          %v1033 = vmul.f32 %v1008, %v1018
          %v1034 = vmul.f32 %v1009, %v1018
          %v1035 = vadd.f32 %v978, %v1019
          %v1036 = vadd.f32 %v979, %v1020
          %v1037 = vadd.f32 %v980, %v1021
          %v1038 = vadd.f32 %v981, %v1022
          %v1039 = vadd.f32 %v982, %v1023
          %v1040 = vadd.f32 %v983, %v1024
          %v1041 = vadd.f32 %v984, %v1025
          %v1042 = vadd.f32 %v985, %v1026
          %v1043 = vadd.f32 %v986, %v1027
          %v1044 = vadd.f32 %v987, %v1028
          %v1045 = vadd.f32 %v988, %v1029
          %v1046 = vadd.f32 %v989, %v1030
          %v1047 = vadd.f32 %v990, %v1031
          %v1048 = vadd.f32 %v991, %v1032
          %v1049 = vadd.f32 %v992, %v1033
          %v1050 = vadd.f32 %v993, %v1034
          %v1051 = vld [vmem:[#allocation7 + $0x4] sm:$0x1]
          %v1052 = vlaneseq
          %v1053 = vshrl.u32 %v1052, 7
          %v1054 = vsub.s32 0, %v1053
          %v1055 = vrot.slane %v1051, %v1054
          %v1056 = vmul.f32 %v996, %v1055
          %v1057 = vmul.f32 %v997, %v1055
          %v1058 = vmul.f32 %v998, %v1055
          %v1059 = vmul.f32 %v999, %v1055
          %v1060 = vmul.f32 %v1000, %v1055
          %v1061 = vmul.f32 %v1001, %v1055
          %v1062 = vmul.f32 %v1002, %v1055
          %v1063 = vmul.f32 %v1003, %v1055
          %v1064 = vmul.f32 %v1004, %v1055
          %v1065 = vmul.f32 %v1005, %v1055
          %v1066 = vmul.f32 %v1006, %v1055
          %v1067 = vmul.f32 %v1007, %v1055
          %v1068 = vmul.f32 %v1008, %v1055
          %v1069 = vmul.f32 %v1009, %v1055
          %v1070 = vmul.f32 %v1010, %v1055
          %v1071 = vmul.f32 %v1011, %v1055
          %v1072 = vadd.f32 %v1035, %v1056
          %v1073 = vadd.f32 %v1036, %v1057
          %v1074 = vadd.f32 %v1037, %v1058
          %v1075 = vadd.f32 %v1038, %v1059
          %v1076 = vadd.f32 %v1039, %v1060
          %v1077 = vadd.f32 %v1040, %v1061
          %v1078 = vadd.f32 %v1041, %v1062
          %v1079 = vadd.f32 %v1042, %v1063
          %v1080 = vadd.f32 %v1043, %v1064
          %v1081 = vadd.f32 %v1044, %v1065
          %v1082 = vadd.f32 %v1045, %v1066
          %v1083 = vadd.f32 %v1046, %v1067
          %v1084 = vadd.f32 %v1047, %v1068
          %v1085 = vadd.f32 %v1048, %v1069
          %v1086 = vadd.f32 %v1049, %v1070
          %v1087 = vadd.f32 %v1050, %v1071
          %v1088 = vld [vmem:[#allocation7 + $0x7] sm:$0x1]
          %v1089 = vlaneseq
          %v1090 = vshrl.u32 %v1089, 7
          %v1091 = vsub.s32 0, %v1090
          %v1092 = vrot.slane %v1088, %v1091
          %v1093 = vmul.f32 %v998, %v1092
          %v1094 = vmul.f32 %v999, %v1092
          %v1095 = vmul.f32 %v1000, %v1092
          %v1096 = vmul.f32 %v1001, %v1092
          %v1097 = vmul.f32 %v1002, %v1092
          %v1098 = vmul.f32 %v1003, %v1092
          %v1099 = vmul.f32 %v1004, %v1092
          %v1100 = vmul.f32 %v1005, %v1092
          %v1101 = vmul.f32 %v1006, %v1092
          %v1102 = vmul.f32 %v1007, %v1092
          %v1103 = vmul.f32 %v1008, %v1092
          %v1104 = vmul.f32 %v1009, %v1092
          %v1105 = vmul.f32 %v1010, %v1092
          %v1106 = vmul.f32 %v1011, %v1092
          %v1107 = vmul.f32 %v1012, %v1092
          %v1108 = vmul.f32 %v1013, %v1092
          %v1109 = vadd.f32 %v1072, %v1093
          %v1110 = vadd.f32 %v1073, %v1094
          %v1111 = vadd.f32 %v1074, %v1095
          %v1112 = vadd.f32 %v1075, %v1096
          %v1113 = vadd.f32 %v1076, %v1097
          %v1114 = vadd.f32 %v1077, %v1098
          %v1115 = vadd.f32 %v1078, %v1099
          %v1116 = vadd.f32 %v1079, %v1100
          %v1117 = vadd.f32 %v1080, %v1101
          %v1118 = vadd.f32 %v1081, %v1102
          %v1119 = vadd.f32 %v1082, %v1103
          %v1120 = vadd.f32 %v1083, %v1104
          %v1121 = vadd.f32 %v1084, %v1105
          %v1122 = vadd.f32 %v1085, %v1106
          %v1123 = vadd.f32 %v1086, %v1107
          %v1124 = vadd.f32 %v1087, %v1108
          %v1125 = vld [vmem:[%s862 + $0x9] sm:$0xff]
          %v1126 = vld [vmem:[%s862 + $0x11] sm:$0xff]
          %v1127 = vld [vmem:[%s862 + $0x29] sm:$0xff]
          %v1128 = vld [vmem:[%s862 + $0x31] sm:$0xff]
          %v1129 = vld [vmem:[%s862 + $0x49] sm:$0xff]
          %v1130 = vld [vmem:[%s862 + $0x51] sm:$0xff]
          %v1131 = vld [vmem:[%s862 + $0x69] sm:$0xff]
          %v1132 = vld [vmem:[%s862 + $0x71] sm:$0xff]
          %v1133 = vld [vmem:[%s862 + $0x89] sm:$0xff]
          %v1134 = vld [vmem:[%s862 + $0x91] sm:$0xff]
          %v1135 = vld [vmem:[%s862 + $0xa9] sm:$0xff]
          %v1136 = vld [vmem:[%s862 + $0xb1] sm:$0xff]
          %v1137 = vld [vmem:[%s862 + $0xc9] sm:$0xff]
          %v1138 = vld [vmem:[%s862 + $0xd1] sm:$0xff]
          %v1139 = vld [vmem:[%s862 + $0xe9] sm:$0xff]
          %v1140 = vld [vmem:[%s862 + $0xf1] sm:$0xff]
          %v1141 = vld [vmem:[%s862 + $0x109] sm:$0xff]
          %v1142 = vld [vmem:[%s862 + $0x111] sm:$0xff]
          %v1143 = vld [vmem:[%s862 + $0x129] sm:$0xff]
          %v1144 = vld [vmem:[%s862 + $0x131] sm:$0xff]
          %v1145 = vld [vmem:[#allocation7 + $0x2] sm:$0x1]
          %v1146 = vlaneseq
          %v1147 = vshrl.u32 %v1146, 7
          %v1148 = vsub.s32 0, %v1147
          %v1149 = vrot.slane %v1145, %v1148
          %v1150 = vmul.f32 %v1125, %v1149
          %v1151 = vmul.f32 %v1126, %v1149
          %v1152 = vmul.f32 %v1127, %v1149
          %v1153 = vmul.f32 %v1128, %v1149
          %v1154 = vmul.f32 %v1129, %v1149
          %v1155 = vmul.f32 %v1130, %v1149
          %v1156 = vmul.f32 %v1131, %v1149
          %v1157 = vmul.f32 %v1132, %v1149
          %v1158 = vmul.f32 %v1133, %v1149
          %v1159 = vmul.f32 %v1134, %v1149
          %v1160 = vmul.f32 %v1135, %v1149
          %v1161 = vmul.f32 %v1136, %v1149
          %v1162 = vmul.f32 %v1137, %v1149
          %v1163 = vmul.f32 %v1138, %v1149
          %v1164 = vmul.f32 %v1139, %v1149
          %v1165 = vmul.f32 %v1140, %v1149
          %v1166 = vadd.f32 %v1109, %v1150
          %v1167 = vadd.f32 %v1110, %v1151
          %v1168 = vadd.f32 %v1111, %v1152
          %v1169 = vadd.f32 %v1112, %v1153
          %v1170 = vadd.f32 %v1113, %v1154
          %v1171 = vadd.f32 %v1114, %v1155
          %v1172 = vadd.f32 %v1115, %v1156
          %v1173 = vadd.f32 %v1116, %v1157
          %v1174 = vadd.f32 %v1117, %v1158
          %v1175 = vadd.f32 %v1118, %v1159
          %v1176 = vadd.f32 %v1119, %v1160
          %v1177 = vadd.f32 %v1120, %v1161
          %v1178 = vadd.f32 %v1121, %v1162
          %v1179 = vadd.f32 %v1122, %v1163
          %v1180 = vadd.f32 %v1123, %v1164
          %v1181 = vadd.f32 %v1124, %v1165
          %v1182 = vld [vmem:[#allocation7 + $0x5] sm:$0x1]
          %v1183 = vlaneseq
          %v1184 = vshrl.u32 %v1183, 7
          %v1185 = vsub.s32 0, %v1184
          %v1186 = vrot.slane %v1182, %v1185
          %v1187 = vmul.f32 %v1127, %v1186
          %v1188 = vmul.f32 %v1128, %v1186
          %v1189 = vmul.f32 %v1129, %v1186
          %v1190 = vmul.f32 %v1130, %v1186
          %v1191 = vmul.f32 %v1131, %v1186
          %v1192 = vmul.f32 %v1132, %v1186
          %v1193 = vmul.f32 %v1133, %v1186
          %v1194 = vmul.f32 %v1134, %v1186
          %v1195 = vmul.f32 %v1135, %v1186
          %v1196 = vmul.f32 %v1136, %v1186
          %v1197 = vmul.f32 %v1137, %v1186
          %v1198 = vmul.f32 %v1138, %v1186
          %v1199 = vmul.f32 %v1139, %v1186
          %v1200 = vmul.f32 %v1140, %v1186
          %v1201 = vmul.f32 %v1141, %v1186
          %v1202 = vmul.f32 %v1142, %v1186
          %v1203 = vadd.f32 %v1166, %v1187
          %v1204 = vadd.f32 %v1167, %v1188
          %v1205 = vadd.f32 %v1168, %v1189
          %v1206 = vadd.f32 %v1169, %v1190
          %v1207 = vadd.f32 %v1170, %v1191
          %v1208 = vadd.f32 %v1171, %v1192
          %v1209 = vadd.f32 %v1172, %v1193
          %v1210 = vadd.f32 %v1173, %v1194
          %v1211 = vadd.f32 %v1174, %v1195
          %v1212 = vadd.f32 %v1175, %v1196
          %v1213 = vadd.f32 %v1176, %v1197
          %v1214 = vadd.f32 %v1177, %v1198
          %v1215 = vadd.f32 %v1178, %v1199
          %v1216 = vadd.f32 %v1179, %v1200
          %v1217 = vadd.f32 %v1180, %v1201
          %v1218 = vadd.f32 %v1181, %v1202
          %v1219 = vld [vmem:[#allocation7 + $0x8] sm:$0x1]
          %v1220 = vlaneseq
          %v1221 = vshrl.u32 %v1220, 7
          %v1222 = vsub.s32 0, %v1221
          %v1223 = vrot.slane %v1219, %v1222
          %v1224 = vmul.f32 %v1129, %v1223
          %v1225 = vmul.f32 %v1130, %v1223
          %v1226 = vmul.f32 %v1131, %v1223
          %v1227 = vmul.f32 %v1132, %v1223
          %v1228 = vmul.f32 %v1133, %v1223
          %v1229 = vmul.f32 %v1134, %v1223
          %v1230 = vmul.f32 %v1135, %v1223
          %v1231 = vmul.f32 %v1136, %v1223
          %v1232 = vmul.f32 %v1137, %v1223
          %v1233 = vmul.f32 %v1138, %v1223
          %v1234 = vmul.f32 %v1139, %v1223
          %v1235 = vmul.f32 %v1140, %v1223
          %v1236 = vmul.f32 %v1141, %v1223
          %v1237 = vmul.f32 %v1142, %v1223
          %v1238 = vmul.f32 %v1143, %v1223
          %v1239 = vmul.f32 %v1144, %v1223
          %v1240 = vadd.f32 %v1203, %v1224
          %v1241 = vadd.f32 %v1204, %v1225
          %v1242 = vadd.f32 %v1205, %v1226
          %v1243 = vadd.f32 %v1206, %v1227
          %v1244 = vadd.f32 %v1207, %v1228
          %v1245 = vadd.f32 %v1208, %v1229
          %v1246 = vadd.f32 %v1209, %v1230
          %v1247 = vadd.f32 %v1210, %v1231
          %v1248 = vadd.f32 %v1211, %v1232
          %v1249 = vadd.f32 %v1212, %v1233
          %v1250 = vadd.f32 %v1213, %v1234
          %v1251 = vadd.f32 %v1214, %v1235
          %v1252 = vadd.f32 %v1215, %v1236
          %v1253 = vadd.f32 %v1216, %v1237
          %v1254 = vadd.f32 %v1217, %v1238
          %v1255 = vadd.f32 %v1218, %v1239
          %s1256 = sadd.s32 %s860, 9
          %s1257 = smul.u32 %s1256, 48
          %s1258 = scalar_lea.vmem [#allocation3], %s1257
          %1259 = vst [vmem:[%s1258 + $0x10] sm:$0xff] %v1240
          %1260 = vst [vmem:[%s1258 + $0x18] sm:$0xff] %v1241
          %1261 = vst [vmem:[%s1258 + $0x40] sm:$0xff] %v1242
          %1262 = vst [vmem:[%s1258 + $0x48] sm:$0xff] %v1243
          %1263 = vst [vmem:[%s1258 + $0x70] sm:$0xff] %v1244
          %1264 = vst [vmem:[%s1258 + $0x78] sm:$0xff] %v1245
          %1265 = vst [vmem:[%s1258 + $0xa0] sm:$0xff] %v1246
          %1266 = vst [vmem:[%s1258 + $0xa8] sm:$0xff] %v1247
          %1267 = vst [vmem:[%s1258 + $0xd0] sm:$0xff] %v1248
          %1268 = vst [vmem:[%s1258 + $0xd8] sm:$0xff] %v1249
          %1269 = vst [vmem:[%s1258 + $0x100] sm:$0xff] %v1250
          %1270 = vst [vmem:[%s1258 + $0x108] sm:$0xff] %v1251
          %1271 = vst [vmem:[%s1258 + $0x130] sm:$0xff] %v1252
          %1272 = vst [vmem:[%s1258 + $0x138] sm:$0xff] %v1253
          %1273 = vst [vmem:[%s1258 + $0x160] sm:$0xff] %v1254
          %1274 = vst [vmem:[%s1258 + $0x168] sm:$0xff] %v1255
        $region109: #{tpu_custom_call.1} parent=75 // loop_footer
          %s859 = sadd.s32 1, %s855
        $region110: #{tpu_custom_call.1} parent=75 // loop_footer_branch
          %854 = sbr.rel target = $region106
        $region111: #{tpu_custom_call.1} parent=75 // loop_exit
          _
        %v1275 = vld [vmem:[%s4] sm:$0x1]
        %v1276 = vld [vmem:[%s5] sm:$0x1]
        %v1277 = vld [vmem:[%s6] sm:$0x1]
        %v1278 = vld [vmem:[%s9] sm:$0x1]
        %v1279 = vld [vmem:[%s10] sm:$0x1]
        %v1280 = vld [vmem:[%s12] sm:$0x1]
        %v1281 = vld [vmem:[%s13] sm:$0x1]
        loop: start=0, step=1, limit=2
        $region112: #{tpu_custom_call.1} parent=75 // loop_pre_header
          _
        $region113: #{tpu_custom_call.1} parent=75 // loop_header
          %s1283 = sphi 0, %s1287
          %p1284 = scmp.ge.s32.totalorder %s1283, 2
        $region114: #{tpu_custom_call.1} parent=75 // loop_header_branch
          %1286 = sbr.rel (%p1284) target = $region118
        $region115: #{tpu_custom_call.1} parent=75 // loop_body
          %s1288 = smul.u32 %s1283, 8
          %s1289 = sadd.s32 %s1288, 6
          %s1290 = smul.u32 %s1289, 48
          %s1291 = scalar_lea.vmem [#allocation3], %s1290
          %v1292 = vld [vmem:[%s1291 + $0xd] sm:$0xff]
          %v1293 = vld [vmem:[%s1291 + $0x15] sm:$0xff]
          %v1294 = vld [vmem:[%s1291 + $0x3d] sm:$0xff]
          %v1295 = vld [vmem:[%s1291 + $0x45] sm:$0xff]
          %v1296 = vld [vmem:[%s1291 + $0x6d] sm:$0xff]
          %v1297 = vld [vmem:[%s1291 + $0x75] sm:$0xff]
          %v1298 = vld [vmem:[%s1291 + $0x9d] sm:$0xff]
          %v1299 = vld [vmem:[%s1291 + $0xa5] sm:$0xff]
          %v1300 = vld [vmem:[%s1291 + $0xcd] sm:$0xff]
          %v1301 = vld [vmem:[%s1291 + $0xd5] sm:$0xff]
          %v1302 = vld [vmem:[%s1291 + $0xfd] sm:$0xff]
          %v1303 = vld [vmem:[%s1291 + $0x105] sm:$0xff]
          %v1304 = vld [vmem:[%s1291 + $0x12d] sm:$0xff]
          %v1305 = vld [vmem:[%s1291 + $0x135] sm:$0xff]
          %v1306 = vld [vmem:[%s1291 + $0x15d] sm:$0xff]
          %v1307 = vld [vmem:[%s1291 + $0x165] sm:$0xff]
          %v1308 = vld [vmem:[%s1291 + $0x18d] sm:$0xff]
          %v1309 = vld [vmem:[%s1291 + $0x195] sm:$0xff]
          %v1310 = vld [vmem:[%s1291 + $0x1bd] sm:$0xff]
          %v1311 = vld [vmem:[%s1291 + $0x1c5] sm:$0xff]
          %v1312 = vld [vmem:[%s1291 + $0x1ed] sm:$0xff]
          %v1313 = vld [vmem:[%s1291 + $0x1f5] sm:$0xff]
          %v1314 = vld [vmem:[%s1291 + $0x21d] sm:$0xff]
          %v1315 = vld [vmem:[%s1291 + $0x225] sm:$0xff]
          %v1316 = vld [vmem:[%s1291 + $0x24d] sm:$0xff]
          %v1317 = vld [vmem:[%s1291 + $0x255] sm:$0xff]
          %v1318 = vld [vmem:[%s1291 + $0x27d] sm:$0xff]
          %v1319 = vld [vmem:[%s1291 + $0x285] sm:$0xff]
          %v1320 = vld [vmem:[#allocation9] sm:$0x1]
          %v1321 = vlaneseq
          %v1322 = vshrl.u32 %v1321, 7
          %v1323 = vsub.s32 0, %v1322
          %v1324 = vrot.slane %v1320, %v1323
          %v1325 = vmul.f32 %v1292, %v1324
          %v1326 = vmul.f32 %v1293, %v1324
          %v1327 = vmul.f32 %v1294, %v1324
          %v1328 = vmul.f32 %v1295, %v1324
          %v1329 = vmul.f32 %v1296, %v1324
          %v1330 = vmul.f32 %v1297, %v1324
          %v1331 = vmul.f32 %v1298, %v1324
          %v1332 = vmul.f32 %v1299, %v1324
          %v1333 = vmul.f32 %v1300, %v1324
          %v1334 = vmul.f32 %v1301, %v1324
          %v1335 = vmul.f32 %v1302, %v1324
          %v1336 = vmul.f32 %v1303, %v1324
          %v1337 = vmul.f32 %v1304, %v1324
          %v1338 = vmul.f32 %v1305, %v1324
          %v1339 = vmul.f32 %v1306, %v1324
          %v1340 = vmul.f32 %v1307, %v1324
          %v1341 = vadd.f32 %v1325, 0.0
          %v1342 = vadd.f32 %v1326, 0.0
          %v1343 = vadd.f32 %v1327, 0.0
          %v1344 = vadd.f32 %v1328, 0.0
          %v1345 = vadd.f32 %v1329, 0.0
          %v1346 = vadd.f32 %v1330, 0.0
          %v1347 = vadd.f32 %v1331, 0.0
          %v1348 = vadd.f32 %v1332, 0.0
          %v1349 = vadd.f32 %v1333, 0.0
          %v1350 = vadd.f32 %v1334, 0.0
          %v1351 = vadd.f32 %v1335, 0.0
          %v1352 = vadd.f32 %v1336, 0.0
          %v1353 = vadd.f32 %v1337, 0.0
          %v1354 = vadd.f32 %v1338, 0.0
          %v1355 = vadd.f32 %v1339, 0.0
          %v1356 = vadd.f32 %v1340, 0.0
          %v1357 = vld [vmem:[#allocation9 + $0x7] sm:$0x1]
          %v1358 = vlaneseq
          %v1359 = vshrl.u32 %v1358, 7
          %v1360 = vsub.s32 0, %v1359
          %v1361 = vrot.slane %v1357, %v1360
          %v1362 = vmul.f32 %v1294, %v1361
          %v1363 = vmul.f32 %v1295, %v1361
          %v1364 = vmul.f32 %v1296, %v1361
          %v1365 = vmul.f32 %v1297, %v1361
          %v1366 = vmul.f32 %v1298, %v1361
          %v1367 = vmul.f32 %v1299, %v1361
          %v1368 = vmul.f32 %v1300, %v1361
          %v1369 = vmul.f32 %v1301, %v1361
          %v1370 = vmul.f32 %v1302, %v1361
          %v1371 = vmul.f32 %v1303, %v1361
          %v1372 = vmul.f32 %v1304, %v1361
          %v1373 = vmul.f32 %v1305, %v1361
          %v1374 = vmul.f32 %v1306, %v1361
          %v1375 = vmul.f32 %v1307, %v1361
          %v1376 = vmul.f32 %v1308, %v1361
          %v1377 = vmul.f32 %v1309, %v1361
          %v1378 = vadd.f32 %v1341, %v1362
          %v1379 = vadd.f32 %v1342, %v1363
          %v1380 = vadd.f32 %v1343, %v1364
          %v1381 = vadd.f32 %v1344, %v1365
          %v1382 = vadd.f32 %v1345, %v1366
          %v1383 = vadd.f32 %v1346, %v1367
          %v1384 = vadd.f32 %v1347, %v1368
          %v1385 = vadd.f32 %v1348, %v1369
          %v1386 = vadd.f32 %v1349, %v1370
          %v1387 = vadd.f32 %v1350, %v1371
          %v1388 = vadd.f32 %v1351, %v1372
          %v1389 = vadd.f32 %v1352, %v1373
          %v1390 = vadd.f32 %v1353, %v1374
          %v1391 = vadd.f32 %v1354, %v1375
          %v1392 = vadd.f32 %v1355, %v1376
          %v1393 = vadd.f32 %v1356, %v1377
          %v1394 = vld [vmem:[#allocation9 + $0xe] sm:$0x1]
          %v1395 = vlaneseq
          %v1396 = vshrl.u32 %v1395, 7
          %v1397 = vsub.s32 0, %v1396
          %v1398 = vrot.slane %v1394, %v1397
          %v1399 = vmul.f32 %v1296, %v1398
          %v1400 = vmul.f32 %v1297, %v1398
          %v1401 = vmul.f32 %v1298, %v1398
          %v1402 = vmul.f32 %v1299, %v1398
          %v1403 = vmul.f32 %v1300, %v1398
          %v1404 = vmul.f32 %v1301, %v1398
          %v1405 = vmul.f32 %v1302, %v1398
          %v1406 = vmul.f32 %v1303, %v1398
          %v1407 = vmul.f32 %v1304, %v1398
          %v1408 = vmul.f32 %v1305, %v1398
          %v1409 = vmul.f32 %v1306, %v1398
          %v1410 = vmul.f32 %v1307, %v1398
          %v1411 = vmul.f32 %v1308, %v1398
          %v1412 = vmul.f32 %v1309, %v1398
          %v1413 = vmul.f32 %v1310, %v1398
          %v1414 = vmul.f32 %v1311, %v1398
          %v1415 = vadd.f32 %v1378, %v1399
          %v1416 = vadd.f32 %v1379, %v1400
          %v1417 = vadd.f32 %v1380, %v1401
          %v1418 = vadd.f32 %v1381, %v1402
          %v1419 = vadd.f32 %v1382, %v1403
          %v1420 = vadd.f32 %v1383, %v1404
          %v1421 = vadd.f32 %v1384, %v1405
          %v1422 = vadd.f32 %v1385, %v1406
          %v1423 = vadd.f32 %v1386, %v1407
          %v1424 = vadd.f32 %v1387, %v1408
          %v1425 = vadd.f32 %v1388, %v1409
          %v1426 = vadd.f32 %v1389, %v1410
          %v1427 = vadd.f32 %v1390, %v1411
          %v1428 = vadd.f32 %v1391, %v1412
          %v1429 = vadd.f32 %v1392, %v1413
          %v1430 = vadd.f32 %v1393, %v1414
          %v1431 = vld [vmem:[#allocation9 + $0x15] sm:$0x1]
          %v1432 = vlaneseq
          %v1433 = vshrl.u32 %v1432, 7
          %v1434 = vsub.s32 0, %v1433
          %v1435 = vrot.slane %v1431, %v1434
          %v1436 = vmul.f32 %v1298, %v1435
          %v1437 = vmul.f32 %v1299, %v1435
          %v1438 = vmul.f32 %v1300, %v1435
          %v1439 = vmul.f32 %v1301, %v1435
          %v1440 = vmul.f32 %v1302, %v1435
          %v1441 = vmul.f32 %v1303, %v1435
          %v1442 = vmul.f32 %v1304, %v1435
          %v1443 = vmul.f32 %v1305, %v1435
          %v1444 = vmul.f32 %v1306, %v1435
          %v1445 = vmul.f32 %v1307, %v1435
          %v1446 = vmul.f32 %v1308, %v1435
          %v1447 = vmul.f32 %v1309, %v1435
          %v1448 = vmul.f32 %v1310, %v1435
          %v1449 = vmul.f32 %v1311, %v1435
          %v1450 = vmul.f32 %v1312, %v1435
          %v1451 = vmul.f32 %v1313, %v1435
          %v1452 = vadd.f32 %v1415, %v1436
          %v1453 = vadd.f32 %v1416, %v1437
          %v1454 = vadd.f32 %v1417, %v1438
          %v1455 = vadd.f32 %v1418, %v1439
          %v1456 = vadd.f32 %v1419, %v1440
          %v1457 = vadd.f32 %v1420, %v1441
          %v1458 = vadd.f32 %v1421, %v1442
          %v1459 = vadd.f32 %v1422, %v1443
          %v1460 = vadd.f32 %v1423, %v1444
          %v1461 = vadd.f32 %v1424, %v1445
          %v1462 = vadd.f32 %v1425, %v1446
          %v1463 = vadd.f32 %v1426, %v1447
          %v1464 = vadd.f32 %v1427, %v1448
          %v1465 = vadd.f32 %v1428, %v1449
          %v1466 = vadd.f32 %v1429, %v1450
          %v1467 = vadd.f32 %v1430, %v1451
          %v1468 = vld [vmem:[#allocation9 + $0x1c] sm:$0x1]
          %v1469 = vlaneseq
          %v1470 = vshrl.u32 %v1469, 7
          %v1471 = vsub.s32 0, %v1470
          %v1472 = vrot.slane %v1468, %v1471
          %v1473 = vmul.f32 %v1300, %v1472
          %v1474 = vmul.f32 %v1301, %v1472
          %v1475 = vmul.f32 %v1302, %v1472
          %v1476 = vmul.f32 %v1303, %v1472
          %v1477 = vmul.f32 %v1304, %v1472
          %v1478 = vmul.f32 %v1305, %v1472
          %v1479 = vmul.f32 %v1306, %v1472
          %v1480 = vmul.f32 %v1307, %v1472
          %v1481 = vmul.f32 %v1308, %v1472
          %v1482 = vmul.f32 %v1309, %v1472
          %v1483 = vmul.f32 %v1310, %v1472
          %v1484 = vmul.f32 %v1311, %v1472
          %v1485 = vmul.f32 %v1312, %v1472
          %v1486 = vmul.f32 %v1313, %v1472
          %v1487 = vmul.f32 %v1314, %v1472
          %v1488 = vmul.f32 %v1315, %v1472
          %v1489 = vadd.f32 %v1452, %v1473
          %v1490 = vadd.f32 %v1453, %v1474
          %v1491 = vadd.f32 %v1454, %v1475
          %v1492 = vadd.f32 %v1455, %v1476
          %v1493 = vadd.f32 %v1456, %v1477
          %v1494 = vadd.f32 %v1457, %v1478
          %v1495 = vadd.f32 %v1458, %v1479
          %v1496 = vadd.f32 %v1459, %v1480
          %v1497 = vadd.f32 %v1460, %v1481
          %v1498 = vadd.f32 %v1461, %v1482
          %v1499 = vadd.f32 %v1462, %v1483
          %v1500 = vadd.f32 %v1463, %v1484
          %v1501 = vadd.f32 %v1464, %v1485
          %v1502 = vadd.f32 %v1465, %v1486
          %v1503 = vadd.f32 %v1466, %v1487
          %v1504 = vadd.f32 %v1467, %v1488
          %v1505 = vld [vmem:[#allocation9 + $0x23] sm:$0x1]
          %v1506 = vlaneseq
          %v1507 = vshrl.u32 %v1506, 7
          %v1508 = vsub.s32 0, %v1507
          %v1509 = vrot.slane %v1505, %v1508
          %v1510 = vmul.f32 %v1302, %v1509
          %v1511 = vmul.f32 %v1303, %v1509
          %v1512 = vmul.f32 %v1304, %v1509
          %v1513 = vmul.f32 %v1305, %v1509
          %v1514 = vmul.f32 %v1306, %v1509
          %v1515 = vmul.f32 %v1307, %v1509
          %v1516 = vmul.f32 %v1308, %v1509
          %v1517 = vmul.f32 %v1309, %v1509
          %v1518 = vmul.f32 %v1310, %v1509
          %v1519 = vmul.f32 %v1311, %v1509
          %v1520 = vmul.f32 %v1312, %v1509
          %v1521 = vmul.f32 %v1313, %v1509
          %v1522 = vmul.f32 %v1314, %v1509
          %v1523 = vmul.f32 %v1315, %v1509
          %v1524 = vmul.f32 %v1316, %v1509
          %v1525 = vmul.f32 %v1317, %v1509
          %v1526 = vadd.f32 %v1489, %v1510
          %v1527 = vadd.f32 %v1490, %v1511
          %v1528 = vadd.f32 %v1491, %v1512
          %v1529 = vadd.f32 %v1492, %v1513
          %v1530 = vadd.f32 %v1493, %v1514
          %v1531 = vadd.f32 %v1494, %v1515
          %v1532 = vadd.f32 %v1495, %v1516
          %v1533 = vadd.f32 %v1496, %v1517
          %v1534 = vadd.f32 %v1497, %v1518
          %v1535 = vadd.f32 %v1498, %v1519
          %v1536 = vadd.f32 %v1499, %v1520
          %v1537 = vadd.f32 %v1500, %v1521
          %v1538 = vadd.f32 %v1501, %v1522
          %v1539 = vadd.f32 %v1502, %v1523
          %v1540 = vadd.f32 %v1503, %v1524
          %v1541 = vadd.f32 %v1504, %v1525
          %v1542 = vld [vmem:[#allocation9 + $0x2a] sm:$0x1]
          %v1543 = vlaneseq
          %v1544 = vshrl.u32 %v1543, 7
          %v1545 = vsub.s32 0, %v1544
          %v1546 = vrot.slane %v1542, %v1545
          %v1547 = vmul.f32 %v1304, %v1546
          %v1548 = vmul.f32 %v1305, %v1546
          %v1549 = vmul.f32 %v1306, %v1546
          %v1550 = vmul.f32 %v1307, %v1546
          %v1551 = vmul.f32 %v1308, %v1546
          %v1552 = vmul.f32 %v1309, %v1546
          %v1553 = vmul.f32 %v1310, %v1546
          %v1554 = vmul.f32 %v1311, %v1546
          %v1555 = vmul.f32 %v1312, %v1546
          %v1556 = vmul.f32 %v1313, %v1546
          %v1557 = vmul.f32 %v1314, %v1546
          %v1558 = vmul.f32 %v1315, %v1546
          %v1559 = vmul.f32 %v1316, %v1546
          %v1560 = vmul.f32 %v1317, %v1546
          %v1561 = vmul.f32 %v1318, %v1546
          %v1562 = vmul.f32 %v1319, %v1546
          %v1563 = vadd.f32 %v1526, %v1547
          %v1564 = vadd.f32 %v1527, %v1548
          %v1565 = vadd.f32 %v1528, %v1549
          %v1566 = vadd.f32 %v1529, %v1550
          %v1567 = vadd.f32 %v1530, %v1551
          %v1568 = vadd.f32 %v1531, %v1552
          %v1569 = vadd.f32 %v1532, %v1553
          %v1570 = vadd.f32 %v1533, %v1554
          %v1571 = vadd.f32 %v1534, %v1555
          %v1572 = vadd.f32 %v1535, %v1556
          %v1573 = vadd.f32 %v1536, %v1557
          %v1574 = vadd.f32 %v1537, %v1558
          %v1575 = vadd.f32 %v1538, %v1559
          %v1576 = vadd.f32 %v1539, %v1560
          %v1577 = vadd.f32 %v1540, %v1561
          %v1578 = vadd.f32 %v1541, %v1562
          %v1579 = vld [vmem:[%s1291 + $0xe] sm:$0xff]
          %v1580 = vld [vmem:[%s1291 + $0x16] sm:$0xff]
          %v1581 = vld [vmem:[%s1291 + $0x3e] sm:$0xff]
          %v1582 = vld [vmem:[%s1291 + $0x46] sm:$0xff]
          %v1583 = vld [vmem:[%s1291 + $0x6e] sm:$0xff]
          %v1584 = vld [vmem:[%s1291 + $0x76] sm:$0xff]
          %v1585 = vld [vmem:[%s1291 + $0x9e] sm:$0xff]
          %v1586 = vld [vmem:[%s1291 + $0xa6] sm:$0xff]
          %v1587 = vld [vmem:[%s1291 + $0xce] sm:$0xff]
          %v1588 = vld [vmem:[%s1291 + $0xd6] sm:$0xff]
          %v1589 = vld [vmem:[%s1291 + $0xfe] sm:$0xff]
          %v1590 = vld [vmem:[%s1291 + $0x106] sm:$0xff]
          %v1591 = vld [vmem:[%s1291 + $0x12e] sm:$0xff]
          %v1592 = vld [vmem:[%s1291 + $0x136] sm:$0xff]
          %v1593 = vld [vmem:[%s1291 + $0x15e] sm:$0xff]
          %v1594 = vld [vmem:[%s1291 + $0x166] sm:$0xff]
          %v1595 = vld [vmem:[%s1291 + $0x18e] sm:$0xff]
          %v1596 = vld [vmem:[%s1291 + $0x196] sm:$0xff]
          %v1597 = vld [vmem:[%s1291 + $0x1be] sm:$0xff]
          %v1598 = vld [vmem:[%s1291 + $0x1c6] sm:$0xff]
          %v1599 = vld [vmem:[%s1291 + $0x1ee] sm:$0xff]
          %v1600 = vld [vmem:[%s1291 + $0x1f6] sm:$0xff]
          %v1601 = vld [vmem:[%s1291 + $0x21e] sm:$0xff]
          %v1602 = vld [vmem:[%s1291 + $0x226] sm:$0xff]
          %v1603 = vld [vmem:[%s1291 + $0x24e] sm:$0xff]
          %v1604 = vld [vmem:[%s1291 + $0x256] sm:$0xff]
          %v1605 = vld [vmem:[%s1291 + $0x27e] sm:$0xff]
          %v1606 = vld [vmem:[%s1291 + $0x286] sm:$0xff]
          %v1607 = vld [vmem:[#allocation9 + $0x1] sm:$0x1]
          %v1608 = vlaneseq
          %v1609 = vshrl.u32 %v1608, 7
          %v1610 = vsub.s32 0, %v1609
          %v1611 = vrot.slane %v1607, %v1610
          %v1612 = vmul.f32 %v1579, %v1611
          %v1613 = vmul.f32 %v1580, %v1611
          %v1614 = vmul.f32 %v1581, %v1611
          %v1615 = vmul.f32 %v1582, %v1611
          %v1616 = vmul.f32 %v1583, %v1611
          %v1617 = vmul.f32 %v1584, %v1611
          %v1618 = vmul.f32 %v1585, %v1611
          %v1619 = vmul.f32 %v1586, %v1611
          %v1620 = vmul.f32 %v1587, %v1611
          %v1621 = vmul.f32 %v1588, %v1611
          %v1622 = vmul.f32 %v1589, %v1611
          %v1623 = vmul.f32 %v1590, %v1611
          %v1624 = vmul.f32 %v1591, %v1611
          %v1625 = vmul.f32 %v1592, %v1611
          %v1626 = vmul.f32 %v1593, %v1611
          %v1627 = vmul.f32 %v1594, %v1611
          %v1628 = vadd.f32 %v1563, %v1612
          %v1629 = vadd.f32 %v1564, %v1613
          %v1630 = vadd.f32 %v1565, %v1614
          %v1631 = vadd.f32 %v1566, %v1615
          %v1632 = vadd.f32 %v1567, %v1616
          %v1633 = vadd.f32 %v1568, %v1617
          %v1634 = vadd.f32 %v1569, %v1618
          %v1635 = vadd.f32 %v1570, %v1619
          %v1636 = vadd.f32 %v1571, %v1620
          %v1637 = vadd.f32 %v1572, %v1621
          %v1638 = vadd.f32 %v1573, %v1622
          %v1639 = vadd.f32 %v1574, %v1623
          %v1640 = vadd.f32 %v1575, %v1624
          %v1641 = vadd.f32 %v1576, %v1625
          %v1642 = vadd.f32 %v1577, %v1626
          %v1643 = vadd.f32 %v1578, %v1627
          %v1644 = vld [vmem:[#allocation9 + $0x8] sm:$0x1]
          %v1645 = vlaneseq
          %v1646 = vshrl.u32 %v1645, 7
          %v1647 = vsub.s32 0, %v1646
          %v1648 = vrot.slane %v1644, %v1647
          %v1649 = vmul.f32 %v1581, %v1648
          %v1650 = vmul.f32 %v1582, %v1648
          %v1651 = vmul.f32 %v1583, %v1648
          %v1652 = vmul.f32 %v1584, %v1648
          %v1653 = vmul.f32 %v1585, %v1648
          %v1654 = vmul.f32 %v1586, %v1648
          %v1655 = vmul.f32 %v1587, %v1648
          %v1656 = vmul.f32 %v1588, %v1648
          %v1657 = vmul.f32 %v1589, %v1648
          %v1658 = vmul.f32 %v1590, %v1648
          %v1659 = vmul.f32 %v1591, %v1648
          %v1660 = vmul.f32 %v1592, %v1648
          %v1661 = vmul.f32 %v1593, %v1648
          %v1662 = vmul.f32 %v1594, %v1648
          %v1663 = vmul.f32 %v1595, %v1648
          %v1664 = vmul.f32 %v1596, %v1648
          %v1665 = vadd.f32 %v1628, %v1649
          %v1666 = vadd.f32 %v1629, %v1650
          %v1667 = vadd.f32 %v1630, %v1651
          %v1668 = vadd.f32 %v1631, %v1652
          %v1669 = vadd.f32 %v1632, %v1653
          %v1670 = vadd.f32 %v1633, %v1654
          %v1671 = vadd.f32 %v1634, %v1655
          %v1672 = vadd.f32 %v1635, %v1656
          %v1673 = vadd.f32 %v1636, %v1657
          %v1674 = vadd.f32 %v1637, %v1658
          %v1675 = vadd.f32 %v1638, %v1659
          %v1676 = vadd.f32 %v1639, %v1660
          %v1677 = vadd.f32 %v1640, %v1661
          %v1678 = vadd.f32 %v1641, %v1662
          %v1679 = vadd.f32 %v1642, %v1663
          %v1680 = vadd.f32 %v1643, %v1664
          %v1681 = vld [vmem:[#allocation9 + $0xf] sm:$0x1]
          %v1682 = vlaneseq
          %v1683 = vshrl.u32 %v1682, 7
          %v1684 = vsub.s32 0, %v1683
          %v1685 = vrot.slane %v1681, %v1684
          %v1686 = vmul.f32 %v1583, %v1685
          %v1687 = vmul.f32 %v1584, %v1685
          %v1688 = vmul.f32 %v1585, %v1685
          %v1689 = vmul.f32 %v1586, %v1685
          %v1690 = vmul.f32 %v1587, %v1685
          %v1691 = vmul.f32 %v1588, %v1685
          %v1692 = vmul.f32 %v1589, %v1685
          %v1693 = vmul.f32 %v1590, %v1685
          %v1694 = vmul.f32 %v1591, %v1685
          %v1695 = vmul.f32 %v1592, %v1685
          %v1696 = vmul.f32 %v1593, %v1685
          %v1697 = vmul.f32 %v1594, %v1685
          %v1698 = vmul.f32 %v1595, %v1685
          %v1699 = vmul.f32 %v1596, %v1685
          %v1700 = vmul.f32 %v1597, %v1685
          %v1701 = vmul.f32 %v1598, %v1685
          %v1702 = vadd.f32 %v1665, %v1686
          %v1703 = vadd.f32 %v1666, %v1687
          %v1704 = vadd.f32 %v1667, %v1688
          %v1705 = vadd.f32 %v1668, %v1689
          %v1706 = vadd.f32 %v1669, %v1690
          %v1707 = vadd.f32 %v1670, %v1691
          %v1708 = vadd.f32 %v1671, %v1692
          %v1709 = vadd.f32 %v1672, %v1693
          %v1710 = vadd.f32 %v1673, %v1694
          %v1711 = vadd.f32 %v1674, %v1695
          %v1712 = vadd.f32 %v1675, %v1696
          %v1713 = vadd.f32 %v1676, %v1697
          %v1714 = vadd.f32 %v1677, %v1698
          %v1715 = vadd.f32 %v1678, %v1699
          %v1716 = vadd.f32 %v1679, %v1700
          %v1717 = vadd.f32 %v1680, %v1701
          %v1718 = vld [vmem:[#allocation9 + $0x16] sm:$0x1]
          %v1719 = vlaneseq
          %v1720 = vshrl.u32 %v1719, 7
          %v1721 = vsub.s32 0, %v1720
          %v1722 = vrot.slane %v1718, %v1721
          %v1723 = vmul.f32 %v1585, %v1722
          %v1724 = vmul.f32 %v1586, %v1722
          %v1725 = vmul.f32 %v1587, %v1722
          %v1726 = vmul.f32 %v1588, %v1722
          %v1727 = vmul.f32 %v1589, %v1722
          %v1728 = vmul.f32 %v1590, %v1722
          %v1729 = vmul.f32 %v1591, %v1722
          %v1730 = vmul.f32 %v1592, %v1722
          %v1731 = vmul.f32 %v1593, %v1722
          %v1732 = vmul.f32 %v1594, %v1722
          %v1733 = vmul.f32 %v1595, %v1722
          %v1734 = vmul.f32 %v1596, %v1722
          %v1735 = vmul.f32 %v1597, %v1722
          %v1736 = vmul.f32 %v1598, %v1722
          %v1737 = vmul.f32 %v1599, %v1722
          %v1738 = vmul.f32 %v1600, %v1722
          %v1739 = vadd.f32 %v1702, %v1723
          %v1740 = vadd.f32 %v1703, %v1724
          %v1741 = vadd.f32 %v1704, %v1725
          %v1742 = vadd.f32 %v1705, %v1726
          %v1743 = vadd.f32 %v1706, %v1727
          %v1744 = vadd.f32 %v1707, %v1728
          %v1745 = vadd.f32 %v1708, %v1729
          %v1746 = vadd.f32 %v1709, %v1730
          %v1747 = vadd.f32 %v1710, %v1731
          %v1748 = vadd.f32 %v1711, %v1732
          %v1749 = vadd.f32 %v1712, %v1733
          %v1750 = vadd.f32 %v1713, %v1734
          %v1751 = vadd.f32 %v1714, %v1735
          %v1752 = vadd.f32 %v1715, %v1736
          %v1753 = vadd.f32 %v1716, %v1737
          %v1754 = vadd.f32 %v1717, %v1738
          %v1755 = vld [vmem:[#allocation9 + $0x1d] sm:$0x1]
          %v1756 = vlaneseq
          %v1757 = vshrl.u32 %v1756, 7
          %v1758 = vsub.s32 0, %v1757
          %v1759 = vrot.slane %v1755, %v1758
          %v1760 = vmul.f32 %v1587, %v1759
          %v1761 = vmul.f32 %v1588, %v1759
          %v1762 = vmul.f32 %v1589, %v1759
          %v1763 = vmul.f32 %v1590, %v1759
          %v1764 = vmul.f32 %v1591, %v1759
          %v1765 = vmul.f32 %v1592, %v1759
          %v1766 = vmul.f32 %v1593, %v1759
          %v1767 = vmul.f32 %v1594, %v1759
          %v1768 = vmul.f32 %v1595, %v1759
          %v1769 = vmul.f32 %v1596, %v1759
          %v1770 = vmul.f32 %v1597, %v1759
          %v1771 = vmul.f32 %v1598, %v1759
          %v1772 = vmul.f32 %v1599, %v1759
          %v1773 = vmul.f32 %v1600, %v1759
          %v1774 = vmul.f32 %v1601, %v1759
          %v1775 = vmul.f32 %v1602, %v1759
          %v1776 = vadd.f32 %v1739, %v1760
          %v1777 = vadd.f32 %v1740, %v1761
          %v1778 = vadd.f32 %v1741, %v1762
          %v1779 = vadd.f32 %v1742, %v1763
          %v1780 = vadd.f32 %v1743, %v1764
          %v1781 = vadd.f32 %v1744, %v1765
          %v1782 = vadd.f32 %v1745, %v1766
          %v1783 = vadd.f32 %v1746, %v1767
          %v1784 = vadd.f32 %v1747, %v1768
          %v1785 = vadd.f32 %v1748, %v1769
          %v1786 = vadd.f32 %v1749, %v1770
          %v1787 = vadd.f32 %v1750, %v1771
          %v1788 = vadd.f32 %v1751, %v1772
          %v1789 = vadd.f32 %v1752, %v1773
          %v1790 = vadd.f32 %v1753, %v1774
          %v1791 = vadd.f32 %v1754, %v1775
          %v1792 = vld [vmem:[#allocation9 + $0x24] sm:$0x1]
          %v1793 = vlaneseq
          %v1794 = vshrl.u32 %v1793, 7
          %v1795 = vsub.s32 0, %v1794
          %v1796 = vrot.slane %v1792, %v1795
          %v1797 = vmul.f32 %v1589, %v1796
          %v1798 = vmul.f32 %v1590, %v1796
          %v1799 = vmul.f32 %v1591, %v1796
          %v1800 = vmul.f32 %v1592, %v1796
          %v1801 = vmul.f32 %v1593, %v1796
          %v1802 = vmul.f32 %v1594, %v1796
          %v1803 = vmul.f32 %v1595, %v1796
          %v1804 = vmul.f32 %v1596, %v1796
          %v1805 = vmul.f32 %v1597, %v1796
          %v1806 = vmul.f32 %v1598, %v1796
          %v1807 = vmul.f32 %v1599, %v1796
          %v1808 = vmul.f32 %v1600, %v1796
          %v1809 = vmul.f32 %v1601, %v1796
          %v1810 = vmul.f32 %v1602, %v1796
          %v1811 = vmul.f32 %v1603, %v1796
          %v1812 = vmul.f32 %v1604, %v1796
          %v1813 = vadd.f32 %v1776, %v1797
          %v1814 = vadd.f32 %v1777, %v1798
          %v1815 = vadd.f32 %v1778, %v1799
          %v1816 = vadd.f32 %v1779, %v1800
          %v1817 = vadd.f32 %v1780, %v1801
          %v1818 = vadd.f32 %v1781, %v1802
          %v1819 = vadd.f32 %v1782, %v1803
          %v1820 = vadd.f32 %v1783, %v1804
          %v1821 = vadd.f32 %v1784, %v1805
          %v1822 = vadd.f32 %v1785, %v1806
          %v1823 = vadd.f32 %v1786, %v1807
          %v1824 = vadd.f32 %v1787, %v1808
          %v1825 = vadd.f32 %v1788, %v1809
          %v1826 = vadd.f32 %v1789, %v1810
          %v1827 = vadd.f32 %v1790, %v1811
          %v1828 = vadd.f32 %v1791, %v1812
          %v1829 = vld [vmem:[#allocation9 + $0x2b] sm:$0x1]
          %v1830 = vlaneseq
          %v1831 = vshrl.u32 %v1830, 7
          %v1832 = vsub.s32 0, %v1831
          %v1833 = vrot.slane %v1829, %v1832
          %v1834 = vmul.f32 %v1591, %v1833
          %v1835 = vmul.f32 %v1592, %v1833
          %v1836 = vmul.f32 %v1593, %v1833
          %v1837 = vmul.f32 %v1594, %v1833
          %v1838 = vmul.f32 %v1595, %v1833
          %v1839 = vmul.f32 %v1596, %v1833
          %v1840 = vmul.f32 %v1597, %v1833
          %v1841 = vmul.f32 %v1598, %v1833
          %v1842 = vmul.f32 %v1599, %v1833
          %v1843 = vmul.f32 %v1600, %v1833
          %v1844 = vmul.f32 %v1601, %v1833
          %v1845 = vmul.f32 %v1602, %v1833
          %v1846 = vmul.f32 %v1603, %v1833
          %v1847 = vmul.f32 %v1604, %v1833
          %v1848 = vmul.f32 %v1605, %v1833
          %v1849 = vmul.f32 %v1606, %v1833
          %v1850 = vadd.f32 %v1813, %v1834
          %v1851 = vadd.f32 %v1814, %v1835
          %v1852 = vadd.f32 %v1815, %v1836
          %v1853 = vadd.f32 %v1816, %v1837
          %v1854 = vadd.f32 %v1817, %v1838
          %v1855 = vadd.f32 %v1818, %v1839
          %v1856 = vadd.f32 %v1819, %v1840
          %v1857 = vadd.f32 %v1820, %v1841
          %v1858 = vadd.f32 %v1821, %v1842
          %v1859 = vadd.f32 %v1822, %v1843
          %v1860 = vadd.f32 %v1823, %v1844
          %v1861 = vadd.f32 %v1824, %v1845
          %v1862 = vadd.f32 %v1825, %v1846
          %v1863 = vadd.f32 %v1826, %v1847
          %v1864 = vadd.f32 %v1827, %v1848
          %v1865 = vadd.f32 %v1828, %v1849
          %v1866 = vld [vmem:[%s1291 + $0xf] sm:$0xff]
          %v1867 = vld [vmem:[%s1291 + $0x17] sm:$0xff]
          %v1868 = vld [vmem:[%s1291 + $0x3f] sm:$0xff]
          %v1869 = vld [vmem:[%s1291 + $0x47] sm:$0xff]
          %v1870 = vld [vmem:[%s1291 + $0x6f] sm:$0xff]
          %v1871 = vld [vmem:[%s1291 + $0x77] sm:$0xff]
          %v1872 = vld [vmem:[%s1291 + $0x9f] sm:$0xff]
          %v1873 = vld [vmem:[%s1291 + $0xa7] sm:$0xff]
          %v1874 = vld [vmem:[%s1291 + $0xcf] sm:$0xff]
          %v1875 = vld [vmem:[%s1291 + $0xd7] sm:$0xff]
          %v1876 = vld [vmem:[%s1291 + $0xff] sm:$0xff]
          %v1877 = vld [vmem:[%s1291 + $0x107] sm:$0xff]
          %v1878 = vld [vmem:[%s1291 + $0x12f] sm:$0xff]
          %v1879 = vld [vmem:[%s1291 + $0x137] sm:$0xff]
          %v1880 = vld [vmem:[%s1291 + $0x15f] sm:$0xff]
          %v1881 = vld [vmem:[%s1291 + $0x167] sm:$0xff]
          %v1882 = vld [vmem:[%s1291 + $0x18f] sm:$0xff]
          %v1883 = vld [vmem:[%s1291 + $0x197] sm:$0xff]
          %v1884 = vld [vmem:[%s1291 + $0x1bf] sm:$0xff]
          %v1885 = vld [vmem:[%s1291 + $0x1c7] sm:$0xff]
          %v1886 = vld [vmem:[%s1291 + $0x1ef] sm:$0xff]
          %v1887 = vld [vmem:[%s1291 + $0x1f7] sm:$0xff]
          %v1888 = vld [vmem:[%s1291 + $0x21f] sm:$0xff]
          %v1889 = vld [vmem:[%s1291 + $0x227] sm:$0xff]
          %v1890 = vld [vmem:[%s1291 + $0x24f] sm:$0xff]
          %v1891 = vld [vmem:[%s1291 + $0x257] sm:$0xff]
          %v1892 = vld [vmem:[%s1291 + $0x27f] sm:$0xff]
          %v1893 = vld [vmem:[%s1291 + $0x287] sm:$0xff]
          %v1894 = vld [vmem:[#allocation9 + $0x2] sm:$0x1]
          %v1895 = vlaneseq
          %v1896 = vshrl.u32 %v1895, 7
          %v1897 = vsub.s32 0, %v1896
          %v1898 = vrot.slane %v1894, %v1897
          %v1899 = vmul.f32 %v1866, %v1898
          %v1900 = vmul.f32 %v1867, %v1898
          %v1901 = vmul.f32 %v1868, %v1898
          %v1902 = vmul.f32 %v1869, %v1898
          %v1903 = vmul.f32 %v1870, %v1898
          %v1904 = vmul.f32 %v1871, %v1898
          %v1905 = vmul.f32 %v1872, %v1898
          %v1906 = vmul.f32 %v1873, %v1898
          %v1907 = vmul.f32 %v1874, %v1898
          %v1908 = vmul.f32 %v1875, %v1898
          %v1909 = vmul.f32 %v1876, %v1898
          %v1910 = vmul.f32 %v1877, %v1898
          %v1911 = vmul.f32 %v1878, %v1898
          %v1912 = vmul.f32 %v1879, %v1898
          %v1913 = vmul.f32 %v1880, %v1898
          %v1914 = vmul.f32 %v1881, %v1898
          %v1915 = vadd.f32 %v1850, %v1899
          %v1916 = vadd.f32 %v1851, %v1900
          %v1917 = vadd.f32 %v1852, %v1901
          %v1918 = vadd.f32 %v1853, %v1902
          %v1919 = vadd.f32 %v1854, %v1903
          %v1920 = vadd.f32 %v1855, %v1904
          %v1921 = vadd.f32 %v1856, %v1905
          %v1922 = vadd.f32 %v1857, %v1906
          %v1923 = vadd.f32 %v1858, %v1907
          %v1924 = vadd.f32 %v1859, %v1908
          %v1925 = vadd.f32 %v1860, %v1909
          %v1926 = vadd.f32 %v1861, %v1910
          %v1927 = vadd.f32 %v1862, %v1911
          %v1928 = vadd.f32 %v1863, %v1912
          %v1929 = vadd.f32 %v1864, %v1913
          %v1930 = vadd.f32 %v1865, %v1914
          %v1931 = vld [vmem:[#allocation9 + $0x9] sm:$0x1]
          %v1932 = vlaneseq
          %v1933 = vshrl.u32 %v1932, 7
          %v1934 = vsub.s32 0, %v1933
          %v1935 = vrot.slane %v1931, %v1934
          %v1936 = vmul.f32 %v1868, %v1935
          %v1937 = vmul.f32 %v1869, %v1935
          %v1938 = vmul.f32 %v1870, %v1935
          %v1939 = vmul.f32 %v1871, %v1935
          %v1940 = vmul.f32 %v1872, %v1935
          %v1941 = vmul.f32 %v1873, %v1935
          %v1942 = vmul.f32 %v1874, %v1935
          %v1943 = vmul.f32 %v1875, %v1935
          %v1944 = vmul.f32 %v1876, %v1935
          %v1945 = vmul.f32 %v1877, %v1935
          %v1946 = vmul.f32 %v1878, %v1935
          %v1947 = vmul.f32 %v1879, %v1935
          %v1948 = vmul.f32 %v1880, %v1935
          %v1949 = vmul.f32 %v1881, %v1935
          %v1950 = vmul.f32 %v1882, %v1935
          %v1951 = vmul.f32 %v1883, %v1935
          %v1952 = vadd.f32 %v1915, %v1936
          %v1953 = vadd.f32 %v1916, %v1937
          %v1954 = vadd.f32 %v1917, %v1938
          %v1955 = vadd.f32 %v1918, %v1939
          %v1956 = vadd.f32 %v1919, %v1940
          %v1957 = vadd.f32 %v1920, %v1941
          %v1958 = vadd.f32 %v1921, %v1942
          %v1959 = vadd.f32 %v1922, %v1943
          %v1960 = vadd.f32 %v1923, %v1944
          %v1961 = vadd.f32 %v1924, %v1945
          %v1962 = vadd.f32 %v1925, %v1946
          %v1963 = vadd.f32 %v1926, %v1947
          %v1964 = vadd.f32 %v1927, %v1948
          %v1965 = vadd.f32 %v1928, %v1949
          %v1966 = vadd.f32 %v1929, %v1950
          %v1967 = vadd.f32 %v1930, %v1951
          %v1968 = vld [vmem:[#allocation9 + $0x10] sm:$0x1]
          %v1969 = vlaneseq
          %v1970 = vshrl.u32 %v1969, 7
          %v1971 = vsub.s32 0, %v1970
          %v1972 = vrot.slane %v1968, %v1971
          %v1973 = vmul.f32 %v1870, %v1972
          %v1974 = vmul.f32 %v1871, %v1972
          %v1975 = vmul.f32 %v1872, %v1972
          %v1976 = vmul.f32 %v1873, %v1972
          %v1977 = vmul.f32 %v1874, %v1972
          %v1978 = vmul.f32 %v1875, %v1972
          %v1979 = vmul.f32 %v1876, %v1972
          %v1980 = vmul.f32 %v1877, %v1972
          %v1981 = vmul.f32 %v1878, %v1972
          %v1982 = vmul.f32 %v1879, %v1972
          %v1983 = vmul.f32 %v1880, %v1972
          %v1984 = vmul.f32 %v1881, %v1972
          %v1985 = vmul.f32 %v1882, %v1972
          %v1986 = vmul.f32 %v1883, %v1972
          %v1987 = vmul.f32 %v1884, %v1972
          %v1988 = vmul.f32 %v1885, %v1972
          %v1989 = vadd.f32 %v1952, %v1973
          %v1990 = vadd.f32 %v1953, %v1974
          %v1991 = vadd.f32 %v1954, %v1975
          %v1992 = vadd.f32 %v1955, %v1976
          %v1993 = vadd.f32 %v1956, %v1977
          %v1994 = vadd.f32 %v1957, %v1978
          %v1995 = vadd.f32 %v1958, %v1979
          %v1996 = vadd.f32 %v1959, %v1980
          %v1997 = vadd.f32 %v1960, %v1981
          %v1998 = vadd.f32 %v1961, %v1982
          %v1999 = vadd.f32 %v1962, %v1983
          %v2000 = vadd.f32 %v1963, %v1984
          %v2001 = vadd.f32 %v1964, %v1985
          %v2002 = vadd.f32 %v1965, %v1986
          %v2003 = vadd.f32 %v1966, %v1987
          %v2004 = vadd.f32 %v1967, %v1988
          %v2005 = vld [vmem:[#allocation9 + $0x17] sm:$0x1]
          %v2006 = vlaneseq
          %v2007 = vshrl.u32 %v2006, 7
          %v2008 = vsub.s32 0, %v2007
          %v2009 = vrot.slane %v2005, %v2008
          %v2010 = vmul.f32 %v1872, %v2009
          %v2011 = vmul.f32 %v1873, %v2009
          %v2012 = vmul.f32 %v1874, %v2009
          %v2013 = vmul.f32 %v1875, %v2009
          %v2014 = vmul.f32 %v1876, %v2009
          %v2015 = vmul.f32 %v1877, %v2009
          %v2016 = vmul.f32 %v1878, %v2009
          %v2017 = vmul.f32 %v1879, %v2009
          %v2018 = vmul.f32 %v1880, %v2009
          %v2019 = vmul.f32 %v1881, %v2009
          %v2020 = vmul.f32 %v1882, %v2009
          %v2021 = vmul.f32 %v1883, %v2009
          %v2022 = vmul.f32 %v1884, %v2009
          %v2023 = vmul.f32 %v1885, %v2009
          %v2024 = vmul.f32 %v1886, %v2009
          %v2025 = vmul.f32 %v1887, %v2009
          %v2026 = vadd.f32 %v1989, %v2010
          %v2027 = vadd.f32 %v1990, %v2011
          %v2028 = vadd.f32 %v1991, %v2012
          %v2029 = vadd.f32 %v1992, %v2013
          %v2030 = vadd.f32 %v1993, %v2014
          %v2031 = vadd.f32 %v1994, %v2015
          %v2032 = vadd.f32 %v1995, %v2016
          %v2033 = vadd.f32 %v1996, %v2017
          %v2034 = vadd.f32 %v1997, %v2018
          %v2035 = vadd.f32 %v1998, %v2019
          %v2036 = vadd.f32 %v1999, %v2020
          %v2037 = vadd.f32 %v2000, %v2021
          %v2038 = vadd.f32 %v2001, %v2022
          %v2039 = vadd.f32 %v2002, %v2023
          %v2040 = vadd.f32 %v2003, %v2024
          %v2041 = vadd.f32 %v2004, %v2025
          %v2042 = vld [vmem:[#allocation9 + $0x1e] sm:$0x1]
          %v2043 = vlaneseq
          %v2044 = vshrl.u32 %v2043, 7
          %v2045 = vsub.s32 0, %v2044
          %v2046 = vrot.slane %v2042, %v2045
          %v2047 = vmul.f32 %v1874, %v2046
          %v2048 = vmul.f32 %v1875, %v2046
          %v2049 = vmul.f32 %v1876, %v2046
          %v2050 = vmul.f32 %v1877, %v2046
          %v2051 = vmul.f32 %v1878, %v2046
          %v2052 = vmul.f32 %v1879, %v2046
          %v2053 = vmul.f32 %v1880, %v2046
          %v2054 = vmul.f32 %v1881, %v2046
          %v2055 = vmul.f32 %v1882, %v2046
          %v2056 = vmul.f32 %v1883, %v2046
          %v2057 = vmul.f32 %v1884, %v2046
          %v2058 = vmul.f32 %v1885, %v2046
          %v2059 = vmul.f32 %v1886, %v2046
          %v2060 = vmul.f32 %v1887, %v2046
          %v2061 = vmul.f32 %v1888, %v2046
          %v2062 = vmul.f32 %v1889, %v2046
          %v2063 = vadd.f32 %v2026, %v2047
          %v2064 = vadd.f32 %v2027, %v2048
          %v2065 = vadd.f32 %v2028, %v2049
          %v2066 = vadd.f32 %v2029, %v2050
          %v2067 = vadd.f32 %v2030, %v2051
          %v2068 = vadd.f32 %v2031, %v2052
          %v2069 = vadd.f32 %v2032, %v2053
          %v2070 = vadd.f32 %v2033, %v2054
          %v2071 = vadd.f32 %v2034, %v2055
          %v2072 = vadd.f32 %v2035, %v2056
          %v2073 = vadd.f32 %v2036, %v2057
          %v2074 = vadd.f32 %v2037, %v2058
          %v2075 = vadd.f32 %v2038, %v2059
          %v2076 = vadd.f32 %v2039, %v2060
          %v2077 = vadd.f32 %v2040, %v2061
          %v2078 = vadd.f32 %v2041, %v2062
          %v2079 = vld [vmem:[#allocation9 + $0x25] sm:$0x1]
          %v2080 = vlaneseq
          %v2081 = vshrl.u32 %v2080, 7
          %v2082 = vsub.s32 0, %v2081
          %v2083 = vrot.slane %v2079, %v2082
          %v2084 = vmul.f32 %v1876, %v2083
          %v2085 = vmul.f32 %v1877, %v2083
          %v2086 = vmul.f32 %v1878, %v2083
          %v2087 = vmul.f32 %v1879, %v2083
          %v2088 = vmul.f32 %v1880, %v2083
          %v2089 = vmul.f32 %v1881, %v2083
          %v2090 = vmul.f32 %v1882, %v2083
          %v2091 = vmul.f32 %v1883, %v2083
          %v2092 = vmul.f32 %v1884, %v2083
          %v2093 = vmul.f32 %v1885, %v2083
          %v2094 = vmul.f32 %v1886, %v2083
          %v2095 = vmul.f32 %v1887, %v2083
          %v2096 = vmul.f32 %v1888, %v2083
          %v2097 = vmul.f32 %v1889, %v2083
          %v2098 = vmul.f32 %v1890, %v2083
          %v2099 = vmul.f32 %v1891, %v2083
          %v2100 = vadd.f32 %v2063, %v2084
          %v2101 = vadd.f32 %v2064, %v2085
          %v2102 = vadd.f32 %v2065, %v2086
          %v2103 = vadd.f32 %v2066, %v2087
          %v2104 = vadd.f32 %v2067, %v2088
          %v2105 = vadd.f32 %v2068, %v2089
          %v2106 = vadd.f32 %v2069, %v2090
          %v2107 = vadd.f32 %v2070, %v2091
          %v2108 = vadd.f32 %v2071, %v2092
          %v2109 = vadd.f32 %v2072, %v2093
          %v2110 = vadd.f32 %v2073, %v2094
          %v2111 = vadd.f32 %v2074, %v2095
          %v2112 = vadd.f32 %v2075, %v2096
          %v2113 = vadd.f32 %v2076, %v2097
          %v2114 = vadd.f32 %v2077, %v2098
          %v2115 = vadd.f32 %v2078, %v2099
          %v2116 = vld [vmem:[#allocation9 + $0x2c] sm:$0x1]
          %v2117 = vlaneseq
          %v2118 = vshrl.u32 %v2117, 7
          %v2119 = vsub.s32 0, %v2118
          %v2120 = vrot.slane %v2116, %v2119
          %v2121 = vmul.f32 %v1878, %v2120
          %v2122 = vmul.f32 %v1879, %v2120
          %v2123 = vmul.f32 %v1880, %v2120
          %v2124 = vmul.f32 %v1881, %v2120
          %v2125 = vmul.f32 %v1882, %v2120
          %v2126 = vmul.f32 %v1883, %v2120
          %v2127 = vmul.f32 %v1884, %v2120
          %v2128 = vmul.f32 %v1885, %v2120
          %v2129 = vmul.f32 %v1886, %v2120
          %v2130 = vmul.f32 %v1887, %v2120
          %v2131 = vmul.f32 %v1888, %v2120
          %v2132 = vmul.f32 %v1889, %v2120
          %v2133 = vmul.f32 %v1890, %v2120
          %v2134 = vmul.f32 %v1891, %v2120
          %v2135 = vmul.f32 %v1892, %v2120
          %v2136 = vmul.f32 %v1893, %v2120
          %v2137 = vadd.f32 %v2100, %v2121
          %v2138 = vadd.f32 %v2101, %v2122
          %v2139 = vadd.f32 %v2102, %v2123
          %v2140 = vadd.f32 %v2103, %v2124
          %v2141 = vadd.f32 %v2104, %v2125
          %v2142 = vadd.f32 %v2105, %v2126
          %v2143 = vadd.f32 %v2106, %v2127
          %v2144 = vadd.f32 %v2107, %v2128
          %v2145 = vadd.f32 %v2108, %v2129
          %v2146 = vadd.f32 %v2109, %v2130
          %v2147 = vadd.f32 %v2110, %v2131
          %v2148 = vadd.f32 %v2111, %v2132
          %v2149 = vadd.f32 %v2112, %v2133
          %v2150 = vadd.f32 %v2113, %v2134
          %v2151 = vadd.f32 %v2114, %v2135
          %v2152 = vadd.f32 %v2115, %v2136
          %v2153 = vld [vmem:[%s1291 + $0x10] sm:$0xff]
          %v2154 = vld [vmem:[%s1291 + $0x18] sm:$0xff]
          %v2155 = vld [vmem:[%s1291 + $0x40] sm:$0xff]
          %v2156 = vld [vmem:[%s1291 + $0x48] sm:$0xff]
          %v2157 = vld [vmem:[%s1291 + $0x70] sm:$0xff]
          %v2158 = vld [vmem:[%s1291 + $0x78] sm:$0xff]
          %v2159 = vld [vmem:[%s1291 + $0xa0] sm:$0xff]
          %v2160 = vld [vmem:[%s1291 + $0xa8] sm:$0xff]
          %v2161 = vld [vmem:[%s1291 + $0xd0] sm:$0xff]
          %v2162 = vld [vmem:[%s1291 + $0xd8] sm:$0xff]
          %v2163 = vld [vmem:[%s1291 + $0x100] sm:$0xff]
          %v2164 = vld [vmem:[%s1291 + $0x108] sm:$0xff]
          %v2165 = vld [vmem:[%s1291 + $0x130] sm:$0xff]
          %v2166 = vld [vmem:[%s1291 + $0x138] sm:$0xff]
          %v2167 = vld [vmem:[%s1291 + $0x160] sm:$0xff]
          %v2168 = vld [vmem:[%s1291 + $0x168] sm:$0xff]
          %v2169 = vld [vmem:[%s1291 + $0x190] sm:$0xff]
          %v2170 = vld [vmem:[%s1291 + $0x198] sm:$0xff]
          %v2171 = vld [vmem:[%s1291 + $0x1c0] sm:$0xff]
          %v2172 = vld [vmem:[%s1291 + $0x1c8] sm:$0xff]
          %v2173 = vld [vmem:[%s1291 + $0x1f0] sm:$0xff]
          %v2174 = vld [vmem:[%s1291 + $0x1f8] sm:$0xff]
          %v2175 = vld [vmem:[%s1291 + $0x220] sm:$0xff]
          %v2176 = vld [vmem:[%s1291 + $0x228] sm:$0xff]
          %v2177 = vld [vmem:[%s1291 + $0x250] sm:$0xff]
          %v2178 = vld [vmem:[%s1291 + $0x258] sm:$0xff]
          %v2179 = vld [vmem:[%s1291 + $0x280] sm:$0xff]
          %v2180 = vld [vmem:[%s1291 + $0x288] sm:$0xff]
          %v2181 = vld [vmem:[#allocation9 + $0x3] sm:$0x1]
          %v2182 = vlaneseq
          %v2183 = vshrl.u32 %v2182, 7
          %v2184 = vsub.s32 0, %v2183
          %v2185 = vrot.slane %v2181, %v2184
          %v2186 = vmul.f32 %v2153, %v2185
          %v2187 = vmul.f32 %v2154, %v2185
          %v2188 = vmul.f32 %v2155, %v2185
          %v2189 = vmul.f32 %v2156, %v2185
          %v2190 = vmul.f32 %v2157, %v2185
          %v2191 = vmul.f32 %v2158, %v2185
          %v2192 = vmul.f32 %v2159, %v2185
          %v2193 = vmul.f32 %v2160, %v2185
          %v2194 = vmul.f32 %v2161, %v2185
          %v2195 = vmul.f32 %v2162, %v2185
          %v2196 = vmul.f32 %v2163, %v2185
          %v2197 = vmul.f32 %v2164, %v2185
          %v2198 = vmul.f32 %v2165, %v2185
          %v2199 = vmul.f32 %v2166, %v2185
          %v2200 = vmul.f32 %v2167, %v2185
          %v2201 = vmul.f32 %v2168, %v2185
          %v2202 = vadd.f32 %v2137, %v2186
          %v2203 = vadd.f32 %v2138, %v2187
          %v2204 = vadd.f32 %v2139, %v2188
          %v2205 = vadd.f32 %v2140, %v2189
          %v2206 = vadd.f32 %v2141, %v2190
          %v2207 = vadd.f32 %v2142, %v2191
          %v2208 = vadd.f32 %v2143, %v2192
          %v2209 = vadd.f32 %v2144, %v2193
          %v2210 = vadd.f32 %v2145, %v2194
          %v2211 = vadd.f32 %v2146, %v2195
          %v2212 = vadd.f32 %v2147, %v2196
          %v2213 = vadd.f32 %v2148, %v2197
          %v2214 = vadd.f32 %v2149, %v2198
          %v2215 = vadd.f32 %v2150, %v2199
          %v2216 = vadd.f32 %v2151, %v2200
          %v2217 = vadd.f32 %v2152, %v2201
          %v2218 = vld [vmem:[#allocation9 + $0xa] sm:$0x1]
          %v2219 = vlaneseq
          %v2220 = vshrl.u32 %v2219, 7
          %v2221 = vsub.s32 0, %v2220
          %v2222 = vrot.slane %v2218, %v2221
          %v2223 = vmul.f32 %v2155, %v2222
          %v2224 = vmul.f32 %v2156, %v2222
          %v2225 = vmul.f32 %v2157, %v2222
          %v2226 = vmul.f32 %v2158, %v2222
          %v2227 = vmul.f32 %v2159, %v2222
          %v2228 = vmul.f32 %v2160, %v2222
          %v2229 = vmul.f32 %v2161, %v2222
          %v2230 = vmul.f32 %v2162, %v2222
          %v2231 = vmul.f32 %v2163, %v2222
          %v2232 = vmul.f32 %v2164, %v2222
          %v2233 = vmul.f32 %v2165, %v2222
          %v2234 = vmul.f32 %v2166, %v2222
          %v2235 = vmul.f32 %v2167, %v2222
          %v2236 = vmul.f32 %v2168, %v2222
          %v2237 = vmul.f32 %v2169, %v2222
          %v2238 = vmul.f32 %v2170, %v2222
          %v2239 = vadd.f32 %v2202, %v2223
          %v2240 = vadd.f32 %v2203, %v2224
          %v2241 = vadd.f32 %v2204, %v2225
          %v2242 = vadd.f32 %v2205, %v2226
          %v2243 = vadd.f32 %v2206, %v2227
          %v2244 = vadd.f32 %v2207, %v2228
          %v2245 = vadd.f32 %v2208, %v2229
          %v2246 = vadd.f32 %v2209, %v2230
          %v2247 = vadd.f32 %v2210, %v2231
          %v2248 = vadd.f32 %v2211, %v2232
          %v2249 = vadd.f32 %v2212, %v2233
          %v2250 = vadd.f32 %v2213, %v2234
          %v2251 = vadd.f32 %v2214, %v2235
          %v2252 = vadd.f32 %v2215, %v2236
          %v2253 = vadd.f32 %v2216, %v2237
          %v2254 = vadd.f32 %v2217, %v2238
          %v2255 = vld [vmem:[#allocation9 + $0x11] sm:$0x1]
          %v2256 = vlaneseq
          %v2257 = vshrl.u32 %v2256, 7
          %v2258 = vsub.s32 0, %v2257
          %v2259 = vrot.slane %v2255, %v2258
          %v2260 = vmul.f32 %v2157, %v2259
          %v2261 = vmul.f32 %v2158, %v2259
          %v2262 = vmul.f32 %v2159, %v2259
          %v2263 = vmul.f32 %v2160, %v2259
          %v2264 = vmul.f32 %v2161, %v2259
          %v2265 = vmul.f32 %v2162, %v2259
          %v2266 = vmul.f32 %v2163, %v2259
          %v2267 = vmul.f32 %v2164, %v2259
          %v2268 = vmul.f32 %v2165, %v2259
          %v2269 = vmul.f32 %v2166, %v2259
          %v2270 = vmul.f32 %v2167, %v2259
          %v2271 = vmul.f32 %v2168, %v2259
          %v2272 = vmul.f32 %v2169, %v2259
          %v2273 = vmul.f32 %v2170, %v2259
          %v2274 = vmul.f32 %v2171, %v2259
          %v2275 = vmul.f32 %v2172, %v2259
          %v2276 = vadd.f32 %v2239, %v2260
          %v2277 = vadd.f32 %v2240, %v2261
          %v2278 = vadd.f32 %v2241, %v2262
          %v2279 = vadd.f32 %v2242, %v2263
          %v2280 = vadd.f32 %v2243, %v2264
          %v2281 = vadd.f32 %v2244, %v2265
          %v2282 = vadd.f32 %v2245, %v2266
          %v2283 = vadd.f32 %v2246, %v2267
          %v2284 = vadd.f32 %v2247, %v2268
          %v2285 = vadd.f32 %v2248, %v2269
          %v2286 = vadd.f32 %v2249, %v2270
          %v2287 = vadd.f32 %v2250, %v2271
          %v2288 = vadd.f32 %v2251, %v2272
          %v2289 = vadd.f32 %v2252, %v2273
          %v2290 = vadd.f32 %v2253, %v2274
          %v2291 = vadd.f32 %v2254, %v2275
          %v2292 = vld [vmem:[#allocation9 + $0x18] sm:$0x1]
          %v2293 = vlaneseq
          %v2294 = vshrl.u32 %v2293, 7
          %v2295 = vsub.s32 0, %v2294
          %v2296 = vrot.slane %v2292, %v2295
          %v2297 = vmul.f32 %v2159, %v2296
          %v2298 = vmul.f32 %v2160, %v2296
          %v2299 = vmul.f32 %v2161, %v2296
          %v2300 = vmul.f32 %v2162, %v2296
          %v2301 = vmul.f32 %v2163, %v2296
          %v2302 = vmul.f32 %v2164, %v2296
          %v2303 = vmul.f32 %v2165, %v2296
          %v2304 = vmul.f32 %v2166, %v2296
          %v2305 = vmul.f32 %v2167, %v2296
          %v2306 = vmul.f32 %v2168, %v2296
          %v2307 = vmul.f32 %v2169, %v2296
          %v2308 = vmul.f32 %v2170, %v2296
          %v2309 = vmul.f32 %v2171, %v2296
          %v2310 = vmul.f32 %v2172, %v2296
          %v2311 = vmul.f32 %v2173, %v2296
          %v2312 = vmul.f32 %v2174, %v2296
          %v2313 = vadd.f32 %v2276, %v2297
          %v2314 = vadd.f32 %v2277, %v2298
          %v2315 = vadd.f32 %v2278, %v2299
          %v2316 = vadd.f32 %v2279, %v2300
          %v2317 = vadd.f32 %v2280, %v2301
          %v2318 = vadd.f32 %v2281, %v2302
          %v2319 = vadd.f32 %v2282, %v2303
          %v2320 = vadd.f32 %v2283, %v2304
          %v2321 = vadd.f32 %v2284, %v2305
          %v2322 = vadd.f32 %v2285, %v2306
          %v2323 = vadd.f32 %v2286, %v2307
          %v2324 = vadd.f32 %v2287, %v2308
          %v2325 = vadd.f32 %v2288, %v2309
          %v2326 = vadd.f32 %v2289, %v2310
          %v2327 = vadd.f32 %v2290, %v2311
          %v2328 = vadd.f32 %v2291, %v2312
          %v2329 = vld [vmem:[#allocation9 + $0x1f] sm:$0x1]
          %v2330 = vlaneseq
          %v2331 = vshrl.u32 %v2330, 7
          %v2332 = vsub.s32 0, %v2331
          %v2333 = vrot.slane %v2329, %v2332
          %v2334 = vmul.f32 %v2161, %v2333
          %v2335 = vmul.f32 %v2162, %v2333
          %v2336 = vmul.f32 %v2163, %v2333
          %v2337 = vmul.f32 %v2164, %v2333
          %v2338 = vmul.f32 %v2165, %v2333
          %v2339 = vmul.f32 %v2166, %v2333
          %v2340 = vmul.f32 %v2167, %v2333
          %v2341 = vmul.f32 %v2168, %v2333
          %v2342 = vmul.f32 %v2169, %v2333
          %v2343 = vmul.f32 %v2170, %v2333
          %v2344 = vmul.f32 %v2171, %v2333
          %v2345 = vmul.f32 %v2172, %v2333
          %v2346 = vmul.f32 %v2173, %v2333
          %v2347 = vmul.f32 %v2174, %v2333
          %v2348 = vmul.f32 %v2175, %v2333
          %v2349 = vmul.f32 %v2176, %v2333
          %v2350 = vadd.f32 %v2313, %v2334
          %v2351 = vadd.f32 %v2314, %v2335
          %v2352 = vadd.f32 %v2315, %v2336
          %v2353 = vadd.f32 %v2316, %v2337
          %v2354 = vadd.f32 %v2317, %v2338
          %v2355 = vadd.f32 %v2318, %v2339
          %v2356 = vadd.f32 %v2319, %v2340
          %v2357 = vadd.f32 %v2320, %v2341
          %v2358 = vadd.f32 %v2321, %v2342
          %v2359 = vadd.f32 %v2322, %v2343
          %v2360 = vadd.f32 %v2323, %v2344
          %v2361 = vadd.f32 %v2324, %v2345
          %v2362 = vadd.f32 %v2325, %v2346
          %v2363 = vadd.f32 %v2326, %v2347
          %v2364 = vadd.f32 %v2327, %v2348
          %v2365 = vadd.f32 %v2328, %v2349
          %v2366 = vld [vmem:[#allocation9 + $0x26] sm:$0x1]
          %v2367 = vlaneseq
          %v2368 = vshrl.u32 %v2367, 7
          %v2369 = vsub.s32 0, %v2368
          %v2370 = vrot.slane %v2366, %v2369
          %v2371 = vmul.f32 %v2163, %v2370
          %v2372 = vmul.f32 %v2164, %v2370
          %v2373 = vmul.f32 %v2165, %v2370
          %v2374 = vmul.f32 %v2166, %v2370
          %v2375 = vmul.f32 %v2167, %v2370
          %v2376 = vmul.f32 %v2168, %v2370
          %v2377 = vmul.f32 %v2169, %v2370
          %v2378 = vmul.f32 %v2170, %v2370
          %v2379 = vmul.f32 %v2171, %v2370
          %v2380 = vmul.f32 %v2172, %v2370
          %v2381 = vmul.f32 %v2173, %v2370
          %v2382 = vmul.f32 %v2174, %v2370
          %v2383 = vmul.f32 %v2175, %v2370
          %v2384 = vmul.f32 %v2176, %v2370
          %v2385 = vmul.f32 %v2177, %v2370
          %v2386 = vmul.f32 %v2178, %v2370
          %v2387 = vadd.f32 %v2350, %v2371
          %v2388 = vadd.f32 %v2351, %v2372
          %v2389 = vadd.f32 %v2352, %v2373
          %v2390 = vadd.f32 %v2353, %v2374
          %v2391 = vadd.f32 %v2354, %v2375
          %v2392 = vadd.f32 %v2355, %v2376
          %v2393 = vadd.f32 %v2356, %v2377
          %v2394 = vadd.f32 %v2357, %v2378
          %v2395 = vadd.f32 %v2358, %v2379
          %v2396 = vadd.f32 %v2359, %v2380
          %v2397 = vadd.f32 %v2360, %v2381
          %v2398 = vadd.f32 %v2361, %v2382
          %v2399 = vadd.f32 %v2362, %v2383
          %v2400 = vadd.f32 %v2363, %v2384
          %v2401 = vadd.f32 %v2364, %v2385
          %v2402 = vadd.f32 %v2365, %v2386
          %v2403 = vld [vmem:[#allocation9 + $0x2d] sm:$0x1]
          %v2404 = vlaneseq
          %v2405 = vshrl.u32 %v2404, 7
          %v2406 = vsub.s32 0, %v2405
          %v2407 = vrot.slane %v2403, %v2406
          %v2408 = vmul.f32 %v2165, %v2407
          %v2409 = vmul.f32 %v2166, %v2407
          %v2410 = vmul.f32 %v2167, %v2407
          %v2411 = vmul.f32 %v2168, %v2407
          %v2412 = vmul.f32 %v2169, %v2407
          %v2413 = vmul.f32 %v2170, %v2407
          %v2414 = vmul.f32 %v2171, %v2407
          %v2415 = vmul.f32 %v2172, %v2407
          %v2416 = vmul.f32 %v2173, %v2407
          %v2417 = vmul.f32 %v2174, %v2407
          %v2418 = vmul.f32 %v2175, %v2407
          %v2419 = vmul.f32 %v2176, %v2407
          %v2420 = vmul.f32 %v2177, %v2407
          %v2421 = vmul.f32 %v2178, %v2407
          %v2422 = vmul.f32 %v2179, %v2407
          %v2423 = vmul.f32 %v2180, %v2407
          %v2424 = vadd.f32 %v2387, %v2408
          %v2425 = vadd.f32 %v2388, %v2409
          %v2426 = vadd.f32 %v2389, %v2410
          %v2427 = vadd.f32 %v2390, %v2411
          %v2428 = vadd.f32 %v2391, %v2412
          %v2429 = vadd.f32 %v2392, %v2413
          %v2430 = vadd.f32 %v2393, %v2414
          %v2431 = vadd.f32 %v2394, %v2415
          %v2432 = vadd.f32 %v2395, %v2416
          %v2433 = vadd.f32 %v2396, %v2417
          %v2434 = vadd.f32 %v2397, %v2418
          %v2435 = vadd.f32 %v2398, %v2419
          %v2436 = vadd.f32 %v2399, %v2420
          %v2437 = vadd.f32 %v2400, %v2421
          %v2438 = vadd.f32 %v2401, %v2422
          %v2439 = vadd.f32 %v2402, %v2423
          %v2440 = vld [vmem:[%s1291 + $0x11] sm:$0xff]
          %v2441 = vld [vmem:[%s1291 + $0x19] sm:$0xff]
          %v2442 = vld [vmem:[%s1291 + $0x41] sm:$0xff]
          %v2443 = vld [vmem:[%s1291 + $0x49] sm:$0xff]
          %v2444 = vld [vmem:[%s1291 + $0x71] sm:$0xff]
          %v2445 = vld [vmem:[%s1291 + $0x79] sm:$0xff]
          %v2446 = vld [vmem:[%s1291 + $0xa1] sm:$0xff]
          %v2447 = vld [vmem:[%s1291 + $0xa9] sm:$0xff]
          %v2448 = vld [vmem:[%s1291 + $0xd1] sm:$0xff]
          %v2449 = vld [vmem:[%s1291 + $0xd9] sm:$0xff]
          %v2450 = vld [vmem:[%s1291 + $0x101] sm:$0xff]
          %v2451 = vld [vmem:[%s1291 + $0x109] sm:$0xff]
          %v2452 = vld [vmem:[%s1291 + $0x131] sm:$0xff]
          %v2453 = vld [vmem:[%s1291 + $0x139] sm:$0xff]
          %v2454 = vld [vmem:[%s1291 + $0x161] sm:$0xff]
          %v2455 = vld [vmem:[%s1291 + $0x169] sm:$0xff]
          %v2456 = vld [vmem:[%s1291 + $0x191] sm:$0xff]
          %v2457 = vld [vmem:[%s1291 + $0x199] sm:$0xff]
          %v2458 = vld [vmem:[%s1291 + $0x1c1] sm:$0xff]
          %v2459 = vld [vmem:[%s1291 + $0x1c9] sm:$0xff]
          %v2460 = vld [vmem:[%s1291 + $0x1f1] sm:$0xff]
          %v2461 = vld [vmem:[%s1291 + $0x1f9] sm:$0xff]
          %v2462 = vld [vmem:[%s1291 + $0x221] sm:$0xff]
          %v2463 = vld [vmem:[%s1291 + $0x229] sm:$0xff]
          %v2464 = vld [vmem:[%s1291 + $0x251] sm:$0xff]
          %v2465 = vld [vmem:[%s1291 + $0x259] sm:$0xff]
          %v2466 = vld [vmem:[%s1291 + $0x281] sm:$0xff]
          %v2467 = vld [vmem:[%s1291 + $0x289] sm:$0xff]
          %v2468 = vld [vmem:[#allocation9 + $0x4] sm:$0x1]
          %v2469 = vlaneseq
          %v2470 = vshrl.u32 %v2469, 7
          %v2471 = vsub.s32 0, %v2470
          %v2472 = vrot.slane %v2468, %v2471
          %v2473 = vmul.f32 %v2440, %v2472
          %v2474 = vmul.f32 %v2441, %v2472
          %v2475 = vmul.f32 %v2442, %v2472
          %v2476 = vmul.f32 %v2443, %v2472
          %v2477 = vmul.f32 %v2444, %v2472
          %v2478 = vmul.f32 %v2445, %v2472
          %v2479 = vmul.f32 %v2446, %v2472
          %v2480 = vmul.f32 %v2447, %v2472
          %v2481 = vmul.f32 %v2448, %v2472
          %v2482 = vmul.f32 %v2449, %v2472
          %v2483 = vmul.f32 %v2450, %v2472
          %v2484 = vmul.f32 %v2451, %v2472
          %v2485 = vmul.f32 %v2452, %v2472
          %v2486 = vmul.f32 %v2453, %v2472
          %v2487 = vmul.f32 %v2454, %v2472
          %v2488 = vmul.f32 %v2455, %v2472
          %v2489 = vadd.f32 %v2424, %v2473
          %v2490 = vadd.f32 %v2425, %v2474
          %v2491 = vadd.f32 %v2426, %v2475
          %v2492 = vadd.f32 %v2427, %v2476
          %v2493 = vadd.f32 %v2428, %v2477
          %v2494 = vadd.f32 %v2429, %v2478
          %v2495 = vadd.f32 %v2430, %v2479
          %v2496 = vadd.f32 %v2431, %v2480
          %v2497 = vadd.f32 %v2432, %v2481
          %v2498 = vadd.f32 %v2433, %v2482
          %v2499 = vadd.f32 %v2434, %v2483
          %v2500 = vadd.f32 %v2435, %v2484
          %v2501 = vadd.f32 %v2436, %v2485
          %v2502 = vadd.f32 %v2437, %v2486
          %v2503 = vadd.f32 %v2438, %v2487
          %v2504 = vadd.f32 %v2439, %v2488
          %v2505 = vld [vmem:[#allocation9 + $0xb] sm:$0x1]
          %v2506 = vlaneseq
          %v2507 = vshrl.u32 %v2506, 7
          %v2508 = vsub.s32 0, %v2507
          %v2509 = vrot.slane %v2505, %v2508
          %v2510 = vmul.f32 %v2442, %v2509
          %v2511 = vmul.f32 %v2443, %v2509
          %v2512 = vmul.f32 %v2444, %v2509
          %v2513 = vmul.f32 %v2445, %v2509
          %v2514 = vmul.f32 %v2446, %v2509
          %v2515 = vmul.f32 %v2447, %v2509
          %v2516 = vmul.f32 %v2448, %v2509
          %v2517 = vmul.f32 %v2449, %v2509
          %v2518 = vmul.f32 %v2450, %v2509
          %v2519 = vmul.f32 %v2451, %v2509
          %v2520 = vmul.f32 %v2452, %v2509
          %v2521 = vmul.f32 %v2453, %v2509
          %v2522 = vmul.f32 %v2454, %v2509
          %v2523 = vmul.f32 %v2455, %v2509
          %v2524 = vmul.f32 %v2456, %v2509
          %v2525 = vmul.f32 %v2457, %v2509
          %v2526 = vadd.f32 %v2489, %v2510
          %v2527 = vadd.f32 %v2490, %v2511
          %v2528 = vadd.f32 %v2491, %v2512
          %v2529 = vadd.f32 %v2492, %v2513
          %v2530 = vadd.f32 %v2493, %v2514
          %v2531 = vadd.f32 %v2494, %v2515
          %v2532 = vadd.f32 %v2495, %v2516
          %v2533 = vadd.f32 %v2496, %v2517
          %v2534 = vadd.f32 %v2497, %v2518
          %v2535 = vadd.f32 %v2498, %v2519
          %v2536 = vadd.f32 %v2499, %v2520
          %v2537 = vadd.f32 %v2500, %v2521
          %v2538 = vadd.f32 %v2501, %v2522
          %v2539 = vadd.f32 %v2502, %v2523
          %v2540 = vadd.f32 %v2503, %v2524
          %v2541 = vadd.f32 %v2504, %v2525
          %v2542 = vld [vmem:[#allocation9 + $0x12] sm:$0x1]
          %v2543 = vlaneseq
          %v2544 = vshrl.u32 %v2543, 7
          %v2545 = vsub.s32 0, %v2544
          %v2546 = vrot.slane %v2542, %v2545
          %v2547 = vmul.f32 %v2444, %v2546
          %v2548 = vmul.f32 %v2445, %v2546
          %v2549 = vmul.f32 %v2446, %v2546
          %v2550 = vmul.f32 %v2447, %v2546
          %v2551 = vmul.f32 %v2448, %v2546
          %v2552 = vmul.f32 %v2449, %v2546
          %v2553 = vmul.f32 %v2450, %v2546
          %v2554 = vmul.f32 %v2451, %v2546
          %v2555 = vmul.f32 %v2452, %v2546
          %v2556 = vmul.f32 %v2453, %v2546
          %v2557 = vmul.f32 %v2454, %v2546
          %v2558 = vmul.f32 %v2455, %v2546
          %v2559 = vmul.f32 %v2456, %v2546
          %v2560 = vmul.f32 %v2457, %v2546
          %v2561 = vmul.f32 %v2458, %v2546
          %v2562 = vmul.f32 %v2459, %v2546
          %v2563 = vadd.f32 %v2526, %v2547
          %v2564 = vadd.f32 %v2527, %v2548
          %v2565 = vadd.f32 %v2528, %v2549
          %v2566 = vadd.f32 %v2529, %v2550
          %v2567 = vadd.f32 %v2530, %v2551
          %v2568 = vadd.f32 %v2531, %v2552
          %v2569 = vadd.f32 %v2532, %v2553
          %v2570 = vadd.f32 %v2533, %v2554
          %v2571 = vadd.f32 %v2534, %v2555
          %v2572 = vadd.f32 %v2535, %v2556
          %v2573 = vadd.f32 %v2536, %v2557
          %v2574 = vadd.f32 %v2537, %v2558
          %v2575 = vadd.f32 %v2538, %v2559
          %v2576 = vadd.f32 %v2539, %v2560
          %v2577 = vadd.f32 %v2540, %v2561
          %v2578 = vadd.f32 %v2541, %v2562
          %v2579 = vld [vmem:[#allocation9 + $0x19] sm:$0x1]
          %v2580 = vlaneseq
          %v2581 = vshrl.u32 %v2580, 7
          %v2582 = vsub.s32 0, %v2581
          %v2583 = vrot.slane %v2579, %v2582
          %v2584 = vmul.f32 %v2446, %v2583
          %v2585 = vmul.f32 %v2447, %v2583
          %v2586 = vmul.f32 %v2448, %v2583
          %v2587 = vmul.f32 %v2449, %v2583
          %v2588 = vmul.f32 %v2450, %v2583
          %v2589 = vmul.f32 %v2451, %v2583
          %v2590 = vmul.f32 %v2452, %v2583
          %v2591 = vmul.f32 %v2453, %v2583
          %v2592 = vmul.f32 %v2454, %v2583
          %v2593 = vmul.f32 %v2455, %v2583
          %v2594 = vmul.f32 %v2456, %v2583
          %v2595 = vmul.f32 %v2457, %v2583
          %v2596 = vmul.f32 %v2458, %v2583
          %v2597 = vmul.f32 %v2459, %v2583
          %v2598 = vmul.f32 %v2460, %v2583
          %v2599 = vmul.f32 %v2461, %v2583
          %v2600 = vadd.f32 %v2563, %v2584
          %v2601 = vadd.f32 %v2564, %v2585
          %v2602 = vadd.f32 %v2565, %v2586
          %v2603 = vadd.f32 %v2566, %v2587
          %v2604 = vadd.f32 %v2567, %v2588
          %v2605 = vadd.f32 %v2568, %v2589
          %v2606 = vadd.f32 %v2569, %v2590
          %v2607 = vadd.f32 %v2570, %v2591
          %v2608 = vadd.f32 %v2571, %v2592
          %v2609 = vadd.f32 %v2572, %v2593
          %v2610 = vadd.f32 %v2573, %v2594
          %v2611 = vadd.f32 %v2574, %v2595
          %v2612 = vadd.f32 %v2575, %v2596
          %v2613 = vadd.f32 %v2576, %v2597
          %v2614 = vadd.f32 %v2577, %v2598
          %v2615 = vadd.f32 %v2578, %v2599
          %v2616 = vld [vmem:[#allocation9 + $0x20] sm:$0x1]
          %v2617 = vlaneseq
          %v2618 = vshrl.u32 %v2617, 7
          %v2619 = vsub.s32 0, %v2618
          %v2620 = vrot.slane %v2616, %v2619
          %v2621 = vmul.f32 %v2448, %v2620
          %v2622 = vmul.f32 %v2449, %v2620
          %v2623 = vmul.f32 %v2450, %v2620
          %v2624 = vmul.f32 %v2451, %v2620
          %v2625 = vmul.f32 %v2452, %v2620
          %v2626 = vmul.f32 %v2453, %v2620
          %v2627 = vmul.f32 %v2454, %v2620
          %v2628 = vmul.f32 %v2455, %v2620
          %v2629 = vmul.f32 %v2456, %v2620
          %v2630 = vmul.f32 %v2457, %v2620
          %v2631 = vmul.f32 %v2458, %v2620
          %v2632 = vmul.f32 %v2459, %v2620
          %v2633 = vmul.f32 %v2460, %v2620
          %v2634 = vmul.f32 %v2461, %v2620
          %v2635 = vmul.f32 %v2462, %v2620
          %v2636 = vmul.f32 %v2463, %v2620
          %v2637 = vadd.f32 %v2600, %v2621
          %v2638 = vadd.f32 %v2601, %v2622
          %v2639 = vadd.f32 %v2602, %v2623
          %v2640 = vadd.f32 %v2603, %v2624
          %v2641 = vadd.f32 %v2604, %v2625
          %v2642 = vadd.f32 %v2605, %v2626
          %v2643 = vadd.f32 %v2606, %v2627
          %v2644 = vadd.f32 %v2607, %v2628
          %v2645 = vadd.f32 %v2608, %v2629
          %v2646 = vadd.f32 %v2609, %v2630
          %v2647 = vadd.f32 %v2610, %v2631
          %v2648 = vadd.f32 %v2611, %v2632
          %v2649 = vadd.f32 %v2612, %v2633
          %v2650 = vadd.f32 %v2613, %v2634
          %v2651 = vadd.f32 %v2614, %v2635
          %v2652 = vadd.f32 %v2615, %v2636
          %v2653 = vld [vmem:[#allocation9 + $0x27] sm:$0x1]
          %v2654 = vlaneseq
          %v2655 = vshrl.u32 %v2654, 7
          %v2656 = vsub.s32 0, %v2655
          %v2657 = vrot.slane %v2653, %v2656
          %v2658 = vmul.f32 %v2450, %v2657
          %v2659 = vmul.f32 %v2451, %v2657
          %v2660 = vmul.f32 %v2452, %v2657
          %v2661 = vmul.f32 %v2453, %v2657
          %v2662 = vmul.f32 %v2454, %v2657
          %v2663 = vmul.f32 %v2455, %v2657
          %v2664 = vmul.f32 %v2456, %v2657
          %v2665 = vmul.f32 %v2457, %v2657
          %v2666 = vmul.f32 %v2458, %v2657
          %v2667 = vmul.f32 %v2459, %v2657
          %v2668 = vmul.f32 %v2460, %v2657
          %v2669 = vmul.f32 %v2461, %v2657
          %v2670 = vmul.f32 %v2462, %v2657
          %v2671 = vmul.f32 %v2463, %v2657
          %v2672 = vmul.f32 %v2464, %v2657
          %v2673 = vmul.f32 %v2465, %v2657
          %v2674 = vadd.f32 %v2637, %v2658
          %v2675 = vadd.f32 %v2638, %v2659
          %v2676 = vadd.f32 %v2639, %v2660
          %v2677 = vadd.f32 %v2640, %v2661
          %v2678 = vadd.f32 %v2641, %v2662
          %v2679 = vadd.f32 %v2642, %v2663
          %v2680 = vadd.f32 %v2643, %v2664
          %v2681 = vadd.f32 %v2644, %v2665
          %v2682 = vadd.f32 %v2645, %v2666
          %v2683 = vadd.f32 %v2646, %v2667
          %v2684 = vadd.f32 %v2647, %v2668
          %v2685 = vadd.f32 %v2648, %v2669
          %v2686 = vadd.f32 %v2649, %v2670
          %v2687 = vadd.f32 %v2650, %v2671
          %v2688 = vadd.f32 %v2651, %v2672
          %v2689 = vadd.f32 %v2652, %v2673
          %v2690 = vld [vmem:[#allocation9 + $0x2e] sm:$0x1]
          %v2691 = vlaneseq
          %v2692 = vshrl.u32 %v2691, 7
          %v2693 = vsub.s32 0, %v2692
          %v2694 = vrot.slane %v2690, %v2693
          %v2695 = vmul.f32 %v2452, %v2694
          %v2696 = vmul.f32 %v2453, %v2694
          %v2697 = vmul.f32 %v2454, %v2694
          %v2698 = vmul.f32 %v2455, %v2694
          %v2699 = vmul.f32 %v2456, %v2694
          %v2700 = vmul.f32 %v2457, %v2694
          %v2701 = vmul.f32 %v2458, %v2694
          %v2702 = vmul.f32 %v2459, %v2694
          %v2703 = vmul.f32 %v2460, %v2694
          %v2704 = vmul.f32 %v2461, %v2694
          %v2705 = vmul.f32 %v2462, %v2694
          %v2706 = vmul.f32 %v2463, %v2694
          %v2707 = vmul.f32 %v2464, %v2694
          %v2708 = vmul.f32 %v2465, %v2694
          %v2709 = vmul.f32 %v2466, %v2694
          %v2710 = vmul.f32 %v2467, %v2694
          %v2711 = vadd.f32 %v2674, %v2695
          %v2712 = vadd.f32 %v2675, %v2696
          %v2713 = vadd.f32 %v2676, %v2697
          %v2714 = vadd.f32 %v2677, %v2698
          %v2715 = vadd.f32 %v2678, %v2699
          %v2716 = vadd.f32 %v2679, %v2700
          %v2717 = vadd.f32 %v2680, %v2701
          %v2718 = vadd.f32 %v2681, %v2702
          %v2719 = vadd.f32 %v2682, %v2703
          %v2720 = vadd.f32 %v2683, %v2704
          %v2721 = vadd.f32 %v2684, %v2705
          %v2722 = vadd.f32 %v2685, %v2706
          %v2723 = vadd.f32 %v2686, %v2707
          %v2724 = vadd.f32 %v2687, %v2708
          %v2725 = vadd.f32 %v2688, %v2709
          %v2726 = vadd.f32 %v2689, %v2710
          %v2727 = vld [vmem:[%s1291 + $0x12] sm:$0xff]
          %v2728 = vld [vmem:[%s1291 + $0x1a] sm:$0xff]
          %v2729 = vld [vmem:[%s1291 + $0x42] sm:$0xff]
          %v2730 = vld [vmem:[%s1291 + $0x4a] sm:$0xff]
          %v2731 = vld [vmem:[%s1291 + $0x72] sm:$0xff]
          %v2732 = vld [vmem:[%s1291 + $0x7a] sm:$0xff]
          %v2733 = vld [vmem:[%s1291 + $0xa2] sm:$0xff]
          %v2734 = vld [vmem:[%s1291 + $0xaa] sm:$0xff]
          %v2735 = vld [vmem:[%s1291 + $0xd2] sm:$0xff]
          %v2736 = vld [vmem:[%s1291 + $0xda] sm:$0xff]
          %v2737 = vld [vmem:[%s1291 + $0x102] sm:$0xff]
          %v2738 = vld [vmem:[%s1291 + $0x10a] sm:$0xff]
          %v2739 = vld [vmem:[%s1291 + $0x132] sm:$0xff]
          %v2740 = vld [vmem:[%s1291 + $0x13a] sm:$0xff]
          %v2741 = vld [vmem:[%s1291 + $0x162] sm:$0xff]
          %v2742 = vld [vmem:[%s1291 + $0x16a] sm:$0xff]
          %v2743 = vld [vmem:[%s1291 + $0x192] sm:$0xff]
          %v2744 = vld [vmem:[%s1291 + $0x19a] sm:$0xff]
          %v2745 = vld [vmem:[%s1291 + $0x1c2] sm:$0xff]
          %v2746 = vld [vmem:[%s1291 + $0x1ca] sm:$0xff]
          %v2747 = vld [vmem:[%s1291 + $0x1f2] sm:$0xff]
          %v2748 = vld [vmem:[%s1291 + $0x1fa] sm:$0xff]
          %v2749 = vld [vmem:[%s1291 + $0x222] sm:$0xff]
          %v2750 = vld [vmem:[%s1291 + $0x22a] sm:$0xff]
          %v2751 = vld [vmem:[%s1291 + $0x252] sm:$0xff]
          %v2752 = vld [vmem:[%s1291 + $0x25a] sm:$0xff]
          %v2753 = vld [vmem:[%s1291 + $0x282] sm:$0xff]
          %v2754 = vld [vmem:[%s1291 + $0x28a] sm:$0xff]
          %v2755 = vld [vmem:[#allocation9 + $0x5] sm:$0x1]
          %v2756 = vlaneseq
          %v2757 = vshrl.u32 %v2756, 7
          %v2758 = vsub.s32 0, %v2757
          %v2759 = vrot.slane %v2755, %v2758
          %v2760 = vmul.f32 %v2727, %v2759
          %v2761 = vmul.f32 %v2728, %v2759
          %v2762 = vmul.f32 %v2729, %v2759
          %v2763 = vmul.f32 %v2730, %v2759
          %v2764 = vmul.f32 %v2731, %v2759
          %v2765 = vmul.f32 %v2732, %v2759
          %v2766 = vmul.f32 %v2733, %v2759
          %v2767 = vmul.f32 %v2734, %v2759
          %v2768 = vmul.f32 %v2735, %v2759
          %v2769 = vmul.f32 %v2736, %v2759
          %v2770 = vmul.f32 %v2737, %v2759
          %v2771 = vmul.f32 %v2738, %v2759
          %v2772 = vmul.f32 %v2739, %v2759
          %v2773 = vmul.f32 %v2740, %v2759
          %v2774 = vmul.f32 %v2741, %v2759
          %v2775 = vmul.f32 %v2742, %v2759
          %v2776 = vadd.f32 %v2711, %v2760
          %v2777 = vadd.f32 %v2712, %v2761
          %v2778 = vadd.f32 %v2713, %v2762
          %v2779 = vadd.f32 %v2714, %v2763
          %v2780 = vadd.f32 %v2715, %v2764
          %v2781 = vadd.f32 %v2716, %v2765
          %v2782 = vadd.f32 %v2717, %v2766
          %v2783 = vadd.f32 %v2718, %v2767
          %v2784 = vadd.f32 %v2719, %v2768
          %v2785 = vadd.f32 %v2720, %v2769
          %v2786 = vadd.f32 %v2721, %v2770
          %v2787 = vadd.f32 %v2722, %v2771
          %v2788 = vadd.f32 %v2723, %v2772
          %v2789 = vadd.f32 %v2724, %v2773
          %v2790 = vadd.f32 %v2725, %v2774
          %v2791 = vadd.f32 %v2726, %v2775
          %v2792 = vld [vmem:[#allocation9 + $0xc] sm:$0x1]
          %v2793 = vlaneseq
          %v2794 = vshrl.u32 %v2793, 7
          %v2795 = vsub.s32 0, %v2794
          %v2796 = vrot.slane %v2792, %v2795
          %v2797 = vmul.f32 %v2729, %v2796
          %v2798 = vmul.f32 %v2730, %v2796
          %v2799 = vmul.f32 %v2731, %v2796
          %v2800 = vmul.f32 %v2732, %v2796
          %v2801 = vmul.f32 %v2733, %v2796
          %v2802 = vmul.f32 %v2734, %v2796
          %v2803 = vmul.f32 %v2735, %v2796
          %v2804 = vmul.f32 %v2736, %v2796
          %v2805 = vmul.f32 %v2737, %v2796
          %v2806 = vmul.f32 %v2738, %v2796
          %v2807 = vmul.f32 %v2739, %v2796
          %v2808 = vmul.f32 %v2740, %v2796
          %v2809 = vmul.f32 %v2741, %v2796
          %v2810 = vmul.f32 %v2742, %v2796
          %v2811 = vmul.f32 %v2743, %v2796
          %v2812 = vmul.f32 %v2744, %v2796
          %v2813 = vadd.f32 %v2776, %v2797
          %v2814 = vadd.f32 %v2777, %v2798
          %v2815 = vadd.f32 %v2778, %v2799
          %v2816 = vadd.f32 %v2779, %v2800
          %v2817 = vadd.f32 %v2780, %v2801
          %v2818 = vadd.f32 %v2781, %v2802
          %v2819 = vadd.f32 %v2782, %v2803
          %v2820 = vadd.f32 %v2783, %v2804
          %v2821 = vadd.f32 %v2784, %v2805
          %v2822 = vadd.f32 %v2785, %v2806
          %v2823 = vadd.f32 %v2786, %v2807
          %v2824 = vadd.f32 %v2787, %v2808
          %v2825 = vadd.f32 %v2788, %v2809
          %v2826 = vadd.f32 %v2789, %v2810
          %v2827 = vadd.f32 %v2790, %v2811
          %v2828 = vadd.f32 %v2791, %v2812
          %v2829 = vld [vmem:[#allocation9 + $0x13] sm:$0x1]
          %v2830 = vlaneseq
          %v2831 = vshrl.u32 %v2830, 7
          %v2832 = vsub.s32 0, %v2831
          %v2833 = vrot.slane %v2829, %v2832
          %v2834 = vmul.f32 %v2731, %v2833
          %v2835 = vmul.f32 %v2732, %v2833
          %v2836 = vmul.f32 %v2733, %v2833
          %v2837 = vmul.f32 %v2734, %v2833
          %v2838 = vmul.f32 %v2735, %v2833
          %v2839 = vmul.f32 %v2736, %v2833
          %v2840 = vmul.f32 %v2737, %v2833
          %v2841 = vmul.f32 %v2738, %v2833
          %v2842 = vmul.f32 %v2739, %v2833
          %v2843 = vmul.f32 %v2740, %v2833
          %v2844 = vmul.f32 %v2741, %v2833
          %v2845 = vmul.f32 %v2742, %v2833
          %v2846 = vmul.f32 %v2743, %v2833
          %v2847 = vmul.f32 %v2744, %v2833
          %v2848 = vmul.f32 %v2745, %v2833
          %v2849 = vmul.f32 %v2746, %v2833
          %v2850 = vadd.f32 %v2813, %v2834
          %v2851 = vadd.f32 %v2814, %v2835
          %v2852 = vadd.f32 %v2815, %v2836
          %v2853 = vadd.f32 %v2816, %v2837
          %v2854 = vadd.f32 %v2817, %v2838
          %v2855 = vadd.f32 %v2818, %v2839
          %v2856 = vadd.f32 %v2819, %v2840
          %v2857 = vadd.f32 %v2820, %v2841
          %v2858 = vadd.f32 %v2821, %v2842
          %v2859 = vadd.f32 %v2822, %v2843
          %v2860 = vadd.f32 %v2823, %v2844
          %v2861 = vadd.f32 %v2824, %v2845
          %v2862 = vadd.f32 %v2825, %v2846
          %v2863 = vadd.f32 %v2826, %v2847
          %v2864 = vadd.f32 %v2827, %v2848
          %v2865 = vadd.f32 %v2828, %v2849
          %v2866 = vld [vmem:[#allocation9 + $0x1a] sm:$0x1]
          %v2867 = vlaneseq
          %v2868 = vshrl.u32 %v2867, 7
          %v2869 = vsub.s32 0, %v2868
          %v2870 = vrot.slane %v2866, %v2869
          %v2871 = vmul.f32 %v2733, %v2870
          %v2872 = vmul.f32 %v2734, %v2870
          %v2873 = vmul.f32 %v2735, %v2870
          %v2874 = vmul.f32 %v2736, %v2870
          %v2875 = vmul.f32 %v2737, %v2870
          %v2876 = vmul.f32 %v2738, %v2870
          %v2877 = vmul.f32 %v2739, %v2870
          %v2878 = vmul.f32 %v2740, %v2870
          %v2879 = vmul.f32 %v2741, %v2870
          %v2880 = vmul.f32 %v2742, %v2870
          %v2881 = vmul.f32 %v2743, %v2870
          %v2882 = vmul.f32 %v2744, %v2870
          %v2883 = vmul.f32 %v2745, %v2870
          %v2884 = vmul.f32 %v2746, %v2870
          %v2885 = vmul.f32 %v2747, %v2870
          %v2886 = vmul.f32 %v2748, %v2870
          %v2887 = vadd.f32 %v2850, %v2871
          %v2888 = vadd.f32 %v2851, %v2872
          %v2889 = vadd.f32 %v2852, %v2873
          %v2890 = vadd.f32 %v2853, %v2874
          %v2891 = vadd.f32 %v2854, %v2875
          %v2892 = vadd.f32 %v2855, %v2876
          %v2893 = vadd.f32 %v2856, %v2877
          %v2894 = vadd.f32 %v2857, %v2878
          %v2895 = vadd.f32 %v2858, %v2879
          %v2896 = vadd.f32 %v2859, %v2880
          %v2897 = vadd.f32 %v2860, %v2881
          %v2898 = vadd.f32 %v2861, %v2882
          %v2899 = vadd.f32 %v2862, %v2883
          %v2900 = vadd.f32 %v2863, %v2884
          %v2901 = vadd.f32 %v2864, %v2885
          %v2902 = vadd.f32 %v2865, %v2886
          %v2903 = vld [vmem:[#allocation9 + $0x21] sm:$0x1]
          %v2904 = vlaneseq
          %v2905 = vshrl.u32 %v2904, 7
          %v2906 = vsub.s32 0, %v2905
          %v2907 = vrot.slane %v2903, %v2906
          %v2908 = vmul.f32 %v2735, %v2907
          %v2909 = vmul.f32 %v2736, %v2907
          %v2910 = vmul.f32 %v2737, %v2907
          %v2911 = vmul.f32 %v2738, %v2907
          %v2912 = vmul.f32 %v2739, %v2907
          %v2913 = vmul.f32 %v2740, %v2907
          %v2914 = vmul.f32 %v2741, %v2907
          %v2915 = vmul.f32 %v2742, %v2907
          %v2916 = vmul.f32 %v2743, %v2907
          %v2917 = vmul.f32 %v2744, %v2907
          %v2918 = vmul.f32 %v2745, %v2907
          %v2919 = vmul.f32 %v2746, %v2907
          %v2920 = vmul.f32 %v2747, %v2907
          %v2921 = vmul.f32 %v2748, %v2907
          %v2922 = vmul.f32 %v2749, %v2907
          %v2923 = vmul.f32 %v2750, %v2907
          %v2924 = vadd.f32 %v2887, %v2908
          %v2925 = vadd.f32 %v2888, %v2909
          %v2926 = vadd.f32 %v2889, %v2910
          %v2927 = vadd.f32 %v2890, %v2911
          %v2928 = vadd.f32 %v2891, %v2912
          %v2929 = vadd.f32 %v2892, %v2913
          %v2930 = vadd.f32 %v2893, %v2914
          %v2931 = vadd.f32 %v2894, %v2915
          %v2932 = vadd.f32 %v2895, %v2916
          %v2933 = vadd.f32 %v2896, %v2917
          %v2934 = vadd.f32 %v2897, %v2918
          %v2935 = vadd.f32 %v2898, %v2919
          %v2936 = vadd.f32 %v2899, %v2920
          %v2937 = vadd.f32 %v2900, %v2921
          %v2938 = vadd.f32 %v2901, %v2922
          %v2939 = vadd.f32 %v2902, %v2923
          %v2940 = vld [vmem:[#allocation9 + $0x28] sm:$0x1]
          %v2941 = vlaneseq
          %v2942 = vshrl.u32 %v2941, 7
          %v2943 = vsub.s32 0, %v2942
          %v2944 = vrot.slane %v2940, %v2943
          %v2945 = vmul.f32 %v2737, %v2944
          %v2946 = vmul.f32 %v2738, %v2944
          %v2947 = vmul.f32 %v2739, %v2944
          %v2948 = vmul.f32 %v2740, %v2944
          %v2949 = vmul.f32 %v2741, %v2944
          %v2950 = vmul.f32 %v2742, %v2944
          %v2951 = vmul.f32 %v2743, %v2944
          %v2952 = vmul.f32 %v2744, %v2944
          %v2953 = vmul.f32 %v2745, %v2944
          %v2954 = vmul.f32 %v2746, %v2944
          %v2955 = vmul.f32 %v2747, %v2944
          %v2956 = vmul.f32 %v2748, %v2944
          %v2957 = vmul.f32 %v2749, %v2944
          %v2958 = vmul.f32 %v2750, %v2944
          %v2959 = vmul.f32 %v2751, %v2944
          %v2960 = vmul.f32 %v2752, %v2944
          %v2961 = vadd.f32 %v2924, %v2945
          %v2962 = vadd.f32 %v2925, %v2946
          %v2963 = vadd.f32 %v2926, %v2947
          %v2964 = vadd.f32 %v2927, %v2948
          %v2965 = vadd.f32 %v2928, %v2949
          %v2966 = vadd.f32 %v2929, %v2950
          %v2967 = vadd.f32 %v2930, %v2951
          %v2968 = vadd.f32 %v2931, %v2952
          %v2969 = vadd.f32 %v2932, %v2953
          %v2970 = vadd.f32 %v2933, %v2954
          %v2971 = vadd.f32 %v2934, %v2955
          %v2972 = vadd.f32 %v2935, %v2956
          %v2973 = vadd.f32 %v2936, %v2957
          %v2974 = vadd.f32 %v2937, %v2958
          %v2975 = vadd.f32 %v2938, %v2959
          %v2976 = vadd.f32 %v2939, %v2960
          %v2977 = vld [vmem:[#allocation9 + $0x2f] sm:$0x1]
          %v2978 = vlaneseq
          %v2979 = vshrl.u32 %v2978, 7
          %v2980 = vsub.s32 0, %v2979
          %v2981 = vrot.slane %v2977, %v2980
          %v2982 = vmul.f32 %v2739, %v2981
          %v2983 = vmul.f32 %v2740, %v2981
          %v2984 = vmul.f32 %v2741, %v2981
          %v2985 = vmul.f32 %v2742, %v2981
          %v2986 = vmul.f32 %v2743, %v2981
          %v2987 = vmul.f32 %v2744, %v2981
          %v2988 = vmul.f32 %v2745, %v2981
          %v2989 = vmul.f32 %v2746, %v2981
          %v2990 = vmul.f32 %v2747, %v2981
          %v2991 = vmul.f32 %v2748, %v2981
          %v2992 = vmul.f32 %v2749, %v2981
          %v2993 = vmul.f32 %v2750, %v2981
          %v2994 = vmul.f32 %v2751, %v2981
          %v2995 = vmul.f32 %v2752, %v2981
          %v2996 = vmul.f32 %v2753, %v2981
          %v2997 = vmul.f32 %v2754, %v2981
          %v2998 = vadd.f32 %v2961, %v2982
          %v2999 = vadd.f32 %v2962, %v2983
          %v3000 = vadd.f32 %v2963, %v2984
          %v3001 = vadd.f32 %v2964, %v2985
          %v3002 = vadd.f32 %v2965, %v2986
          %v3003 = vadd.f32 %v2966, %v2987
          %v3004 = vadd.f32 %v2967, %v2988
          %v3005 = vadd.f32 %v2968, %v2989
          %v3006 = vadd.f32 %v2969, %v2990
          %v3007 = vadd.f32 %v2970, %v2991
          %v3008 = vadd.f32 %v2971, %v2992
          %v3009 = vadd.f32 %v2972, %v2993
          %v3010 = vadd.f32 %v2973, %v2994
          %v3011 = vadd.f32 %v2974, %v2995
          %v3012 = vadd.f32 %v2975, %v2996
          %v3013 = vadd.f32 %v2976, %v2997
          %v3014 = vld [vmem:[%s1291 + $0x13] sm:$0xff]
          %v3015 = vld [vmem:[%s1291 + $0x1b] sm:$0xff]
          %v3016 = vld [vmem:[%s1291 + $0x43] sm:$0xff]
          %v3017 = vld [vmem:[%s1291 + $0x4b] sm:$0xff]
          %v3018 = vld [vmem:[%s1291 + $0x73] sm:$0xff]
          %v3019 = vld [vmem:[%s1291 + $0x7b] sm:$0xff]
          %v3020 = vld [vmem:[%s1291 + $0xa3] sm:$0xff]
          %v3021 = vld [vmem:[%s1291 + $0xab] sm:$0xff]
          %v3022 = vld [vmem:[%s1291 + $0xd3] sm:$0xff]
          %v3023 = vld [vmem:[%s1291 + $0xdb] sm:$0xff]
          %v3024 = vld [vmem:[%s1291 + $0x103] sm:$0xff]
          %v3025 = vld [vmem:[%s1291 + $0x10b] sm:$0xff]
          %v3026 = vld [vmem:[%s1291 + $0x133] sm:$0xff]
          %v3027 = vld [vmem:[%s1291 + $0x13b] sm:$0xff]
          %v3028 = vld [vmem:[%s1291 + $0x163] sm:$0xff]
          %v3029 = vld [vmem:[%s1291 + $0x16b] sm:$0xff]
          %v3030 = vld [vmem:[%s1291 + $0x193] sm:$0xff]
          %v3031 = vld [vmem:[%s1291 + $0x19b] sm:$0xff]
          %v3032 = vld [vmem:[%s1291 + $0x1c3] sm:$0xff]
          %v3033 = vld [vmem:[%s1291 + $0x1cb] sm:$0xff]
          %v3034 = vld [vmem:[%s1291 + $0x1f3] sm:$0xff]
          %v3035 = vld [vmem:[%s1291 + $0x1fb] sm:$0xff]
          %v3036 = vld [vmem:[%s1291 + $0x223] sm:$0xff]
          %v3037 = vld [vmem:[%s1291 + $0x22b] sm:$0xff]
          %v3038 = vld [vmem:[%s1291 + $0x253] sm:$0xff]
          %v3039 = vld [vmem:[%s1291 + $0x25b] sm:$0xff]
          %v3040 = vld [vmem:[%s1291 + $0x283] sm:$0xff]
          %v3041 = vld [vmem:[%s1291 + $0x28b] sm:$0xff]
          %v3042 = vld [vmem:[#allocation9 + $0x6] sm:$0x1]
          %v3043 = vlaneseq
          %v3044 = vshrl.u32 %v3043, 7
          %v3045 = vsub.s32 0, %v3044
          %v3046 = vrot.slane %v3042, %v3045
          %v3047 = vmul.f32 %v3014, %v3046
          %v3048 = vmul.f32 %v3015, %v3046
          %v3049 = vmul.f32 %v3016, %v3046
          %v3050 = vmul.f32 %v3017, %v3046
          %v3051 = vmul.f32 %v3018, %v3046
          %v3052 = vmul.f32 %v3019, %v3046
          %v3053 = vmul.f32 %v3020, %v3046
          %v3054 = vmul.f32 %v3021, %v3046
          %v3055 = vmul.f32 %v3022, %v3046
          %v3056 = vmul.f32 %v3023, %v3046
          %v3057 = vmul.f32 %v3024, %v3046
          %v3058 = vmul.f32 %v3025, %v3046
          %v3059 = vmul.f32 %v3026, %v3046
          %v3060 = vmul.f32 %v3027, %v3046
          %v3061 = vmul.f32 %v3028, %v3046
          %v3062 = vmul.f32 %v3029, %v3046
          %v3063 = vadd.f32 %v2998, %v3047
          %v3064 = vadd.f32 %v2999, %v3048
          %v3065 = vadd.f32 %v3000, %v3049
          %v3066 = vadd.f32 %v3001, %v3050
          %v3067 = vadd.f32 %v3002, %v3051
          %v3068 = vadd.f32 %v3003, %v3052
          %v3069 = vadd.f32 %v3004, %v3053
          %v3070 = vadd.f32 %v3005, %v3054
          %v3071 = vadd.f32 %v3006, %v3055
          %v3072 = vadd.f32 %v3007, %v3056
          %v3073 = vadd.f32 %v3008, %v3057
          %v3074 = vadd.f32 %v3009, %v3058
          %v3075 = vadd.f32 %v3010, %v3059
          %v3076 = vadd.f32 %v3011, %v3060
          %v3077 = vadd.f32 %v3012, %v3061
          %v3078 = vadd.f32 %v3013, %v3062
          %v3079 = vld [vmem:[#allocation9 + $0xd] sm:$0x1]
          %v3080 = vlaneseq
          %v3081 = vshrl.u32 %v3080, 7
          %v3082 = vsub.s32 0, %v3081
          %v3083 = vrot.slane %v3079, %v3082
          %v3084 = vmul.f32 %v3016, %v3083
          %v3085 = vmul.f32 %v3017, %v3083
          %v3086 = vmul.f32 %v3018, %v3083
          %v3087 = vmul.f32 %v3019, %v3083
          %v3088 = vmul.f32 %v3020, %v3083
          %v3089 = vmul.f32 %v3021, %v3083
          %v3090 = vmul.f32 %v3022, %v3083
          %v3091 = vmul.f32 %v3023, %v3083
          %v3092 = vmul.f32 %v3024, %v3083
          %v3093 = vmul.f32 %v3025, %v3083
          %v3094 = vmul.f32 %v3026, %v3083
          %v3095 = vmul.f32 %v3027, %v3083
          %v3096 = vmul.f32 %v3028, %v3083
          %v3097 = vmul.f32 %v3029, %v3083
          %v3098 = vmul.f32 %v3030, %v3083
          %v3099 = vmul.f32 %v3031, %v3083
          %v3100 = vadd.f32 %v3063, %v3084
          %v3101 = vadd.f32 %v3064, %v3085
          %v3102 = vadd.f32 %v3065, %v3086
          %v3103 = vadd.f32 %v3066, %v3087
          %v3104 = vadd.f32 %v3067, %v3088
          %v3105 = vadd.f32 %v3068, %v3089
          %v3106 = vadd.f32 %v3069, %v3090
          %v3107 = vadd.f32 %v3070, %v3091
          %v3108 = vadd.f32 %v3071, %v3092
          %v3109 = vadd.f32 %v3072, %v3093
          %v3110 = vadd.f32 %v3073, %v3094
          %v3111 = vadd.f32 %v3074, %v3095
          %v3112 = vadd.f32 %v3075, %v3096
          %v3113 = vadd.f32 %v3076, %v3097
          %v3114 = vadd.f32 %v3077, %v3098
          %v3115 = vadd.f32 %v3078, %v3099
          %v3116 = vld [vmem:[#allocation9 + $0x14] sm:$0x1]
          %v3117 = vlaneseq
          %v3118 = vshrl.u32 %v3117, 7
          %v3119 = vsub.s32 0, %v3118
          %v3120 = vrot.slane %v3116, %v3119
          %v3121 = vmul.f32 %v3018, %v3120
          %v3122 = vmul.f32 %v3019, %v3120
          %v3123 = vmul.f32 %v3020, %v3120
          %v3124 = vmul.f32 %v3021, %v3120
          %v3125 = vmul.f32 %v3022, %v3120
          %v3126 = vmul.f32 %v3023, %v3120
          %v3127 = vmul.f32 %v3024, %v3120
          %v3128 = vmul.f32 %v3025, %v3120
          %v3129 = vmul.f32 %v3026, %v3120
          %v3130 = vmul.f32 %v3027, %v3120
          %v3131 = vmul.f32 %v3028, %v3120
          %v3132 = vmul.f32 %v3029, %v3120
          %v3133 = vmul.f32 %v3030, %v3120
          %v3134 = vmul.f32 %v3031, %v3120
          %v3135 = vmul.f32 %v3032, %v3120
          %v3136 = vmul.f32 %v3033, %v3120
          %v3137 = vadd.f32 %v3100, %v3121
          %v3138 = vadd.f32 %v3101, %v3122
          %v3139 = vadd.f32 %v3102, %v3123
          %v3140 = vadd.f32 %v3103, %v3124
          %v3141 = vadd.f32 %v3104, %v3125
          %v3142 = vadd.f32 %v3105, %v3126
          %v3143 = vadd.f32 %v3106, %v3127
          %v3144 = vadd.f32 %v3107, %v3128
          %v3145 = vadd.f32 %v3108, %v3129
          %v3146 = vadd.f32 %v3109, %v3130
          %v3147 = vadd.f32 %v3110, %v3131
          %v3148 = vadd.f32 %v3111, %v3132
          %v3149 = vadd.f32 %v3112, %v3133
          %v3150 = vadd.f32 %v3113, %v3134
          %v3151 = vadd.f32 %v3114, %v3135
          %v3152 = vadd.f32 %v3115, %v3136
          %v3153 = vld [vmem:[#allocation9 + $0x1b] sm:$0x1]
          %v3154 = vlaneseq
          %v3155 = vshrl.u32 %v3154, 7
          %v3156 = vsub.s32 0, %v3155
          %v3157 = vrot.slane %v3153, %v3156
          %v3158 = vmul.f32 %v3020, %v3157
          %v3159 = vmul.f32 %v3021, %v3157
          %v3160 = vmul.f32 %v3022, %v3157
          %v3161 = vmul.f32 %v3023, %v3157
          %v3162 = vmul.f32 %v3024, %v3157
          %v3163 = vmul.f32 %v3025, %v3157
          %v3164 = vmul.f32 %v3026, %v3157
          %v3165 = vmul.f32 %v3027, %v3157
          %v3166 = vmul.f32 %v3028, %v3157
          %v3167 = vmul.f32 %v3029, %v3157
          %v3168 = vmul.f32 %v3030, %v3157
          %v3169 = vmul.f32 %v3031, %v3157
          %v3170 = vmul.f32 %v3032, %v3157
          %v3171 = vmul.f32 %v3033, %v3157
          %v3172 = vmul.f32 %v3034, %v3157
          %v3173 = vmul.f32 %v3035, %v3157
          %v3174 = vadd.f32 %v3137, %v3158
          %v3175 = vadd.f32 %v3138, %v3159
          %v3176 = vadd.f32 %v3139, %v3160
          %v3177 = vadd.f32 %v3140, %v3161
          %v3178 = vadd.f32 %v3141, %v3162
          %v3179 = vadd.f32 %v3142, %v3163
          %v3180 = vadd.f32 %v3143, %v3164
          %v3181 = vadd.f32 %v3144, %v3165
          %v3182 = vadd.f32 %v3145, %v3166
          %v3183 = vadd.f32 %v3146, %v3167
          %v3184 = vadd.f32 %v3147, %v3168
          %v3185 = vadd.f32 %v3148, %v3169
          %v3186 = vadd.f32 %v3149, %v3170
          %v3187 = vadd.f32 %v3150, %v3171
          %v3188 = vadd.f32 %v3151, %v3172
          %v3189 = vadd.f32 %v3152, %v3173
          %v3190 = vld [vmem:[#allocation9 + $0x22] sm:$0x1]
          %v3191 = vlaneseq
          %v3192 = vshrl.u32 %v3191, 7
          %v3193 = vsub.s32 0, %v3192
          %v3194 = vrot.slane %v3190, %v3193
          %v3195 = vmul.f32 %v3022, %v3194
          %v3196 = vmul.f32 %v3023, %v3194
          %v3197 = vmul.f32 %v3024, %v3194
          %v3198 = vmul.f32 %v3025, %v3194
          %v3199 = vmul.f32 %v3026, %v3194
          %v3200 = vmul.f32 %v3027, %v3194
          %v3201 = vmul.f32 %v3028, %v3194
          %v3202 = vmul.f32 %v3029, %v3194
          %v3203 = vmul.f32 %v3030, %v3194
          %v3204 = vmul.f32 %v3031, %v3194
          %v3205 = vmul.f32 %v3032, %v3194
          %v3206 = vmul.f32 %v3033, %v3194
          %v3207 = vmul.f32 %v3034, %v3194
          %v3208 = vmul.f32 %v3035, %v3194
          %v3209 = vmul.f32 %v3036, %v3194
          %v3210 = vmul.f32 %v3037, %v3194
          %v3211 = vadd.f32 %v3174, %v3195
          %v3212 = vadd.f32 %v3175, %v3196
          %v3213 = vadd.f32 %v3176, %v3197
          %v3214 = vadd.f32 %v3177, %v3198
          %v3215 = vadd.f32 %v3178, %v3199
          %v3216 = vadd.f32 %v3179, %v3200
          %v3217 = vadd.f32 %v3180, %v3201
          %v3218 = vadd.f32 %v3181, %v3202
          %v3219 = vadd.f32 %v3182, %v3203
          %v3220 = vadd.f32 %v3183, %v3204
          %v3221 = vadd.f32 %v3184, %v3205
          %v3222 = vadd.f32 %v3185, %v3206
          %v3223 = vadd.f32 %v3186, %v3207
          %v3224 = vadd.f32 %v3187, %v3208
          %v3225 = vadd.f32 %v3188, %v3209
          %v3226 = vadd.f32 %v3189, %v3210
          %v3227 = vld [vmem:[#allocation9 + $0x29] sm:$0x1]
          %v3228 = vlaneseq
          %v3229 = vshrl.u32 %v3228, 7
          %v3230 = vsub.s32 0, %v3229
          %v3231 = vrot.slane %v3227, %v3230
          %v3232 = vmul.f32 %v3024, %v3231
          %v3233 = vmul.f32 %v3025, %v3231
          %v3234 = vmul.f32 %v3026, %v3231
          %v3235 = vmul.f32 %v3027, %v3231
          %v3236 = vmul.f32 %v3028, %v3231
          %v3237 = vmul.f32 %v3029, %v3231
          %v3238 = vmul.f32 %v3030, %v3231
          %v3239 = vmul.f32 %v3031, %v3231
          %v3240 = vmul.f32 %v3032, %v3231
          %v3241 = vmul.f32 %v3033, %v3231
          %v3242 = vmul.f32 %v3034, %v3231
          %v3243 = vmul.f32 %v3035, %v3231
          %v3244 = vmul.f32 %v3036, %v3231
          %v3245 = vmul.f32 %v3037, %v3231
          %v3246 = vmul.f32 %v3038, %v3231
          %v3247 = vmul.f32 %v3039, %v3231
          %v3248 = vadd.f32 %v3211, %v3232
          %v3249 = vadd.f32 %v3212, %v3233
          %v3250 = vadd.f32 %v3213, %v3234
          %v3251 = vadd.f32 %v3214, %v3235
          %v3252 = vadd.f32 %v3215, %v3236
          %v3253 = vadd.f32 %v3216, %v3237
          %v3254 = vadd.f32 %v3217, %v3238
          %v3255 = vadd.f32 %v3218, %v3239
          %v3256 = vadd.f32 %v3219, %v3240
          %v3257 = vadd.f32 %v3220, %v3241
          %v3258 = vadd.f32 %v3221, %v3242
          %v3259 = vadd.f32 %v3222, %v3243
          %v3260 = vadd.f32 %v3223, %v3244
          %v3261 = vadd.f32 %v3224, %v3245
          %v3262 = vadd.f32 %v3225, %v3246
          %v3263 = vadd.f32 %v3226, %v3247
          %v3264 = vld [vmem:[#allocation9 + $0x30] sm:$0x1]
          %v3265 = vlaneseq
          %v3266 = vshrl.u32 %v3265, 7
          %v3267 = vsub.s32 0, %v3266
          %v3268 = vrot.slane %v3264, %v3267
          %v3269 = vmul.f32 %v3026, %v3268
          %v3270 = vmul.f32 %v3027, %v3268
          %v3271 = vmul.f32 %v3028, %v3268
          %v3272 = vmul.f32 %v3029, %v3268
          %v3273 = vmul.f32 %v3030, %v3268
          %v3274 = vmul.f32 %v3031, %v3268
          %v3275 = vmul.f32 %v3032, %v3268
          %v3276 = vmul.f32 %v3033, %v3268
          %v3277 = vmul.f32 %v3034, %v3268
          %v3278 = vmul.f32 %v3035, %v3268
          %v3279 = vmul.f32 %v3036, %v3268
          %v3280 = vmul.f32 %v3037, %v3268
          %v3281 = vmul.f32 %v3038, %v3268
          %v3282 = vmul.f32 %v3039, %v3268
          %v3283 = vmul.f32 %v3040, %v3268
          %v3284 = vmul.f32 %v3041, %v3268
          %v3285 = vadd.f32 %v3248, %v3269
          %v3286 = vadd.f32 %v3249, %v3270
          %v3287 = vadd.f32 %v3250, %v3271
          %v3288 = vadd.f32 %v3251, %v3272
          %v3289 = vadd.f32 %v3252, %v3273
          %v3290 = vadd.f32 %v3253, %v3274
          %v3291 = vadd.f32 %v3254, %v3275
          %v3292 = vadd.f32 %v3255, %v3276
          %v3293 = vadd.f32 %v3256, %v3277
          %v3294 = vadd.f32 %v3257, %v3278
          %v3295 = vadd.f32 %v3258, %v3279
          %v3296 = vadd.f32 %v3259, %v3280
          %v3297 = vadd.f32 %v3260, %v3281
          %v3298 = vadd.f32 %v3261, %v3282
          %v3299 = vadd.f32 %v3262, %v3283
          %v3300 = vadd.f32 %v3263, %v3284
          %s3301 = smul.u32 %s1288, 48
          %s3302 = scalar_lea.vmem [#allocation3], %s3301
          %v3303 = vld [vmem:[%s3302 + $0x7] sm:$0xff]
          %v3304 = vld [vmem:[%s3302 + $0xf] sm:$0xff]
          %v3305 = vld [vmem:[%s3302 + $0x37] sm:$0xff]
          %v3306 = vld [vmem:[%s3302 + $0x3f] sm:$0xff]
          %v3307 = vld [vmem:[%s3302 + $0x67] sm:$0xff]
          %v3308 = vld [vmem:[%s3302 + $0x6f] sm:$0xff]
          %v3309 = vld [vmem:[%s3302 + $0x97] sm:$0xff]
          %v3310 = vld [vmem:[%s3302 + $0x9f] sm:$0xff]
          %v3311 = vld [vmem:[%s3302 + $0xc7] sm:$0xff]
          %v3312 = vld [vmem:[%s3302 + $0xcf] sm:$0xff]
          %v3313 = vld [vmem:[%s3302 + $0xf7] sm:$0xff]
          %v3314 = vld [vmem:[%s3302 + $0xff] sm:$0xff]
          %v3315 = vld [vmem:[%s3302 + $0x127] sm:$0xff]
          %v3316 = vld [vmem:[%s3302 + $0x12f] sm:$0xff]
          %v3317 = vld [vmem:[%s3302 + $0x157] sm:$0xff]
          %v3318 = vld [vmem:[%s3302 + $0x15f] sm:$0xff]
          %v3319 = vld [vmem:[%s3302 + $0x187] sm:$0xff]
          %v3320 = vld [vmem:[%s3302 + $0x18f] sm:$0xff]
          %v3321 = vld [vmem:[%s3302 + $0x1b7] sm:$0xff]
          %v3322 = vld [vmem:[%s3302 + $0x1bf] sm:$0xff]
          %v3323 = vld [vmem:[%s3302 + $0x1e7] sm:$0xff]
          %v3324 = vld [vmem:[%s3302 + $0x1ef] sm:$0xff]
          %v3325 = vld [vmem:[%s3302 + $0x217] sm:$0xff]
          %v3326 = vld [vmem:[%s3302 + $0x21f] sm:$0xff]
          %v3327 = vld [vmem:[%s3302 + $0x247] sm:$0xff]
          %v3328 = vld [vmem:[%s3302 + $0x24f] sm:$0xff]
          %v3329 = vld [vmem:[%s3302 + $0x277] sm:$0xff]
          %v3330 = vld [vmem:[%s3302 + $0x27f] sm:$0xff]
          %v3331 = vld [vmem:[#allocation10] sm:$0x1]
          %v3332 = vlaneseq
          %v3333 = vshrl.u32 %v3332, 7
          %v3334 = vsub.s32 0, %v3333
          %v3335 = vrot.slane %v3331, %v3334
          %v3336 = vmul.f32 %v3303, %v3335
          %v3337 = vmul.f32 %v3304, %v3335
          %v3338 = vmul.f32 %v3305, %v3335
          %v3339 = vmul.f32 %v3306, %v3335
          %v3340 = vmul.f32 %v3307, %v3335
          %v3341 = vmul.f32 %v3308, %v3335
          %v3342 = vmul.f32 %v3309, %v3335
          %v3343 = vmul.f32 %v3310, %v3335
          %v3344 = vmul.f32 %v3311, %v3335
          %v3345 = vmul.f32 %v3312, %v3335
          %v3346 = vmul.f32 %v3313, %v3335
          %v3347 = vmul.f32 %v3314, %v3335
          %v3348 = vmul.f32 %v3315, %v3335
          %v3349 = vmul.f32 %v3316, %v3335
          %v3350 = vmul.f32 %v3317, %v3335
          %v3351 = vmul.f32 %v3318, %v3335
          %v3352 = vadd.f32 %v3285, %v3336
          %v3353 = vadd.f32 %v3286, %v3337
          %v3354 = vadd.f32 %v3287, %v3338
          %v3355 = vadd.f32 %v3288, %v3339
          %v3356 = vadd.f32 %v3289, %v3340
          %v3357 = vadd.f32 %v3290, %v3341
          %v3358 = vadd.f32 %v3291, %v3342
          %v3359 = vadd.f32 %v3292, %v3343
          %v3360 = vadd.f32 %v3293, %v3344
          %v3361 = vadd.f32 %v3294, %v3345
          %v3362 = vadd.f32 %v3295, %v3346
          %v3363 = vadd.f32 %v3296, %v3347
          %v3364 = vadd.f32 %v3297, %v3348
          %v3365 = vadd.f32 %v3298, %v3349
          %v3366 = vadd.f32 %v3299, %v3350
          %v3367 = vadd.f32 %v3300, %v3351
          %v3368 = vld [vmem:[#allocation10 + $0x7] sm:$0x1]
          %v3369 = vlaneseq
          %v3370 = vshrl.u32 %v3369, 7
          %v3371 = vsub.s32 0, %v3370
          %v3372 = vrot.slane %v3368, %v3371
          %v3373 = vmul.f32 %v3309, %v3372
          %v3374 = vmul.f32 %v3310, %v3372
          %v3375 = vmul.f32 %v3311, %v3372
          %v3376 = vmul.f32 %v3312, %v3372
          %v3377 = vmul.f32 %v3313, %v3372
          %v3378 = vmul.f32 %v3314, %v3372
          %v3379 = vmul.f32 %v3315, %v3372
          %v3380 = vmul.f32 %v3316, %v3372
          %v3381 = vmul.f32 %v3317, %v3372
          %v3382 = vmul.f32 %v3318, %v3372
          %v3383 = vmul.f32 %v3319, %v3372
          %v3384 = vmul.f32 %v3320, %v3372
          %v3385 = vmul.f32 %v3321, %v3372
          %v3386 = vmul.f32 %v3322, %v3372
          %v3387 = vmul.f32 %v3323, %v3372
          %v3388 = vmul.f32 %v3324, %v3372
          %v3389 = vadd.f32 %v3352, %v3373
          %v3390 = vadd.f32 %v3353, %v3374
          %v3391 = vadd.f32 %v3354, %v3375
          %v3392 = vadd.f32 %v3355, %v3376
          %v3393 = vadd.f32 %v3356, %v3377
          %v3394 = vadd.f32 %v3357, %v3378
          %v3395 = vadd.f32 %v3358, %v3379
          %v3396 = vadd.f32 %v3359, %v3380
          %v3397 = vadd.f32 %v3360, %v3381
          %v3398 = vadd.f32 %v3361, %v3382
          %v3399 = vadd.f32 %v3362, %v3383
          %v3400 = vadd.f32 %v3363, %v3384
          %v3401 = vadd.f32 %v3364, %v3385
          %v3402 = vadd.f32 %v3365, %v3386
          %v3403 = vadd.f32 %v3366, %v3387
          %v3404 = vadd.f32 %v3367, %v3388
          %v3405 = vld [vmem:[#allocation10 + $0xe] sm:$0x1]
          %v3406 = vlaneseq
          %v3407 = vshrl.u32 %v3406, 7
          %v3408 = vsub.s32 0, %v3407
          %v3409 = vrot.slane %v3405, %v3408
          %v3410 = vmul.f32 %v3315, %v3409
          %v3411 = vmul.f32 %v3316, %v3409
          %v3412 = vmul.f32 %v3317, %v3409
          %v3413 = vmul.f32 %v3318, %v3409
          %v3414 = vmul.f32 %v3319, %v3409
          %v3415 = vmul.f32 %v3320, %v3409
          %v3416 = vmul.f32 %v3321, %v3409
          %v3417 = vmul.f32 %v3322, %v3409
          %v3418 = vmul.f32 %v3323, %v3409
          %v3419 = vmul.f32 %v3324, %v3409
          %v3420 = vmul.f32 %v3325, %v3409
          %v3421 = vmul.f32 %v3326, %v3409
          %v3422 = vmul.f32 %v3327, %v3409
          %v3423 = vmul.f32 %v3328, %v3409
          %v3424 = vmul.f32 %v3329, %v3409
          %v3425 = vmul.f32 %v3330, %v3409
          %v3426 = vadd.f32 %v3389, %v3410
          %v3427 = vadd.f32 %v3390, %v3411
          %v3428 = vadd.f32 %v3391, %v3412
          %v3429 = vadd.f32 %v3392, %v3413
          %v3430 = vadd.f32 %v3393, %v3414
          %v3431 = vadd.f32 %v3394, %v3415
          %v3432 = vadd.f32 %v3395, %v3416
          %v3433 = vadd.f32 %v3396, %v3417
          %v3434 = vadd.f32 %v3397, %v3418
          %v3435 = vadd.f32 %v3398, %v3419
          %v3436 = vadd.f32 %v3399, %v3420
          %v3437 = vadd.f32 %v3400, %v3421
          %v3438 = vadd.f32 %v3401, %v3422
          %v3439 = vadd.f32 %v3402, %v3423
          %v3440 = vadd.f32 %v3403, %v3424
          %v3441 = vadd.f32 %v3404, %v3425
          %s3442 = sadd.s32 %s1288, 9
          %s3443 = smul.u32 %s3442, 48
          %s3444 = scalar_lea.vmem [#allocation3], %s3443
          %v3445 = vld [vmem:[%s3444 + $0x7] sm:$0xff]
          %v3446 = vld [vmem:[%s3444 + $0xf] sm:$0xff]
          %v3447 = vld [vmem:[%s3444 + $0x37] sm:$0xff]
          %v3448 = vld [vmem:[%s3444 + $0x3f] sm:$0xff]
          %v3449 = vld [vmem:[%s3444 + $0x67] sm:$0xff]
          %v3450 = vld [vmem:[%s3444 + $0x6f] sm:$0xff]
          %v3451 = vld [vmem:[%s3444 + $0x97] sm:$0xff]
          %v3452 = vld [vmem:[%s3444 + $0x9f] sm:$0xff]
          %v3453 = vld [vmem:[%s3444 + $0xc7] sm:$0xff]
          %v3454 = vld [vmem:[%s3444 + $0xcf] sm:$0xff]
          %v3455 = vld [vmem:[%s3444 + $0xf7] sm:$0xff]
          %v3456 = vld [vmem:[%s3444 + $0xff] sm:$0xff]
          %v3457 = vld [vmem:[%s3444 + $0x127] sm:$0xff]
          %v3458 = vld [vmem:[%s3444 + $0x12f] sm:$0xff]
          %v3459 = vld [vmem:[%s3444 + $0x157] sm:$0xff]
          %v3460 = vld [vmem:[%s3444 + $0x15f] sm:$0xff]
          %v3461 = vld [vmem:[%s3444 + $0x187] sm:$0xff]
          %v3462 = vld [vmem:[%s3444 + $0x18f] sm:$0xff]
          %v3463 = vld [vmem:[%s3444 + $0x1b7] sm:$0xff]
          %v3464 = vld [vmem:[%s3444 + $0x1bf] sm:$0xff]
          %v3465 = vld [vmem:[%s3444 + $0x1e7] sm:$0xff]
          %v3466 = vld [vmem:[%s3444 + $0x1ef] sm:$0xff]
          %v3467 = vld [vmem:[%s3444 + $0x217] sm:$0xff]
          %v3468 = vld [vmem:[%s3444 + $0x21f] sm:$0xff]
          %v3469 = vld [vmem:[%s3444 + $0x247] sm:$0xff]
          %v3470 = vld [vmem:[%s3444 + $0x24f] sm:$0xff]
          %v3471 = vld [vmem:[%s3444 + $0x277] sm:$0xff]
          %v3472 = vld [vmem:[%s3444 + $0x27f] sm:$0xff]
          %v3473 = vld [vmem:[#allocation10 + $0x15] sm:$0x1]
          %v3474 = vlaneseq
          %v3475 = vshrl.u32 %v3474, 7
          %v3476 = vsub.s32 0, %v3475
          %v3477 = vrot.slane %v3473, %v3476
          %v3478 = vmul.f32 %v3445, %v3477
          %v3479 = vmul.f32 %v3446, %v3477
          %v3480 = vmul.f32 %v3447, %v3477
          %v3481 = vmul.f32 %v3448, %v3477
          %v3482 = vmul.f32 %v3449, %v3477
          %v3483 = vmul.f32 %v3450, %v3477
          %v3484 = vmul.f32 %v3451, %v3477
          %v3485 = vmul.f32 %v3452, %v3477
          %v3486 = vmul.f32 %v3453, %v3477
          %v3487 = vmul.f32 %v3454, %v3477
          %v3488 = vmul.f32 %v3455, %v3477
          %v3489 = vmul.f32 %v3456, %v3477
          %v3490 = vmul.f32 %v3457, %v3477
          %v3491 = vmul.f32 %v3458, %v3477
          %v3492 = vmul.f32 %v3459, %v3477
          %v3493 = vmul.f32 %v3460, %v3477
          %v3494 = vadd.f32 %v3426, %v3478
          %v3495 = vadd.f32 %v3427, %v3479
          %v3496 = vadd.f32 %v3428, %v3480
          %v3497 = vadd.f32 %v3429, %v3481
          %v3498 = vadd.f32 %v3430, %v3482
          %v3499 = vadd.f32 %v3431, %v3483
          %v3500 = vadd.f32 %v3432, %v3484
          %v3501 = vadd.f32 %v3433, %v3485
          %v3502 = vadd.f32 %v3434, %v3486
          %v3503 = vadd.f32 %v3435, %v3487
          %v3504 = vadd.f32 %v3436, %v3488
          %v3505 = vadd.f32 %v3437, %v3489
          %v3506 = vadd.f32 %v3438, %v3490
          %v3507 = vadd.f32 %v3439, %v3491
          %v3508 = vadd.f32 %v3440, %v3492
          %v3509 = vadd.f32 %v3441, %v3493
          %v3510 = vld [vmem:[#allocation10 + $0x1c] sm:$0x1]
          %v3511 = vlaneseq
          %v3512 = vshrl.u32 %v3511, 7
          %v3513 = vsub.s32 0, %v3512
          %v3514 = vrot.slane %v3510, %v3513
          %v3515 = vmul.f32 %v3451, %v3514
          %v3516 = vmul.f32 %v3452, %v3514
          %v3517 = vmul.f32 %v3453, %v3514
          %v3518 = vmul.f32 %v3454, %v3514
          %v3519 = vmul.f32 %v3455, %v3514
          %v3520 = vmul.f32 %v3456, %v3514
          %v3521 = vmul.f32 %v3457, %v3514
          %v3522 = vmul.f32 %v3458, %v3514
          %v3523 = vmul.f32 %v3459, %v3514
          %v3524 = vmul.f32 %v3460, %v3514
          %v3525 = vmul.f32 %v3461, %v3514
          %v3526 = vmul.f32 %v3462, %v3514
          %v3527 = vmul.f32 %v3463, %v3514
          %v3528 = vmul.f32 %v3464, %v3514
          %v3529 = vmul.f32 %v3465, %v3514
          %v3530 = vmul.f32 %v3466, %v3514
          %v3531 = vadd.f32 %v3494, %v3515
          %v3532 = vadd.f32 %v3495, %v3516
          %v3533 = vadd.f32 %v3496, %v3517
          %v3534 = vadd.f32 %v3497, %v3518
          %v3535 = vadd.f32 %v3498, %v3519
          %v3536 = vadd.f32 %v3499, %v3520
          %v3537 = vadd.f32 %v3500, %v3521
          %v3538 = vadd.f32 %v3501, %v3522
          %v3539 = vadd.f32 %v3502, %v3523
          %v3540 = vadd.f32 %v3503, %v3524
          %v3541 = vadd.f32 %v3504, %v3525
          %v3542 = vadd.f32 %v3505, %v3526
          %v3543 = vadd.f32 %v3506, %v3527
          %v3544 = vadd.f32 %v3507, %v3528
          %v3545 = vadd.f32 %v3508, %v3529
          %v3546 = vadd.f32 %v3509, %v3530
          %v3547 = vld [vmem:[#allocation10 + $0x23] sm:$0x1]
          %v3548 = vlaneseq
          %v3549 = vshrl.u32 %v3548, 7
          %v3550 = vsub.s32 0, %v3549
          %v3551 = vrot.slane %v3547, %v3550
          %v3552 = vmul.f32 %v3457, %v3551
          %v3553 = vmul.f32 %v3458, %v3551
          %v3554 = vmul.f32 %v3459, %v3551
          %v3555 = vmul.f32 %v3460, %v3551
          %v3556 = vmul.f32 %v3461, %v3551
          %v3557 = vmul.f32 %v3462, %v3551
          %v3558 = vmul.f32 %v3463, %v3551
          %v3559 = vmul.f32 %v3464, %v3551
          %v3560 = vmul.f32 %v3465, %v3551
          %v3561 = vmul.f32 %v3466, %v3551
          %v3562 = vmul.f32 %v3467, %v3551
          %v3563 = vmul.f32 %v3468, %v3551
          %v3564 = vmul.f32 %v3469, %v3551
          %v3565 = vmul.f32 %v3470, %v3551
          %v3566 = vmul.f32 %v3471, %v3551
          %v3567 = vmul.f32 %v3472, %v3551
          %v3568 = vadd.f32 %v3531, %v3552
          %v3569 = vadd.f32 %v3532, %v3553
          %v3570 = vadd.f32 %v3533, %v3554
          %v3571 = vadd.f32 %v3534, %v3555
          %v3572 = vadd.f32 %v3535, %v3556
          %v3573 = vadd.f32 %v3536, %v3557
          %v3574 = vadd.f32 %v3537, %v3558
          %v3575 = vadd.f32 %v3538, %v3559
          %v3576 = vadd.f32 %v3539, %v3560
          %v3577 = vadd.f32 %v3540, %v3561
          %v3578 = vadd.f32 %v3541, %v3562
          %v3579 = vadd.f32 %v3542, %v3563
          %v3580 = vadd.f32 %v3543, %v3564
          %v3581 = vadd.f32 %v3544, %v3565
          %v3582 = vadd.f32 %v3545, %v3566
          %v3583 = vadd.f32 %v3546, %v3567
          %s3584 = sadd.s32 %s1288, 18
          %s3585 = smul.u32 %s3584, 48
          %s3586 = scalar_lea.vmem [#allocation3], %s3585
          %v3587 = vld [vmem:[%s3586 + $0x7] sm:$0xff]
          %v3588 = vld [vmem:[%s3586 + $0xf] sm:$0xff]
          %v3589 = vld [vmem:[%s3586 + $0x37] sm:$0xff]
          %v3590 = vld [vmem:[%s3586 + $0x3f] sm:$0xff]
          %v3591 = vld [vmem:[%s3586 + $0x67] sm:$0xff]
          %v3592 = vld [vmem:[%s3586 + $0x6f] sm:$0xff]
          %v3593 = vld [vmem:[%s3586 + $0x97] sm:$0xff]
          %v3594 = vld [vmem:[%s3586 + $0x9f] sm:$0xff]
          %v3595 = vld [vmem:[%s3586 + $0xc7] sm:$0xff]
          %v3596 = vld [vmem:[%s3586 + $0xcf] sm:$0xff]
          %v3597 = vld [vmem:[%s3586 + $0xf7] sm:$0xff]
          %v3598 = vld [vmem:[%s3586 + $0xff] sm:$0xff]
          %v3599 = vld [vmem:[%s3586 + $0x127] sm:$0xff]
          %v3600 = vld [vmem:[%s3586 + $0x12f] sm:$0xff]
          %v3601 = vld [vmem:[%s3586 + $0x157] sm:$0xff]
          %v3602 = vld [vmem:[%s3586 + $0x15f] sm:$0xff]
          %v3603 = vld [vmem:[#allocation10 + $0x2a] sm:$0x1]
          %v3604 = vlaneseq
          %v3605 = vshrl.u32 %v3604, 7
          %v3606 = vsub.s32 0, %v3605
          %v3607 = vrot.slane %v3603, %v3606
          %v3608 = vmul.f32 %v3587, %v3607
          %v3609 = vmul.f32 %v3588, %v3607
          %v3610 = vmul.f32 %v3589, %v3607
          %v3611 = vmul.f32 %v3590, %v3607
          %v3612 = vmul.f32 %v3591, %v3607
          %v3613 = vmul.f32 %v3592, %v3607
          %v3614 = vmul.f32 %v3593, %v3607
          %v3615 = vmul.f32 %v3594, %v3607
          %v3616 = vmul.f32 %v3595, %v3607
          %v3617 = vmul.f32 %v3596, %v3607
          %v3618 = vmul.f32 %v3597, %v3607
          %v3619 = vmul.f32 %v3598, %v3607
          %v3620 = vmul.f32 %v3599, %v3607
          %v3621 = vmul.f32 %v3600, %v3607
          %v3622 = vmul.f32 %v3601, %v3607
          %v3623 = vmul.f32 %v3602, %v3607
          %v3624 = vadd.f32 %v3568, %v3608
          %v3625 = vadd.f32 %v3569, %v3609
          %v3626 = vadd.f32 %v3570, %v3610
          %v3627 = vadd.f32 %v3571, %v3611
          %v3628 = vadd.f32 %v3572, %v3612
          %v3629 = vadd.f32 %v3573, %v3613
          %v3630 = vadd.f32 %v3574, %v3614
          %v3631 = vadd.f32 %v3575, %v3615
          %v3632 = vadd.f32 %v3576, %v3616
          %v3633 = vadd.f32 %v3577, %v3617
          %v3634 = vadd.f32 %v3578, %v3618
          %v3635 = vadd.f32 %v3579, %v3619
          %v3636 = vadd.f32 %v3580, %v3620
          %v3637 = vadd.f32 %v3581, %v3621
          %v3638 = vadd.f32 %v3582, %v3622
          %v3639 = vadd.f32 %v3583, %v3623
          %v3640 = vld [vmem:[%s3302 + $0xa] sm:$0xff]
          %v3641 = vld [vmem:[%s3302 + $0x12] sm:$0xff]
          %v3642 = vld [vmem:[%s3302 + $0x3a] sm:$0xff]
          %v3643 = vld [vmem:[%s3302 + $0x42] sm:$0xff]
          %v3644 = vld [vmem:[%s3302 + $0x6a] sm:$0xff]
          %v3645 = vld [vmem:[%s3302 + $0x72] sm:$0xff]
          %v3646 = vld [vmem:[%s3302 + $0x9a] sm:$0xff]
          %v3647 = vld [vmem:[%s3302 + $0xa2] sm:$0xff]
          %v3648 = vld [vmem:[%s3302 + $0xca] sm:$0xff]
          %v3649 = vld [vmem:[%s3302 + $0xd2] sm:$0xff]
          %v3650 = vld [vmem:[%s3302 + $0xfa] sm:$0xff]
          %v3651 = vld [vmem:[%s3302 + $0x102] sm:$0xff]
          %v3652 = vld [vmem:[%s3302 + $0x12a] sm:$0xff]
          %v3653 = vld [vmem:[%s3302 + $0x132] sm:$0xff]
          %v3654 = vld [vmem:[%s3302 + $0x15a] sm:$0xff]
          %v3655 = vld [vmem:[%s3302 + $0x162] sm:$0xff]
          %v3656 = vld [vmem:[%s3302 + $0x18a] sm:$0xff]
          %v3657 = vld [vmem:[%s3302 + $0x192] sm:$0xff]
          %v3658 = vld [vmem:[%s3302 + $0x1ba] sm:$0xff]
          %v3659 = vld [vmem:[%s3302 + $0x1c2] sm:$0xff]
          %v3660 = vld [vmem:[%s3302 + $0x1ea] sm:$0xff]
          %v3661 = vld [vmem:[%s3302 + $0x1f2] sm:$0xff]
          %v3662 = vld [vmem:[%s3302 + $0x21a] sm:$0xff]
          %v3663 = vld [vmem:[%s3302 + $0x222] sm:$0xff]
          %v3664 = vld [vmem:[%s3302 + $0x24a] sm:$0xff]
          %v3665 = vld [vmem:[%s3302 + $0x252] sm:$0xff]
          %v3666 = vld [vmem:[%s3302 + $0x27a] sm:$0xff]
          %v3667 = vld [vmem:[%s3302 + $0x282] sm:$0xff]
          %v3668 = vld [vmem:[#allocation10 + $0x1] sm:$0x1]
          %v3669 = vlaneseq
          %v3670 = vshrl.u32 %v3669, 7
          %v3671 = vsub.s32 0, %v3670
          %v3672 = vrot.slane %v3668, %v3671
          %v3673 = vmul.f32 %v3640, %v3672
          %v3674 = vmul.f32 %v3641, %v3672
          %v3675 = vmul.f32 %v3642, %v3672
          %v3676 = vmul.f32 %v3643, %v3672
          %v3677 = vmul.f32 %v3644, %v3672
          %v3678 = vmul.f32 %v3645, %v3672
          %v3679 = vmul.f32 %v3646, %v3672
          %v3680 = vmul.f32 %v3647, %v3672
          %v3681 = vmul.f32 %v3648, %v3672
          %v3682 = vmul.f32 %v3649, %v3672
          %v3683 = vmul.f32 %v3650, %v3672
          %v3684 = vmul.f32 %v3651, %v3672
          %v3685 = vmul.f32 %v3652, %v3672
          %v3686 = vmul.f32 %v3653, %v3672
          %v3687 = vmul.f32 %v3654, %v3672
          %v3688 = vmul.f32 %v3655, %v3672
          %v3689 = vadd.f32 %v3624, %v3673
          %v3690 = vadd.f32 %v3625, %v3674
          %v3691 = vadd.f32 %v3626, %v3675
          %v3692 = vadd.f32 %v3627, %v3676
          %v3693 = vadd.f32 %v3628, %v3677
          %v3694 = vadd.f32 %v3629, %v3678
          %v3695 = vadd.f32 %v3630, %v3679
          %v3696 = vadd.f32 %v3631, %v3680
          %v3697 = vadd.f32 %v3632, %v3681
          %v3698 = vadd.f32 %v3633, %v3682
          %v3699 = vadd.f32 %v3634, %v3683
          %v3700 = vadd.f32 %v3635, %v3684
          %v3701 = vadd.f32 %v3636, %v3685
          %v3702 = vadd.f32 %v3637, %v3686
          %v3703 = vadd.f32 %v3638, %v3687
          %v3704 = vadd.f32 %v3639, %v3688
          %v3705 = vld [vmem:[#allocation10 + $0x8] sm:$0x1]
          %v3706 = vlaneseq
          %v3707 = vshrl.u32 %v3706, 7
          %v3708 = vsub.s32 0, %v3707
          %v3709 = vrot.slane %v3705, %v3708
          %v3710 = vmul.f32 %v3646, %v3709
          %v3711 = vmul.f32 %v3647, %v3709
          %v3712 = vmul.f32 %v3648, %v3709
          %v3713 = vmul.f32 %v3649, %v3709
          %v3714 = vmul.f32 %v3650, %v3709
          %v3715 = vmul.f32 %v3651, %v3709
          %v3716 = vmul.f32 %v3652, %v3709
          %v3717 = vmul.f32 %v3653, %v3709
          %v3718 = vmul.f32 %v3654, %v3709
          %v3719 = vmul.f32 %v3655, %v3709
          %v3720 = vmul.f32 %v3656, %v3709
          %v3721 = vmul.f32 %v3657, %v3709
          %v3722 = vmul.f32 %v3658, %v3709
          %v3723 = vmul.f32 %v3659, %v3709
          %v3724 = vmul.f32 %v3660, %v3709
          %v3725 = vmul.f32 %v3661, %v3709
          %v3726 = vadd.f32 %v3689, %v3710
          %v3727 = vadd.f32 %v3690, %v3711
          %v3728 = vadd.f32 %v3691, %v3712
          %v3729 = vadd.f32 %v3692, %v3713
          %v3730 = vadd.f32 %v3693, %v3714
          %v3731 = vadd.f32 %v3694, %v3715
          %v3732 = vadd.f32 %v3695, %v3716
          %v3733 = vadd.f32 %v3696, %v3717
          %v3734 = vadd.f32 %v3697, %v3718
          %v3735 = vadd.f32 %v3698, %v3719
          %v3736 = vadd.f32 %v3699, %v3720
          %v3737 = vadd.f32 %v3700, %v3721
          %v3738 = vadd.f32 %v3701, %v3722
          %v3739 = vadd.f32 %v3702, %v3723
          %v3740 = vadd.f32 %v3703, %v3724
          %v3741 = vadd.f32 %v3704, %v3725
          %v3742 = vld [vmem:[#allocation10 + $0xf] sm:$0x1]
          %v3743 = vlaneseq
          %v3744 = vshrl.u32 %v3743, 7
          %v3745 = vsub.s32 0, %v3744
          %v3746 = vrot.slane %v3742, %v3745
          %v3747 = vmul.f32 %v3652, %v3746
          %v3748 = vmul.f32 %v3653, %v3746
          %v3749 = vmul.f32 %v3654, %v3746
          %v3750 = vmul.f32 %v3655, %v3746
          %v3751 = vmul.f32 %v3656, %v3746
          %v3752 = vmul.f32 %v3657, %v3746
          %v3753 = vmul.f32 %v3658, %v3746
          %v3754 = vmul.f32 %v3659, %v3746
          %v3755 = vmul.f32 %v3660, %v3746
          %v3756 = vmul.f32 %v3661, %v3746
          %v3757 = vmul.f32 %v3662, %v3746
          %v3758 = vmul.f32 %v3663, %v3746
          %v3759 = vmul.f32 %v3664, %v3746
          %v3760 = vmul.f32 %v3665, %v3746
          %v3761 = vmul.f32 %v3666, %v3746
          %v3762 = vmul.f32 %v3667, %v3746
          %v3763 = vadd.f32 %v3726, %v3747
          %v3764 = vadd.f32 %v3727, %v3748
          %v3765 = vadd.f32 %v3728, %v3749
          %v3766 = vadd.f32 %v3729, %v3750
          %v3767 = vadd.f32 %v3730, %v3751
          %v3768 = vadd.f32 %v3731, %v3752
          %v3769 = vadd.f32 %v3732, %v3753
          %v3770 = vadd.f32 %v3733, %v3754
          %v3771 = vadd.f32 %v3734, %v3755
          %v3772 = vadd.f32 %v3735, %v3756
          %v3773 = vadd.f32 %v3736, %v3757
          %v3774 = vadd.f32 %v3737, %v3758
          %v3775 = vadd.f32 %v3738, %v3759
          %v3776 = vadd.f32 %v3739, %v3760
          %v3777 = vadd.f32 %v3740, %v3761
          %v3778 = vadd.f32 %v3741, %v3762
          %v3779 = vld [vmem:[%s3444 + $0xa] sm:$0xff]
          %v3780 = vld [vmem:[%s3444 + $0x12] sm:$0xff]
          %v3781 = vld [vmem:[%s3444 + $0x3a] sm:$0xff]
          %v3782 = vld [vmem:[%s3444 + $0x42] sm:$0xff]
          %v3783 = vld [vmem:[%s3444 + $0x6a] sm:$0xff]
          %v3784 = vld [vmem:[%s3444 + $0x72] sm:$0xff]
          %v3785 = vld [vmem:[%s3444 + $0x9a] sm:$0xff]
          %v3786 = vld [vmem:[%s3444 + $0xa2] sm:$0xff]
          %v3787 = vld [vmem:[%s3444 + $0xca] sm:$0xff]
          %v3788 = vld [vmem:[%s3444 + $0xd2] sm:$0xff]
          %v3789 = vld [vmem:[%s3444 + $0xfa] sm:$0xff]
          %v3790 = vld [vmem:[%s3444 + $0x102] sm:$0xff]
          %v3791 = vld [vmem:[%s3444 + $0x12a] sm:$0xff]
          %v3792 = vld [vmem:[%s3444 + $0x132] sm:$0xff]
          %v3793 = vld [vmem:[%s3444 + $0x15a] sm:$0xff]
          %v3794 = vld [vmem:[%s3444 + $0x162] sm:$0xff]
          %v3795 = vld [vmem:[%s3444 + $0x18a] sm:$0xff]
          %v3796 = vld [vmem:[%s3444 + $0x192] sm:$0xff]
          %v3797 = vld [vmem:[%s3444 + $0x1ba] sm:$0xff]
          %v3798 = vld [vmem:[%s3444 + $0x1c2] sm:$0xff]
          %v3799 = vld [vmem:[%s3444 + $0x1ea] sm:$0xff]
          %v3800 = vld [vmem:[%s3444 + $0x1f2] sm:$0xff]
          %v3801 = vld [vmem:[%s3444 + $0x21a] sm:$0xff]
          %v3802 = vld [vmem:[%s3444 + $0x222] sm:$0xff]
          %v3803 = vld [vmem:[%s3444 + $0x24a] sm:$0xff]
          %v3804 = vld [vmem:[%s3444 + $0x252] sm:$0xff]
          %v3805 = vld [vmem:[%s3444 + $0x27a] sm:$0xff]
          %v3806 = vld [vmem:[%s3444 + $0x282] sm:$0xff]
          %v3807 = vld [vmem:[#allocation10 + $0x16] sm:$0x1]
          %v3808 = vlaneseq
          %v3809 = vshrl.u32 %v3808, 7
          %v3810 = vsub.s32 0, %v3809
          %v3811 = vrot.slane %v3807, %v3810
          %v3812 = vmul.f32 %v3779, %v3811
          %v3813 = vmul.f32 %v3780, %v3811
          %v3814 = vmul.f32 %v3781, %v3811
          %v3815 = vmul.f32 %v3782, %v3811
          %v3816 = vmul.f32 %v3783, %v3811
          %v3817 = vmul.f32 %v3784, %v3811
          %v3818 = vmul.f32 %v3785, %v3811
          %v3819 = vmul.f32 %v3786, %v3811
          %v3820 = vmul.f32 %v3787, %v3811
          %v3821 = vmul.f32 %v3788, %v3811
          %v3822 = vmul.f32 %v3789, %v3811
          %v3823 = vmul.f32 %v3790, %v3811
          %v3824 = vmul.f32 %v3791, %v3811
          %v3825 = vmul.f32 %v3792, %v3811
          %v3826 = vmul.f32 %v3793, %v3811
          %v3827 = vmul.f32 %v3794, %v3811
          %v3828 = vadd.f32 %v3763, %v3812
          %v3829 = vadd.f32 %v3764, %v3813
          %v3830 = vadd.f32 %v3765, %v3814
          %v3831 = vadd.f32 %v3766, %v3815
          %v3832 = vadd.f32 %v3767, %v3816
          %v3833 = vadd.f32 %v3768, %v3817
          %v3834 = vadd.f32 %v3769, %v3818
          %v3835 = vadd.f32 %v3770, %v3819
          %v3836 = vadd.f32 %v3771, %v3820
          %v3837 = vadd.f32 %v3772, %v3821
          %v3838 = vadd.f32 %v3773, %v3822
          %v3839 = vadd.f32 %v3774, %v3823
          %v3840 = vadd.f32 %v3775, %v3824
          %v3841 = vadd.f32 %v3776, %v3825
          %v3842 = vadd.f32 %v3777, %v3826
          %v3843 = vadd.f32 %v3778, %v3827
          %v3844 = vld [vmem:[#allocation10 + $0x1d] sm:$0x1]
          %v3845 = vlaneseq
          %v3846 = vshrl.u32 %v3845, 7
          %v3847 = vsub.s32 0, %v3846
          %v3848 = vrot.slane %v3844, %v3847
          %v3849 = vmul.f32 %v3785, %v3848
          %v3850 = vmul.f32 %v3786, %v3848
          %v3851 = vmul.f32 %v3787, %v3848
          %v3852 = vmul.f32 %v3788, %v3848
          %v3853 = vmul.f32 %v3789, %v3848
          %v3854 = vmul.f32 %v3790, %v3848
          %v3855 = vmul.f32 %v3791, %v3848
          %v3856 = vmul.f32 %v3792, %v3848
          %v3857 = vmul.f32 %v3793, %v3848
          %v3858 = vmul.f32 %v3794, %v3848
          %v3859 = vmul.f32 %v3795, %v3848
          %v3860 = vmul.f32 %v3796, %v3848
          %v3861 = vmul.f32 %v3797, %v3848
          %v3862 = vmul.f32 %v3798, %v3848
          %v3863 = vmul.f32 %v3799, %v3848
          %v3864 = vmul.f32 %v3800, %v3848
          %v3865 = vadd.f32 %v3828, %v3849
          %v3866 = vadd.f32 %v3829, %v3850
          %v3867 = vadd.f32 %v3830, %v3851
          %v3868 = vadd.f32 %v3831, %v3852
          %v3869 = vadd.f32 %v3832, %v3853
          %v3870 = vadd.f32 %v3833, %v3854
          %v3871 = vadd.f32 %v3834, %v3855
          %v3872 = vadd.f32 %v3835, %v3856
          %v3873 = vadd.f32 %v3836, %v3857
          %v3874 = vadd.f32 %v3837, %v3858
          %v3875 = vadd.f32 %v3838, %v3859
          %v3876 = vadd.f32 %v3839, %v3860
          %v3877 = vadd.f32 %v3840, %v3861
          %v3878 = vadd.f32 %v3841, %v3862
          %v3879 = vadd.f32 %v3842, %v3863
          %v3880 = vadd.f32 %v3843, %v3864
          %v3881 = vld [vmem:[#allocation10 + $0x24] sm:$0x1]
          %v3882 = vlaneseq
          %v3883 = vshrl.u32 %v3882, 7
          %v3884 = vsub.s32 0, %v3883
          %v3885 = vrot.slane %v3881, %v3884
          %v3886 = vmul.f32 %v3791, %v3885
          %v3887 = vmul.f32 %v3792, %v3885
          %v3888 = vmul.f32 %v3793, %v3885
          %v3889 = vmul.f32 %v3794, %v3885
          %v3890 = vmul.f32 %v3795, %v3885
          %v3891 = vmul.f32 %v3796, %v3885
          %v3892 = vmul.f32 %v3797, %v3885
          %v3893 = vmul.f32 %v3798, %v3885
          %v3894 = vmul.f32 %v3799, %v3885
          %v3895 = vmul.f32 %v3800, %v3885
          %v3896 = vmul.f32 %v3801, %v3885
          %v3897 = vmul.f32 %v3802, %v3885
          %v3898 = vmul.f32 %v3803, %v3885
          %v3899 = vmul.f32 %v3804, %v3885
          %v3900 = vmul.f32 %v3805, %v3885
          %v3901 = vmul.f32 %v3806, %v3885
          %v3902 = vadd.f32 %v3865, %v3886
          %v3903 = vadd.f32 %v3866, %v3887
          %v3904 = vadd.f32 %v3867, %v3888
          %v3905 = vadd.f32 %v3868, %v3889
          %v3906 = vadd.f32 %v3869, %v3890
          %v3907 = vadd.f32 %v3870, %v3891
          %v3908 = vadd.f32 %v3871, %v3892
          %v3909 = vadd.f32 %v3872, %v3893
          %v3910 = vadd.f32 %v3873, %v3894
          %v3911 = vadd.f32 %v3874, %v3895
          %v3912 = vadd.f32 %v3875, %v3896
          %v3913 = vadd.f32 %v3876, %v3897
          %v3914 = vadd.f32 %v3877, %v3898
          %v3915 = vadd.f32 %v3878, %v3899
          %v3916 = vadd.f32 %v3879, %v3900
          %v3917 = vadd.f32 %v3880, %v3901
          %v3918 = vld [vmem:[%s3586 + $0xa] sm:$0xff]
          %v3919 = vld [vmem:[%s3586 + $0x12] sm:$0xff]
          %v3920 = vld [vmem:[%s3586 + $0x3a] sm:$0xff]
          %v3921 = vld [vmem:[%s3586 + $0x42] sm:$0xff]
          %v3922 = vld [vmem:[%s3586 + $0x6a] sm:$0xff]
          %v3923 = vld [vmem:[%s3586 + $0x72] sm:$0xff]
          %v3924 = vld [vmem:[%s3586 + $0x9a] sm:$0xff]
          %v3925 = vld [vmem:[%s3586 + $0xa2] sm:$0xff]
          %v3926 = vld [vmem:[%s3586 + $0xca] sm:$0xff]
          %v3927 = vld [vmem:[%s3586 + $0xd2] sm:$0xff]
          %v3928 = vld [vmem:[%s3586 + $0xfa] sm:$0xff]
          %v3929 = vld [vmem:[%s3586 + $0x102] sm:$0xff]
          %v3930 = vld [vmem:[%s3586 + $0x12a] sm:$0xff]
          %v3931 = vld [vmem:[%s3586 + $0x132] sm:$0xff]
          %v3932 = vld [vmem:[%s3586 + $0x15a] sm:$0xff]
          %v3933 = vld [vmem:[%s3586 + $0x162] sm:$0xff]
          %v3934 = vld [vmem:[#allocation10 + $0x2b] sm:$0x1]
          %v3935 = vlaneseq
          %v3936 = vshrl.u32 %v3935, 7
          %v3937 = vsub.s32 0, %v3936
          %v3938 = vrot.slane %v3934, %v3937
          %v3939 = vmul.f32 %v3918, %v3938
          %v3940 = vmul.f32 %v3919, %v3938
          %v3941 = vmul.f32 %v3920, %v3938
          %v3942 = vmul.f32 %v3921, %v3938
          %v3943 = vmul.f32 %v3922, %v3938
          %v3944 = vmul.f32 %v3923, %v3938
          %v3945 = vmul.f32 %v3924, %v3938
          %v3946 = vmul.f32 %v3925, %v3938
          %v3947 = vmul.f32 %v3926, %v3938
          %v3948 = vmul.f32 %v3927, %v3938
          %v3949 = vmul.f32 %v3928, %v3938
          %v3950 = vmul.f32 %v3929, %v3938
          %v3951 = vmul.f32 %v3930, %v3938
          %v3952 = vmul.f32 %v3931, %v3938
          %v3953 = vmul.f32 %v3932, %v3938
          %v3954 = vmul.f32 %v3933, %v3938
          %v3955 = vadd.f32 %v3902, %v3939
          %v3956 = vadd.f32 %v3903, %v3940
          %v3957 = vadd.f32 %v3904, %v3941
          %v3958 = vadd.f32 %v3905, %v3942
          %v3959 = vadd.f32 %v3906, %v3943
          %v3960 = vadd.f32 %v3907, %v3944
          %v3961 = vadd.f32 %v3908, %v3945
          %v3962 = vadd.f32 %v3909, %v3946
          %v3963 = vadd.f32 %v3910, %v3947
          %v3964 = vadd.f32 %v3911, %v3948
          %v3965 = vadd.f32 %v3912, %v3949
          %v3966 = vadd.f32 %v3913, %v3950
          %v3967 = vadd.f32 %v3914, %v3951
          %v3968 = vadd.f32 %v3915, %v3952
          %v3969 = vadd.f32 %v3916, %v3953
          %v3970 = vadd.f32 %v3917, %v3954
          %v3971 = vld [vmem:[%s3302 + $0xd] sm:$0xff]
          %v3972 = vld [vmem:[%s3302 + $0x15] sm:$0xff]
          %v3973 = vld [vmem:[%s3302 + $0x3d] sm:$0xff]
          %v3974 = vld [vmem:[%s3302 + $0x45] sm:$0xff]
          %v3975 = vld [vmem:[%s3302 + $0x6d] sm:$0xff]
          %v3976 = vld [vmem:[%s3302 + $0x75] sm:$0xff]
          %v3977 = vld [vmem:[%s3302 + $0x9d] sm:$0xff]
          %v3978 = vld [vmem:[%s3302 + $0xa5] sm:$0xff]
          %v3979 = vld [vmem:[%s3302 + $0xcd] sm:$0xff]
          %v3980 = vld [vmem:[%s3302 + $0xd5] sm:$0xff]
          %v3981 = vld [vmem:[%s3302 + $0xfd] sm:$0xff]
          %v3982 = vld [vmem:[%s3302 + $0x105] sm:$0xff]
          %v3983 = vld [vmem:[%s3302 + $0x12d] sm:$0xff]
          %v3984 = vld [vmem:[%s3302 + $0x135] sm:$0xff]
          %v3985 = vld [vmem:[%s3302 + $0x15d] sm:$0xff]
          %v3986 = vld [vmem:[%s3302 + $0x165] sm:$0xff]
          %v3987 = vld [vmem:[%s3302 + $0x18d] sm:$0xff]
          %v3988 = vld [vmem:[%s3302 + $0x195] sm:$0xff]
          %v3989 = vld [vmem:[%s3302 + $0x1bd] sm:$0xff]
          %v3990 = vld [vmem:[%s3302 + $0x1c5] sm:$0xff]
          %v3991 = vld [vmem:[%s3302 + $0x1ed] sm:$0xff]
          %v3992 = vld [vmem:[%s3302 + $0x1f5] sm:$0xff]
          %v3993 = vld [vmem:[%s3302 + $0x21d] sm:$0xff]
          %v3994 = vld [vmem:[%s3302 + $0x225] sm:$0xff]
          %v3995 = vld [vmem:[%s3302 + $0x24d] sm:$0xff]
          %v3996 = vld [vmem:[%s3302 + $0x255] sm:$0xff]
          %v3997 = vld [vmem:[%s3302 + $0x27d] sm:$0xff]
          %v3998 = vld [vmem:[%s3302 + $0x285] sm:$0xff]
          %v3999 = vld [vmem:[#allocation10 + $0x2] sm:$0x1]
          %v4000 = vlaneseq
          %v4001 = vshrl.u32 %v4000, 7
          %v4002 = vsub.s32 0, %v4001
          %v4003 = vrot.slane %v3999, %v4002
          %v4004 = vmul.f32 %v3971, %v4003
          %v4005 = vmul.f32 %v3972, %v4003
          %v4006 = vmul.f32 %v3973, %v4003
          %v4007 = vmul.f32 %v3974, %v4003
          %v4008 = vmul.f32 %v3975, %v4003
          %v4009 = vmul.f32 %v3976, %v4003
          %v4010 = vmul.f32 %v3977, %v4003
          %v4011 = vmul.f32 %v3978, %v4003
          %v4012 = vmul.f32 %v3979, %v4003
          %v4013 = vmul.f32 %v3980, %v4003
          %v4014 = vmul.f32 %v3981, %v4003
          %v4015 = vmul.f32 %v3982, %v4003
          %v4016 = vmul.f32 %v3983, %v4003
          %v4017 = vmul.f32 %v3984, %v4003
          %v4018 = vmul.f32 %v3985, %v4003
          %v4019 = vmul.f32 %v3986, %v4003
          %v4020 = vadd.f32 %v3955, %v4004
          %v4021 = vadd.f32 %v3956, %v4005
          %v4022 = vadd.f32 %v3957, %v4006
          %v4023 = vadd.f32 %v3958, %v4007
          %v4024 = vadd.f32 %v3959, %v4008
          %v4025 = vadd.f32 %v3960, %v4009
          %v4026 = vadd.f32 %v3961, %v4010
          %v4027 = vadd.f32 %v3962, %v4011
          %v4028 = vadd.f32 %v3963, %v4012
          %v4029 = vadd.f32 %v3964, %v4013
          %v4030 = vadd.f32 %v3965, %v4014
          %v4031 = vadd.f32 %v3966, %v4015
          %v4032 = vadd.f32 %v3967, %v4016
          %v4033 = vadd.f32 %v3968, %v4017
          %v4034 = vadd.f32 %v3969, %v4018
          %v4035 = vadd.f32 %v3970, %v4019
          %v4036 = vld [vmem:[#allocation10 + $0x9] sm:$0x1]
          %v4037 = vlaneseq
          %v4038 = vshrl.u32 %v4037, 7
          %v4039 = vsub.s32 0, %v4038
          %v4040 = vrot.slane %v4036, %v4039
          %v4041 = vmul.f32 %v3977, %v4040
          %v4042 = vmul.f32 %v3978, %v4040
          %v4043 = vmul.f32 %v3979, %v4040
          %v4044 = vmul.f32 %v3980, %v4040
          %v4045 = vmul.f32 %v3981, %v4040
          %v4046 = vmul.f32 %v3982, %v4040
          %v4047 = vmul.f32 %v3983, %v4040
          %v4048 = vmul.f32 %v3984, %v4040
          %v4049 = vmul.f32 %v3985, %v4040
          %v4050 = vmul.f32 %v3986, %v4040
          %v4051 = vmul.f32 %v3987, %v4040
          %v4052 = vmul.f32 %v3988, %v4040
          %v4053 = vmul.f32 %v3989, %v4040
          %v4054 = vmul.f32 %v3990, %v4040
          %v4055 = vmul.f32 %v3991, %v4040
          %v4056 = vmul.f32 %v3992, %v4040
          %v4057 = vadd.f32 %v4020, %v4041
          %v4058 = vadd.f32 %v4021, %v4042
          %v4059 = vadd.f32 %v4022, %v4043
          %v4060 = vadd.f32 %v4023, %v4044
          %v4061 = vadd.f32 %v4024, %v4045
          %v4062 = vadd.f32 %v4025, %v4046
          %v4063 = vadd.f32 %v4026, %v4047
          %v4064 = vadd.f32 %v4027, %v4048
          %v4065 = vadd.f32 %v4028, %v4049
          %v4066 = vadd.f32 %v4029, %v4050
          %v4067 = vadd.f32 %v4030, %v4051
          %v4068 = vadd.f32 %v4031, %v4052
          %v4069 = vadd.f32 %v4032, %v4053
          %v4070 = vadd.f32 %v4033, %v4054
          %v4071 = vadd.f32 %v4034, %v4055
          %v4072 = vadd.f32 %v4035, %v4056
          %v4073 = vld [vmem:[#allocation10 + $0x10] sm:$0x1]
          %v4074 = vlaneseq
          %v4075 = vshrl.u32 %v4074, 7
          %v4076 = vsub.s32 0, %v4075
          %v4077 = vrot.slane %v4073, %v4076
          %v4078 = vmul.f32 %v3983, %v4077
          %v4079 = vmul.f32 %v3984, %v4077
          %v4080 = vmul.f32 %v3985, %v4077
          %v4081 = vmul.f32 %v3986, %v4077
          %v4082 = vmul.f32 %v3987, %v4077
          %v4083 = vmul.f32 %v3988, %v4077
          %v4084 = vmul.f32 %v3989, %v4077
          %v4085 = vmul.f32 %v3990, %v4077
          %v4086 = vmul.f32 %v3991, %v4077
          %v4087 = vmul.f32 %v3992, %v4077
          %v4088 = vmul.f32 %v3993, %v4077
          %v4089 = vmul.f32 %v3994, %v4077
          %v4090 = vmul.f32 %v3995, %v4077
          %v4091 = vmul.f32 %v3996, %v4077
          %v4092 = vmul.f32 %v3997, %v4077
          %v4093 = vmul.f32 %v3998, %v4077
          %v4094 = vadd.f32 %v4057, %v4078
          %v4095 = vadd.f32 %v4058, %v4079
          %v4096 = vadd.f32 %v4059, %v4080
          %v4097 = vadd.f32 %v4060, %v4081
          %v4098 = vadd.f32 %v4061, %v4082
          %v4099 = vadd.f32 %v4062, %v4083
          %v4100 = vadd.f32 %v4063, %v4084
          %v4101 = vadd.f32 %v4064, %v4085
          %v4102 = vadd.f32 %v4065, %v4086
          %v4103 = vadd.f32 %v4066, %v4087
          %v4104 = vadd.f32 %v4067, %v4088
          %v4105 = vadd.f32 %v4068, %v4089
          %v4106 = vadd.f32 %v4069, %v4090
          %v4107 = vadd.f32 %v4070, %v4091
          %v4108 = vadd.f32 %v4071, %v4092
          %v4109 = vadd.f32 %v4072, %v4093
          %v4110 = vld [vmem:[%s3444 + $0xd] sm:$0xff]
          %v4111 = vld [vmem:[%s3444 + $0x15] sm:$0xff]
          %v4112 = vld [vmem:[%s3444 + $0x3d] sm:$0xff]
          %v4113 = vld [vmem:[%s3444 + $0x45] sm:$0xff]
          %v4114 = vld [vmem:[%s3444 + $0x6d] sm:$0xff]
          %v4115 = vld [vmem:[%s3444 + $0x75] sm:$0xff]
          %v4116 = vld [vmem:[%s3444 + $0x9d] sm:$0xff]
          %v4117 = vld [vmem:[%s3444 + $0xa5] sm:$0xff]
          %v4118 = vld [vmem:[%s3444 + $0xcd] sm:$0xff]
          %v4119 = vld [vmem:[%s3444 + $0xd5] sm:$0xff]
          %v4120 = vld [vmem:[%s3444 + $0xfd] sm:$0xff]
          %v4121 = vld [vmem:[%s3444 + $0x105] sm:$0xff]
          %v4122 = vld [vmem:[%s3444 + $0x12d] sm:$0xff]
          %v4123 = vld [vmem:[%s3444 + $0x135] sm:$0xff]
          %v4124 = vld [vmem:[%s3444 + $0x15d] sm:$0xff]
          %v4125 = vld [vmem:[%s3444 + $0x165] sm:$0xff]
          %v4126 = vld [vmem:[%s3444 + $0x18d] sm:$0xff]
          %v4127 = vld [vmem:[%s3444 + $0x195] sm:$0xff]
          %v4128 = vld [vmem:[%s3444 + $0x1bd] sm:$0xff]
          %v4129 = vld [vmem:[%s3444 + $0x1c5] sm:$0xff]
          %v4130 = vld [vmem:[%s3444 + $0x1ed] sm:$0xff]
          %v4131 = vld [vmem:[%s3444 + $0x1f5] sm:$0xff]
          %v4132 = vld [vmem:[%s3444 + $0x21d] sm:$0xff]
          %v4133 = vld [vmem:[%s3444 + $0x225] sm:$0xff]
          %v4134 = vld [vmem:[%s3444 + $0x24d] sm:$0xff]
          %v4135 = vld [vmem:[%s3444 + $0x255] sm:$0xff]
          %v4136 = vld [vmem:[%s3444 + $0x27d] sm:$0xff]
          %v4137 = vld [vmem:[%s3444 + $0x285] sm:$0xff]
          %v4138 = vld [vmem:[#allocation10 + $0x17] sm:$0x1]
          %v4139 = vlaneseq
          %v4140 = vshrl.u32 %v4139, 7
          %v4141 = vsub.s32 0, %v4140
          %v4142 = vrot.slane %v4138, %v4141
          %v4143 = vmul.f32 %v4110, %v4142
          %v4144 = vmul.f32 %v4111, %v4142
          %v4145 = vmul.f32 %v4112, %v4142
          %v4146 = vmul.f32 %v4113, %v4142
          %v4147 = vmul.f32 %v4114, %v4142
          %v4148 = vmul.f32 %v4115, %v4142
          %v4149 = vmul.f32 %v4116, %v4142
          %v4150 = vmul.f32 %v4117, %v4142
          %v4151 = vmul.f32 %v4118, %v4142
          %v4152 = vmul.f32 %v4119, %v4142
          %v4153 = vmul.f32 %v4120, %v4142
          %v4154 = vmul.f32 %v4121, %v4142
          %v4155 = vmul.f32 %v4122, %v4142
          %v4156 = vmul.f32 %v4123, %v4142
          %v4157 = vmul.f32 %v4124, %v4142
          %v4158 = vmul.f32 %v4125, %v4142
          %v4159 = vadd.f32 %v4094, %v4143
          %v4160 = vadd.f32 %v4095, %v4144
          %v4161 = vadd.f32 %v4096, %v4145
          %v4162 = vadd.f32 %v4097, %v4146
          %v4163 = vadd.f32 %v4098, %v4147
          %v4164 = vadd.f32 %v4099, %v4148
          %v4165 = vadd.f32 %v4100, %v4149
          %v4166 = vadd.f32 %v4101, %v4150
          %v4167 = vadd.f32 %v4102, %v4151
          %v4168 = vadd.f32 %v4103, %v4152
          %v4169 = vadd.f32 %v4104, %v4153
          %v4170 = vadd.f32 %v4105, %v4154
          %v4171 = vadd.f32 %v4106, %v4155
          %v4172 = vadd.f32 %v4107, %v4156
          %v4173 = vadd.f32 %v4108, %v4157
          %v4174 = vadd.f32 %v4109, %v4158
          %v4175 = vld [vmem:[#allocation10 + $0x1e] sm:$0x1]
          %v4176 = vlaneseq
          %v4177 = vshrl.u32 %v4176, 7
          %v4178 = vsub.s32 0, %v4177
          %v4179 = vrot.slane %v4175, %v4178
          %v4180 = vmul.f32 %v4116, %v4179
          %v4181 = vmul.f32 %v4117, %v4179
          %v4182 = vmul.f32 %v4118, %v4179
          %v4183 = vmul.f32 %v4119, %v4179
          %v4184 = vmul.f32 %v4120, %v4179
          %v4185 = vmul.f32 %v4121, %v4179
          %v4186 = vmul.f32 %v4122, %v4179
          %v4187 = vmul.f32 %v4123, %v4179
          %v4188 = vmul.f32 %v4124, %v4179
          %v4189 = vmul.f32 %v4125, %v4179
          %v4190 = vmul.f32 %v4126, %v4179
          %v4191 = vmul.f32 %v4127, %v4179
          %v4192 = vmul.f32 %v4128, %v4179
          %v4193 = vmul.f32 %v4129, %v4179
          %v4194 = vmul.f32 %v4130, %v4179
          %v4195 = vmul.f32 %v4131, %v4179
          %v4196 = vadd.f32 %v4159, %v4180
          %v4197 = vadd.f32 %v4160, %v4181
          %v4198 = vadd.f32 %v4161, %v4182
          %v4199 = vadd.f32 %v4162, %v4183
          %v4200 = vadd.f32 %v4163, %v4184
          %v4201 = vadd.f32 %v4164, %v4185
          %v4202 = vadd.f32 %v4165, %v4186
          %v4203 = vadd.f32 %v4166, %v4187
          %v4204 = vadd.f32 %v4167, %v4188
          %v4205 = vadd.f32 %v4168, %v4189
          %v4206 = vadd.f32 %v4169, %v4190
          %v4207 = vadd.f32 %v4170, %v4191
          %v4208 = vadd.f32 %v4171, %v4192
          %v4209 = vadd.f32 %v4172, %v4193
          %v4210 = vadd.f32 %v4173, %v4194
          %v4211 = vadd.f32 %v4174, %v4195
          %v4212 = vld [vmem:[#allocation10 + $0x25] sm:$0x1]
          %v4213 = vlaneseq
          %v4214 = vshrl.u32 %v4213, 7
          %v4215 = vsub.s32 0, %v4214
          %v4216 = vrot.slane %v4212, %v4215
          %v4217 = vmul.f32 %v4122, %v4216
          %v4218 = vmul.f32 %v4123, %v4216
          %v4219 = vmul.f32 %v4124, %v4216
          %v4220 = vmul.f32 %v4125, %v4216
          %v4221 = vmul.f32 %v4126, %v4216
          %v4222 = vmul.f32 %v4127, %v4216
          %v4223 = vmul.f32 %v4128, %v4216
          %v4224 = vmul.f32 %v4129, %v4216
          %v4225 = vmul.f32 %v4130, %v4216
          %v4226 = vmul.f32 %v4131, %v4216
          %v4227 = vmul.f32 %v4132, %v4216
          %v4228 = vmul.f32 %v4133, %v4216
          %v4229 = vmul.f32 %v4134, %v4216
          %v4230 = vmul.f32 %v4135, %v4216
          %v4231 = vmul.f32 %v4136, %v4216
          %v4232 = vmul.f32 %v4137, %v4216
          %v4233 = vadd.f32 %v4196, %v4217
          %v4234 = vadd.f32 %v4197, %v4218
          %v4235 = vadd.f32 %v4198, %v4219
          %v4236 = vadd.f32 %v4199, %v4220
          %v4237 = vadd.f32 %v4200, %v4221
          %v4238 = vadd.f32 %v4201, %v4222
          %v4239 = vadd.f32 %v4202, %v4223
          %v4240 = vadd.f32 %v4203, %v4224
          %v4241 = vadd.f32 %v4204, %v4225
          %v4242 = vadd.f32 %v4205, %v4226
          %v4243 = vadd.f32 %v4206, %v4227
          %v4244 = vadd.f32 %v4207, %v4228
          %v4245 = vadd.f32 %v4208, %v4229
          %v4246 = vadd.f32 %v4209, %v4230
          %v4247 = vadd.f32 %v4210, %v4231
          %v4248 = vadd.f32 %v4211, %v4232
          %v4249 = vld [vmem:[%s3586 + $0xd] sm:$0xff]
          %v4250 = vld [vmem:[%s3586 + $0x15] sm:$0xff]
          %v4251 = vld [vmem:[%s3586 + $0x3d] sm:$0xff]
          %v4252 = vld [vmem:[%s3586 + $0x45] sm:$0xff]
          %v4253 = vld [vmem:[%s3586 + $0x6d] sm:$0xff]
          %v4254 = vld [vmem:[%s3586 + $0x75] sm:$0xff]
          %v4255 = vld [vmem:[%s3586 + $0x9d] sm:$0xff]
          %v4256 = vld [vmem:[%s3586 + $0xa5] sm:$0xff]
          %v4257 = vld [vmem:[%s3586 + $0xcd] sm:$0xff]
          %v4258 = vld [vmem:[%s3586 + $0xd5] sm:$0xff]
          %v4259 = vld [vmem:[%s3586 + $0xfd] sm:$0xff]
          %v4260 = vld [vmem:[%s3586 + $0x105] sm:$0xff]
          %v4261 = vld [vmem:[%s3586 + $0x12d] sm:$0xff]
          %v4262 = vld [vmem:[%s3586 + $0x135] sm:$0xff]
          %v4263 = vld [vmem:[%s3586 + $0x15d] sm:$0xff]
          %v4264 = vld [vmem:[%s3586 + $0x165] sm:$0xff]
          %v4265 = vld [vmem:[#allocation10 + $0x2c] sm:$0x1]
          %v4266 = vlaneseq
          %v4267 = vshrl.u32 %v4266, 7
          %v4268 = vsub.s32 0, %v4267
          %v4269 = vrot.slane %v4265, %v4268
          %v4270 = vmul.f32 %v4249, %v4269
          %v4271 = vmul.f32 %v4250, %v4269
          %v4272 = vmul.f32 %v4251, %v4269
          %v4273 = vmul.f32 %v4252, %v4269
          %v4274 = vmul.f32 %v4253, %v4269
          %v4275 = vmul.f32 %v4254, %v4269
          %v4276 = vmul.f32 %v4255, %v4269
          %v4277 = vmul.f32 %v4256, %v4269
          %v4278 = vmul.f32 %v4257, %v4269
          %v4279 = vmul.f32 %v4258, %v4269
          %v4280 = vmul.f32 %v4259, %v4269
          %v4281 = vmul.f32 %v4260, %v4269
          %v4282 = vmul.f32 %v4261, %v4269
          %v4283 = vmul.f32 %v4262, %v4269
          %v4284 = vmul.f32 %v4263, %v4269
          %v4285 = vmul.f32 %v4264, %v4269
          %v4286 = vadd.f32 %v4233, %v4270
          %v4287 = vadd.f32 %v4234, %v4271
          %v4288 = vadd.f32 %v4235, %v4272
          %v4289 = vadd.f32 %v4236, %v4273
          %v4290 = vadd.f32 %v4237, %v4274
          %v4291 = vadd.f32 %v4238, %v4275
          %v4292 = vadd.f32 %v4239, %v4276
          %v4293 = vadd.f32 %v4240, %v4277
          %v4294 = vadd.f32 %v4241, %v4278
          %v4295 = vadd.f32 %v4242, %v4279
          %v4296 = vadd.f32 %v4243, %v4280
          %v4297 = vadd.f32 %v4244, %v4281
          %v4298 = vadd.f32 %v4245, %v4282
          %v4299 = vadd.f32 %v4246, %v4283
          %v4300 = vadd.f32 %v4247, %v4284
          %v4301 = vadd.f32 %v4248, %v4285
          %v4302 = vld [vmem:[%s3302 + $0x10] sm:$0xff]
          %v4303 = vld [vmem:[%s3302 + $0x18] sm:$0xff]
          %v4304 = vld [vmem:[%s3302 + $0x40] sm:$0xff]
          %v4305 = vld [vmem:[%s3302 + $0x48] sm:$0xff]
          %v4306 = vld [vmem:[%s3302 + $0x70] sm:$0xff]
          %v4307 = vld [vmem:[%s3302 + $0x78] sm:$0xff]
          %v4308 = vld [vmem:[%s3302 + $0xa0] sm:$0xff]
          %v4309 = vld [vmem:[%s3302 + $0xa8] sm:$0xff]
          %v4310 = vld [vmem:[%s3302 + $0xd0] sm:$0xff]
          %v4311 = vld [vmem:[%s3302 + $0xd8] sm:$0xff]
          %v4312 = vld [vmem:[%s3302 + $0x100] sm:$0xff]
          %v4313 = vld [vmem:[%s3302 + $0x108] sm:$0xff]
          %v4314 = vld [vmem:[%s3302 + $0x130] sm:$0xff]
          %v4315 = vld [vmem:[%s3302 + $0x138] sm:$0xff]
          %v4316 = vld [vmem:[%s3302 + $0x160] sm:$0xff]
          %v4317 = vld [vmem:[%s3302 + $0x168] sm:$0xff]
          %v4318 = vld [vmem:[%s3302 + $0x190] sm:$0xff]
          %v4319 = vld [vmem:[%s3302 + $0x198] sm:$0xff]
          %v4320 = vld [vmem:[%s3302 + $0x1c0] sm:$0xff]
          %v4321 = vld [vmem:[%s3302 + $0x1c8] sm:$0xff]
          %v4322 = vld [vmem:[%s3302 + $0x1f0] sm:$0xff]
          %v4323 = vld [vmem:[%s3302 + $0x1f8] sm:$0xff]
          %v4324 = vld [vmem:[%s3302 + $0x220] sm:$0xff]
          %v4325 = vld [vmem:[%s3302 + $0x228] sm:$0xff]
          %v4326 = vld [vmem:[%s3302 + $0x250] sm:$0xff]
          %v4327 = vld [vmem:[%s3302 + $0x258] sm:$0xff]
          %v4328 = vld [vmem:[%s3302 + $0x280] sm:$0xff]
          %v4329 = vld [vmem:[%s3302 + $0x288] sm:$0xff]
          %v4330 = vld [vmem:[#allocation10 + $0x3] sm:$0x1]
          %v4331 = vlaneseq
          %v4332 = vshrl.u32 %v4331, 7
          %v4333 = vsub.s32 0, %v4332
          %v4334 = vrot.slane %v4330, %v4333
          %v4335 = vmul.f32 %v4302, %v4334
          %v4336 = vmul.f32 %v4303, %v4334
          %v4337 = vmul.f32 %v4304, %v4334
          %v4338 = vmul.f32 %v4305, %v4334
          %v4339 = vmul.f32 %v4306, %v4334
          %v4340 = vmul.f32 %v4307, %v4334
          %v4341 = vmul.f32 %v4308, %v4334
          %v4342 = vmul.f32 %v4309, %v4334
          %v4343 = vmul.f32 %v4310, %v4334
          %v4344 = vmul.f32 %v4311, %v4334
          %v4345 = vmul.f32 %v4312, %v4334
          %v4346 = vmul.f32 %v4313, %v4334
          %v4347 = vmul.f32 %v4314, %v4334
          %v4348 = vmul.f32 %v4315, %v4334
          %v4349 = vmul.f32 %v4316, %v4334
          %v4350 = vmul.f32 %v4317, %v4334
          %v4351 = vadd.f32 %v4286, %v4335
          %v4352 = vadd.f32 %v4287, %v4336
          %v4353 = vadd.f32 %v4288, %v4337
          %v4354 = vadd.f32 %v4289, %v4338
          %v4355 = vadd.f32 %v4290, %v4339
          %v4356 = vadd.f32 %v4291, %v4340
          %v4357 = vadd.f32 %v4292, %v4341
          %v4358 = vadd.f32 %v4293, %v4342
          %v4359 = vadd.f32 %v4294, %v4343
          %v4360 = vadd.f32 %v4295, %v4344
          %v4361 = vadd.f32 %v4296, %v4345
          %v4362 = vadd.f32 %v4297, %v4346
          %v4363 = vadd.f32 %v4298, %v4347
          %v4364 = vadd.f32 %v4299, %v4348
          %v4365 = vadd.f32 %v4300, %v4349
          %v4366 = vadd.f32 %v4301, %v4350
          %v4367 = vld [vmem:[#allocation10 + $0xa] sm:$0x1]
          %v4368 = vlaneseq
          %v4369 = vshrl.u32 %v4368, 7
          %v4370 = vsub.s32 0, %v4369
          %v4371 = vrot.slane %v4367, %v4370
          %v4372 = vmul.f32 %v4308, %v4371
          %v4373 = vmul.f32 %v4309, %v4371
          %v4374 = vmul.f32 %v4310, %v4371
          %v4375 = vmul.f32 %v4311, %v4371
          %v4376 = vmul.f32 %v4312, %v4371
          %v4377 = vmul.f32 %v4313, %v4371
          %v4378 = vmul.f32 %v4314, %v4371
          %v4379 = vmul.f32 %v4315, %v4371
          %v4380 = vmul.f32 %v4316, %v4371
          %v4381 = vmul.f32 %v4317, %v4371
          %v4382 = vmul.f32 %v4318, %v4371
          %v4383 = vmul.f32 %v4319, %v4371
          %v4384 = vmul.f32 %v4320, %v4371
          %v4385 = vmul.f32 %v4321, %v4371
          %v4386 = vmul.f32 %v4322, %v4371
          %v4387 = vmul.f32 %v4323, %v4371
          %v4388 = vadd.f32 %v4351, %v4372
          %v4389 = vadd.f32 %v4352, %v4373
          %v4390 = vadd.f32 %v4353, %v4374
          %v4391 = vadd.f32 %v4354, %v4375
          %v4392 = vadd.f32 %v4355, %v4376
          %v4393 = vadd.f32 %v4356, %v4377
          %v4394 = vadd.f32 %v4357, %v4378
          %v4395 = vadd.f32 %v4358, %v4379
          %v4396 = vadd.f32 %v4359, %v4380
          %v4397 = vadd.f32 %v4360, %v4381
          %v4398 = vadd.f32 %v4361, %v4382
          %v4399 = vadd.f32 %v4362, %v4383
          %v4400 = vadd.f32 %v4363, %v4384
          %v4401 = vadd.f32 %v4364, %v4385
          %v4402 = vadd.f32 %v4365, %v4386
          %v4403 = vadd.f32 %v4366, %v4387
          %v4404 = vld [vmem:[#allocation10 + $0x11] sm:$0x1]
          %v4405 = vlaneseq
          %v4406 = vshrl.u32 %v4405, 7
          %v4407 = vsub.s32 0, %v4406
          %v4408 = vrot.slane %v4404, %v4407
          %v4409 = vmul.f32 %v4314, %v4408
          %v4410 = vmul.f32 %v4315, %v4408
          %v4411 = vmul.f32 %v4316, %v4408
          %v4412 = vmul.f32 %v4317, %v4408
          %v4413 = vmul.f32 %v4318, %v4408
          %v4414 = vmul.f32 %v4319, %v4408
          %v4415 = vmul.f32 %v4320, %v4408
          %v4416 = vmul.f32 %v4321, %v4408
          %v4417 = vmul.f32 %v4322, %v4408
          %v4418 = vmul.f32 %v4323, %v4408
          %v4419 = vmul.f32 %v4324, %v4408
          %v4420 = vmul.f32 %v4325, %v4408
          %v4421 = vmul.f32 %v4326, %v4408
          %v4422 = vmul.f32 %v4327, %v4408
          %v4423 = vmul.f32 %v4328, %v4408
          %v4424 = vmul.f32 %v4329, %v4408
          %v4425 = vadd.f32 %v4388, %v4409
          %v4426 = vadd.f32 %v4389, %v4410
          %v4427 = vadd.f32 %v4390, %v4411
          %v4428 = vadd.f32 %v4391, %v4412
          %v4429 = vadd.f32 %v4392, %v4413
          %v4430 = vadd.f32 %v4393, %v4414
          %v4431 = vadd.f32 %v4394, %v4415
          %v4432 = vadd.f32 %v4395, %v4416
          %v4433 = vadd.f32 %v4396, %v4417
          %v4434 = vadd.f32 %v4397, %v4418
          %v4435 = vadd.f32 %v4398, %v4419
          %v4436 = vadd.f32 %v4399, %v4420
          %v4437 = vadd.f32 %v4400, %v4421
          %v4438 = vadd.f32 %v4401, %v4422
          %v4439 = vadd.f32 %v4402, %v4423
          %v4440 = vadd.f32 %v4403, %v4424
          %v4441 = vld [vmem:[%s3444 + $0x10] sm:$0xff]
          %v4442 = vld [vmem:[%s3444 + $0x18] sm:$0xff]
          %v4443 = vld [vmem:[%s3444 + $0x40] sm:$0xff]
          %v4444 = vld [vmem:[%s3444 + $0x48] sm:$0xff]
          %v4445 = vld [vmem:[%s3444 + $0x70] sm:$0xff]
          %v4446 = vld [vmem:[%s3444 + $0x78] sm:$0xff]
          %v4447 = vld [vmem:[%s3444 + $0xa0] sm:$0xff]
          %v4448 = vld [vmem:[%s3444 + $0xa8] sm:$0xff]
          %v4449 = vld [vmem:[%s3444 + $0xd0] sm:$0xff]
          %v4450 = vld [vmem:[%s3444 + $0xd8] sm:$0xff]
          %v4451 = vld [vmem:[%s3444 + $0x100] sm:$0xff]
          %v4452 = vld [vmem:[%s3444 + $0x108] sm:$0xff]
          %v4453 = vld [vmem:[%s3444 + $0x130] sm:$0xff]
          %v4454 = vld [vmem:[%s3444 + $0x138] sm:$0xff]
          %v4455 = vld [vmem:[%s3444 + $0x160] sm:$0xff]
          %v4456 = vld [vmem:[%s3444 + $0x168] sm:$0xff]
          %v4457 = vld [vmem:[%s3444 + $0x190] sm:$0xff]
          %v4458 = vld [vmem:[%s3444 + $0x198] sm:$0xff]
          %v4459 = vld [vmem:[%s3444 + $0x1c0] sm:$0xff]
          %v4460 = vld [vmem:[%s3444 + $0x1c8] sm:$0xff]
          %v4461 = vld [vmem:[%s3444 + $0x1f0] sm:$0xff]
          %v4462 = vld [vmem:[%s3444 + $0x1f8] sm:$0xff]
          %v4463 = vld [vmem:[%s3444 + $0x220] sm:$0xff]
          %v4464 = vld [vmem:[%s3444 + $0x228] sm:$0xff]
          %v4465 = vld [vmem:[%s3444 + $0x250] sm:$0xff]
          %v4466 = vld [vmem:[%s3444 + $0x258] sm:$0xff]
          %v4467 = vld [vmem:[%s3444 + $0x280] sm:$0xff]
          %v4468 = vld [vmem:[%s3444 + $0x288] sm:$0xff]
          %v4469 = vld [vmem:[#allocation10 + $0x18] sm:$0x1]
          %v4470 = vlaneseq
          %v4471 = vshrl.u32 %v4470, 7
          %v4472 = vsub.s32 0, %v4471
          %v4473 = vrot.slane %v4469, %v4472
          %v4474 = vmul.f32 %v4441, %v4473
          %v4475 = vmul.f32 %v4442, %v4473
          %v4476 = vmul.f32 %v4443, %v4473
          %v4477 = vmul.f32 %v4444, %v4473
          %v4478 = vmul.f32 %v4445, %v4473
          %v4479 = vmul.f32 %v4446, %v4473
          %v4480 = vmul.f32 %v4447, %v4473
          %v4481 = vmul.f32 %v4448, %v4473
          %v4482 = vmul.f32 %v4449, %v4473
          %v4483 = vmul.f32 %v4450, %v4473
          %v4484 = vmul.f32 %v4451, %v4473
          %v4485 = vmul.f32 %v4452, %v4473
          %v4486 = vmul.f32 %v4453, %v4473
          %v4487 = vmul.f32 %v4454, %v4473
          %v4488 = vmul.f32 %v4455, %v4473
          %v4489 = vmul.f32 %v4456, %v4473
          %v4490 = vadd.f32 %v4425, %v4474
          %v4491 = vadd.f32 %v4426, %v4475
          %v4492 = vadd.f32 %v4427, %v4476
          %v4493 = vadd.f32 %v4428, %v4477
          %v4494 = vadd.f32 %v4429, %v4478
          %v4495 = vadd.f32 %v4430, %v4479
          %v4496 = vadd.f32 %v4431, %v4480
          %v4497 = vadd.f32 %v4432, %v4481
          %v4498 = vadd.f32 %v4433, %v4482
          %v4499 = vadd.f32 %v4434, %v4483
          %v4500 = vadd.f32 %v4435, %v4484
          %v4501 = vadd.f32 %v4436, %v4485
          %v4502 = vadd.f32 %v4437, %v4486
          %v4503 = vadd.f32 %v4438, %v4487
          %v4504 = vadd.f32 %v4439, %v4488
          %v4505 = vadd.f32 %v4440, %v4489
          %v4506 = vld [vmem:[#allocation10 + $0x1f] sm:$0x1]
          %v4507 = vlaneseq
          %v4508 = vshrl.u32 %v4507, 7
          %v4509 = vsub.s32 0, %v4508
          %v4510 = vrot.slane %v4506, %v4509
          %v4511 = vmul.f32 %v4447, %v4510
          %v4512 = vmul.f32 %v4448, %v4510
          %v4513 = vmul.f32 %v4449, %v4510
          %v4514 = vmul.f32 %v4450, %v4510
          %v4515 = vmul.f32 %v4451, %v4510
          %v4516 = vmul.f32 %v4452, %v4510
          %v4517 = vmul.f32 %v4453, %v4510
          %v4518 = vmul.f32 %v4454, %v4510
          %v4519 = vmul.f32 %v4455, %v4510
          %v4520 = vmul.f32 %v4456, %v4510
          %v4521 = vmul.f32 %v4457, %v4510
          %v4522 = vmul.f32 %v4458, %v4510
          %v4523 = vmul.f32 %v4459, %v4510
          %v4524 = vmul.f32 %v4460, %v4510
          %v4525 = vmul.f32 %v4461, %v4510
          %v4526 = vmul.f32 %v4462, %v4510
          %v4527 = vadd.f32 %v4490, %v4511
          %v4528 = vadd.f32 %v4491, %v4512
          %v4529 = vadd.f32 %v4492, %v4513
          %v4530 = vadd.f32 %v4493, %v4514
          %v4531 = vadd.f32 %v4494, %v4515
          %v4532 = vadd.f32 %v4495, %v4516
          %v4533 = vadd.f32 %v4496, %v4517
          %v4534 = vadd.f32 %v4497, %v4518
          %v4535 = vadd.f32 %v4498, %v4519
          %v4536 = vadd.f32 %v4499, %v4520
          %v4537 = vadd.f32 %v4500, %v4521
          %v4538 = vadd.f32 %v4501, %v4522
          %v4539 = vadd.f32 %v4502, %v4523
          %v4540 = vadd.f32 %v4503, %v4524
          %v4541 = vadd.f32 %v4504, %v4525
          %v4542 = vadd.f32 %v4505, %v4526
          %v4543 = vld [vmem:[#allocation10 + $0x26] sm:$0x1]
          %v4544 = vlaneseq
          %v4545 = vshrl.u32 %v4544, 7
          %v4546 = vsub.s32 0, %v4545
          %v4547 = vrot.slane %v4543, %v4546
          %v4548 = vmul.f32 %v4453, %v4547
          %v4549 = vmul.f32 %v4454, %v4547
          %v4550 = vmul.f32 %v4455, %v4547
          %v4551 = vmul.f32 %v4456, %v4547
          %v4552 = vmul.f32 %v4457, %v4547
          %v4553 = vmul.f32 %v4458, %v4547
          %v4554 = vmul.f32 %v4459, %v4547
          %v4555 = vmul.f32 %v4460, %v4547
          %v4556 = vmul.f32 %v4461, %v4547
          %v4557 = vmul.f32 %v4462, %v4547
          %v4558 = vmul.f32 %v4463, %v4547
          %v4559 = vmul.f32 %v4464, %v4547
          %v4560 = vmul.f32 %v4465, %v4547
          %v4561 = vmul.f32 %v4466, %v4547
          %v4562 = vmul.f32 %v4467, %v4547
          %v4563 = vmul.f32 %v4468, %v4547
          %v4564 = vadd.f32 %v4527, %v4548
          %v4565 = vadd.f32 %v4528, %v4549
          %v4566 = vadd.f32 %v4529, %v4550
          %v4567 = vadd.f32 %v4530, %v4551
          %v4568 = vadd.f32 %v4531, %v4552
          %v4569 = vadd.f32 %v4532, %v4553
          %v4570 = vadd.f32 %v4533, %v4554
          %v4571 = vadd.f32 %v4534, %v4555
          %v4572 = vadd.f32 %v4535, %v4556
          %v4573 = vadd.f32 %v4536, %v4557
          %v4574 = vadd.f32 %v4537, %v4558
          %v4575 = vadd.f32 %v4538, %v4559
          %v4576 = vadd.f32 %v4539, %v4560
          %v4577 = vadd.f32 %v4540, %v4561
          %v4578 = vadd.f32 %v4541, %v4562
          %v4579 = vadd.f32 %v4542, %v4563
          %v4580 = vld [vmem:[%s3586 + $0x10] sm:$0xff]
          %v4581 = vld [vmem:[%s3586 + $0x18] sm:$0xff]
          %v4582 = vld [vmem:[%s3586 + $0x40] sm:$0xff]
          %v4583 = vld [vmem:[%s3586 + $0x48] sm:$0xff]
          %v4584 = vld [vmem:[%s3586 + $0x70] sm:$0xff]
          %v4585 = vld [vmem:[%s3586 + $0x78] sm:$0xff]
          %v4586 = vld [vmem:[%s3586 + $0xa0] sm:$0xff]
          %v4587 = vld [vmem:[%s3586 + $0xa8] sm:$0xff]
          %v4588 = vld [vmem:[%s3586 + $0xd0] sm:$0xff]
          %v4589 = vld [vmem:[%s3586 + $0xd8] sm:$0xff]
          %v4590 = vld [vmem:[%s3586 + $0x100] sm:$0xff]
          %v4591 = vld [vmem:[%s3586 + $0x108] sm:$0xff]
          %v4592 = vld [vmem:[%s3586 + $0x130] sm:$0xff]
          %v4593 = vld [vmem:[%s3586 + $0x138] sm:$0xff]
          %v4594 = vld [vmem:[%s3586 + $0x160] sm:$0xff]
          %v4595 = vld [vmem:[%s3586 + $0x168] sm:$0xff]
          %v4596 = vld [vmem:[#allocation10 + $0x2d] sm:$0x1]
          %v4597 = vlaneseq
          %v4598 = vshrl.u32 %v4597, 7
          %v4599 = vsub.s32 0, %v4598
          %v4600 = vrot.slane %v4596, %v4599
          %v4601 = vmul.f32 %v4580, %v4600
          %v4602 = vmul.f32 %v4581, %v4600
          %v4603 = vmul.f32 %v4582, %v4600
          %v4604 = vmul.f32 %v4583, %v4600
          %v4605 = vmul.f32 %v4584, %v4600
          %v4606 = vmul.f32 %v4585, %v4600
          %v4607 = vmul.f32 %v4586, %v4600
          %v4608 = vmul.f32 %v4587, %v4600
          %v4609 = vmul.f32 %v4588, %v4600
          %v4610 = vmul.f32 %v4589, %v4600
          %v4611 = vmul.f32 %v4590, %v4600
          %v4612 = vmul.f32 %v4591, %v4600
          %v4613 = vmul.f32 %v4592, %v4600
          %v4614 = vmul.f32 %v4593, %v4600
          %v4615 = vmul.f32 %v4594, %v4600
          %v4616 = vmul.f32 %v4595, %v4600
          %v4617 = vadd.f32 %v4564, %v4601
          %v4618 = vadd.f32 %v4565, %v4602
          %v4619 = vadd.f32 %v4566, %v4603
          %v4620 = vadd.f32 %v4567, %v4604
          %v4621 = vadd.f32 %v4568, %v4605
          %v4622 = vadd.f32 %v4569, %v4606
          %v4623 = vadd.f32 %v4570, %v4607
          %v4624 = vadd.f32 %v4571, %v4608
          %v4625 = vadd.f32 %v4572, %v4609
          %v4626 = vadd.f32 %v4573, %v4610
          %v4627 = vadd.f32 %v4574, %v4611
          %v4628 = vadd.f32 %v4575, %v4612
          %v4629 = vadd.f32 %v4576, %v4613
          %v4630 = vadd.f32 %v4577, %v4614
          %v4631 = vadd.f32 %v4578, %v4615
          %v4632 = vadd.f32 %v4579, %v4616
          %v4633 = vld [vmem:[%s3302 + $0x13] sm:$0xff]
          %v4634 = vld [vmem:[%s3302 + $0x1b] sm:$0xff]
          %v4635 = vld [vmem:[%s3302 + $0x43] sm:$0xff]
          %v4636 = vld [vmem:[%s3302 + $0x4b] sm:$0xff]
          %v4637 = vld [vmem:[%s3302 + $0x73] sm:$0xff]
          %v4638 = vld [vmem:[%s3302 + $0x7b] sm:$0xff]
          %v4639 = vld [vmem:[%s3302 + $0xa3] sm:$0xff]
          %v4640 = vld [vmem:[%s3302 + $0xab] sm:$0xff]
          %v4641 = vld [vmem:[%s3302 + $0xd3] sm:$0xff]
          %v4642 = vld [vmem:[%s3302 + $0xdb] sm:$0xff]
          %v4643 = vld [vmem:[%s3302 + $0x103] sm:$0xff]
          %v4644 = vld [vmem:[%s3302 + $0x10b] sm:$0xff]
          %v4645 = vld [vmem:[%s3302 + $0x133] sm:$0xff]
          %v4646 = vld [vmem:[%s3302 + $0x13b] sm:$0xff]
          %v4647 = vld [vmem:[%s3302 + $0x163] sm:$0xff]
          %v4648 = vld [vmem:[%s3302 + $0x16b] sm:$0xff]
          %v4649 = vld [vmem:[%s3302 + $0x193] sm:$0xff]
          %v4650 = vld [vmem:[%s3302 + $0x19b] sm:$0xff]
          %v4651 = vld [vmem:[%s3302 + $0x1c3] sm:$0xff]
          %v4652 = vld [vmem:[%s3302 + $0x1cb] sm:$0xff]
          %v4653 = vld [vmem:[%s3302 + $0x1f3] sm:$0xff]
          %v4654 = vld [vmem:[%s3302 + $0x1fb] sm:$0xff]
          %v4655 = vld [vmem:[%s3302 + $0x223] sm:$0xff]
          %v4656 = vld [vmem:[%s3302 + $0x22b] sm:$0xff]
          %v4657 = vld [vmem:[%s3302 + $0x253] sm:$0xff]
          %v4658 = vld [vmem:[%s3302 + $0x25b] sm:$0xff]
          %v4659 = vld [vmem:[%s3302 + $0x283] sm:$0xff]
          %v4660 = vld [vmem:[%s3302 + $0x28b] sm:$0xff]
          %v4661 = vld [vmem:[#allocation10 + $0x4] sm:$0x1]
          %v4662 = vlaneseq
          %v4663 = vshrl.u32 %v4662, 7
          %v4664 = vsub.s32 0, %v4663
          %v4665 = vrot.slane %v4661, %v4664
          %v4666 = vmul.f32 %v4633, %v4665
          %v4667 = vmul.f32 %v4634, %v4665
          %v4668 = vmul.f32 %v4635, %v4665
          %v4669 = vmul.f32 %v4636, %v4665
          %v4670 = vmul.f32 %v4637, %v4665
          %v4671 = vmul.f32 %v4638, %v4665
          %v4672 = vmul.f32 %v4639, %v4665
          %v4673 = vmul.f32 %v4640, %v4665
          %v4674 = vmul.f32 %v4641, %v4665
          %v4675 = vmul.f32 %v4642, %v4665
          %v4676 = vmul.f32 %v4643, %v4665
          %v4677 = vmul.f32 %v4644, %v4665
          %v4678 = vmul.f32 %v4645, %v4665
          %v4679 = vmul.f32 %v4646, %v4665
          %v4680 = vmul.f32 %v4647, %v4665
          %v4681 = vmul.f32 %v4648, %v4665
          %v4682 = vadd.f32 %v4617, %v4666
          %v4683 = vadd.f32 %v4618, %v4667
          %v4684 = vadd.f32 %v4619, %v4668
          %v4685 = vadd.f32 %v4620, %v4669
          %v4686 = vadd.f32 %v4621, %v4670
          %v4687 = vadd.f32 %v4622, %v4671
          %v4688 = vadd.f32 %v4623, %v4672
          %v4689 = vadd.f32 %v4624, %v4673
          %v4690 = vadd.f32 %v4625, %v4674
          %v4691 = vadd.f32 %v4626, %v4675
          %v4692 = vadd.f32 %v4627, %v4676
          %v4693 = vadd.f32 %v4628, %v4677
          %v4694 = vadd.f32 %v4629, %v4678
          %v4695 = vadd.f32 %v4630, %v4679
          %v4696 = vadd.f32 %v4631, %v4680
          %v4697 = vadd.f32 %v4632, %v4681
          %v4698 = vld [vmem:[#allocation10 + $0xb] sm:$0x1]
          %v4699 = vlaneseq
          %v4700 = vshrl.u32 %v4699, 7
          %v4701 = vsub.s32 0, %v4700
          %v4702 = vrot.slane %v4698, %v4701
          %v4703 = vmul.f32 %v4639, %v4702
          %v4704 = vmul.f32 %v4640, %v4702
          %v4705 = vmul.f32 %v4641, %v4702
          %v4706 = vmul.f32 %v4642, %v4702
          %v4707 = vmul.f32 %v4643, %v4702
          %v4708 = vmul.f32 %v4644, %v4702
          %v4709 = vmul.f32 %v4645, %v4702
          %v4710 = vmul.f32 %v4646, %v4702
          %v4711 = vmul.f32 %v4647, %v4702
          %v4712 = vmul.f32 %v4648, %v4702
          %v4713 = vmul.f32 %v4649, %v4702
          %v4714 = vmul.f32 %v4650, %v4702
          %v4715 = vmul.f32 %v4651, %v4702
          %v4716 = vmul.f32 %v4652, %v4702
          %v4717 = vmul.f32 %v4653, %v4702
          %v4718 = vmul.f32 %v4654, %v4702
          %v4719 = vadd.f32 %v4682, %v4703
          %v4720 = vadd.f32 %v4683, %v4704
          %v4721 = vadd.f32 %v4684, %v4705
          %v4722 = vadd.f32 %v4685, %v4706
          %v4723 = vadd.f32 %v4686, %v4707
          %v4724 = vadd.f32 %v4687, %v4708
          %v4725 = vadd.f32 %v4688, %v4709
          %v4726 = vadd.f32 %v4689, %v4710
          %v4727 = vadd.f32 %v4690, %v4711
          %v4728 = vadd.f32 %v4691, %v4712
          %v4729 = vadd.f32 %v4692, %v4713
          %v4730 = vadd.f32 %v4693, %v4714
          %v4731 = vadd.f32 %v4694, %v4715
          %v4732 = vadd.f32 %v4695, %v4716
          %v4733 = vadd.f32 %v4696, %v4717
          %v4734 = vadd.f32 %v4697, %v4718
          %v4735 = vld [vmem:[#allocation10 + $0x12] sm:$0x1]
          %v4736 = vlaneseq
          %v4737 = vshrl.u32 %v4736, 7
          %v4738 = vsub.s32 0, %v4737
          %v4739 = vrot.slane %v4735, %v4738
          %v4740 = vmul.f32 %v4645, %v4739
          %v4741 = vmul.f32 %v4646, %v4739
          %v4742 = vmul.f32 %v4647, %v4739
          %v4743 = vmul.f32 %v4648, %v4739
          %v4744 = vmul.f32 %v4649, %v4739
          %v4745 = vmul.f32 %v4650, %v4739
          %v4746 = vmul.f32 %v4651, %v4739
          %v4747 = vmul.f32 %v4652, %v4739
          %v4748 = vmul.f32 %v4653, %v4739
          %v4749 = vmul.f32 %v4654, %v4739
          %v4750 = vmul.f32 %v4655, %v4739
          %v4751 = vmul.f32 %v4656, %v4739
          %v4752 = vmul.f32 %v4657, %v4739
          %v4753 = vmul.f32 %v4658, %v4739
          %v4754 = vmul.f32 %v4659, %v4739
          %v4755 = vmul.f32 %v4660, %v4739
          %v4756 = vadd.f32 %v4719, %v4740
          %v4757 = vadd.f32 %v4720, %v4741
          %v4758 = vadd.f32 %v4721, %v4742
          %v4759 = vadd.f32 %v4722, %v4743
          %v4760 = vadd.f32 %v4723, %v4744
          %v4761 = vadd.f32 %v4724, %v4745
          %v4762 = vadd.f32 %v4725, %v4746
          %v4763 = vadd.f32 %v4726, %v4747
          %v4764 = vadd.f32 %v4727, %v4748
          %v4765 = vadd.f32 %v4728, %v4749
          %v4766 = vadd.f32 %v4729, %v4750
          %v4767 = vadd.f32 %v4730, %v4751
          %v4768 = vadd.f32 %v4731, %v4752
          %v4769 = vadd.f32 %v4732, %v4753
          %v4770 = vadd.f32 %v4733, %v4754
          %v4771 = vadd.f32 %v4734, %v4755
          %v4772 = vld [vmem:[%s3444 + $0x13] sm:$0xff]
          %v4773 = vld [vmem:[%s3444 + $0x1b] sm:$0xff]
          %v4774 = vld [vmem:[%s3444 + $0x43] sm:$0xff]
          %v4775 = vld [vmem:[%s3444 + $0x4b] sm:$0xff]
          %v4776 = vld [vmem:[%s3444 + $0x73] sm:$0xff]
          %v4777 = vld [vmem:[%s3444 + $0x7b] sm:$0xff]
          %v4778 = vld [vmem:[%s3444 + $0xa3] sm:$0xff]
          %v4779 = vld [vmem:[%s3444 + $0xab] sm:$0xff]
          %v4780 = vld [vmem:[%s3444 + $0xd3] sm:$0xff]
          %v4781 = vld [vmem:[%s3444 + $0xdb] sm:$0xff]
          %v4782 = vld [vmem:[%s3444 + $0x103] sm:$0xff]
          %v4783 = vld [vmem:[%s3444 + $0x10b] sm:$0xff]
          %v4784 = vld [vmem:[%s3444 + $0x133] sm:$0xff]
          %v4785 = vld [vmem:[%s3444 + $0x13b] sm:$0xff]
          %v4786 = vld [vmem:[%s3444 + $0x163] sm:$0xff]
          %v4787 = vld [vmem:[%s3444 + $0x16b] sm:$0xff]
          %v4788 = vld [vmem:[%s3444 + $0x193] sm:$0xff]
          %v4789 = vld [vmem:[%s3444 + $0x19b] sm:$0xff]
          %v4790 = vld [vmem:[%s3444 + $0x1c3] sm:$0xff]
          %v4791 = vld [vmem:[%s3444 + $0x1cb] sm:$0xff]
          %v4792 = vld [vmem:[%s3444 + $0x1f3] sm:$0xff]
          %v4793 = vld [vmem:[%s3444 + $0x1fb] sm:$0xff]
          %v4794 = vld [vmem:[%s3444 + $0x223] sm:$0xff]
          %v4795 = vld [vmem:[%s3444 + $0x22b] sm:$0xff]
          %v4796 = vld [vmem:[%s3444 + $0x253] sm:$0xff]
          %v4797 = vld [vmem:[%s3444 + $0x25b] sm:$0xff]
          %v4798 = vld [vmem:[%s3444 + $0x283] sm:$0xff]
          %v4799 = vld [vmem:[%s3444 + $0x28b] sm:$0xff]
          %v4800 = vld [vmem:[#allocation10 + $0x19] sm:$0x1]
          %v4801 = vlaneseq
          %v4802 = vshrl.u32 %v4801, 7
          %v4803 = vsub.s32 0, %v4802
          %v4804 = vrot.slane %v4800, %v4803
          %v4805 = vmul.f32 %v4772, %v4804
          %v4806 = vmul.f32 %v4773, %v4804
          %v4807 = vmul.f32 %v4774, %v4804
          %v4808 = vmul.f32 %v4775, %v4804
          %v4809 = vmul.f32 %v4776, %v4804
          %v4810 = vmul.f32 %v4777, %v4804
          %v4811 = vmul.f32 %v4778, %v4804
          %v4812 = vmul.f32 %v4779, %v4804
          %v4813 = vmul.f32 %v4780, %v4804
          %v4814 = vmul.f32 %v4781, %v4804
          %v4815 = vmul.f32 %v4782, %v4804
          %v4816 = vmul.f32 %v4783, %v4804
          %v4817 = vmul.f32 %v4784, %v4804
          %v4818 = vmul.f32 %v4785, %v4804
          %v4819 = vmul.f32 %v4786, %v4804
          %v4820 = vmul.f32 %v4787, %v4804
          %v4821 = vadd.f32 %v4756, %v4805
          %v4822 = vadd.f32 %v4757, %v4806
          %v4823 = vadd.f32 %v4758, %v4807
          %v4824 = vadd.f32 %v4759, %v4808
          %v4825 = vadd.f32 %v4760, %v4809
          %v4826 = vadd.f32 %v4761, %v4810
          %v4827 = vadd.f32 %v4762, %v4811
          %v4828 = vadd.f32 %v4763, %v4812
          %v4829 = vadd.f32 %v4764, %v4813
          %v4830 = vadd.f32 %v4765, %v4814
          %v4831 = vadd.f32 %v4766, %v4815
          %v4832 = vadd.f32 %v4767, %v4816
          %v4833 = vadd.f32 %v4768, %v4817
          %v4834 = vadd.f32 %v4769, %v4818
          %v4835 = vadd.f32 %v4770, %v4819
          %v4836 = vadd.f32 %v4771, %v4820
          %v4837 = vld [vmem:[#allocation10 + $0x20] sm:$0x1]
          %v4838 = vlaneseq
          %v4839 = vshrl.u32 %v4838, 7
          %v4840 = vsub.s32 0, %v4839
          %v4841 = vrot.slane %v4837, %v4840
          %v4842 = vmul.f32 %v4778, %v4841
          %v4843 = vmul.f32 %v4779, %v4841
          %v4844 = vmul.f32 %v4780, %v4841
          %v4845 = vmul.f32 %v4781, %v4841
          %v4846 = vmul.f32 %v4782, %v4841
          %v4847 = vmul.f32 %v4783, %v4841
          %v4848 = vmul.f32 %v4784, %v4841
          %v4849 = vmul.f32 %v4785, %v4841
          %v4850 = vmul.f32 %v4786, %v4841
          %v4851 = vmul.f32 %v4787, %v4841
          %v4852 = vmul.f32 %v4788, %v4841
          %v4853 = vmul.f32 %v4789, %v4841
          %v4854 = vmul.f32 %v4790, %v4841
          %v4855 = vmul.f32 %v4791, %v4841
          %v4856 = vmul.f32 %v4792, %v4841
          %v4857 = vmul.f32 %v4793, %v4841
          %v4858 = vadd.f32 %v4821, %v4842
          %v4859 = vadd.f32 %v4822, %v4843
          %v4860 = vadd.f32 %v4823, %v4844
          %v4861 = vadd.f32 %v4824, %v4845
          %v4862 = vadd.f32 %v4825, %v4846
          %v4863 = vadd.f32 %v4826, %v4847
          %v4864 = vadd.f32 %v4827, %v4848
          %v4865 = vadd.f32 %v4828, %v4849
          %v4866 = vadd.f32 %v4829, %v4850
          %v4867 = vadd.f32 %v4830, %v4851
          %v4868 = vadd.f32 %v4831, %v4852
          %v4869 = vadd.f32 %v4832, %v4853
          %v4870 = vadd.f32 %v4833, %v4854
          %v4871 = vadd.f32 %v4834, %v4855
          %v4872 = vadd.f32 %v4835, %v4856
          %v4873 = vadd.f32 %v4836, %v4857
          %v4874 = vld [vmem:[#allocation10 + $0x27] sm:$0x1]
          %v4875 = vlaneseq
          %v4876 = vshrl.u32 %v4875, 7
          %v4877 = vsub.s32 0, %v4876
          %v4878 = vrot.slane %v4874, %v4877
          %v4879 = vmul.f32 %v4784, %v4878
          %v4880 = vmul.f32 %v4785, %v4878
          %v4881 = vmul.f32 %v4786, %v4878
          %v4882 = vmul.f32 %v4787, %v4878
          %v4883 = vmul.f32 %v4788, %v4878
          %v4884 = vmul.f32 %v4789, %v4878
          %v4885 = vmul.f32 %v4790, %v4878
          %v4886 = vmul.f32 %v4791, %v4878
          %v4887 = vmul.f32 %v4792, %v4878
          %v4888 = vmul.f32 %v4793, %v4878
          %v4889 = vmul.f32 %v4794, %v4878
          %v4890 = vmul.f32 %v4795, %v4878
          %v4891 = vmul.f32 %v4796, %v4878
          %v4892 = vmul.f32 %v4797, %v4878
          %v4893 = vmul.f32 %v4798, %v4878
          %v4894 = vmul.f32 %v4799, %v4878
          %v4895 = vadd.f32 %v4858, %v4879
          %v4896 = vadd.f32 %v4859, %v4880
          %v4897 = vadd.f32 %v4860, %v4881
          %v4898 = vadd.f32 %v4861, %v4882
          %v4899 = vadd.f32 %v4862, %v4883
          %v4900 = vadd.f32 %v4863, %v4884
          %v4901 = vadd.f32 %v4864, %v4885
          %v4902 = vadd.f32 %v4865, %v4886
          %v4903 = vadd.f32 %v4866, %v4887
          %v4904 = vadd.f32 %v4867, %v4888
          %v4905 = vadd.f32 %v4868, %v4889
          %v4906 = vadd.f32 %v4869, %v4890
          %v4907 = vadd.f32 %v4870, %v4891
          %v4908 = vadd.f32 %v4871, %v4892
          %v4909 = vadd.f32 %v4872, %v4893
          %v4910 = vadd.f32 %v4873, %v4894
          %v4911 = vld [vmem:[%s3586 + $0x13] sm:$0xff]
          %v4912 = vld [vmem:[%s3586 + $0x1b] sm:$0xff]
          %v4913 = vld [vmem:[%s3586 + $0x43] sm:$0xff]
          %v4914 = vld [vmem:[%s3586 + $0x4b] sm:$0xff]
          %v4915 = vld [vmem:[%s3586 + $0x73] sm:$0xff]
          %v4916 = vld [vmem:[%s3586 + $0x7b] sm:$0xff]
          %v4917 = vld [vmem:[%s3586 + $0xa3] sm:$0xff]
          %v4918 = vld [vmem:[%s3586 + $0xab] sm:$0xff]
          %v4919 = vld [vmem:[%s3586 + $0xd3] sm:$0xff]
          %v4920 = vld [vmem:[%s3586 + $0xdb] sm:$0xff]
          %v4921 = vld [vmem:[%s3586 + $0x103] sm:$0xff]
          %v4922 = vld [vmem:[%s3586 + $0x10b] sm:$0xff]
          %v4923 = vld [vmem:[%s3586 + $0x133] sm:$0xff]
          %v4924 = vld [vmem:[%s3586 + $0x13b] sm:$0xff]
          %v4925 = vld [vmem:[%s3586 + $0x163] sm:$0xff]
          %v4926 = vld [vmem:[%s3586 + $0x16b] sm:$0xff]
          %v4927 = vld [vmem:[#allocation10 + $0x2e] sm:$0x1]
          %v4928 = vlaneseq
          %v4929 = vshrl.u32 %v4928, 7
          %v4930 = vsub.s32 0, %v4929
          %v4931 = vrot.slane %v4927, %v4930
          %v4932 = vmul.f32 %v4911, %v4931
          %v4933 = vmul.f32 %v4912, %v4931
          %v4934 = vmul.f32 %v4913, %v4931
          %v4935 = vmul.f32 %v4914, %v4931
          %v4936 = vmul.f32 %v4915, %v4931
          %v4937 = vmul.f32 %v4916, %v4931
          %v4938 = vmul.f32 %v4917, %v4931
          %v4939 = vmul.f32 %v4918, %v4931
          %v4940 = vmul.f32 %v4919, %v4931
          %v4941 = vmul.f32 %v4920, %v4931
          %v4942 = vmul.f32 %v4921, %v4931
          %v4943 = vmul.f32 %v4922, %v4931
          %v4944 = vmul.f32 %v4923, %v4931
          %v4945 = vmul.f32 %v4924, %v4931
          %v4946 = vmul.f32 %v4925, %v4931
          %v4947 = vmul.f32 %v4926, %v4931
          %v4948 = vadd.f32 %v4895, %v4932
          %v4949 = vadd.f32 %v4896, %v4933
          %v4950 = vadd.f32 %v4897, %v4934
          %v4951 = vadd.f32 %v4898, %v4935
          %v4952 = vadd.f32 %v4899, %v4936
          %v4953 = vadd.f32 %v4900, %v4937
          %v4954 = vadd.f32 %v4901, %v4938
          %v4955 = vadd.f32 %v4902, %v4939
          %v4956 = vadd.f32 %v4903, %v4940
          %v4957 = vadd.f32 %v4904, %v4941
          %v4958 = vadd.f32 %v4905, %v4942
          %v4959 = vadd.f32 %v4906, %v4943
          %v4960 = vadd.f32 %v4907, %v4944
          %v4961 = vadd.f32 %v4908, %v4945
          %v4962 = vadd.f32 %v4909, %v4946
          %v4963 = vadd.f32 %v4910, %v4947
          %v4964 = vld [vmem:[%s3302 + $0x16] sm:$0xff]
          %v4965 = vld [vmem:[%s3302 + $0x1e] sm:$0xff]
          %v4966 = vld [vmem:[%s3302 + $0x46] sm:$0xff]
          %v4967 = vld [vmem:[%s3302 + $0x4e] sm:$0xff]
          %v4968 = vld [vmem:[%s3302 + $0x76] sm:$0xff]
          %v4969 = vld [vmem:[%s3302 + $0x7e] sm:$0xff]
          %v4970 = vld [vmem:[%s3302 + $0xa6] sm:$0xff]
          %v4971 = vld [vmem:[%s3302 + $0xae] sm:$0xff]
          %v4972 = vld [vmem:[%s3302 + $0xd6] sm:$0xff]
          %v4973 = vld [vmem:[%s3302 + $0xde] sm:$0xff]
          %v4974 = vld [vmem:[%s3302 + $0x106] sm:$0xff]
          %v4975 = vld [vmem:[%s3302 + $0x10e] sm:$0xff]
          %v4976 = vld [vmem:[%s3302 + $0x136] sm:$0xff]
          %v4977 = vld [vmem:[%s3302 + $0x13e] sm:$0xff]
          %v4978 = vld [vmem:[%s3302 + $0x166] sm:$0xff]
          %v4979 = vld [vmem:[%s3302 + $0x16e] sm:$0xff]
          %v4980 = vld [vmem:[%s3302 + $0x196] sm:$0xff]
          %v4981 = vld [vmem:[%s3302 + $0x19e] sm:$0xff]
          %v4982 = vld [vmem:[%s3302 + $0x1c6] sm:$0xff]
          %v4983 = vld [vmem:[%s3302 + $0x1ce] sm:$0xff]
          %v4984 = vld [vmem:[%s3302 + $0x1f6] sm:$0xff]
          %v4985 = vld [vmem:[%s3302 + $0x1fe] sm:$0xff]
          %v4986 = vld [vmem:[%s3302 + $0x226] sm:$0xff]
          %v4987 = vld [vmem:[%s3302 + $0x22e] sm:$0xff]
          %v4988 = vld [vmem:[%s3302 + $0x256] sm:$0xff]
          %v4989 = vld [vmem:[%s3302 + $0x25e] sm:$0xff]
          %v4990 = vld [vmem:[%s3302 + $0x286] sm:$0xff]
          %v4991 = vld [vmem:[%s3302 + $0x28e] sm:$0xff]
          %v4992 = vld [vmem:[#allocation10 + $0x5] sm:$0x1]
          %v4993 = vlaneseq
          %v4994 = vshrl.u32 %v4993, 7
          %v4995 = vsub.s32 0, %v4994
          %v4996 = vrot.slane %v4992, %v4995
          %v4997 = vmul.f32 %v4964, %v4996
          %v4998 = vmul.f32 %v4965, %v4996
          %v4999 = vmul.f32 %v4966, %v4996
          %v5000 = vmul.f32 %v4967, %v4996
          %v5001 = vmul.f32 %v4968, %v4996
          %v5002 = vmul.f32 %v4969, %v4996
          %v5003 = vmul.f32 %v4970, %v4996
          %v5004 = vmul.f32 %v4971, %v4996
          %v5005 = vmul.f32 %v4972, %v4996
          %v5006 = vmul.f32 %v4973, %v4996
          %v5007 = vmul.f32 %v4974, %v4996
          %v5008 = vmul.f32 %v4975, %v4996
          %v5009 = vmul.f32 %v4976, %v4996
          %v5010 = vmul.f32 %v4977, %v4996
          %v5011 = vmul.f32 %v4978, %v4996
          %v5012 = vmul.f32 %v4979, %v4996
          %v5013 = vadd.f32 %v4948, %v4997
          %v5014 = vadd.f32 %v4949, %v4998
          %v5015 = vadd.f32 %v4950, %v4999
          %v5016 = vadd.f32 %v4951, %v5000
          %v5017 = vadd.f32 %v4952, %v5001
          %v5018 = vadd.f32 %v4953, %v5002
          %v5019 = vadd.f32 %v4954, %v5003
          %v5020 = vadd.f32 %v4955, %v5004
          %v5021 = vadd.f32 %v4956, %v5005
          %v5022 = vadd.f32 %v4957, %v5006
          %v5023 = vadd.f32 %v4958, %v5007
          %v5024 = vadd.f32 %v4959, %v5008
          %v5025 = vadd.f32 %v4960, %v5009
          %v5026 = vadd.f32 %v4961, %v5010
          %v5027 = vadd.f32 %v4962, %v5011
          %v5028 = vadd.f32 %v4963, %v5012
          %v5029 = vld [vmem:[#allocation10 + $0xc] sm:$0x1]
          %v5030 = vlaneseq
          %v5031 = vshrl.u32 %v5030, 7
          %v5032 = vsub.s32 0, %v5031
          %v5033 = vrot.slane %v5029, %v5032
          %v5034 = vmul.f32 %v4970, %v5033
          %v5035 = vmul.f32 %v4971, %v5033
          %v5036 = vmul.f32 %v4972, %v5033
          %v5037 = vmul.f32 %v4973, %v5033
          %v5038 = vmul.f32 %v4974, %v5033
          %v5039 = vmul.f32 %v4975, %v5033
          %v5040 = vmul.f32 %v4976, %v5033
          %v5041 = vmul.f32 %v4977, %v5033
          %v5042 = vmul.f32 %v4978, %v5033
          %v5043 = vmul.f32 %v4979, %v5033
          %v5044 = vmul.f32 %v4980, %v5033
          %v5045 = vmul.f32 %v4981, %v5033
          %v5046 = vmul.f32 %v4982, %v5033
          %v5047 = vmul.f32 %v4983, %v5033
          %v5048 = vmul.f32 %v4984, %v5033
          %v5049 = vmul.f32 %v4985, %v5033
          %v5050 = vadd.f32 %v5013, %v5034
          %v5051 = vadd.f32 %v5014, %v5035
          %v5052 = vadd.f32 %v5015, %v5036
          %v5053 = vadd.f32 %v5016, %v5037
          %v5054 = vadd.f32 %v5017, %v5038
          %v5055 = vadd.f32 %v5018, %v5039
          %v5056 = vadd.f32 %v5019, %v5040
          %v5057 = vadd.f32 %v5020, %v5041
          %v5058 = vadd.f32 %v5021, %v5042
          %v5059 = vadd.f32 %v5022, %v5043
          %v5060 = vadd.f32 %v5023, %v5044
          %v5061 = vadd.f32 %v5024, %v5045
          %v5062 = vadd.f32 %v5025, %v5046
          %v5063 = vadd.f32 %v5026, %v5047
          %v5064 = vadd.f32 %v5027, %v5048
          %v5065 = vadd.f32 %v5028, %v5049
          %v5066 = vld [vmem:[#allocation10 + $0x13] sm:$0x1]
          %v5067 = vlaneseq
          %v5068 = vshrl.u32 %v5067, 7
          %v5069 = vsub.s32 0, %v5068
          %v5070 = vrot.slane %v5066, %v5069
          %v5071 = vmul.f32 %v4976, %v5070
          %v5072 = vmul.f32 %v4977, %v5070
          %v5073 = vmul.f32 %v4978, %v5070
          %v5074 = vmul.f32 %v4979, %v5070
          %v5075 = vmul.f32 %v4980, %v5070
          %v5076 = vmul.f32 %v4981, %v5070
          %v5077 = vmul.f32 %v4982, %v5070
          %v5078 = vmul.f32 %v4983, %v5070
          %v5079 = vmul.f32 %v4984, %v5070
          %v5080 = vmul.f32 %v4985, %v5070
          %v5081 = vmul.f32 %v4986, %v5070
          %v5082 = vmul.f32 %v4987, %v5070
          %v5083 = vmul.f32 %v4988, %v5070
          %v5084 = vmul.f32 %v4989, %v5070
          %v5085 = vmul.f32 %v4990, %v5070
          %v5086 = vmul.f32 %v4991, %v5070
          %v5087 = vadd.f32 %v5050, %v5071
          %v5088 = vadd.f32 %v5051, %v5072
          %v5089 = vadd.f32 %v5052, %v5073
          %v5090 = vadd.f32 %v5053, %v5074
          %v5091 = vadd.f32 %v5054, %v5075
          %v5092 = vadd.f32 %v5055, %v5076
          %v5093 = vadd.f32 %v5056, %v5077
          %v5094 = vadd.f32 %v5057, %v5078
          %v5095 = vadd.f32 %v5058, %v5079
          %v5096 = vadd.f32 %v5059, %v5080
          %v5097 = vadd.f32 %v5060, %v5081
          %v5098 = vadd.f32 %v5061, %v5082
          %v5099 = vadd.f32 %v5062, %v5083
          %v5100 = vadd.f32 %v5063, %v5084
          %v5101 = vadd.f32 %v5064, %v5085
          %v5102 = vadd.f32 %v5065, %v5086
          %v5103 = vld [vmem:[%s3444 + $0x16] sm:$0xff]
          %v5104 = vld [vmem:[%s3444 + $0x1e] sm:$0xff]
          %v5105 = vld [vmem:[%s3444 + $0x46] sm:$0xff]
          %v5106 = vld [vmem:[%s3444 + $0x4e] sm:$0xff]
          %v5107 = vld [vmem:[%s3444 + $0x76] sm:$0xff]
          %v5108 = vld [vmem:[%s3444 + $0x7e] sm:$0xff]
          %v5109 = vld [vmem:[%s3444 + $0xa6] sm:$0xff]
          %v5110 = vld [vmem:[%s3444 + $0xae] sm:$0xff]
          %v5111 = vld [vmem:[%s3444 + $0xd6] sm:$0xff]
          %v5112 = vld [vmem:[%s3444 + $0xde] sm:$0xff]
          %v5113 = vld [vmem:[%s3444 + $0x106] sm:$0xff]
          %v5114 = vld [vmem:[%s3444 + $0x10e] sm:$0xff]
          %v5115 = vld [vmem:[%s3444 + $0x136] sm:$0xff]
          %v5116 = vld [vmem:[%s3444 + $0x13e] sm:$0xff]
          %v5117 = vld [vmem:[%s3444 + $0x166] sm:$0xff]
          %v5118 = vld [vmem:[%s3444 + $0x16e] sm:$0xff]
          %v5119 = vld [vmem:[%s3444 + $0x196] sm:$0xff]
          %v5120 = vld [vmem:[%s3444 + $0x19e] sm:$0xff]
          %v5121 = vld [vmem:[%s3444 + $0x1c6] sm:$0xff]
          %v5122 = vld [vmem:[%s3444 + $0x1ce] sm:$0xff]
          %v5123 = vld [vmem:[%s3444 + $0x1f6] sm:$0xff]
          %v5124 = vld [vmem:[%s3444 + $0x1fe] sm:$0xff]
          %v5125 = vld [vmem:[%s3444 + $0x226] sm:$0xff]
          %v5126 = vld [vmem:[%s3444 + $0x22e] sm:$0xff]
          %v5127 = vld [vmem:[%s3444 + $0x256] sm:$0xff]
          %v5128 = vld [vmem:[%s3444 + $0x25e] sm:$0xff]
          %v5129 = vld [vmem:[%s3444 + $0x286] sm:$0xff]
          %v5130 = vld [vmem:[%s3444 + $0x28e] sm:$0xff]
          %v5131 = vld [vmem:[#allocation10 + $0x1a] sm:$0x1]
          %v5132 = vlaneseq
          %v5133 = vshrl.u32 %v5132, 7
          %v5134 = vsub.s32 0, %v5133
          %v5135 = vrot.slane %v5131, %v5134
          %v5136 = vmul.f32 %v5103, %v5135
          %v5137 = vmul.f32 %v5104, %v5135
          %v5138 = vmul.f32 %v5105, %v5135
          %v5139 = vmul.f32 %v5106, %v5135
          %v5140 = vmul.f32 %v5107, %v5135
          %v5141 = vmul.f32 %v5108, %v5135
          %v5142 = vmul.f32 %v5109, %v5135
          %v5143 = vmul.f32 %v5110, %v5135
          %v5144 = vmul.f32 %v5111, %v5135
          %v5145 = vmul.f32 %v5112, %v5135
          %v5146 = vmul.f32 %v5113, %v5135
          %v5147 = vmul.f32 %v5114, %v5135
          %v5148 = vmul.f32 %v5115, %v5135
          %v5149 = vmul.f32 %v5116, %v5135
          %v5150 = vmul.f32 %v5117, %v5135
          %v5151 = vmul.f32 %v5118, %v5135
          %v5152 = vadd.f32 %v5087, %v5136
          %v5153 = vadd.f32 %v5088, %v5137
          %v5154 = vadd.f32 %v5089, %v5138
          %v5155 = vadd.f32 %v5090, %v5139
          %v5156 = vadd.f32 %v5091, %v5140
          %v5157 = vadd.f32 %v5092, %v5141
          %v5158 = vadd.f32 %v5093, %v5142
          %v5159 = vadd.f32 %v5094, %v5143
          %v5160 = vadd.f32 %v5095, %v5144
          %v5161 = vadd.f32 %v5096, %v5145
          %v5162 = vadd.f32 %v5097, %v5146
          %v5163 = vadd.f32 %v5098, %v5147
          %v5164 = vadd.f32 %v5099, %v5148
          %v5165 = vadd.f32 %v5100, %v5149
          %v5166 = vadd.f32 %v5101, %v5150
          %v5167 = vadd.f32 %v5102, %v5151
          %v5168 = vld [vmem:[#allocation10 + $0x21] sm:$0x1]
          %v5169 = vlaneseq
          %v5170 = vshrl.u32 %v5169, 7
          %v5171 = vsub.s32 0, %v5170
          %v5172 = vrot.slane %v5168, %v5171
          %v5173 = vmul.f32 %v5109, %v5172
          %v5174 = vmul.f32 %v5110, %v5172
          %v5175 = vmul.f32 %v5111, %v5172
          %v5176 = vmul.f32 %v5112, %v5172
          %v5177 = vmul.f32 %v5113, %v5172
          %v5178 = vmul.f32 %v5114, %v5172
          %v5179 = vmul.f32 %v5115, %v5172
          %v5180 = vmul.f32 %v5116, %v5172
          %v5181 = vmul.f32 %v5117, %v5172
          %v5182 = vmul.f32 %v5118, %v5172
          %v5183 = vmul.f32 %v5119, %v5172
          %v5184 = vmul.f32 %v5120, %v5172
          %v5185 = vmul.f32 %v5121, %v5172
          %v5186 = vmul.f32 %v5122, %v5172
          %v5187 = vmul.f32 %v5123, %v5172
          %v5188 = vmul.f32 %v5124, %v5172
          %v5189 = vadd.f32 %v5152, %v5173
          %v5190 = vadd.f32 %v5153, %v5174
          %v5191 = vadd.f32 %v5154, %v5175
          %v5192 = vadd.f32 %v5155, %v5176
          %v5193 = vadd.f32 %v5156, %v5177
          %v5194 = vadd.f32 %v5157, %v5178
          %v5195 = vadd.f32 %v5158, %v5179
          %v5196 = vadd.f32 %v5159, %v5180
          %v5197 = vadd.f32 %v5160, %v5181
          %v5198 = vadd.f32 %v5161, %v5182
          %v5199 = vadd.f32 %v5162, %v5183
          %v5200 = vadd.f32 %v5163, %v5184
          %v5201 = vadd.f32 %v5164, %v5185
          %v5202 = vadd.f32 %v5165, %v5186
          %v5203 = vadd.f32 %v5166, %v5187
          %v5204 = vadd.f32 %v5167, %v5188
          %v5205 = vld [vmem:[#allocation10 + $0x28] sm:$0x1]
          %v5206 = vlaneseq
          %v5207 = vshrl.u32 %v5206, 7
          %v5208 = vsub.s32 0, %v5207
          %v5209 = vrot.slane %v5205, %v5208
          %v5210 = vmul.f32 %v5115, %v5209
          %v5211 = vmul.f32 %v5116, %v5209
          %v5212 = vmul.f32 %v5117, %v5209
          %v5213 = vmul.f32 %v5118, %v5209
          %v5214 = vmul.f32 %v5119, %v5209
          %v5215 = vmul.f32 %v5120, %v5209
          %v5216 = vmul.f32 %v5121, %v5209
          %v5217 = vmul.f32 %v5122, %v5209
          %v5218 = vmul.f32 %v5123, %v5209
          %v5219 = vmul.f32 %v5124, %v5209
          %v5220 = vmul.f32 %v5125, %v5209
          %v5221 = vmul.f32 %v5126, %v5209
          %v5222 = vmul.f32 %v5127, %v5209
          %v5223 = vmul.f32 %v5128, %v5209
          %v5224 = vmul.f32 %v5129, %v5209
          %v5225 = vmul.f32 %v5130, %v5209
          %v5226 = vadd.f32 %v5189, %v5210
          %v5227 = vadd.f32 %v5190, %v5211
          %v5228 = vadd.f32 %v5191, %v5212
          %v5229 = vadd.f32 %v5192, %v5213
          %v5230 = vadd.f32 %v5193, %v5214
          %v5231 = vadd.f32 %v5194, %v5215
          %v5232 = vadd.f32 %v5195, %v5216
          %v5233 = vadd.f32 %v5196, %v5217
          %v5234 = vadd.f32 %v5197, %v5218
          %v5235 = vadd.f32 %v5198, %v5219
          %v5236 = vadd.f32 %v5199, %v5220
          %v5237 = vadd.f32 %v5200, %v5221
          %v5238 = vadd.f32 %v5201, %v5222
          %v5239 = vadd.f32 %v5202, %v5223
          %v5240 = vadd.f32 %v5203, %v5224
          %v5241 = vadd.f32 %v5204, %v5225
          %v5242 = vld [vmem:[%s3586 + $0x16] sm:$0xff]
          %v5243 = vld [vmem:[%s3586 + $0x1e] sm:$0xff]
          %v5244 = vld [vmem:[%s3586 + $0x46] sm:$0xff]
          %v5245 = vld [vmem:[%s3586 + $0x4e] sm:$0xff]
          %v5246 = vld [vmem:[%s3586 + $0x76] sm:$0xff]
          %v5247 = vld [vmem:[%s3586 + $0x7e] sm:$0xff]
          %v5248 = vld [vmem:[%s3586 + $0xa6] sm:$0xff]
          %v5249 = vld [vmem:[%s3586 + $0xae] sm:$0xff]
          %v5250 = vld [vmem:[%s3586 + $0xd6] sm:$0xff]
          %v5251 = vld [vmem:[%s3586 + $0xde] sm:$0xff]
          %v5252 = vld [vmem:[%s3586 + $0x106] sm:$0xff]
          %v5253 = vld [vmem:[%s3586 + $0x10e] sm:$0xff]
          %v5254 = vld [vmem:[%s3586 + $0x136] sm:$0xff]
          %v5255 = vld [vmem:[%s3586 + $0x13e] sm:$0xff]
          %v5256 = vld [vmem:[%s3586 + $0x166] sm:$0xff]
          %v5257 = vld [vmem:[%s3586 + $0x16e] sm:$0xff]
          %v5258 = vld [vmem:[#allocation10 + $0x2f] sm:$0x1]
          %v5259 = vlaneseq
          %v5260 = vshrl.u32 %v5259, 7
          %v5261 = vsub.s32 0, %v5260
          %v5262 = vrot.slane %v5258, %v5261
          %v5263 = vmul.f32 %v5242, %v5262
          %v5264 = vmul.f32 %v5243, %v5262
          %v5265 = vmul.f32 %v5244, %v5262
          %v5266 = vmul.f32 %v5245, %v5262
          %v5267 = vmul.f32 %v5246, %v5262
          %v5268 = vmul.f32 %v5247, %v5262
          %v5269 = vmul.f32 %v5248, %v5262
          %v5270 = vmul.f32 %v5249, %v5262
          %v5271 = vmul.f32 %v5250, %v5262
          %v5272 = vmul.f32 %v5251, %v5262
          %v5273 = vmul.f32 %v5252, %v5262
          %v5274 = vmul.f32 %v5253, %v5262
          %v5275 = vmul.f32 %v5254, %v5262
          %v5276 = vmul.f32 %v5255, %v5262
          %v5277 = vmul.f32 %v5256, %v5262
          %v5278 = vmul.f32 %v5257, %v5262
          %v5279 = vadd.f32 %v5226, %v5263
          %v5280 = vadd.f32 %v5227, %v5264
          %v5281 = vadd.f32 %v5228, %v5265
          %v5282 = vadd.f32 %v5229, %v5266
          %v5283 = vadd.f32 %v5230, %v5267
          %v5284 = vadd.f32 %v5231, %v5268
          %v5285 = vadd.f32 %v5232, %v5269
          %v5286 = vadd.f32 %v5233, %v5270
          %v5287 = vadd.f32 %v5234, %v5271
          %v5288 = vadd.f32 %v5235, %v5272
          %v5289 = vadd.f32 %v5236, %v5273
          %v5290 = vadd.f32 %v5237, %v5274
          %v5291 = vadd.f32 %v5238, %v5275
          %v5292 = vadd.f32 %v5239, %v5276
          %v5293 = vadd.f32 %v5240, %v5277
          %v5294 = vadd.f32 %v5241, %v5278
          %v5295 = vld [vmem:[%s3302 + $0x19] sm:$0xff]
          %v5296 = vld [vmem:[%s3302 + $0x21] sm:$0xff]
          %v5297 = vld [vmem:[%s3302 + $0x49] sm:$0xff]
          %v5298 = vld [vmem:[%s3302 + $0x51] sm:$0xff]
          %v5299 = vld [vmem:[%s3302 + $0x79] sm:$0xff]
          %v5300 = vld [vmem:[%s3302 + $0x81] sm:$0xff]
          %v5301 = vld [vmem:[%s3302 + $0xa9] sm:$0xff]
          %v5302 = vld [vmem:[%s3302 + $0xb1] sm:$0xff]
          %v5303 = vld [vmem:[%s3302 + $0xd9] sm:$0xff]
          %v5304 = vld [vmem:[%s3302 + $0xe1] sm:$0xff]
          %v5305 = vld [vmem:[%s3302 + $0x109] sm:$0xff]
          %v5306 = vld [vmem:[%s3302 + $0x111] sm:$0xff]
          %v5307 = vld [vmem:[%s3302 + $0x139] sm:$0xff]
          %v5308 = vld [vmem:[%s3302 + $0x141] sm:$0xff]
          %v5309 = vld [vmem:[%s3302 + $0x169] sm:$0xff]
          %v5310 = vld [vmem:[%s3302 + $0x171] sm:$0xff]
          %v5311 = vld [vmem:[%s3302 + $0x199] sm:$0xff]
          %v5312 = vld [vmem:[%s3302 + $0x1a1] sm:$0xff]
          %v5313 = vld [vmem:[%s3302 + $0x1c9] sm:$0xff]
          %v5314 = vld [vmem:[%s3302 + $0x1d1] sm:$0xff]
          %v5315 = vld [vmem:[%s3302 + $0x1f9] sm:$0xff]
          %v5316 = vld [vmem:[%s3302 + $0x201] sm:$0xff]
          %v5317 = vld [vmem:[%s3302 + $0x229] sm:$0xff]
          %v5318 = vld [vmem:[%s3302 + $0x231] sm:$0xff]
          %v5319 = vld [vmem:[%s3302 + $0x259] sm:$0xff]
          %v5320 = vld [vmem:[%s3302 + $0x261] sm:$0xff]
          %v5321 = vld [vmem:[%s3302 + $0x289] sm:$0xff]
          %v5322 = vld [vmem:[%s3302 + $0x291] sm:$0xff]
          %v5323 = vld [vmem:[#allocation10 + $0x6] sm:$0x1]
          %v5324 = vlaneseq
          %v5325 = vshrl.u32 %v5324, 7
          %v5326 = vsub.s32 0, %v5325
          %v5327 = vrot.slane %v5323, %v5326
          %v5328 = vmul.f32 %v5295, %v5327
          %v5329 = vmul.f32 %v5296, %v5327
          %v5330 = vmul.f32 %v5297, %v5327
          %v5331 = vmul.f32 %v5298, %v5327
          %v5332 = vmul.f32 %v5299, %v5327
          %v5333 = vmul.f32 %v5300, %v5327
          %v5334 = vmul.f32 %v5301, %v5327
          %v5335 = vmul.f32 %v5302, %v5327
          %v5336 = vmul.f32 %v5303, %v5327
          %v5337 = vmul.f32 %v5304, %v5327
          %v5338 = vmul.f32 %v5305, %v5327
          %v5339 = vmul.f32 %v5306, %v5327
          %v5340 = vmul.f32 %v5307, %v5327
          %v5341 = vmul.f32 %v5308, %v5327
          %v5342 = vmul.f32 %v5309, %v5327
          %v5343 = vmul.f32 %v5310, %v5327
          %v5344 = vadd.f32 %v5279, %v5328
          %v5345 = vadd.f32 %v5280, %v5329
          %v5346 = vadd.f32 %v5281, %v5330
          %v5347 = vadd.f32 %v5282, %v5331
          %v5348 = vadd.f32 %v5283, %v5332
          %v5349 = vadd.f32 %v5284, %v5333
          %v5350 = vadd.f32 %v5285, %v5334
          %v5351 = vadd.f32 %v5286, %v5335
          %v5352 = vadd.f32 %v5287, %v5336
          %v5353 = vadd.f32 %v5288, %v5337
          %v5354 = vadd.f32 %v5289, %v5338
          %v5355 = vadd.f32 %v5290, %v5339
          %v5356 = vadd.f32 %v5291, %v5340
          %v5357 = vadd.f32 %v5292, %v5341
          %v5358 = vadd.f32 %v5293, %v5342
          %v5359 = vadd.f32 %v5294, %v5343
          %v5360 = vld [vmem:[#allocation10 + $0xd] sm:$0x1]
          %v5361 = vlaneseq
          %v5362 = vshrl.u32 %v5361, 7
          %v5363 = vsub.s32 0, %v5362
          %v5364 = vrot.slane %v5360, %v5363
          %v5365 = vmul.f32 %v5301, %v5364
          %v5366 = vmul.f32 %v5302, %v5364
          %v5367 = vmul.f32 %v5303, %v5364
          %v5368 = vmul.f32 %v5304, %v5364
          %v5369 = vmul.f32 %v5305, %v5364
          %v5370 = vmul.f32 %v5306, %v5364
          %v5371 = vmul.f32 %v5307, %v5364
          %v5372 = vmul.f32 %v5308, %v5364
          %v5373 = vmul.f32 %v5309, %v5364
          %v5374 = vmul.f32 %v5310, %v5364
          %v5375 = vmul.f32 %v5311, %v5364
          %v5376 = vmul.f32 %v5312, %v5364
          %v5377 = vmul.f32 %v5313, %v5364
          %v5378 = vmul.f32 %v5314, %v5364
          %v5379 = vmul.f32 %v5315, %v5364
          %v5380 = vmul.f32 %v5316, %v5364
          %v5381 = vadd.f32 %v5344, %v5365
          %v5382 = vadd.f32 %v5345, %v5366
          %v5383 = vadd.f32 %v5346, %v5367
          %v5384 = vadd.f32 %v5347, %v5368
          %v5385 = vadd.f32 %v5348, %v5369
          %v5386 = vadd.f32 %v5349, %v5370
          %v5387 = vadd.f32 %v5350, %v5371
          %v5388 = vadd.f32 %v5351, %v5372
          %v5389 = vadd.f32 %v5352, %v5373
          %v5390 = vadd.f32 %v5353, %v5374
          %v5391 = vadd.f32 %v5354, %v5375
          %v5392 = vadd.f32 %v5355, %v5376
          %v5393 = vadd.f32 %v5356, %v5377
          %v5394 = vadd.f32 %v5357, %v5378
          %v5395 = vadd.f32 %v5358, %v5379
          %v5396 = vadd.f32 %v5359, %v5380
          %v5397 = vld [vmem:[#allocation10 + $0x14] sm:$0x1]
          %v5398 = vlaneseq
          %v5399 = vshrl.u32 %v5398, 7
          %v5400 = vsub.s32 0, %v5399
          %v5401 = vrot.slane %v5397, %v5400
          %v5402 = vmul.f32 %v5307, %v5401
          %v5403 = vmul.f32 %v5308, %v5401
          %v5404 = vmul.f32 %v5309, %v5401
          %v5405 = vmul.f32 %v5310, %v5401
          %v5406 = vmul.f32 %v5311, %v5401
          %v5407 = vmul.f32 %v5312, %v5401
          %v5408 = vmul.f32 %v5313, %v5401
          %v5409 = vmul.f32 %v5314, %v5401
          %v5410 = vmul.f32 %v5315, %v5401
          %v5411 = vmul.f32 %v5316, %v5401
          %v5412 = vmul.f32 %v5317, %v5401
          %v5413 = vmul.f32 %v5318, %v5401
          %v5414 = vmul.f32 %v5319, %v5401
          %v5415 = vmul.f32 %v5320, %v5401
          %v5416 = vmul.f32 %v5321, %v5401
          %v5417 = vmul.f32 %v5322, %v5401
          %v5418 = vadd.f32 %v5381, %v5402
          %v5419 = vadd.f32 %v5382, %v5403
          %v5420 = vadd.f32 %v5383, %v5404
          %v5421 = vadd.f32 %v5384, %v5405
          %v5422 = vadd.f32 %v5385, %v5406
          %v5423 = vadd.f32 %v5386, %v5407
          %v5424 = vadd.f32 %v5387, %v5408
          %v5425 = vadd.f32 %v5388, %v5409
          %v5426 = vadd.f32 %v5389, %v5410
          %v5427 = vadd.f32 %v5390, %v5411
          %v5428 = vadd.f32 %v5391, %v5412
          %v5429 = vadd.f32 %v5392, %v5413
          %v5430 = vadd.f32 %v5393, %v5414
          %v5431 = vadd.f32 %v5394, %v5415
          %v5432 = vadd.f32 %v5395, %v5416
          %v5433 = vadd.f32 %v5396, %v5417
          %v5434 = vld [vmem:[%s3444 + $0x19] sm:$0xff]
          %v5435 = vld [vmem:[%s3444 + $0x21] sm:$0xff]
          %v5436 = vld [vmem:[%s3444 + $0x49] sm:$0xff]
          %v5437 = vld [vmem:[%s3444 + $0x51] sm:$0xff]
          %v5438 = vld [vmem:[%s3444 + $0x79] sm:$0xff]
          %v5439 = vld [vmem:[%s3444 + $0x81] sm:$0xff]
          %v5440 = vld [vmem:[%s3444 + $0xa9] sm:$0xff]
          %v5441 = vld [vmem:[%s3444 + $0xb1] sm:$0xff]
          %v5442 = vld [vmem:[%s3444 + $0xd9] sm:$0xff]
          %v5443 = vld [vmem:[%s3444 + $0xe1] sm:$0xff]
          %v5444 = vld [vmem:[%s3444 + $0x109] sm:$0xff]
          %v5445 = vld [vmem:[%s3444 + $0x111] sm:$0xff]
          %v5446 = vld [vmem:[%s3444 + $0x139] sm:$0xff]
          %v5447 = vld [vmem:[%s3444 + $0x141] sm:$0xff]
          %v5448 = vld [vmem:[%s3444 + $0x169] sm:$0xff]
          %v5449 = vld [vmem:[%s3444 + $0x171] sm:$0xff]
          %v5450 = vld [vmem:[%s3444 + $0x199] sm:$0xff]
          %v5451 = vld [vmem:[%s3444 + $0x1a1] sm:$0xff]
          %v5452 = vld [vmem:[%s3444 + $0x1c9] sm:$0xff]
          %v5453 = vld [vmem:[%s3444 + $0x1d1] sm:$0xff]
          %v5454 = vld [vmem:[%s3444 + $0x1f9] sm:$0xff]
          %v5455 = vld [vmem:[%s3444 + $0x201] sm:$0xff]
          %v5456 = vld [vmem:[%s3444 + $0x229] sm:$0xff]
          %v5457 = vld [vmem:[%s3444 + $0x231] sm:$0xff]
          %v5458 = vld [vmem:[%s3444 + $0x259] sm:$0xff]
          %v5459 = vld [vmem:[%s3444 + $0x261] sm:$0xff]
          %v5460 = vld [vmem:[%s3444 + $0x289] sm:$0xff]
          %v5461 = vld [vmem:[%s3444 + $0x291] sm:$0xff]
          %v5462 = vld [vmem:[#allocation10 + $0x1b] sm:$0x1]
          %v5463 = vlaneseq
          %v5464 = vshrl.u32 %v5463, 7
          %v5465 = vsub.s32 0, %v5464
          %v5466 = vrot.slane %v5462, %v5465
          %v5467 = vmul.f32 %v5434, %v5466
          %v5468 = vmul.f32 %v5435, %v5466
          %v5469 = vmul.f32 %v5436, %v5466
          %v5470 = vmul.f32 %v5437, %v5466
          %v5471 = vmul.f32 %v5438, %v5466
          %v5472 = vmul.f32 %v5439, %v5466
          %v5473 = vmul.f32 %v5440, %v5466
          %v5474 = vmul.f32 %v5441, %v5466
          %v5475 = vmul.f32 %v5442, %v5466
          %v5476 = vmul.f32 %v5443, %v5466
          %v5477 = vmul.f32 %v5444, %v5466
          %v5478 = vmul.f32 %v5445, %v5466
          %v5479 = vmul.f32 %v5446, %v5466
          %v5480 = vmul.f32 %v5447, %v5466
          %v5481 = vmul.f32 %v5448, %v5466
          %v5482 = vmul.f32 %v5449, %v5466
          %v5483 = vadd.f32 %v5418, %v5467
          %v5484 = vadd.f32 %v5419, %v5468
          %v5485 = vadd.f32 %v5420, %v5469
          %v5486 = vadd.f32 %v5421, %v5470
          %v5487 = vadd.f32 %v5422, %v5471
          %v5488 = vadd.f32 %v5423, %v5472
          %v5489 = vadd.f32 %v5424, %v5473
          %v5490 = vadd.f32 %v5425, %v5474
          %v5491 = vadd.f32 %v5426, %v5475
          %v5492 = vadd.f32 %v5427, %v5476
          %v5493 = vadd.f32 %v5428, %v5477
          %v5494 = vadd.f32 %v5429, %v5478
          %v5495 = vadd.f32 %v5430, %v5479
          %v5496 = vadd.f32 %v5431, %v5480
          %v5497 = vadd.f32 %v5432, %v5481
          %v5498 = vadd.f32 %v5433, %v5482
          %v5499 = vld [vmem:[#allocation10 + $0x22] sm:$0x1]
          %v5500 = vlaneseq
          %v5501 = vshrl.u32 %v5500, 7
          %v5502 = vsub.s32 0, %v5501
          %v5503 = vrot.slane %v5499, %v5502
          %v5504 = vmul.f32 %v5440, %v5503
          %v5505 = vmul.f32 %v5441, %v5503
          %v5506 = vmul.f32 %v5442, %v5503
          %v5507 = vmul.f32 %v5443, %v5503
          %v5508 = vmul.f32 %v5444, %v5503
          %v5509 = vmul.f32 %v5445, %v5503
          %v5510 = vmul.f32 %v5446, %v5503
          %v5511 = vmul.f32 %v5447, %v5503
          %v5512 = vmul.f32 %v5448, %v5503
          %v5513 = vmul.f32 %v5449, %v5503
          %v5514 = vmul.f32 %v5450, %v5503
          %v5515 = vmul.f32 %v5451, %v5503
          %v5516 = vmul.f32 %v5452, %v5503
          %v5517 = vmul.f32 %v5453, %v5503
          %v5518 = vmul.f32 %v5454, %v5503
          %v5519 = vmul.f32 %v5455, %v5503
          %v5520 = vadd.f32 %v5483, %v5504
          %v5521 = vadd.f32 %v5484, %v5505
          %v5522 = vadd.f32 %v5485, %v5506
          %v5523 = vadd.f32 %v5486, %v5507
          %v5524 = vadd.f32 %v5487, %v5508
          %v5525 = vadd.f32 %v5488, %v5509
          %v5526 = vadd.f32 %v5489, %v5510
          %v5527 = vadd.f32 %v5490, %v5511
          %v5528 = vadd.f32 %v5491, %v5512
          %v5529 = vadd.f32 %v5492, %v5513
          %v5530 = vadd.f32 %v5493, %v5514
          %v5531 = vadd.f32 %v5494, %v5515
          %v5532 = vadd.f32 %v5495, %v5516
          %v5533 = vadd.f32 %v5496, %v5517
          %v5534 = vadd.f32 %v5497, %v5518
          %v5535 = vadd.f32 %v5498, %v5519
          %v5536 = vld [vmem:[#allocation10 + $0x29] sm:$0x1]
          %v5537 = vlaneseq
          %v5538 = vshrl.u32 %v5537, 7
          %v5539 = vsub.s32 0, %v5538
          %v5540 = vrot.slane %v5536, %v5539
          %v5541 = vmul.f32 %v5446, %v5540
          %v5542 = vmul.f32 %v5447, %v5540
          %v5543 = vmul.f32 %v5448, %v5540
          %v5544 = vmul.f32 %v5449, %v5540
          %v5545 = vmul.f32 %v5450, %v5540
          %v5546 = vmul.f32 %v5451, %v5540
          %v5547 = vmul.f32 %v5452, %v5540
          %v5548 = vmul.f32 %v5453, %v5540
          %v5549 = vmul.f32 %v5454, %v5540
          %v5550 = vmul.f32 %v5455, %v5540
          %v5551 = vmul.f32 %v5456, %v5540
          %v5552 = vmul.f32 %v5457, %v5540
          %v5553 = vmul.f32 %v5458, %v5540
          %v5554 = vmul.f32 %v5459, %v5540
          %v5555 = vmul.f32 %v5460, %v5540
          %v5556 = vmul.f32 %v5461, %v5540
          %v5557 = vadd.f32 %v5520, %v5541
          %v5558 = vadd.f32 %v5521, %v5542
          %v5559 = vadd.f32 %v5522, %v5543
          %v5560 = vadd.f32 %v5523, %v5544
          %v5561 = vadd.f32 %v5524, %v5545
          %v5562 = vadd.f32 %v5525, %v5546
          %v5563 = vadd.f32 %v5526, %v5547
          %v5564 = vadd.f32 %v5527, %v5548
          %v5565 = vadd.f32 %v5528, %v5549
          %v5566 = vadd.f32 %v5529, %v5550
          %v5567 = vadd.f32 %v5530, %v5551
          %v5568 = vadd.f32 %v5531, %v5552
          %v5569 = vadd.f32 %v5532, %v5553
          %v5570 = vadd.f32 %v5533, %v5554
          %v5571 = vadd.f32 %v5534, %v5555
          %v5572 = vadd.f32 %v5535, %v5556
          %v5573 = vld [vmem:[%s3586 + $0x19] sm:$0xff]
          %v5574 = vld [vmem:[%s3586 + $0x21] sm:$0xff]
          %v5575 = vld [vmem:[%s3586 + $0x49] sm:$0xff]
          %v5576 = vld [vmem:[%s3586 + $0x51] sm:$0xff]
          %v5577 = vld [vmem:[%s3586 + $0x79] sm:$0xff]
          %v5578 = vld [vmem:[%s3586 + $0x81] sm:$0xff]
          %v5579 = vld [vmem:[%s3586 + $0xa9] sm:$0xff]
          %v5580 = vld [vmem:[%s3586 + $0xb1] sm:$0xff]
          %v5581 = vld [vmem:[%s3586 + $0xd9] sm:$0xff]
          %v5582 = vld [vmem:[%s3586 + $0xe1] sm:$0xff]
          %v5583 = vld [vmem:[%s3586 + $0x109] sm:$0xff]
          %v5584 = vld [vmem:[%s3586 + $0x111] sm:$0xff]
          %v5585 = vld [vmem:[%s3586 + $0x139] sm:$0xff]
          %v5586 = vld [vmem:[%s3586 + $0x141] sm:$0xff]
          %v5587 = vld [vmem:[%s3586 + $0x169] sm:$0xff]
          %v5588 = vld [vmem:[%s3586 + $0x171] sm:$0xff]
          %v5589 = vld [vmem:[#allocation10 + $0x30] sm:$0x1]
          %v5590 = vlaneseq
          %v5591 = vshrl.u32 %v5590, 7
          %v5592 = vsub.s32 0, %v5591
          %v5593 = vrot.slane %v5589, %v5592
          %v5594 = vmul.f32 %v5573, %v5593
          %v5595 = vmul.f32 %v5574, %v5593
          %v5596 = vmul.f32 %v5575, %v5593
          %v5597 = vmul.f32 %v5576, %v5593
          %v5598 = vmul.f32 %v5577, %v5593
          %v5599 = vmul.f32 %v5578, %v5593
          %v5600 = vmul.f32 %v5579, %v5593
          %v5601 = vmul.f32 %v5580, %v5593
          %v5602 = vmul.f32 %v5581, %v5593
          %v5603 = vmul.f32 %v5582, %v5593
          %v5604 = vmul.f32 %v5583, %v5593
          %v5605 = vmul.f32 %v5584, %v5593
          %v5606 = vmul.f32 %v5585, %v5593
          %v5607 = vmul.f32 %v5586, %v5593
          %v5608 = vmul.f32 %v5587, %v5593
          %v5609 = vmul.f32 %v5588, %v5593
          %v5610 = vadd.f32 %v5557, %v5594
          %v5611 = vadd.f32 %v5558, %v5595
          %v5612 = vadd.f32 %v5559, %v5596
          %v5613 = vadd.f32 %v5560, %v5597
          %v5614 = vadd.f32 %v5561, %v5598
          %v5615 = vadd.f32 %v5562, %v5599
          %v5616 = vadd.f32 %v5563, %v5600
          %v5617 = vadd.f32 %v5564, %v5601
          %v5618 = vadd.f32 %v5565, %v5602
          %v5619 = vadd.f32 %v5566, %v5603
          %v5620 = vadd.f32 %v5567, %v5604
          %v5621 = vadd.f32 %v5568, %v5605
          %v5622 = vadd.f32 %v5569, %v5606
          %v5623 = vadd.f32 %v5570, %v5607
          %v5624 = vadd.f32 %v5571, %v5608
          %v5625 = vadd.f32 %v5572, %v5609
          %v5627 = vlaneseq
          %v5628 = vshrl.u32 %v5627, 7
          %v5629 = vsub.s32 0, %v5628
          %v5630 = vrot.slane %v1275, %v5629
          %v5632 = vadd.f32 %v5610, %v5630
          %v5633 = vadd.f32 %v5611, %v5630
          %v5634 = vadd.f32 %v5612, %v5630
          %v5635 = vadd.f32 %v5613, %v5630
          %v5636 = vadd.f32 %v5614, %v5630
          %v5637 = vadd.f32 %v5615, %v5630
          %v5638 = vadd.f32 %v5616, %v5630
          %v5639 = vadd.f32 %v5617, %v5630
          %v5640 = vadd.f32 %v5618, %v5630
          %v5641 = vadd.f32 %v5619, %v5630
          %v5642 = vadd.f32 %v5620, %v5630
          %v5643 = vadd.f32 %v5621, %v5630
          %v5644 = vadd.f32 %v5622, %v5630
          %v5645 = vadd.f32 %v5623, %v5630
          %v5646 = vadd.f32 %v5624, %v5630
          %v5647 = vadd.f32 %v5625, %v5630
          %5648 = vadd.xlane.f32.xlu0 %v5632
          %v5649 = vpop.xlane.xlu0 %5648
          %5650 = vadd.xlane.f32.xlu0 %v5633
          %v5651 = vpop.xlane.xlu0 %5650
          %5652 = vadd.xlane.f32.xlu0 %v5634
          %v5653 = vpop.xlane.xlu0 %5652
          %5654 = vadd.xlane.f32.xlu0 %v5635
          %v5655 = vpop.xlane.xlu0 %5654
          %5656 = vadd.xlane.f32.xlu0 %v5636
          %v5657 = vpop.xlane.xlu0 %5656
          %5658 = vadd.xlane.f32.xlu0 %v5637
          %v5659 = vpop.xlane.xlu0 %5658
          %5660 = vadd.xlane.f32.xlu0 %v5638
          %v5661 = vpop.xlane.xlu0 %5660
          %5662 = vadd.xlane.f32.xlu0 %v5639
          %v5663 = vpop.xlane.xlu0 %5662
          %5664 = vadd.xlane.f32.xlu0 %v5640
          %v5665 = vpop.xlane.xlu0 %5664
          %5666 = vadd.xlane.f32.xlu0 %v5641
          %v5667 = vpop.xlane.xlu0 %5666
          %5668 = vadd.xlane.f32.xlu0 %v5642
          %v5669 = vpop.xlane.xlu0 %5668
          %5670 = vadd.xlane.f32.xlu0 %v5643
          %v5671 = vpop.xlane.xlu0 %5670
          %5672 = vadd.xlane.f32.xlu0 %v5644
          %v5673 = vpop.xlane.xlu0 %5672
          %5674 = vadd.xlane.f32.xlu0 %v5645
          %v5675 = vpop.xlane.xlu0 %5674
          %5676 = vadd.xlane.f32.xlu0 %v5646
          %v5677 = vpop.xlane.xlu0 %5676
          %5678 = vadd.xlane.f32.xlu0 %v5647
          %v5679 = vpop.xlane.xlu0 %5678
          %v5680 = vrcp.pop 128.0
          %v5681 = vmul.f32 %v5649, %v5680
          %v5682 = vmul.f32 %v5651, %v5680
          %v5683 = vmul.f32 %v5653, %v5680
          %v5684 = vmul.f32 %v5655, %v5680
          %v5685 = vmul.f32 %v5657, %v5680
          %v5686 = vmul.f32 %v5659, %v5680
          %v5687 = vmul.f32 %v5661, %v5680
          %v5688 = vmul.f32 %v5663, %v5680
          %v5689 = vmul.f32 %v5665, %v5680
          %v5690 = vmul.f32 %v5667, %v5680
          %v5691 = vmul.f32 %v5669, %v5680
          %v5692 = vmul.f32 %v5671, %v5680
          %v5693 = vmul.f32 %v5673, %v5680
          %v5694 = vmul.f32 %v5675, %v5680
          %v5695 = vmul.f32 %v5677, %v5680
          %v5696 = vmul.f32 %v5679, %v5680
          %v5697 = vsub.f32 %v5632, %v5681
          %v5698 = vsub.f32 %v5633, %v5682
          %v5699 = vsub.f32 %v5634, %v5683
          %v5700 = vsub.f32 %v5635, %v5684
          %v5701 = vsub.f32 %v5636, %v5685
          %v5702 = vsub.f32 %v5637, %v5686
          %v5703 = vsub.f32 %v5638, %v5687
          %v5704 = vsub.f32 %v5639, %v5688
          %v5705 = vsub.f32 %v5640, %v5689
          %v5706 = vsub.f32 %v5641, %v5690
          %v5707 = vsub.f32 %v5642, %v5691
          %v5708 = vsub.f32 %v5643, %v5692
          %v5709 = vsub.f32 %v5644, %v5693
          %v5710 = vsub.f32 %v5645, %v5694
          %v5711 = vsub.f32 %v5646, %v5695
          %v5712 = vsub.f32 %v5647, %v5696
          %v5713 = vmul.f32 %v5697, %v5697
          %v5714 = vmul.f32 %v5698, %v5698
          %v5715 = vmul.f32 %v5699, %v5699
          %v5716 = vmul.f32 %v5700, %v5700
          %v5717 = vmul.f32 %v5701, %v5701
          %v5718 = vmul.f32 %v5702, %v5702
          %v5719 = vmul.f32 %v5703, %v5703
          %v5720 = vmul.f32 %v5704, %v5704
          %v5721 = vmul.f32 %v5705, %v5705
          %v5722 = vmul.f32 %v5706, %v5706
          %v5723 = vmul.f32 %v5707, %v5707
          %v5724 = vmul.f32 %v5708, %v5708
          %v5725 = vmul.f32 %v5709, %v5709
          %v5726 = vmul.f32 %v5710, %v5710
          %v5727 = vmul.f32 %v5711, %v5711
          %v5728 = vmul.f32 %v5712, %v5712
          %5729 = vadd.xlane.f32.xlu0 %v5713
          %v5730 = vpop.xlane.xlu0 %5729
          %5731 = vadd.xlane.f32.xlu0 %v5714
          %v5732 = vpop.xlane.xlu0 %5731
          %5733 = vadd.xlane.f32.xlu0 %v5715
          %v5734 = vpop.xlane.xlu0 %5733
          %5735 = vadd.xlane.f32.xlu0 %v5716
          %v5736 = vpop.xlane.xlu0 %5735
          %5737 = vadd.xlane.f32.xlu0 %v5717
          %v5738 = vpop.xlane.xlu0 %5737
          %5739 = vadd.xlane.f32.xlu0 %v5718
          %v5740 = vpop.xlane.xlu0 %5739
          %5741 = vadd.xlane.f32.xlu0 %v5719
          %v5742 = vpop.xlane.xlu0 %5741
          %5743 = vadd.xlane.f32.xlu0 %v5720
          %v5744 = vpop.xlane.xlu0 %5743
          %5745 = vadd.xlane.f32.xlu0 %v5721
          %v5746 = vpop.xlane.xlu0 %5745
          %5747 = vadd.xlane.f32.xlu0 %v5722
          %v5748 = vpop.xlane.xlu0 %5747
          %5749 = vadd.xlane.f32.xlu0 %v5723
          %v5750 = vpop.xlane.xlu0 %5749
          %5751 = vadd.xlane.f32.xlu0 %v5724
          %v5752 = vpop.xlane.xlu0 %5751
          %5753 = vadd.xlane.f32.xlu0 %v5725
          %v5754 = vpop.xlane.xlu0 %5753
          %5755 = vadd.xlane.f32.xlu0 %v5726
          %v5756 = vpop.xlane.xlu0 %5755
          %5757 = vadd.xlane.f32.xlu0 %v5727
          %v5758 = vpop.xlane.xlu0 %5757
          %5759 = vadd.xlane.f32.xlu0 %v5728
          %v5760 = vpop.xlane.xlu0 %5759
          %v5761 = vmul.f32 %v5730, %v5680
          %v5762 = vmul.f32 %v5732, %v5680
          %v5763 = vmul.f32 %v5734, %v5680
          %v5764 = vmul.f32 %v5736, %v5680
          %v5765 = vmul.f32 %v5738, %v5680
          %v5766 = vmul.f32 %v5740, %v5680
          %v5767 = vmul.f32 %v5742, %v5680
          %v5768 = vmul.f32 %v5744, %v5680
          %v5769 = vmul.f32 %v5746, %v5680
          %v5770 = vmul.f32 %v5748, %v5680
          %v5771 = vmul.f32 %v5750, %v5680
          %v5772 = vmul.f32 %v5752, %v5680
          %v5773 = vmul.f32 %v5754, %v5680
          %v5774 = vmul.f32 %v5756, %v5680
          %v5775 = vmul.f32 %v5758, %v5680
          %v5776 = vmul.f32 %v5760, %v5680
          %v5777 = vadd.f32 %v5761, 1e-05
          %v5778 = vadd.f32 %v5762, 1e-05
          %v5779 = vadd.f32 %v5763, 1e-05
          %v5780 = vadd.f32 %v5764, 1e-05
          %v5781 = vadd.f32 %v5765, 1e-05
          %v5782 = vadd.f32 %v5766, 1e-05
          %v5783 = vadd.f32 %v5767, 1e-05
          %v5784 = vadd.f32 %v5768, 1e-05
          %v5785 = vadd.f32 %v5769, 1e-05
          %v5786 = vadd.f32 %v5770, 1e-05
          %v5787 = vadd.f32 %v5771, 1e-05
          %v5788 = vadd.f32 %v5772, 1e-05
          %v5789 = vadd.f32 %v5773, 1e-05
          %v5790 = vadd.f32 %v5774, 1e-05
          %v5791 = vadd.f32 %v5775, 1e-05
          %v5792 = vadd.f32 %v5776, 1e-05
          %v5793 = vrsqrt.pop %v5777
          %v5794 = vrsqrt.pop %v5778
          %v5795 = vrsqrt.pop %v5779
          %v5796 = vrsqrt.pop %v5780
          %v5797 = vrsqrt.pop %v5781
          %v5798 = vrsqrt.pop %v5782
          %v5799 = vrsqrt.pop %v5783
          %v5800 = vrsqrt.pop %v5784
          %v5801 = vrsqrt.pop %v5785
          %v5802 = vrsqrt.pop %v5786
          %v5803 = vrsqrt.pop %v5787
          %v5804 = vrsqrt.pop %v5788
          %v5805 = vrsqrt.pop %v5789
          %v5806 = vrsqrt.pop %v5790
          %v5807 = vrsqrt.pop %v5791
          %v5808 = vrsqrt.pop %v5792
          %v5809 = vmul.f32 %v5697, %v5793
          %v5810 = vmul.f32 %v5698, %v5794
          %v5811 = vmul.f32 %v5699, %v5795
          %v5812 = vmul.f32 %v5700, %v5796
          %v5813 = vmul.f32 %v5701, %v5797
          %v5814 = vmul.f32 %v5702, %v5798
          %v5815 = vmul.f32 %v5703, %v5799
          %v5816 = vmul.f32 %v5704, %v5800
          %v5817 = vmul.f32 %v5705, %v5801
          %v5818 = vmul.f32 %v5706, %v5802
          %v5819 = vmul.f32 %v5707, %v5803
          %v5820 = vmul.f32 %v5708, %v5804
          %v5821 = vmul.f32 %v5709, %v5805
          %v5822 = vmul.f32 %v5710, %v5806
          %v5823 = vmul.f32 %v5711, %v5807
          %v5824 = vmul.f32 %v5712, %v5808
          %v5826 = vlaneseq
          %v5827 = vshrl.u32 %v5826, 7
          %v5828 = vsub.s32 0, %v5827
          %v5829 = vrot.slane %v1276, %v5828
          %v5831 = vmul.f32 %v5809, %v5829
          %v5832 = vmul.f32 %v5810, %v5829
          %v5833 = vmul.f32 %v5811, %v5829
          %v5834 = vmul.f32 %v5812, %v5829
          %v5835 = vmul.f32 %v5813, %v5829
          %v5836 = vmul.f32 %v5814, %v5829
          %v5837 = vmul.f32 %v5815, %v5829
          %v5838 = vmul.f32 %v5816, %v5829
          %v5839 = vmul.f32 %v5817, %v5829
          %v5840 = vmul.f32 %v5818, %v5829
          %v5841 = vmul.f32 %v5819, %v5829
          %v5842 = vmul.f32 %v5820, %v5829
          %v5843 = vmul.f32 %v5821, %v5829
          %v5844 = vmul.f32 %v5822, %v5829
          %v5845 = vmul.f32 %v5823, %v5829
          %v5846 = vmul.f32 %v5824, %v5829
          %v5848 = vlaneseq
          %v5849 = vshrl.u32 %v5848, 7
          %v5850 = vsub.s32 0, %v5849
          %v5851 = vrot.slane %v1277, %v5850
          %v5853 = vadd.f32 %v5831, %v5851
          %v5854 = vadd.f32 %v5832, %v5851
          %v5855 = vadd.f32 %v5833, %v5851
          %v5856 = vadd.f32 %v5834, %v5851
          %v5857 = vadd.f32 %v5835, %v5851
          %v5858 = vadd.f32 %v5836, %v5851
          %v5859 = vadd.f32 %v5837, %v5851
          %v5860 = vadd.f32 %v5838, %v5851
          %v5861 = vadd.f32 %v5839, %v5851
          %v5862 = vadd.f32 %v5840, %v5851
          %v5863 = vadd.f32 %v5841, %v5851
          %v5864 = vadd.f32 %v5842, %v5851
          %v5865 = vadd.f32 %v5843, %v5851
          %v5866 = vadd.f32 %v5844, %v5851
          %v5867 = vadd.f32 %v5845, %v5851
          %v5868 = vadd.f32 %v5846, %v5851
          %v5869 = vpack.c.bf16 %v5854, %v5853
          %v5870 = vpack.c.bf16 %v5856, %v5855
          %v5871 = vpack.c.bf16 %v5858, %v5857
          %v5872 = vpack.c.bf16 %v5860, %v5859
          %v5873 = vpack.c.bf16 %v5862, %v5861
          %v5874 = vpack.c.bf16 %v5864, %v5863
          %v5875 = vpack.c.bf16 %v5866, %v5865
          %v5876 = vpack.c.bf16 %v5868, %v5867
          %v5877 = vld [vmem:[#allocation12] sm:$0xf]
          %v5878 = vld [vmem:[#allocation12 + $0x4] sm:$0xf]
          %v5879 = vld [vmem:[#allocation12 + $0x8] sm:$0xf]
          %v5880 = vld [vmem:[#allocation12 + $0xc] sm:$0xf]
          %v5881 = vld [vmem:[#allocation12 + $0x10] sm:$0xf]
          %v5882 = vld [vmem:[#allocation12 + $0x14] sm:$0xf]
          %v5883 = vld [vmem:[#allocation12 + $0x18] sm:$0xf]
          %v5884 = vld [vmem:[#allocation12 + $0x1c] sm:$0xf]
          %v5885 = vld [vmem:[#allocation12 + $0x20] sm:$0xf]
          %v5886 = vld [vmem:[#allocation12 + $0x24] sm:$0xf]
          %v5887 = vld [vmem:[#allocation12 + $0x28] sm:$0xf]
          %v5888 = vld [vmem:[#allocation12 + $0x2c] sm:$0xf]
          %v5889 = vld [vmem:[#allocation12 + $0x30] sm:$0xf]
          %v5890 = vld [vmem:[#allocation12 + $0x34] sm:$0xf]
          %v5891 = vld [vmem:[#allocation12 + $0x38] sm:$0xf]
          %v5892 = vld [vmem:[#allocation12 + $0x3c] sm:$0xf]
          %v5894 = vlaneseq
          %v5895 = vshrl.u32 %v5894, 7
          %v5896 = vsub.s32 0, %v5895
          %v5897 = vrot.slane %v1278, %v5896
          %v5915 = vunpack.c.l.b16 %v5877
          %v5916 = vunpack.c.l.b16 %v5878
          %v5917 = vunpack.c.l.b16 %v5879
          %v5918 = vunpack.c.l.b16 %v5880
          %v5919 = vunpack.c.l.b16 %v5881
          %v5920 = vunpack.c.l.b16 %v5882
          %v5921 = vunpack.c.l.b16 %v5883
          %v5922 = vunpack.c.l.b16 %v5884
          %v5923 = vunpack.c.l.b16 %v5885
          %v5924 = vunpack.c.l.b16 %v5886
          %v5925 = vunpack.c.l.b16 %v5887
          %v5926 = vunpack.c.l.b16 %v5888
          %v5927 = vunpack.c.l.b16 %v5889
          %v5928 = vunpack.c.l.b16 %v5890
          %v5929 = vunpack.c.l.b16 %v5891
          %v5930 = vunpack.c.l.b16 %v5892
          %v5931 = vpack.c.b16 %v5916, %v5915
          %v5932 = vpack.c.b16 %v5918, %v5917
          %v5933 = vpack.c.b16 %v5920, %v5919
          %v5934 = vpack.c.b16 %v5922, %v5921
          %v5935 = vpack.c.b16 %v5924, %v5923
          %v5936 = vpack.c.b16 %v5926, %v5925
          %v5937 = vpack.c.b16 %v5928, %v5927
          %v5938 = vpack.c.b16 %v5930, %v5929
          %5947 = vmatprep.subr.bf16.mxu0 0
          %5948 = vmatpush1.bf16.msra.mxu0 %v5931
          %5949 = vmatprep.subr.bf16.mxu0 0
          %5950 = vmatpush1.bf16.msra.mxu0 %v5932
          %5951 = vmatprep.subr.bf16.mxu0 0
          %5952 = vmatpush1.bf16.msra.mxu0 %v5933
          %5953 = vmatprep.subr.bf16.mxu0 0
          %5954 = vmatpush1.bf16.msra.mxu0 %v5934
          %5955 = vmatprep.subr.bf16.mxu0 0
          %5956 = vmatpush1.bf16.msra.mxu0 %v5935
          %5957 = vmatprep.subr.bf16.mxu0 0
          %5958 = vmatpush1.bf16.msra.mxu0 %v5936
          %5959 = vmatprep.subr.bf16.mxu0 0
          %5960 = vmatpush1.bf16.msra.mxu0 %v5937
          %5961 = vmatprep.subr.bf16.mxu0 0
          %5962 = vmatpush1.bf16.msra.mxu0 %v5938
          %5963 = vmatprep.subr.bf16.mxu0 0
          %5964 = vmatpush1.bf16.msra.mxu0 0
          %5965 = vmatprep.subr.bf16.mxu0 0
          %5966 = vmatpush1.bf16.msra.mxu0 0
          %5967 = vmatprep.subr.bf16.mxu0 0
          %5968 = vmatpush1.bf16.msra.mxu0 0
          %5969 = vmatprep.subr.bf16.mxu0 0
          %5970 = vmatpush1.bf16.msra.mxu0 0
          %5971 = vmatprep.subr.bf16.mxu0 0
          %5972 = vmatpush1.bf16.msra.mxu0 0
          %5973 = vmatprep.subr.bf16.mxu0 0
          %5974 = vmatpush1.bf16.msra.mxu0 0
          %5975 = vmatprep.subr.bf16.mxu0 0
          %5976 = vmatpush1.bf16.msra.mxu0 0
          %5977 = vmatprep.subr.bf16.mxu0 0
          %5978 = vmatpush1.bf16.msra.mxu0 0
          %5979 = vmatprep.mubr.bf16.mxu0 0
          %5980 = vmatmul.mubr.bf16.gmra.mrb[0].mxu0 %v5869
          %v5981 = vpop.f32.mrb[0].mxu0
          %v5982 = vadd.f32 %v5897, %v5981
          %v5983 = vpop.f32.mrb[0].mxu0
          %v5984 = vpop.f32.mrb[0].mxu0
          %v5985 = vadd.f32 %v5897, %v5984
          %v5986 = vpop.f32.mrb[0].mxu0
          %5987 = vmatprep.mubr.bf16.mxu0 0
          %5988 = vmatmul.mubr.bf16.gmra.mrb[0].mxu0 %v5870
          %v5989 = vpop.f32.mrb[0].mxu0
          %v5990 = vadd.f32 %v5897, %v5989
          %v5991 = vpop.f32.mrb[0].mxu0
          %v5992 = vpop.f32.mrb[0].mxu0
          %v5993 = vadd.f32 %v5897, %v5992
          %v5994 = vpop.f32.mrb[0].mxu0
          %5995 = vmatprep.mubr.bf16.mxu0 0
          %5996 = vmatmul.mubr.bf16.gmra.mrb[0].mxu0 %v5871
          %v5997 = vpop.f32.mrb[0].mxu0
          %v5998 = vadd.f32 %v5897, %v5997
          %v5999 = vpop.f32.mrb[0].mxu0
          %v6000 = vpop.f32.mrb[0].mxu0
          %v6001 = vadd.f32 %v5897, %v6000
          %v6002 = vpop.f32.mrb[0].mxu0
          %6003 = vmatprep.mubr.bf16.mxu0 0
          %6004 = vmatmul.mubr.bf16.gmra.mrb[0].mxu0 %v5872
          %v6005 = vpop.f32.mrb[0].mxu0
          %v6006 = vadd.f32 %v5897, %v6005
          %v6007 = vpop.f32.mrb[0].mxu0
          %v6008 = vpop.f32.mrb[0].mxu0
          %v6009 = vadd.f32 %v5897, %v6008
          %v6010 = vpop.f32.mrb[0].mxu0
          %6011 = vmatprep.mubr.bf16.mxu0 0
          %6012 = vmatmul.mubr.bf16.gmra.mrb[0].mxu0 %v5873
          %v6013 = vpop.f32.mrb[0].mxu0
          %v6014 = vadd.f32 %v5897, %v6013
          %v6015 = vpop.f32.mrb[0].mxu0
          %v6016 = vpop.f32.mrb[0].mxu0
          %v6017 = vadd.f32 %v5897, %v6016
          %v6018 = vpop.f32.mrb[0].mxu0
          %6019 = vmatprep.mubr.bf16.mxu0 0
          %6020 = vmatmul.mubr.bf16.gmra.mrb[0].mxu0 %v5874
          %v6021 = vpop.f32.mrb[0].mxu0
          %v6022 = vadd.f32 %v5897, %v6021
          %v6023 = vpop.f32.mrb[0].mxu0
          %v6024 = vpop.f32.mrb[0].mxu0
          %v6025 = vadd.f32 %v5897, %v6024
          %v6026 = vpop.f32.mrb[0].mxu0
          %6027 = vmatprep.mubr.bf16.mxu0 0
          %6028 = vmatmul.mubr.bf16.gmra.mrb[0].mxu0 %v5875
          %v6029 = vpop.f32.mrb[0].mxu0
          %v6030 = vadd.f32 %v5897, %v6029
          %v6031 = vpop.f32.mrb[0].mxu0
          %v6032 = vpop.f32.mrb[0].mxu0
          %v6033 = vadd.f32 %v5897, %v6032
          %v6034 = vpop.f32.mrb[0].mxu0
          %6035 = vmatprep.mubr.bf16.mxu0 0
          %6036 = vmatmul.mubr.bf16.gmra.mrb[0].mxu0 %v5876
          %v6037 = vpop.f32.mrb[0].mxu0
          %v6038 = vadd.f32 %v5897, %v6037
          %v6039 = vpop.f32.mrb[0].mxu0
          %v6040 = vpop.f32.mrb[0].mxu0
          %v6041 = vadd.f32 %v5897, %v6040
          %v6042 = vpop.f32.mrb[0].mxu0
          %6043 = vdwg.mxu0
          %v6044 = vld [vmem:[#allocation13] sm:$0xf]
          %v6045 = vld [vmem:[#allocation13 + $0x4] sm:$0xf]
          %v6046 = vld [vmem:[#allocation13 + $0x8] sm:$0xf]
          %v6047 = vld [vmem:[#allocation13 + $0xc] sm:$0xf]
          %v6048 = vld [vmem:[#allocation13 + $0x10] sm:$0xf]
          %v6049 = vld [vmem:[#allocation13 + $0x14] sm:$0xf]
          %v6050 = vld [vmem:[#allocation13 + $0x18] sm:$0xf]
          %v6051 = vld [vmem:[#allocation13 + $0x1c] sm:$0xf]
          %v6052 = vld [vmem:[#allocation13 + $0x20] sm:$0xf]
          %v6053 = vld [vmem:[#allocation13 + $0x24] sm:$0xf]
          %v6054 = vld [vmem:[#allocation13 + $0x28] sm:$0xf]
          %v6055 = vld [vmem:[#allocation13 + $0x2c] sm:$0xf]
          %v6056 = vld [vmem:[#allocation13 + $0x30] sm:$0xf]
          %v6057 = vld [vmem:[#allocation13 + $0x34] sm:$0xf]
          %v6058 = vld [vmem:[#allocation13 + $0x38] sm:$0xf]
          %v6059 = vld [vmem:[#allocation13 + $0x3c] sm:$0xf]
          %v6061 = vlaneseq
          %v6062 = vshrl.u32 %v6061, 7
          %v6063 = vsub.s32 0, %v6062
          %v6064 = vrot.slane %v1279, %v6063
          %v6082 = vunpack.c.l.b16 %v6044
          %v6083 = vunpack.c.l.b16 %v6045
          %v6084 = vunpack.c.l.b16 %v6046
          %v6085 = vunpack.c.l.b16 %v6047
          %v6086 = vunpack.c.l.b16 %v6048
          %v6087 = vunpack.c.l.b16 %v6049
          %v6088 = vunpack.c.l.b16 %v6050
          %v6089 = vunpack.c.l.b16 %v6051
          %v6090 = vunpack.c.l.b16 %v6052
          %v6091 = vunpack.c.l.b16 %v6053
          %v6092 = vunpack.c.l.b16 %v6054
          %v6093 = vunpack.c.l.b16 %v6055
          %v6094 = vunpack.c.l.b16 %v6056
          %v6095 = vunpack.c.l.b16 %v6057
          %v6096 = vunpack.c.l.b16 %v6058
          %v6097 = vunpack.c.l.b16 %v6059
          %v6098 = vpack.c.b16 %v6083, %v6082
          %v6099 = vpack.c.b16 %v6085, %v6084
          %v6100 = vpack.c.b16 %v6087, %v6086
          %v6101 = vpack.c.b16 %v6089, %v6088
          %v6102 = vpack.c.b16 %v6091, %v6090
          %v6103 = vpack.c.b16 %v6093, %v6092
          %v6104 = vpack.c.b16 %v6095, %v6094
          %v6105 = vpack.c.b16 %v6097, %v6096
          %6114 = vmatprep.subr.bf16.mxu0 0
          %6115 = vmatpush1.bf16.msra.mxu0 %v6098
          %6116 = vmatprep.subr.bf16.mxu0 0
          %6117 = vmatpush1.bf16.msra.mxu0 %v6099
          %6118 = vmatprep.subr.bf16.mxu0 0
          %6119 = vmatpush1.bf16.msra.mxu0 %v6100
          %6120 = vmatprep.subr.bf16.mxu0 0
          %6121 = vmatpush1.bf16.msra.mxu0 %v6101
          %6122 = vmatprep.subr.bf16.mxu0 0
          %6123 = vmatpush1.bf16.msra.mxu0 %v6102
          %6124 = vmatprep.subr.bf16.mxu0 0
          %6125 = vmatpush1.bf16.msra.mxu0 %v6103
          %6126 = vmatprep.subr.bf16.mxu0 0
          %6127 = vmatpush1.bf16.msra.mxu0 %v6104
          %6128 = vmatprep.subr.bf16.mxu0 0
          %6129 = vmatpush1.bf16.msra.mxu0 %v6105
          %6130 = vmatprep.subr.bf16.mxu0 0
          %6131 = vmatpush1.bf16.msra.mxu0 0
          %6132 = vmatprep.subr.bf16.mxu0 0
          %6133 = vmatpush1.bf16.msra.mxu0 0
          %6134 = vmatprep.subr.bf16.mxu0 0
          %6135 = vmatpush1.bf16.msra.mxu0 0
          %6136 = vmatprep.subr.bf16.mxu0 0
          %6137 = vmatpush1.bf16.msra.mxu0 0
          %6138 = vmatprep.subr.bf16.mxu0 0
          %6139 = vmatpush1.bf16.msra.mxu0 0
          %6140 = vmatprep.subr.bf16.mxu0 0
          %6141 = vmatpush1.bf16.msra.mxu0 0
          %6142 = vmatprep.subr.bf16.mxu0 0
          %6143 = vmatpush1.bf16.msra.mxu0 0
          %6144 = vmatprep.subr.bf16.mxu0 0
          %6145 = vmatpush1.bf16.msra.mxu0 0
          %6146 = vmatprep.mubr.bf16.mxu0 0
          %6147 = vmatmul.mubr.bf16.gmra.mrb[0].mxu0 %v5869
          %v6148 = vpop.f32.mrb[0].mxu0
          %v6149 = vadd.f32 %v6064, %v6148
          %v6150 = vpop.f32.mrb[0].mxu0
          %v6151 = vpop.f32.mrb[0].mxu0
          %v6152 = vadd.f32 %v6064, %v6151
          %v6153 = vpop.f32.mrb[0].mxu0
          %6154 = vmatprep.mubr.bf16.mxu0 0
          %6155 = vmatmul.mubr.bf16.gmra.mrb[0].mxu0 %v5870
          %v6156 = vpop.f32.mrb[0].mxu0
          %v6157 = vadd.f32 %v6064, %v6156
          %v6158 = vpop.f32.mrb[0].mxu0
          %v6159 = vpop.f32.mrb[0].mxu0
          %v6160 = vadd.f32 %v6064, %v6159
          %v6161 = vpop.f32.mrb[0].mxu0
          %6162 = vmatprep.mubr.bf16.mxu0 0
          %6163 = vmatmul.mubr.bf16.gmra.mrb[0].mxu0 %v5871
          %v6164 = vpop.f32.mrb[0].mxu0
          %v6165 = vadd.f32 %v6064, %v6164
          %v6166 = vpop.f32.mrb[0].mxu0
          %v6167 = vpop.f32.mrb[0].mxu0
          %v6168 = vadd.f32 %v6064, %v6167
          %v6169 = vpop.f32.mrb[0].mxu0
          %6170 = vmatprep.mubr.bf16.mxu0 0
          %6171 = vmatmul.mubr.bf16.gmra.mrb[0].mxu0 %v5872
          %v6172 = vpop.f32.mrb[0].mxu0
          %v6173 = vadd.f32 %v6064, %v6172
          %v6174 = vpop.f32.mrb[0].mxu0
          %v6175 = vpop.f32.mrb[0].mxu0
          %v6176 = vadd.f32 %v6064, %v6175
          %v6177 = vpop.f32.mrb[0].mxu0
          %6178 = vmatprep.mubr.bf16.mxu0 0
          %6179 = vmatmul.mubr.bf16.gmra.mrb[0].mxu0 %v5873
          %v6180 = vpop.f32.mrb[0].mxu0
          %v6181 = vadd.f32 %v6064, %v6180
          %v6182 = vpop.f32.mrb[0].mxu0
          %v6183 = vpop.f32.mrb[0].mxu0
          %v6184 = vadd.f32 %v6064, %v6183
          %v6185 = vpop.f32.mrb[0].mxu0
          %6186 = vmatprep.mubr.bf16.mxu0 0
          %6187 = vmatmul.mubr.bf16.gmra.mrb[0].mxu0 %v5874
          %v6188 = vpop.f32.mrb[0].mxu0
          %v6189 = vadd.f32 %v6064, %v6188
          %v6190 = vpop.f32.mrb[0].mxu0
          %v6191 = vpop.f32.mrb[0].mxu0
          %v6192 = vadd.f32 %v6064, %v6191
          %v6193 = vpop.f32.mrb[0].mxu0
          %6194 = vmatprep.mubr.bf16.mxu0 0
          %6195 = vmatmul.mubr.bf16.gmra.mrb[0].mxu0 %v5875
          %v6196 = vpop.f32.mrb[0].mxu0
          %v6197 = vadd.f32 %v6064, %v6196
          %v6198 = vpop.f32.mrb[0].mxu0
          %v6199 = vpop.f32.mrb[0].mxu0
          %v6200 = vadd.f32 %v6064, %v6199
          %v6201 = vpop.f32.mrb[0].mxu0
          %6202 = vmatprep.mubr.bf16.mxu0 0
          %6203 = vmatmul.mubr.bf16.gmra.mrb[0].mxu0 %v5876
          %v6204 = vpop.f32.mrb[0].mxu0
          %v6205 = vadd.f32 %v6064, %v6204
          %v6206 = vpop.f32.mrb[0].mxu0
          %v6207 = vpop.f32.mrb[0].mxu0
          %v6208 = vadd.f32 %v6064, %v6207
          %v6209 = vpop.f32.mrb[0].mxu0
          %6210 = vdwg.mxu0
          %v6211 = vmul.f32 %v5982, 1.442695
          %v6212 = vpow.pop %v6211
          %v6213 = vmul.f32 %v5985, 1.442695
          %v6214 = vpow.pop %v6213
          %v6215 = vmul.f32 %v5990, 1.442695
          %v6216 = vpow.pop %v6215
          %v6217 = vmul.f32 %v5993, 1.442695
          %v6218 = vpow.pop %v6217
          %v6219 = vmul.f32 %v5998, 1.442695
          %v6220 = vpow.pop %v6219
          %v6221 = vmul.f32 %v6001, 1.442695
          %v6222 = vpow.pop %v6221
          %v6223 = vmul.f32 %v6006, 1.442695
          %v6224 = vpow.pop %v6223
          %v6225 = vmul.f32 %v6009, 1.442695
          %v6226 = vpow.pop %v6225
          %v6227 = vmul.f32 %v6014, 1.442695
          %v6228 = vpow.pop %v6227
          %v6229 = vmul.f32 %v6017, 1.442695
          %v6230 = vpow.pop %v6229
          %v6231 = vmul.f32 %v6022, 1.442695
          %v6232 = vpow.pop %v6231
          %v6233 = vmul.f32 %v6025, 1.442695
          %v6234 = vpow.pop %v6233
          %v6235 = vmul.f32 %v6030, 1.442695
          %v6236 = vpow.pop %v6235
          %v6237 = vmul.f32 %v6033, 1.442695
          %v6238 = vpow.pop %v6237
          %v6239 = vmul.f32 %v6038, 1.442695
          %v6240 = vpow.pop %v6239
          %v6241 = vmul.f32 %v6041, 1.442695
          %v6242 = vpow.pop %v6241
          %v6243 = vtanh.pop %v6212
          %v6244 = vtanh.pop %v6214
          %v6245 = vtanh.pop %v6216
          %v6246 = vtanh.pop %v6218
          %v6247 = vtanh.pop %v6220
          %v6248 = vtanh.pop %v6222
          %v6249 = vtanh.pop %v6224
          %v6250 = vtanh.pop %v6226
          %v6251 = vtanh.pop %v6228
          %v6252 = vtanh.pop %v6230
          %v6253 = vtanh.pop %v6232
          %v6254 = vtanh.pop %v6234
          %v6255 = vtanh.pop %v6236
          %v6256 = vtanh.pop %v6238
          %v6257 = vtanh.pop %v6240
          %v6258 = vtanh.pop %v6242
          %v6259 = vmul.f32 %v6243, %v5982
          %v6260 = vmul.f32 %v6244, %v5985
          %v6261 = vmul.f32 %v6245, %v5990
          %v6262 = vmul.f32 %v6246, %v5993
          %v6263 = vmul.f32 %v6247, %v5998
          %v6264 = vmul.f32 %v6248, %v6001
          %v6265 = vmul.f32 %v6249, %v6006
          %v6266 = vmul.f32 %v6250, %v6009
          %v6267 = vmul.f32 %v6251, %v6014
          %v6268 = vmul.f32 %v6252, %v6017
          %v6269 = vmul.f32 %v6253, %v6022
          %v6270 = vmul.f32 %v6254, %v6025
          %v6271 = vmul.f32 %v6255, %v6030
          %v6272 = vmul.f32 %v6256, %v6033
          %v6273 = vmul.f32 %v6257, %v6038
          %v6274 = vmul.f32 %v6258, %v6041
          %v6275 = vmul.f32 %v6259, %v6149
          %v6276 = vmul.f32 %v6260, %v6152
          %v6277 = vmul.f32 %v6261, %v6157
          %v6278 = vmul.f32 %v6262, %v6160
          %v6279 = vmul.f32 %v6263, %v6165
          %v6280 = vmul.f32 %v6264, %v6168
          %v6281 = vmul.f32 %v6265, %v6173
          %v6282 = vmul.f32 %v6266, %v6176
          %v6283 = vmul.f32 %v6267, %v6181
          %v6284 = vmul.f32 %v6268, %v6184
          %v6285 = vmul.f32 %v6269, %v6189
          %v6286 = vmul.f32 %v6270, %v6192
          %v6287 = vmul.f32 %v6271, %v6197
          %v6288 = vmul.f32 %v6272, %v6200
          %v6289 = vmul.f32 %v6273, %v6205
          %v6290 = vmul.f32 %v6274, %v6208
          %v6291 = vpack.c.bf16 %v6276, %v6275
          %v6292 = vpack.c.bf16 %v6278, %v6277
          %v6293 = vpack.c.bf16 %v6280, %v6279
          %v6294 = vpack.c.bf16 %v6282, %v6281
          %v6295 = vpack.c.bf16 %v6284, %v6283
          %v6296 = vpack.c.bf16 %v6286, %v6285
          %v6297 = vpack.c.bf16 %v6288, %v6287
          %v6298 = vpack.c.bf16 %v6290, %v6289
          %v6299 = vld [vmem:[#allocation15] sm:$0xf]
          %v6300 = vld [vmem:[#allocation15 + $0x4] sm:$0xf]
          %v6301 = vld [vmem:[#allocation15 + $0x8] sm:$0xf]
          %v6302 = vld [vmem:[#allocation15 + $0xc] sm:$0xf]
          %v6303 = vld [vmem:[#allocation15 + $0x10] sm:$0xf]
          %v6304 = vld [vmem:[#allocation15 + $0x14] sm:$0xf]
          %v6305 = vld [vmem:[#allocation15 + $0x18] sm:$0xf]
          %v6306 = vld [vmem:[#allocation15 + $0x1c] sm:$0xf]
          %v6307 = vld [vmem:[#allocation15 + $0x20] sm:$0xf]
          %v6308 = vld [vmem:[#allocation15 + $0x24] sm:$0xf]
          %v6309 = vld [vmem:[#allocation15 + $0x28] sm:$0xf]
          %v6310 = vld [vmem:[#allocation15 + $0x2c] sm:$0xf]
          %v6311 = vld [vmem:[#allocation15 + $0x30] sm:$0xf]
          %v6312 = vld [vmem:[#allocation15 + $0x34] sm:$0xf]
          %v6313 = vld [vmem:[#allocation15 + $0x38] sm:$0xf]
          %v6314 = vld [vmem:[#allocation15 + $0x3c] sm:$0xf]
          %v6316 = vlaneseq
          %v6317 = vshrl.u32 %v6316, 7
          %v6318 = vsub.s32 0, %v6317
          %v6319 = vrot.slane %v1280, %v6318
          %v6337 = vunpack.c.l.b16 %v6299
          %v6338 = vunpack.c.l.b16 %v6300
          %v6339 = vunpack.c.l.b16 %v6301
          %v6340 = vunpack.c.l.b16 %v6302
          %v6341 = vunpack.c.l.b16 %v6303
          %v6342 = vunpack.c.l.b16 %v6304
          %v6343 = vunpack.c.l.b16 %v6305
          %v6344 = vunpack.c.l.b16 %v6306
          %v6345 = vunpack.c.l.b16 %v6307
          %v6346 = vunpack.c.l.b16 %v6308
          %v6347 = vunpack.c.l.b16 %v6309
          %v6348 = vunpack.c.l.b16 %v6310
          %v6349 = vunpack.c.l.b16 %v6311
          %v6350 = vunpack.c.l.b16 %v6312
          %v6351 = vunpack.c.l.b16 %v6313
          %v6352 = vunpack.c.l.b16 %v6314
          %v6353 = vpack.c.b16 %v6338, %v6337
          %v6354 = vpack.c.b16 %v6340, %v6339
          %v6355 = vpack.c.b16 %v6342, %v6341
          %v6356 = vpack.c.b16 %v6344, %v6343
          %v6357 = vpack.c.b16 %v6346, %v6345
          %v6358 = vpack.c.b16 %v6348, %v6347
          %v6359 = vpack.c.b16 %v6350, %v6349
          %v6360 = vpack.c.b16 %v6352, %v6351
          %6369 = vmatprep.subr.bf16.mxu0 0
          %6370 = vmatpush1.bf16.msra.mxu0 %v6353
          %6371 = vmatprep.subr.bf16.mxu0 0
          %6372 = vmatpush1.bf16.msra.mxu0 %v6354
          %6373 = vmatprep.subr.bf16.mxu0 0
          %6374 = vmatpush1.bf16.msra.mxu0 %v6355
          %6375 = vmatprep.subr.bf16.mxu0 0
          %6376 = vmatpush1.bf16.msra.mxu0 %v6356
          %6377 = vmatprep.subr.bf16.mxu0 0
          %6378 = vmatpush1.bf16.msra.mxu0 %v6357
          %6379 = vmatprep.subr.bf16.mxu0 0
          %6380 = vmatpush1.bf16.msra.mxu0 %v6358
          %6381 = vmatprep.subr.bf16.mxu0 0
          %6382 = vmatpush1.bf16.msra.mxu0 %v6359
          %6383 = vmatprep.subr.bf16.mxu0 0
          %6384 = vmatpush1.bf16.msra.mxu0 %v6360
          %6385 = vmatprep.subr.bf16.mxu0 0
          %6386 = vmatpush1.bf16.msra.mxu0 0
          %6387 = vmatprep.subr.bf16.mxu0 0
          %6388 = vmatpush1.bf16.msra.mxu0 0
          %6389 = vmatprep.subr.bf16.mxu0 0
          %6390 = vmatpush1.bf16.msra.mxu0 0
          %6391 = vmatprep.subr.bf16.mxu0 0
          %6392 = vmatpush1.bf16.msra.mxu0 0
          %6393 = vmatprep.subr.bf16.mxu0 0
          %6394 = vmatpush1.bf16.msra.mxu0 0
          %6395 = vmatprep.subr.bf16.mxu0 0
          %6396 = vmatpush1.bf16.msra.mxu0 0
          %6397 = vmatprep.subr.bf16.mxu0 0
          %6398 = vmatpush1.bf16.msra.mxu0 0
          %6399 = vmatprep.subr.bf16.mxu0 0
          %6400 = vmatpush1.bf16.msra.mxu0 0
          %6401 = vmatprep.mubr.bf16.mxu0 0
          %6402 = vmatmul.mubr.bf16.gmra.mrb[0].mxu0 %v6291
          %v6403 = vpop.f32.mrb[0].mxu0
          %v6404 = vadd.f32 %v6319, %v6403
          %v6405 = vpop.f32.mrb[0].mxu0
          %v6406 = vpop.f32.mrb[0].mxu0
          %v6407 = vadd.f32 %v6319, %v6406
          %v6408 = vpop.f32.mrb[0].mxu0
          %6409 = vmatprep.mubr.bf16.mxu0 0
          %6410 = vmatmul.mubr.bf16.gmra.mrb[0].mxu0 %v6292
          %v6411 = vpop.f32.mrb[0].mxu0
          %v6412 = vadd.f32 %v6319, %v6411
          %v6413 = vpop.f32.mrb[0].mxu0
          %v6414 = vpop.f32.mrb[0].mxu0
          %v6415 = vadd.f32 %v6319, %v6414
          %v6416 = vpop.f32.mrb[0].mxu0
          %6417 = vmatprep.mubr.bf16.mxu0 0
          %6418 = vmatmul.mubr.bf16.gmra.mrb[0].mxu0 %v6293
          %v6419 = vpop.f32.mrb[0].mxu0
          %v6420 = vadd.f32 %v6319, %v6419
          %v6421 = vpop.f32.mrb[0].mxu0
          %v6422 = vpop.f32.mrb[0].mxu0
          %v6423 = vadd.f32 %v6319, %v6422
          %v6424 = vpop.f32.mrb[0].mxu0
          %6425 = vmatprep.mubr.bf16.mxu0 0
          %6426 = vmatmul.mubr.bf16.gmra.mrb[0].mxu0 %v6294
          %v6427 = vpop.f32.mrb[0].mxu0
          %v6428 = vadd.f32 %v6319, %v6427
          %v6429 = vpop.f32.mrb[0].mxu0
          %v6430 = vpop.f32.mrb[0].mxu0
          %v6431 = vadd.f32 %v6319, %v6430
          %v6432 = vpop.f32.mrb[0].mxu0
          %6433 = vmatprep.mubr.bf16.mxu0 0
          %6434 = vmatmul.mubr.bf16.gmra.mrb[0].mxu0 %v6295
          %v6435 = vpop.f32.mrb[0].mxu0
          %v6436 = vadd.f32 %v6319, %v6435
          %v6437 = vpop.f32.mrb[0].mxu0
          %v6438 = vpop.f32.mrb[0].mxu0
          %v6439 = vadd.f32 %v6319, %v6438
          %v6440 = vpop.f32.mrb[0].mxu0
          %6441 = vmatprep.mubr.bf16.mxu0 0
          %6442 = vmatmul.mubr.bf16.gmra.mrb[0].mxu0 %v6296
          %v6443 = vpop.f32.mrb[0].mxu0
          %v6444 = vadd.f32 %v6319, %v6443
          %v6445 = vpop.f32.mrb[0].mxu0
          %v6446 = vpop.f32.mrb[0].mxu0
          %v6447 = vadd.f32 %v6319, %v6446
          %v6448 = vpop.f32.mrb[0].mxu0
          %6449 = vmatprep.mubr.bf16.mxu0 0
          %6450 = vmatmul.mubr.bf16.gmra.mrb[0].mxu0 %v6297
          %v6451 = vpop.f32.mrb[0].mxu0
          %v6452 = vadd.f32 %v6319, %v6451
          %v6453 = vpop.f32.mrb[0].mxu0
          %v6454 = vpop.f32.mrb[0].mxu0
          %v6455 = vadd.f32 %v6319, %v6454
          %v6456 = vpop.f32.mrb[0].mxu0
          %6457 = vmatprep.mubr.bf16.mxu0 0
          %6458 = vmatmul.mubr.bf16.gmra.mrb[0].mxu0 %v6298
          %v6459 = vpop.f32.mrb[0].mxu0
          %v6460 = vadd.f32 %v6319, %v6459
          %v6461 = vpop.f32.mrb[0].mxu0
          %v6462 = vpop.f32.mrb[0].mxu0
          %v6463 = vadd.f32 %v6319, %v6462
          %v6464 = vpop.f32.mrb[0].mxu0
          %6465 = vdwg.mxu0
          %s6466 = smul.u32 %s1288, 16
          %s6467 = scalar_lea.vmem %s504, %s6466 [#allocation4]
          %v6468 = vld [vmem:[%s6467] sm:$0xff]
          %v6469 = vld [vmem:[%s6467 + $0x8] sm:$0xff]
          %v6470 = vld [vmem:[%s6467 + $0x10] sm:$0xff]
          %v6471 = vld [vmem:[%s6467 + $0x18] sm:$0xff]
          %v6472 = vld [vmem:[%s6467 + $0x20] sm:$0xff]
          %v6473 = vld [vmem:[%s6467 + $0x28] sm:$0xff]
          %v6474 = vld [vmem:[%s6467 + $0x30] sm:$0xff]
          %v6475 = vld [vmem:[%s6467 + $0x38] sm:$0xff]
          %v6476 = vld [vmem:[%s6467 + $0x40] sm:$0xff]
          %v6477 = vld [vmem:[%s6467 + $0x48] sm:$0xff]
          %v6478 = vld [vmem:[%s6467 + $0x50] sm:$0xff]
          %v6479 = vld [vmem:[%s6467 + $0x58] sm:$0xff]
          %v6480 = vld [vmem:[%s6467 + $0x60] sm:$0xff]
          %v6481 = vld [vmem:[%s6467 + $0x68] sm:$0xff]
          %v6482 = vld [vmem:[%s6467 + $0x70] sm:$0xff]
          %v6483 = vld [vmem:[%s6467 + $0x78] sm:$0xff]
          %v6485 = vlaneseq
          %v6486 = vshrl.u32 %v6485, 7
          %v6487 = vsub.s32 0, %v6486
          %v6488 = vrot.slane %v1281, %v6487
          %v6490 = vmul.f32 %v6468, %v6488
          %v6491 = vmul.f32 %v6469, %v6488
          %v6492 = vmul.f32 %v6470, %v6488
          %v6493 = vmul.f32 %v6471, %v6488
          %v6494 = vmul.f32 %v6472, %v6488
          %v6495 = vmul.f32 %v6473, %v6488
          %v6496 = vmul.f32 %v6474, %v6488
          %v6497 = vmul.f32 %v6475, %v6488
          %v6498 = vmul.f32 %v6476, %v6488
          %v6499 = vmul.f32 %v6477, %v6488
          %v6500 = vmul.f32 %v6478, %v6488
          %v6501 = vmul.f32 %v6479, %v6488
          %v6502 = vmul.f32 %v6480, %v6488
          %v6503 = vmul.f32 %v6481, %v6488
          %v6504 = vmul.f32 %v6482, %v6488
          %v6505 = vmul.f32 %v6483, %v6488
          %v6506 = vadd.f32 %v6404, %v6490
          %v6507 = vadd.f32 %v6407, %v6491
          %v6508 = vadd.f32 %v6412, %v6492
          %v6509 = vadd.f32 %v6415, %v6493
          %v6510 = vadd.f32 %v6420, %v6494
          %v6511 = vadd.f32 %v6423, %v6495
          %v6512 = vadd.f32 %v6428, %v6496
          %v6513 = vadd.f32 %v6431, %v6497
          %v6514 = vadd.f32 %v6436, %v6498
          %v6515 = vadd.f32 %v6439, %v6499
          %v6516 = vadd.f32 %v6444, %v6500
          %v6517 = vadd.f32 %v6447, %v6501
          %v6518 = vadd.f32 %v6452, %v6502
          %v6519 = vadd.f32 %v6455, %v6503
          %v6520 = vadd.f32 %v6460, %v6504
          %v6521 = vadd.f32 %v6463, %v6505
          %s6522 = scalar_lea.vmem %s572, %s6466 [#allocation16]
          %6523 = vst [vmem:[%s6522] sm:$0xff] %v6506
          %6524 = vst [vmem:[%s6522 + $0x8] sm:$0xff] %v6507
          %6525 = vst [vmem:[%s6522 + $0x10] sm:$0xff] %v6508
          %6526 = vst [vmem:[%s6522 + $0x18] sm:$0xff] %v6509
          %6527 = vst [vmem:[%s6522 + $0x20] sm:$0xff] %v6510
          %6528 = vst [vmem:[%s6522 + $0x28] sm:$0xff] %v6511
          %6529 = vst [vmem:[%s6522 + $0x30] sm:$0xff] %v6512
          %6530 = vst [vmem:[%s6522 + $0x38] sm:$0xff] %v6513
          %6531 = vst [vmem:[%s6522 + $0x40] sm:$0xff] %v6514
          %6532 = vst [vmem:[%s6522 + $0x48] sm:$0xff] %v6515
          %6533 = vst [vmem:[%s6522 + $0x50] sm:$0xff] %v6516
          %6534 = vst [vmem:[%s6522 + $0x58] sm:$0xff] %v6517
          %6535 = vst [vmem:[%s6522 + $0x60] sm:$0xff] %v6518
          %6536 = vst [vmem:[%s6522 + $0x68] sm:$0xff] %v6519
          %6537 = vst [vmem:[%s6522 + $0x70] sm:$0xff] %v6520
          %6538 = vst [vmem:[%s6522 + $0x78] sm:$0xff] %v6521
        $region116: #{tpu_custom_call.1} parent=75 // loop_footer
          %s1287 = sadd.s32 1, %s1283
        $region117: #{tpu_custom_call.1} parent=75 // loop_footer_branch
          %1282 = sbr.rel target = $region113
        $region118: #{tpu_custom_call.1} parent=75 // loop_exit
          _
        %s6539 = sand.u32 %s341, 1
        %s6540 = scalar_lea.sflag [#allocation6], %s6539
        %s6541 = sand.u32 %s341, 1
        %s6542 = smul.addr %s6541, 256
        %s6543 = scalar_lea.vmem [#allocation16], %s6542
        // Predicated region
        $region119: #{tpu_custom_call.1} parent=75 // pred_check
          %p6544 = pneg %p351
        $region120: #{tpu_custom_call.1} parent=75 // pred_check_branch
          %6546 = sbr.rel (%p6544) target = $region122
        $region121: #{tpu_custom_call.1} parent=75 // pred_region
          %s6548 = ssub.s32 4096, 4096
          %6549 = vsyncadd %s6540, %s6548
          %s6550 = smul.addr %s34, 32
          %s6551 = smul.addr %s6550, 128
          %s6552 = scalar_lea.hbm %s14, %s6551
          %s6553 = sshll.u32 %s6543, 4
          %s6554 = int_to_ptr.vmem [resolvable:$true] %s6553
          %6559 = dma.vmem_to_hbm [thread:$0]  %s6554, 4096, %s6552, %s6540, 128, 128, 8
        $region122: #{tpu_custom_call.1} parent=75 // pred_fallthru
          _
      $region76: #{tpu_custom_call.1} parent=5 // pred_fallthru
        _
      %p6560 = scmp.le.s32.totalorder 2, %s29
      // Predicated region
      $region123: #{tpu_custom_call.1} parent=5 // pred_check
        %p6561 = pneg %p6560
      $region124: #{tpu_custom_call.1} parent=5 // pred_check_branch
        %6563 = sbr.rel (%p6561) target = $region126
      $region125: #{tpu_custom_call.1} parent=5 // pred_region
        %s6564 = ssub.s32 %s29, 2
        // Predicated region
        $region127: #{tpu_custom_call.1} parent=125 // pred_check
          %p6565 = pneg %p357
        $region128: #{tpu_custom_call.1} parent=125 // pred_check_branch
          %6567 = sbr.rel (%p6565) target = $region130
        $region129: #{tpu_custom_call.1} parent=125 // pred_region
          %s6568 = sand.u32 %s342, 1
          %s6569 = scalar_lea.sflag [#allocation6], %s6568
          %s6570 = sand.u32 %s342, 1
          %s6571 = smul.addr %s6570, 256
          %s6572 = scalar_lea.vmem [#allocation16], %s6571
          %6573 = dma.done %s6569, 4096
        $region130: #{tpu_custom_call.1} parent=125 // pred_fallthru
          _
      $region126: #{tpu_custom_call.1} parent=5 // pred_fallthru
        _
    $region6: #{tpu_custom_call.1} parent=1 // loop_footer
      %s33 = sadd.s32 1, %s29
    $region7: #{tpu_custom_call.1} parent=1 // loop_footer_branch
      %28 = sbr.rel target = $region3
    $region8: #{tpu_custom_call.1} parent=1 // loop_exit
      _
    %6574 = vsyncpa [#allocation5], 1
    %s6575 = scalar_lea.sflag [#allocation5], 1
    %6576 = vsyncpa %s6575, 1
    %6577 = vsyncpa [#allocation8], 1
    %6578 = vsyncpa [#allocation11], 1
    %6579 = vsyncpa [#allocation14], 1
    %6580 = vsyncpa [#allocation6], 1
    %s6581 = scalar_lea.sflag [#allocation6], 1
    %6582 = vsyncpa %s6581, 1

</llo_original>
